<compile_context>
chip_gen: v7x
topology: tpu7x:2x2x1
jax: 0.10.0
libtpu: 0.0.40
codegen_flags: <defaults>
</compile_context>

<pallas_src>
import functools

import jax
import jax.numpy as jnp
from jax.experimental import pallas as pl
from jax.experimental.pallas import tpu as pltpu

CFG = dict(
    vocab=512, seq=16, batch=2, max_pos=64,
    e5_dim=128, e5_heads=4, e5_ffn=256, e5_layers=2,
    lm_dim=256, lm_heads=4, lm_ffn=512, lm_layers=2,
)

# ------------------------------------------------------------------ fused linear

def _fused_linear_kernel(*refs, prenorm, has_bias, activation, has_residual,
                         postnorm, pre_eps, post_eps, n_half):
    refs = list(refs)
    o_ref = refs.pop()
    it = iter(refs)
    x_ref = next(it)
    pre_g_ref = next(it) if prenorm else None
    w_ref = next(it)
    b_ref = next(it) if has_bias else None
    res_ref = next(it) if has_residual else None
    post_g_ref = next(it) if postnorm else None
    post_b_ref = next(it) if postnorm else None

    x = x_ref[...]
    if prenorm:  # RMSNorm prologue (f32 statistics)
        xf = x.astype(jnp.float32)
        ms = jnp.mean(xf * xf, axis=-1, keepdims=True)
        x = (xf * jax.lax.rsqrt(ms + pre_eps)
             * pre_g_ref[...].astype(jnp.float32)).astype(w_ref.dtype)

    acc = jnp.dot(x, w_ref[...], preferred_element_type=jnp.float32)

    if has_bias:
        acc = acc + b_ref[...].astype(jnp.float32)

    if activation == "gelu":
        # NOTE: tanh-approx GELU (HF BERT uses exact erf GELU; negligible here).
        acc = jax.nn.gelu(acc, approximate=True)
    elif activation == "swiglu":
        g = acc[:, :n_half]          # lane-aligned slice (n_half is a mult. of 128)
        u = acc[:, n_half:]
        acc = g * jax.nn.sigmoid(g) * u

    if has_residual:
        acc = acc + res_ref[...].astype(jnp.float32)

    if postnorm:  # LayerNorm epilogue (f32 statistics)
        mu = jnp.mean(acc, axis=-1, keepdims=True)
        var = jnp.mean(jnp.square(acc - mu), axis=-1, keepdims=True)
        acc = (acc - mu) * jax.lax.rsqrt(var + post_eps)
        acc = acc * post_g_ref[...].astype(jnp.float32) + post_b_ref[...].astype(jnp.float32)

    o_ref[...] = acc.astype(o_ref.dtype)


def fused_linear(x, w, *, bias=None, prenorm_g=None, pre_eps=1e-5,
                 activation=None, residual=None,
                 postnorm_g=None, postnorm_b=None, post_eps=1e-12,
                 out_dtype=None, tm=16):
    """y = [LN]( [residual +] act( [rmsnorm](x) @ w [+ bias] ) ); grid tiles rows."""
    M, K = x.shape
    Kw, N = w.shape
    assert K == Kw and M % tm == 0 and N % 128 == 0
    n_out = N // 2 if activation == "swiglu" else N
    out_dtype = out_dtype or x.dtype

    inputs = [x]
    in_specs = [pl.BlockSpec((tm, K), lambda i: (i, 0))]
    if prenorm_g is not None:
        inputs.append(prenorm_g.reshape(1, K))
        in_specs.append(pl.BlockSpec((1, K), lambda i: (0, 0)))
    inputs.append(w)
    in_specs.append(pl.BlockSpec((K, N), lambda i: (0, 0)))
    if bias is not None:
        inputs.append(bias.reshape(1, N).astype(jnp.float32))
        in_specs.append(pl.BlockSpec((1, N), lambda i: (0, 0)))
    if residual is not None:
        inputs.append(residual)
        in_specs.append(pl.BlockSpec((tm, n_out), lambda i: (i, 0)))
    if postnorm_g is not None:
        inputs.append(postnorm_g.reshape(1, N))
        in_specs.append(pl.BlockSpec((1, N), lambda i: (0, 0)))
        inputs.append(postnorm_b.reshape(1, N))
        in_specs.append(pl.BlockSpec((1, N), lambda i: (0, 0)))

    kernel = functools.partial(
        _fused_linear_kernel,
        prenorm=prenorm_g is not None, has_bias=bias is not None,
        activation=activation, has_residual=residual is not None,
        postnorm=postnorm_g is not None,
        pre_eps=pre_eps, post_eps=post_eps, n_half=N // 2)

    return pl.pallas_call(
        kernel,
        out_shape=jax.ShapeDtypeStruct((M, n_out), out_dtype),
        grid=(M // tm,),
        in_specs=in_specs,
        out_specs=pl.BlockSpec((tm, n_out), lambda i: (i, 0)),
        compiler_params=pltpu.CompilerParams(dimension_semantics=("parallel",)),
    )(*inputs)


# ------------------------------------------------------------------ layernorm (embeddings)

def _layernorm_kernel(x_ref, g_ref, b_ref, o_ref, *, eps):
    x = x_ref[...].astype(jnp.float32)
    mu = jnp.mean(x, axis=-1, keepdims=True)
    var = jnp.mean(jnp.square(x - mu), axis=-1, keepdims=True)
    y = (x - mu) * jax.lax.rsqrt(var + eps)
    o_ref[...] = (y * g_ref[...].astype(jnp.float32)
                  + b_ref[...].astype(jnp.float32)).astype(o_ref.dtype)


def layernorm(x, g, b, eps=1e-12, tm=16):
    M, D = x.shape
    return pl.pallas_call(
        functools.partial(_layernorm_kernel, eps=eps),
        out_shape=jax.ShapeDtypeStruct((M, D), x.dtype),
        grid=(M // tm,),
        in_specs=[pl.BlockSpec((tm, D), lambda i: (i, 0)),
                  pl.BlockSpec((1, D), lambda i: (0, 0)),
                  pl.BlockSpec((1, D), lambda i: (0, 0))],
        out_specs=pl.BlockSpec((tm, D), lambda i: (i, 0)),
        compiler_params=pltpu.CompilerParams(dimension_semantics=("parallel",)),
    )(x, g.reshape(1, D), b.reshape(1, D))


# ------------------------------------------------------------------ attention (heads batched)

def _mha_kernel(q_ref, k_ref, v_ref, bias_ref, o_ref, *, scale):
    q = q_ref[0]                               # (H, S, dh) bf16
    k = k_ref[0]
    v = v_ref[0]
    bias = bias_ref[0].astype(jnp.float32)     # (S, S) additive mask
    # scores: contract dh, batch over heads (no explicit transpose of K).
    s = jax.lax.dot_general(q, k, (((2,), (2,)), ((0,), (0,))),
                            preferred_element_type=jnp.float32)
    s = s * scale + bias[None, :, :]
    m = jnp.max(s, axis=-1, keepdims=True)
    p = jnp.exp(s - m)
    denom = jnp.sum(p, axis=-1, keepdims=True)
    p = p * pl.reciprocal(denom, approx=True)
    ctx = jax.lax.dot_general(p.astype(v.dtype), v, (((2,), (1,)), ((0,), (0,))),
                              preferred_element_type=jnp.float32)
    o_ref[0] = ctx.astype(o_ref.dtype)


def mha(q, k, v, bias, scale):
    """q,k,v: (B, H, S, dh); bias: (B, S, S) additive mask; grid over batch only."""
    B, H, S, dh = q.shape
    spec = pl.BlockSpec((1, H, S, dh), lambda b: (b, 0, 0, 0))
    return pl.pallas_call(
        functools.partial(_mha_kernel, scale=scale),
        out_shape=jax.ShapeDtypeStruct((B, H, S, dh), q.dtype),
        grid=(B,),
        in_specs=[spec, spec, spec,
                  pl.BlockSpec((1, S, S), lambda b: (b, 0, 0))],
        out_specs=spec,
        compiler_params=pltpu.CompilerParams(dimension_semantics=("parallel",)),
    )(q, k, v, bias)


# ------------------------------------------------------------------ final rmsnorm + lm head + CE

def _head_ce_kernel(x_ref, g_ref, w_ref, tgt_ref, logits_ref, nll_ref, *, eps):
    x = x_ref[...].astype(jnp.float32)
    ms = jnp.mean(x * x, axis=-1, keepdims=True)
    n = x * jax.lax.rsqrt(ms + eps) * g_ref[...].astype(jnp.float32)
    logits = jnp.dot(n.astype(w_ref.dtype), w_ref[...],
                     preferred_element_type=jnp.float32)            # (tm, V)
    logits_ref[...] = logits
    m = jnp.max(logits, axis=-1, keepdims=True)
    lse = jnp.log(jnp.sum(jnp.exp(logits - m), axis=-1, keepdims=True)) + m
    lab = tgt_ref[...]                                               # (tm, 1) int32
    col = jax.lax.broadcasted_iota(jnp.int32, logits.shape, 1)
    tgt = jnp.sum(jnp.where(col == lab, logits, 0.0), axis=-1, keepdims=True)
    nll = lse - tgt                                                  # (tm, 1)
    nll_ref[...] = jnp.broadcast_to(nll, nll_ref.shape)              # lane-dense store


def lm_head_ce(hf, g, w_head, targets, *, eps=1e-5, tm=16):
    M, D = hf.shape
    _, V = w_head.shape
    logits, nll = pl.pallas_call(
        functools.partial(_head_ce_kernel, eps=eps),
        out_shape=(jax.ShapeDtypeStruct((M, V), jnp.float32),
                   jax.ShapeDtypeStruct((M, 128), jnp.float32)),
        grid=(M // tm,),
        in_specs=[pl.BlockSpec((tm, D), lambda i: (i, 0)),
                  pl.BlockSpec((1, D), lambda i: (0, 0)),
                  pl.BlockSpec((D, V), lambda i: (0, 0)),
                  pl.BlockSpec((tm, 1), lambda i: (i, 0))],
        out_specs=(pl.BlockSpec((tm, V), lambda i: (i, 0)),
                   pl.BlockSpec((tm, 128), lambda i: (i, 0))),
        compiler_params=pltpu.CompilerParams(dimension_semantics=("parallel",)),
    )(hf, g.reshape(1, D), w_head, targets.reshape(M, 1).astype(jnp.int32))
    return logits, nll[:, 0]


# ------------------------------------------------------------------ glue (XLA)

def split_heads(x_flat, B, S, H):
    D = x_flat.shape[-1]
    return x_flat.reshape(B, S, H, D // H).transpose(0, 2, 1, 3)


def merge_heads(x):
    B, H, S, dh = x.shape
    return x.transpose(0, 2, 1, 3).reshape(B * S, H * dh)


def rope_tables(S, dh):
    half = dh // 2
    inv = 1.0 / (10000.0 ** (jnp.arange(half, dtype=jnp.float32) / half))
    fr = jnp.arange(S, dtype=jnp.float32)[:, None] * inv[None, :]
    emb = jnp.concatenate([fr, fr], axis=-1)
    return jnp.cos(emb), jnp.sin(emb)          # each (S, dh)


def apply_rope(x, cos, sin):                    # x: (B, H, S, dh) f32
    dh = x.shape[-1]
    x1, x2 = x[..., : dh // 2], x[..., dh // 2:]
    rot = jnp.concatenate([-x2, x1], axis=-1)
    return x * cos[None, None] + rot * sin[None, None]


# ------------------------------------------------------------------ params

def init_params(key, cfg):
    keys = iter(jax.random.split(key, 256))
    nk = lambda: next(keys)

    def dense(shape, scale=0.02):  # bf16 storage for all matmul weights/embeddings
        return (scale * jax.random.normal(nk(), shape, dtype=jnp.float32)).astype(jnp.bfloat16)

    De, Dl, V = cfg["e5_dim"], cfg["lm_dim"], cfg["vocab"]
    f32 = jnp.float32
    e5 = dict(word_emb=dense((V, De)),
              pos_emb=dense((cfg["max_pos"], De)),
              emb_ln_g=jnp.ones((De,), f32), emb_ln_b=jnp.zeros((De,), f32),
              layers=[])
    for _ in range(cfg["e5_layers"]):
        e5["layers"].append(dict(
            wqkv=dense((De, 3 * De)), bqkv=jnp.zeros((3 * De,), f32),
            wo=dense((De, De)), bo=jnp.zeros((De,), f32),
            ln1_g=jnp.ones((De,), f32), ln1_b=jnp.zeros((De,), f32),
            w1=dense((De, cfg["e5_ffn"])), b1=jnp.zeros((cfg["e5_ffn"],), f32),
            w2=dense((cfg["e5_ffn"], De)), b2=jnp.zeros((De,), f32),
            ln2_g=jnp.ones((De,), f32), ln2_b=jnp.zeros((De,), f32),
        ))
    proj = dict(w=dense((De, Dl)), b=jnp.zeros((Dl,), f32))
    lm = dict(layers=[], rms_f=jnp.ones((Dl,), f32), lm_head=dense((Dl, V)))
    for _ in range(cfg["lm_layers"]):
        lm["layers"].append(dict(
            rms1=jnp.ones((Dl,), f32),
            wqkv=dense((Dl, 3 * Dl)),
            wo=dense((Dl, Dl)),
            rms2=jnp.ones((Dl,), f32),
            wgu=dense((Dl, 2 * cfg["lm_ffn"])),
            wd=dense((cfg["lm_ffn"], Dl)),
        ))
    return dict(e5=e5, proj=proj, lm=lm)


# ------------------------------------------------------------------ forward

def e5smollm_forward(params, input_ids, attention_mask, labels=None):
    cfg = CFG
    B, S = input_ids.shape
    De, Dl, V = cfg["e5_dim"], cfg["lm_dim"], cfg["vocab"]
    He, Hl = cfg["e5_heads"], cfg["lm_heads"]
    dhe, dhl = De // He, Dl // Hl
    M = B * S
    amask_f = attention_mask.astype(jnp.float32)

    # ---- frozen E5 encoder (BERT-style, post-LN) ----
    e5 = params["e5"]
    emb = e5["word_emb"][input_ids] + e5["pos_emb"][:S][None, :, :]
    xf = layernorm(emb.reshape(M, De), e5["emb_ln_g"], e5["emb_ln_b"], eps=1e-12)
    enc_bias = jnp.broadcast_to((1.0 - amask_f)[:, None, :] * jnp.float32(-1e9),
                                (B, S, S))
    for lyr in e5["layers"]:
        qkv = fused_linear(xf, lyr["wqkv"], bias=lyr["bqkv"])             # (M, 3De)
        q = split_heads(qkv[:, :De], B, S, He)
        k = split_heads(qkv[:, De:2 * De], B, S, He)
        v = split_heads(qkv[:, 2 * De:], B, S, He)
        ctx = mha(q, k, v, enc_bias, scale=1.0 / (dhe ** 0.5))
        xf = fused_linear(merge_heads(ctx), lyr["wo"], bias=lyr["bo"],
                          residual=xf, postnorm_g=lyr["ln1_g"],
                          postnorm_b=lyr["ln1_b"], post_eps=1e-12)
        h = fused_linear(xf, lyr["w1"], bias=lyr["b1"], activation="gelu")
        xf = fused_linear(h, lyr["w2"], bias=lyr["b2"],
                          residual=xf, postnorm_g=lyr["ln2_g"],
                          postnorm_b=lyr["ln2_b"], post_eps=1e-12)
    xf = jax.lax.stop_gradient(xf)   # e5 params are frozen in the torch module

    # ---- projection (e5_dim != lm_dim -> nn.Linear) ----
    hf = fused_linear(xf, params["proj"]["w"], bias=params["proj"]["b"])  # (M, Dl)

    # ---- SmolLM2-style decoder (LLaMA arch), consuming inputs_embeds ----
    lm = params["lm"]
    causal = jnp.tril(jnp.ones((S, S), jnp.float32))
    dec_bias = (1.0 - causal[None] * amask_f[:, None, :]) * jnp.float32(-1e9)
    cos, sin = rope_tables(S, dhl)
    for lyr in lm["layers"]:
        qkv = fused_linear(hf, lyr["wqkv"], prenorm_g=lyr["rms1"], pre_eps=1e-5)
        q = split_heads(qkv[:, :Dl], B, S, Hl)
        k = split_heads(qkv[:, Dl:2 * Dl], B, S, Hl)
        v = split_heads(qkv[:, 2 * Dl:], B, S, Hl)
        q = apply_rope(q.astype(jnp.float32), cos, sin).astype(qkv.dtype)
        k = apply_rope(k.astype(jnp.float32), cos, sin).astype(qkv.dtype)
        ctx = mha(q, k, v, dec_bias, scale=1.0 / (dhl ** 0.5))
        hf = fused_linear(merge_heads(ctx), lyr["wo"], residual=hf)
        act = fused_linear(hf, lyr["wgu"], prenorm_g=lyr["rms2"], pre_eps=1e-5,
                           activation="swiglu")                            # (M, ffn)
        hf = fused_linear(act, lyr["wd"], residual=hf)

    # ---- fused final RMSNorm + LM head + per-token cross-entropy ----
    if labels is not None:
        shift = jnp.concatenate(
            [labels[:, 1:], jnp.full((B, 1), -100, labels.dtype)], axis=1).reshape(M)
    else:
        shift = jnp.full((M,), -100, jnp.int32)
    valid = (shift != -100)
    safe = jnp.where(valid, shift, 0).astype(jnp.int32)
    logits_flat, nll = lm_head_ce(hf, lm["rms_f"], lm["lm_head"], safe, eps=1e-5)
    logits = logits_flat.reshape(B, S, V)

    loss = None
    if labels is not None:
        vf = valid.astype(jnp.float32)
        loss = jnp.sum(nll * vf) / jnp.maximum(jnp.sum(vf), 1.0)
    return loss, logits


# ------------------------------------------------------------------ main

if __name__ == "__main__":
    key = jax.random.PRNGKey(0)
    kp, ki = jax.random.split(key)
    params = init_params(kp, CFG)

    B, S, V = CFG["batch"], CFG["seq"], CFG["vocab"]
    input_ids = jax.random.randint(ki, (B, S), 0, V, dtype=jnp.int32)
    attention_mask = jnp.ones((B, S), jnp.int32).at[1, S - 3:].set(0)
    labels = jnp.where(attention_mask == 1, input_ids, -100)

    fwd = jax.jit(e5smollm_forward)
    loss, logits = fwd(params, input_ids, attention_mask, labels)
    jax.block_until_ready((loss, logits))
    assert logits.shape == (B, S, V)
    assert bool(jnp.isfinite(loss)) and bool(jnp.all(jnp.isfinite(logits)))
    print("KERNEL_OK")
</pallas_src>

<mosaic_0001>
module attributes {stable_mosaic.version = 11 : i64} {
  func.func @_layernorm_kernel(%arg0: i32, %arg1: memref<16x128xbf16, #tpu.memory_space<vmem>>, %arg2: memref<1x128xf32, #tpu.memory_space<vmem>>, %arg3: memref<1x128xf32, #tpu.memory_space<vmem>>, %arg4: memref<16x128xbf16, #tpu.memory_space<vmem>>) attributes {dimension_semantics = [#tpu.dimension_semantics<parallel>], iteration_bounds = array<i64: 2>, scalar_prefetch = 0 : i64, scratch_operands = 0 : i64, tpu.core_type = #tpu.core_type<tc>, window_params = [{transform_indices = @transform_0, window_bounds = array<i64: 16, 128>}, {pipeline_mode = #tpu.pipeline_mode<synchronous>, transform_indices = @transform_1, window_bounds = array<i64: 1, 128>}, {pipeline_mode = #tpu.pipeline_mode<synchronous>, transform_indices = @transform_2, window_bounds = array<i64: 1, 128>}, {transform_indices = @transform_3, window_bounds = array<i64: 16, 128>}]} {
    %c0 = arith.constant 0 : index
    %c0_0 = arith.constant 0 : index
    %0 = vector.load %arg1[%c0, %c0_0] : memref<16x128xbf16, #tpu.memory_space<vmem>>, vector<16x128xbf16>
    %1 = arith.extf %0 : vector<16x128xbf16> to vector<16x128xf32>
    %cst = arith.constant dense<0.000000e+00> : vector<16xf32>
    %2 = vector.multi_reduction <add>, %1, %cst [1] : vector<16x128xf32> to vector<16xf32>
    %3 = vector.shape_cast %2 : vector<16xf32> to vector<16x1xf32>
    %cst_1 = arith.constant 1.280000e+02 : f32
    %4 = vector.broadcast %cst_1 : f32 to vector<16x1xf32>
    %5 = arith.divf %3, %4 : vector<16x1xf32>
    %6 = vector.broadcast %5 : vector<16x1xf32> to vector<16x128xf32>
    %7 = arith.subf %1, %6 : vector<16x128xf32>
    %8 = arith.mulf %7, %7 : vector<16x128xf32>
    %cst_2 = arith.constant dense<0.000000e+00> : vector<16xf32>
    %9 = vector.multi_reduction <add>, %8, %cst_2 [1] : vector<16x128xf32> to vector<16xf32>
    %10 = vector.shape_cast %9 : vector<16xf32> to vector<16x1xf32>
    %cst_3 = arith.constant 1.280000e+02 : f32
    %11 = vector.broadcast %cst_3 : f32 to vector<16x1xf32>
    %12 = arith.divf %10, %11 : vector<16x1xf32>
    %13 = vector.broadcast %5 : vector<16x1xf32> to vector<16x128xf32>
    %14 = arith.subf %1, %13 : vector<16x128xf32>
    %cst_4 = arith.constant 9.99999996E-13 : f32
    %15 = vector.broadcast %cst_4 : f32 to vector<16x1xf32>
    %16 = arith.addf %12, %15 : vector<16x1xf32>
    %17 = math.rsqrt %16 : vector<16x1xf32>
    %18 = vector.broadcast %17 : vector<16x1xf32> to vector<16x128xf32>
    %19 = arith.mulf %14, %18 : vector<16x128xf32>
    %c0_5 = arith.constant 0 : index
    %c0_6 = arith.constant 0 : index
    %20 = vector.load %arg2[%c0_5, %c0_6] : memref<1x128xf32, #tpu.memory_space<vmem>>, vector<1x128xf32>
    %21 = vector.broadcast %20 : vector<1x128xf32> to vector<16x128xf32>
    %22 = arith.mulf %19, %21 : vector<16x128xf32>
    %c0_7 = arith.constant 0 : index
    %c0_8 = arith.constant 0 : index
    %23 = vector.load %arg3[%c0_7, %c0_8] : memref<1x128xf32, #tpu.memory_space<vmem>>, vector<1x128xf32>
    %24 = vector.broadcast %23 : vector<1x128xf32> to vector<16x128xf32>
    %25 = arith.addf %22, %24 : vector<16x128xf32>
    %26 = arith.truncf %25 : vector<16x128xf32> to vector<16x128xbf16>
    %c0_9 = arith.constant 0 : index
    %c0_10 = arith.constant 0 : index
    %27 = vector.load %arg4[%c0_9, %c0_10] : memref<16x128xbf16, #tpu.memory_space<vmem>>, vector<16x128xbf16>
    tpu.vector_store %arg4[%c0_9, %c0_10], %26 {strides = array<i32>} : memref<16x128xbf16, #tpu.memory_space<vmem>>, vector<16x128xbf16>,
    return
  }
  func.func @transform_0(%arg0: i32) -> (i32, i32) {
    %c0_i32 = arith.constant 0 : i32
    %c0_i32_0 = arith.constant 0 : i32
    return %arg0, %c0_i32 : i32, i32
  }
  func.func @transform_1(%arg0: i32) -> (i32, i32) {
    %c0_i32 = arith.constant 0 : i32
    %c0_i32_0 = arith.constant 0 : i32
    %c0_i32_1 = arith.constant 0 : i32
    return %c0_i32, %c0_i32_0 : i32, i32
  }
  func.func @transform_2(%arg0: i32) -> (i32, i32) {
    %c0_i32 = arith.constant 0 : i32
    %c0_i32_0 = arith.constant 0 : i32
    %c0_i32_1 = arith.constant 0 : i32
    return %c0_i32, %c0_i32_0 : i32, i32
  }
  func.func @transform_3(%arg0: i32) -> (i32, i32) {
    %c0_i32 = arith.constant 0 : i32
    %c0_i32_0 = arith.constant 0 : i32
    return %arg0, %c0_i32 : i32, i32
  }
}

module attributes {stable_mosaic.version = 11 : i64} {
  func.func @_fused_linear_kernel(%arg0: i32, %arg1: memref<16x128xbf16, #tpu.memory_space<vmem>>, %arg2: memref<128x384xbf16, #tpu.memory_space<vmem>>, %arg3: memref<1x384xf32, #tpu.memory_space<vmem>>, %arg4: memref<16x384xbf16, #tpu.memory_space<vmem>>) attributes {dimension_semantics = [#tpu.dimension_semantics<parallel>], iteration_bounds = array<i64: 2>, scalar_prefetch = 0 : i64, scratch_operands = 0 : i64, tpu.core_type = #tpu.core_type<tc>, window_params = [{transform_indices = @transform_0, window_bounds = array<i64: 16, 128>}, {pipeline_mode = #tpu.pipeline_mode<synchronous>, transform_indices = @transform_1, window_bounds = array<i64: 128, 384>}, {pipeline_mode = #tpu.pipeline_mode<synchronous>, transform_indices = @transform_2, window_bounds = array<i64: 1, 384>}, {transform_indices = @transform_3, window_bounds = array<i64: 16, 384>}]} {
    %c0 = arith.constant 0 : index
    %c0_0 = arith.constant 0 : index
    %0 = vector.load %arg1[%c0, %c0_0] : memref<16x128xbf16, #tpu.memory_space<vmem>>, vector<16x128xbf16>
    %c0_1 = arith.constant 0 : index
    %c0_2 = arith.constant 0 : index
    %1 = vector.load %arg2[%c0_1, %c0_2] : memref<128x384xbf16, #tpu.memory_space<vmem>>, vector<128x384xbf16>
    %cst = arith.constant dense<0.000000e+00> : vector<16x384xf32>
    %2 = tpu.matmul %0, %1, %cst {dimension_numbers = #tpu.dot_dimension_numbers<[1], [0], [0], [1], [0, 0, 1, 1], [], []>} : vector<16x128xbf16>, vector<128x384xbf16>, vector<16x384xf32> -> vector<16x384xf32>
    %c0_3 = arith.constant 0 : index
    %c0_4 = arith.constant 0 : index
    %3 = vector.load %arg3[%c0_3, %c0_4] : memref<1x384xf32, #tpu.memory_space<vmem>>, vector<1x384xf32>
    %4 = vector.broadcast %3 : vector<1x384xf32> to vector<16x384xf32>
    %5 = arith.addf %2, %4 : vector<16x384xf32>
    %6 = arith.truncf %5 : vector<16x384xf32> to vector<16x384xbf16>
    %c0_5 = arith.constant 0 : index
    %c0_6 = arith.constant 0 : index
    %7 = vector.load %arg4[%c0_5, %c0_6] : memref<16x384xbf16, #tpu.memory_space<vmem>>, vector<16x384xbf16>
    tpu.vector_store %arg4[%c0_5, %c0_6], %6 {strides = array<i32>} : memref<16x384xbf16, #tpu.memory_space<vmem>>, vector<16x384xbf16>,
    return
  }
  func.func @transform_0(%arg0: i32) -> (i32, i32) {
    %c0_i32 = arith.constant 0 : i32
    %c0_i32_0 = arith.constant 0 : i32
    return %arg0, %c0_i32 : i32, i32
  }
  func.func @transform_1(%arg0: i32) -> (i32, i32) {
    %c0_i32 = arith.constant 0 : i32
    %c0_i32_0 = arith.constant 0 : i32
    %c0_i32_1 = arith.constant 0 : i32
    return %c0_i32, %c0_i32_0 : i32, i32
  }
  func.func @transform_2(%arg0: i32) -> (i32, i32) {
    %c0_i32 = arith.constant 0 : i32
    %c0_i32_0 = arith.constant 0 : i32
    %c0_i32_1 = arith.constant 0 : i32
    return %c0_i32, %c0_i32_0 : i32, i32
  }
  func.func @transform_3(%arg0: i32) -> (i32, i32) {
    %c0_i32 = arith.constant 0 : i32
    %c0_i32_0 = arith.constant 0 : i32
    return %arg0, %c0_i32 : i32, i32
  }
}

module attributes {stable_mosaic.version = 11 : i64} {
  func.func @_mha_kernel(%arg0: i32, %arg1: memref<1x4x16x32xbf16, #tpu.memory_space<vmem>>, %arg2: memref<1x4x16x32xbf16, #tpu.memory_space<vmem>>, %arg3: memref<1x4x16x32xbf16, #tpu.memory_space<vmem>>, %arg4: memref<1x16x16xf32, #tpu.memory_space<vmem>>, %arg5: memref<1x4x16x32xbf16, #tpu.memory_space<vmem>>) attributes {dimension_semantics = [#tpu.dimension_semantics<parallel>], iteration_bounds = array<i64: 2>, scalar_prefetch = 0 : i64, scratch_operands = 0 : i64, tpu.core_type = #tpu.core_type<tc>, window_params = [{transform_indices = @transform_0, window_bounds = array<i64: 1, 4, 16, 32>}, {transform_indices = @transform_1, window_bounds = array<i64: 1, 4, 16, 32>}, {transform_indices = @transform_2, window_bounds = array<i64: 1, 4, 16, 32>}, {transform_indices = @transform_3, window_bounds = array<i64: 1, 16, 16>}, {transform_indices = @transform_4, window_bounds = array<i64: 1, 4, 16, 32>}]} {
    %c0 = arith.constant 0 : index
    %c0_0 = arith.constant 0 : index
    %c0_1 = arith.constant 0 : index
    %c0_2 = arith.constant 0 : index
    %0 = vector.load %arg1[%c0, %c0_0, %c0_1, %c0_2] : memref<1x4x16x32xbf16, #tpu.memory_space<vmem>>, vector<1x4x16x32xbf16>
    %1 = vector.shape_cast %0 : vector<1x4x16x32xbf16> to vector<4x16x32xbf16>
    %c0_3 = arith.constant 0 : index
    %c0_4 = arith.constant 0 : index
    %c0_5 = arith.constant 0 : index
    %c0_6 = arith.constant 0 : index
    %2 = vector.load %arg2[%c0_3, %c0_4, %c0_5, %c0_6] : memref<1x4x16x32xbf16, #tpu.memory_space<vmem>>, vector<1x4x16x32xbf16>
    %3 = vector.shape_cast %2 : vector<1x4x16x32xbf16> to vector<4x16x32xbf16>
    %c0_7 = arith.constant 0 : index
    %c0_8 = arith.constant 0 : index
    %c0_9 = arith.constant 0 : index
    %c0_10 = arith.constant 0 : index
    %4 = vector.load %arg3[%c0_7, %c0_8, %c0_9, %c0_10] : memref<1x4x16x32xbf16, #tpu.memory_space<vmem>>, vector<1x4x16x32xbf16>
    %5 = vector.shape_cast %4 : vector<1x4x16x32xbf16> to vector<4x16x32xbf16>
    %c0_11 = arith.constant 0 : index
    %c0_12 = arith.constant 0 : index
    %c0_13 = arith.constant 0 : index
    %6 = vector.load %arg4[%c0_11, %c0_12, %c0_13] : memref<1x16x16xf32, #tpu.memory_space<vmem>>, vector<1x16x16xf32>
    %7 = vector.shape_cast %6 : vector<1x16x16xf32> to vector<16x16xf32>
    %cst = arith.constant dense<0.000000e+00> : vector<4x16x16xf32>
    %8 = tpu.matmul %1, %3, %cst {dimension_numbers = #tpu.dot_dimension_numbers<[2], [2], [1], [1], [0, 0, 0, 1, 1, 1], [0], [0]>} : vector<4x16x32xbf16>, vector<4x16x32xbf16>, vector<4x16x16xf32> -> vector<4x16x16xf32>
    %cst_14 = arith.constant 0.176776692 : f32
    %9 = vector.broadcast %cst_14 : f32 to vector<4x16x16xf32>
    %10 = arith.mulf %8, %9 : vector<4x16x16xf32>
    %11 = vector.shape_cast %7 : vector<16x16xf32> to vector<1x16x16xf32>
    %12 = vector.broadcast %11 : vector<1x16x16xf32> to vector<4x16x16xf32>
    %13 = arith.addf %10, %12 : vector<4x16x16xf32>
    %cst_15 = arith.constant dense<0xFF800000> : vector<4x16xf32>
    %14 = vector.multi_reduction <maximumf>, %13, %cst_15 [2] : vector<4x16x16xf32> to vector<4x16xf32>
    %15 = vector.shape_cast %14 : vector<4x16xf32> to vector<4x16x1xf32>
    %16 = vector.broadcast %15 : vector<4x16x1xf32> to vector<4x16x16xf32>
    %17 = arith.subf %13, %16 : vector<4x16x16xf32>
    %18 = math.exp %17 : vector<4x16x16xf32>
    %cst_16 = arith.constant dense<0.000000e+00> : vector<4x16xf32>
    %19 = vector.multi_reduction <add>, %18, %cst_16 [2] : vector<4x16x16xf32> to vector<4x16xf32>
    %20 = vector.shape_cast %19 : vector<4x16xf32> to vector<4x16x1xf32>
    %21 = tpu.reciprocal %20 {approx = true} : vector<4x16x1xf32> -> vector<4x16x1xf32>
    %22 = vector.broadcast %21 : vector<4x16x1xf32> to vector<4x16x16xf32>
    %23 = arith.mulf %18, %22 : vector<4x16x16xf32>
    %24 = arith.truncf %23 : vector<4x16x16xf32> to vector<4x16x16xbf16>
    %cst_17 = arith.constant dense<0.000000e+00> : vector<4x16x32xf32>
    %25 = tpu.matmul %24, %5, %cst_17 {dimension_numbers = #tpu.dot_dimension_numbers<[2], [1], [1], [2], [0, 0, 0, 1, 1, 2], [0], [0]>} : vector<4x16x16xbf16>, vector<4x16x32xbf16>, vector<4x16x32xf32> -> vector<4x16x32xf32>
    %26 = arith.truncf %25 : vector<4x16x32xf32> to vector<4x16x32xbf16>
    %c0_18 = arith.constant 0 : index
    %c0_19 = arith.constant 0 : index
    %c0_20 = arith.constant 0 : index
    %c0_21 = arith.constant 0 : index
    %27 = vector.load %arg5[%c0_18, %c0_19, %c0_20, %c0_21] : memref<1x4x16x32xbf16, #tpu.memory_space<vmem>>, vector<1x4x16x32xbf16>
    %28 = vector.shape_cast %27 : vector<1x4x16x32xbf16> to vector<4x16x32xbf16>
    %29 = vector.shape_cast %26 : vector<4x16x32xbf16> to vector<1x4x16x32xbf16>
    tpu.vector_store %arg5[%c0_18, %c0_19, %c0_20, %c0_21], %29 {strides = array<i32>} : memref<1x4x16x32xbf16, #tpu.memory_space<vmem>>, vector<1x4x16x32xbf16>,
    return
  }
  func.func @transform_0(%arg0: i32) -> (i32, i32, i32, i32) {
    %c0_i32 = arith.constant 0 : i32
    %c0_i32_0 = arith.constant 0 : i32
    %c0_i32_1 = arith.constant 0 : i32
    %c0_i32_2 = arith.constant 0 : i32
    return %arg0, %c0_i32, %c0_i32_0, %c0_i32_1 : i32, i32, i32, i32
  }
  func.func @transform_1(%arg0: i32) -> (i32, i32, i32, i32) {
    %c0_i32 = arith.constant 0 : i32
    %c0_i32_0 = arith.constant 0 : i32
    %c0_i32_1 = arith.constant 0 : i32
    %c0_i32_2 = arith.constant 0 : i32
    return %arg0, %c0_i32, %c0_i32_0, %c0_i32_1 : i32, i32, i32, i32
  }
  func.func @transform_2(%arg0: i32) -> (i32, i32, i32, i32) {
    %c0_i32 = arith.constant 0 : i32
    %c0_i32_0 = arith.constant 0 : i32
    %c0_i32_1 = arith.constant 0 : i32
    %c0_i32_2 = arith.constant 0 : i32
    return %arg0, %c0_i32, %c0_i32_0, %c0_i32_1 : i32, i32, i32, i32
  }
  func.func @transform_3(%arg0: i32) -> (i32, i32, i32) {
    %c0_i32 = arith.constant 0 : i32
    %c0_i32_0 = arith.constant 0 : i32
    %c0_i32_1 = arith.constant 0 : i32
    return %arg0, %c0_i32, %c0_i32_0 : i32, i32, i32
  }
  func.func @transform_4(%arg0: i32) -> (i32, i32, i32, i32) {
    %c0_i32 = arith.constant 0 : i32
    %c0_i32_0 = arith.constant 0 : i32
    %c0_i32_1 = arith.constant 0 : i32
    %c0_i32_2 = arith.constant 0 : i32
    return %arg0, %c0_i32, %c0_i32_0, %c0_i32_1 : i32, i32, i32, i32
  }
}

module attributes {stable_mosaic.version = 11 : i64} {
  func.func @_fused_linear_kernel(%arg0: i32, %arg1: memref<16x128xbf16, #tpu.memory_space<vmem>>, %arg2: memref<128x128xbf16, #tpu.memory_space<vmem>>, %arg3: memref<1x128xf32, #tpu.memory_space<vmem>>, %arg4: memref<16x128xbf16, #tpu.memory_space<vmem>>, %arg5: memref<1x128xf32, #tpu.memory_space<vmem>>, %arg6: memref<1x128xf32, #tpu.memory_space<vmem>>, %arg7: memref<16x128xbf16, #tpu.memory_space<vmem>>) attributes {dimension_semantics = [#tpu.dimension_semantics<parallel>], iteration_bounds = array<i64: 2>, scalar_prefetch = 0 : i64, scratch_operands = 0 : i64, tpu.core_type = #tpu.core_type<tc>, window_params = [{transform_indices = @transform_0, window_bounds = array<i64: 16, 128>}, {pipeline_mode = #tpu.pipeline_mode<synchronous>, transform_indices = @transform_1, window_bounds = array<i64: 128, 128>}, {pipeline_mode = #tpu.pipeline_mode<synchronous>, transform_indices = @transform_2, window_bounds = array<i64: 1, 128>}, {transform_indices = @transform_3, window_bounds = array<i64: 16, 128>}, {pipeline_mode = #tpu.pipeline_mode<synchronous>, transform_indices = @transform_4, window_bounds = array<i64: 1, 128>}, {pipeline_mode = #tpu.pipeline_mode<synchronous>, transform_indices = @transform_5, window_bounds = array<i64: 1, 128>}, {transform_indices = @transform_6, window_bounds = array<i64: 16, 128>}]} {
    %c0 = arith.constant 0 : index
    %c0_0 = arith.constant 0 : index
    %0 = vector.load %arg1[%c0, %c0_0] : memref<16x128xbf16, #tpu.memory_space<vmem>>, vector<16x128xbf16>
    %c0_1 = arith.constant 0 : index
    %c0_2 = arith.constant 0 : index
    %1 = vector.load %arg2[%c0_1, %c0_2] : memref<128x128xbf16, #tpu.memory_space<vmem>>, vector<128x128xbf16>
    %cst = arith.constant dense<0.000000e+00> : vector<16x128xf32>
    %2 = tpu.matmul %0, %1, %cst {dimension_numbers = #tpu.dot_dimension_numbers<[1], [0], [0], [1], [0, 0, 1, 1], [], []>} : vector<16x128xbf16>, vector<128x128xbf16>, vector<16x128xf32> -> vector<16x128xf32>
    %c0_3 = arith.constant 0 : index
    %c0_4 = arith.constant 0 : index
    %3 = vector.load %arg3[%c0_3, %c0_4] : memref<1x128xf32, #tpu.memory_space<vmem>>, vector<1x128xf32>
    %4 = vector.broadcast %3 : vector<1x128xf32> to vector<16x128xf32>
    %5 = arith.addf %2, %4 : vector<16x128xf32>
    %c0_5 = arith.constant 0 : index
    %c0_6 = arith.constant 0 : index
    %6 = vector.load %arg4[%c0_5, %c0_6] : memref<16x128xbf16, #tpu.memory_space<vmem>>, vector<16x128xbf16>
    %7 = arith.extf %6 : vector<16x128xbf16> to vector<16x128xf32>
    %8 = arith.addf %5, %7 : vector<16x128xf32>
    %cst_7 = arith.constant dense<0.000000e+00> : vector<16xf32>
    %9 = vector.multi_reduction <add>, %8, %cst_7 [1] : vector<16x128xf32> to vector<16xf32>
    %10 = vector.shape_cast %9 : vector<16xf32> to vector<16x1xf32>
    %cst_8 = arith.constant 1.280000e+02 : f32
    %11 = vector.broadcast %cst_8 : f32 to vector<16x1xf32>
    %12 = arith.divf %10, %11 : vector<16x1xf32>
    %13 = vector.broadcast %12 : vector<16x1xf32> to vector<16x128xf32>
    %14 = arith.subf %8, %13 : vector<16x128xf32>
    %15 = arith.mulf %14, %14 : vector<16x128xf32>
    %cst_9 = arith.constant dense<0.000000e+00> : vector<16xf32>
    %16 = vector.multi_reduction <add>, %15, %cst_9 [1] : vector<16x128xf32> to vector<16xf32>
    %17 = vector.shape_cast %16 : vector<16xf32> to vector<16x1xf32>
    %cst_10 = arith.constant 1.280000e+02 : f32
    %18 = vector.broadcast %cst_10 : f32 to vector<16x1xf32>
    %19 = arith.divf %17, %18 : vector<16x1xf32>
    %20 = vector.broadcast %12 : vector<16x1xf32> to vector<16x128xf32>
    %21 = arith.subf %8, %20 : vector<16x128xf32>
    %cst_11 = arith.constant 9.99999996E-13 : f32
    %22 = vector.broadcast %cst_11 : f32 to vector<16x1xf32>
    %23 = arith.addf %19, %22 : vector<16x1xf32>
    %24 = math.rsqrt %23 : vector<16x1xf32>
    %25 = vector.broadcast %24 : vector<16x1xf32> to vector<16x128xf32>
    %26 = arith.mulf %21, %25 : vector<16x128xf32>
    %c0_12 = arith.constant 0 : index
    %c0_13 = arith.constant 0 : index
    %27 = vector.load %arg5[%c0_12, %c0_13] : memref<1x128xf32, #tpu.memory_space<vmem>>, vector<1x128xf32>
    %28 = vector.broadcast %27 : vector<1x128xf32> to vector<16x128xf32>
    %29 = arith.mulf %26, %28 : vector<16x128xf32>
    %c0_14 = arith.constant 0 : index
    %c0_15 = arith.constant 0 : index
    %30 = vector.load %arg6[%c0_14, %c0_15] : memref<1x128xf32, #tpu.memory_space<vmem>>, vector<1x128xf32>
    %31 = vector.broadcast %30 : vector<1x128xf32> to vector<16x128xf32>
    %32 = arith.addf %29, %31 : vector<16x128xf32>
    %33 = arith.truncf %32 : vector<16x128xf32> to vector<16x128xbf16>
    %c0_16 = arith.constant 0 : index
    %c0_17 = arith.constant 0 : index
    %34 = vector.load %arg7[%c0_16, %c0_17] : memref<16x128xbf16, #tpu.memory_space<vmem>>, vector<16x128xbf16>
    tpu.vector_store %arg7[%c0_16, %c0_17], %33 {strides = array<i32>} : memref<16x128xbf16, #tpu.memory_space<vmem>>, vector<16x128xbf16>,
    return
  }
  func.func @transform_0(%arg0: i32) -> (i32, i32) {
    %c0_i32 = arith.constant 0 : i32
    %c0_i32_0 = arith.constant 0 : i32
    return %arg0, %c0_i32 : i32, i32
  }
  func.func @transform_1(%arg0: i32) -> (i32, i32) {
    %c0_i32 = arith.constant 0 : i32
    %c0_i32_0 = arith.constant 0 : i32
    %c0_i32_1 = arith.constant 0 : i32
    return %c0_i32, %c0_i32_0 : i32, i32
  }
  func.func @transform_2(%arg0: i32) -> (i32, i32) {
    %c0_i32 = arith.constant 0 : i32
    %c0_i32_0 = arith.constant 0 : i32
    %c0_i32_1 = arith.constant 0 : i32
    return %c0_i32, %c0_i32_0 : i32, i32
  }
  func.func @transform_3(%arg0: i32) -> (i32, i32) {
    %c0_i32 = arith.constant 0 : i32
    %c0_i32_0 = arith.constant 0 : i32
    return %arg0, %c0_i32 : i32, i32
  }
  func.func @transform_4(%arg0: i32) -> (i32, i32) {
    %c0_i32 = arith.constant 0 : i32
    %c0_i32_0 = arith.constant 0 : i32
    %c0_i32_1 = arith.constant 0 : i32
    return %c0_i32, %c0_i32_0 : i32, i32
  }
  func.func @transform_5(%arg0: i32) -> (i32, i32) {
    %c0_i32 = arith.constant 0 : i32
    %c0_i32_0 = arith.constant 0 : i32
    %c0_i32_1 = arith.constant 0 : i32
    return %c0_i32, %c0_i32_0 : i32, i32
  }
  func.func @transform_6(%arg0: i32) -> (i32, i32) {
    %c0_i32 = arith.constant 0 : i32
    %c0_i32_0 = arith.constant 0 : i32
    return %arg0, %c0_i32 : i32, i32
  }
}

module attributes {stable_mosaic.version = 11 : i64} {
  func.func @_fused_linear_kernel(%arg0: i32, %arg1: memref<16x128xbf16, #tpu.memory_space<vmem>>, %arg2: memref<128x256xbf16, #tpu.memory_space<vmem>>, %arg3: memref<1x256xf32, #tpu.memory_space<vmem>>, %arg4: memref<16x256xbf16, #tpu.memory_space<vmem>>) attributes {dimension_semantics = [#tpu.dimension_semantics<parallel>], iteration_bounds = array<i64: 2>, scalar_prefetch = 0 : i64, scratch_operands = 0 : i64, tpu.core_type = #tpu.core_type<tc>, window_params = [{transform_indices = @transform_0, window_bounds = array<i64: 16, 128>}, {pipeline_mode = #tpu.pipeline_mode<synchronous>, transform_indices = @transform_1, window_bounds = array<i64: 128, 256>}, {pipeline_mode = #tpu.pipeline_mode<synchronous>, transform_indices = @transform_2, window_bounds = array<i64: 1, 256>}, {transform_indices = @transform_3, window_bounds = array<i64: 16, 256>}]} {
    %c0 = arith.constant 0 : index
    %c0_0 = arith.constant 0 : index
    %0 = vector.load %arg1[%c0, %c0_0] : memref<16x128xbf16, #tpu.memory_space<vmem>>, vector<16x128xbf16>
    %c0_1 = arith.constant 0 : index
    %c0_2 = arith.constant 0 : index
    %1 = vector.load %arg2[%c0_1, %c0_2] : memref<128x256xbf16, #tpu.memory_space<vmem>>, vector<128x256xbf16>
    %cst = arith.constant dense<0.000000e+00> : vector<16x256xf32>
    %2 = tpu.matmul %0, %1, %cst {dimension_numbers = #tpu.dot_dimension_numbers<[1], [0], [0], [1], [0, 0, 1, 1], [], []>} : vector<16x128xbf16>, vector<128x256xbf16>, vector<16x256xf32> -> vector<16x256xf32>
    %c0_3 = arith.constant 0 : index
    %c0_4 = arith.constant 0 : index
    %3 = vector.load %arg3[%c0_3, %c0_4] : memref<1x256xf32, #tpu.memory_space<vmem>>, vector<1x256xf32>
    %4 = vector.broadcast %3 : vector<1x256xf32> to vector<16x256xf32>
    %5 = arith.addf %2, %4 : vector<16x256xf32>
    %6 = arith.mulf %5, %5 : vector<16x256xf32>
    %7 = arith.mulf %5, %6 : vector<16x256xf32>
    %cst_5 = arith.constant 4.471500e-02 : f32
    %8 = vector.broadcast %cst_5 : f32 to vector<16x256xf32>
    %9 = arith.mulf %8, %7 : vector<16x256xf32>
    %10 = arith.addf %5, %9 : vector<16x256xf32>
    %cst_6 = arith.constant 0.797884583 : f32
    %11 = vector.broadcast %cst_6 : f32 to vector<16x256xf32>
    %12 = arith.mulf %11, %10 : vector<16x256xf32>
    %13 = math.tanh %12 : vector<16x256xf32>
    %cst_7 = arith.constant 1.000000e+00 : f32
    %14 = vector.broadcast %cst_7 : f32 to vector<16x256xf32>
    %15 = arith.addf %14, %13 : vector<16x256xf32>
    %cst_8 = arith.constant 5.000000e-01 : f32
    %16 = vector.broadcast %cst_8 : f32 to vector<16x256xf32>
    %17 = arith.mulf %16, %15 : vector<16x256xf32>
    %18 = arith.mulf %5, %17 : vector<16x256xf32>
    %19 = arith.truncf %18 : vector<16x256xf32> to vector<16x256xbf16>
    %c0_9 = arith.constant 0 : index
    %c0_10 = arith.constant 0 : index
    %20 = vector.load %arg4[%c0_9, %c0_10] : memref<16x256xbf16, #tpu.memory_space<vmem>>, vector<16x256xbf16>
    tpu.vector_store %arg4[%c0_9, %c0_10], %19 {strides = array<i32>} : memref<16x256xbf16, #tpu.memory_space<vmem>>, vector<16x256xbf16>,
    return
  }
  func.func @transform_0(%arg0: i32) -> (i32, i32) {
    %c0_i32 = arith.constant 0 : i32
    %c0_i32_0 = arith.constant 0 : i32
    return %arg0, %c0_i32 : i32, i32
  }
  func.func @transform_1(%arg0: i32) -> (i32, i32) {
    %c0_i32 = arith.constant 0 : i32
    %c0_i32_0 = arith.constant 0 : i32
    %c0_i32_1 = arith.constant 0 : i32
    return %c0_i32, %c0_i32_0 : i32, i32
  }
  func.func @transform_2(%arg0: i32) -> (i32, i32) {
    %c0_i32 = arith.constant 0 : i32
    %c0_i32_0 = arith.constant 0 : i32
    %c0_i32_1 = arith.constant 0 : i32
    return %c0_i32, %c0_i32_0 : i32, i32
  }
  func.func @transform_3(%arg0: i32) -> (i32, i32) {
    %c0_i32 = arith.constant 0 : i32
    %c0_i32_0 = arith.constant 0 : i32
    return %arg0, %c0_i32 : i32, i32
  }
}

module attributes {stable_mosaic.version = 11 : i64} {
  func.func @_fused_linear_kernel(%arg0: i32, %arg1: memref<16x256xbf16, #tpu.memory_space<vmem>>, %arg2: memref<256x128xbf16, #tpu.memory_space<vmem>>, %arg3: memref<1x128xf32, #tpu.memory_space<vmem>>, %arg4: memref<16x128xbf16, #tpu.memory_space<vmem>>, %arg5: memref<1x128xf32, #tpu.memory_space<vmem>>, %arg6: memref<1x128xf32, #tpu.memory_space<vmem>>, %arg7: memref<16x128xbf16, #tpu.memory_space<vmem>>) attributes {dimension_semantics = [#tpu.dimension_semantics<parallel>], iteration_bounds = array<i64: 2>, scalar_prefetch = 0 : i64, scratch_operands = 0 : i64, tpu.core_type = #tpu.core_type<tc>, window_params = [{transform_indices = @transform_0, window_bounds = array<i64: 16, 256>}, {pipeline_mode = #tpu.pipeline_mode<synchronous>, transform_indices = @transform_1, window_bounds = array<i64: 256, 128>}, {pipeline_mode = #tpu.pipeline_mode<synchronous>, transform_indices = @transform_2, window_bounds = array<i64: 1, 128>}, {transform_indices = @transform_3, window_bounds = array<i64: 16, 128>}, {pipeline_mode = #tpu.pipeline_mode<synchronous>, transform_indices = @transform_4, window_bounds = array<i64: 1, 128>}, {pipeline_mode = #tpu.pipeline_mode<synchronous>, transform_indices = @transform_5, window_bounds = array<i64: 1, 128>}, {transform_indices = @transform_6, window_bounds = array<i64: 16, 128>}]} {
    %c0 = arith.constant 0 : index
    %c0_0 = arith.constant 0 : index
    %0 = vector.load %arg1[%c0, %c0_0] : memref<16x256xbf16, #tpu.memory_space<vmem>>, vector<16x256xbf16>
    %c0_1 = arith.constant 0 : index
    %c0_2 = arith.constant 0 : index
    %1 = vector.load %arg2[%c0_1, %c0_2] : memref<256x128xbf16, #tpu.memory_space<vmem>>, vector<256x128xbf16>
    %cst = arith.constant dense<0.000000e+00> : vector<16x128xf32>
    %2 = tpu.matmul %0, %1, %cst {dimension_numbers = #tpu.dot_dimension_numbers<[1], [0], [0], [1], [0, 0, 1, 1], [], []>} : vector<16x256xbf16>, vector<256x128xbf16>, vector<16x128xf32> -> vector<16x128xf32>
    %c0_3 = arith.constant 0 : index
    %c0_4 = arith.constant 0 : index
    %3 = vector.load %arg3[%c0_3, %c0_4] : memref<1x128xf32, #tpu.memory_space<vmem>>, vector<1x128xf32>
    %4 = vector.broadcast %3 : vector<1x128xf32> to vector<16x128xf32>
    %5 = arith.addf %2, %4 : vector<16x128xf32>
    %c0_5 = arith.constant 0 : index
    %c0_6 = arith.constant 0 : index
    %6 = vector.load %arg4[%c0_5, %c0_6] : memref<16x128xbf16, #tpu.memory_space<vmem>>, vector<16x128xbf16>
    %7 = arith.extf %6 : vector<16x128xbf16> to vector<16x128xf32>
    %8 = arith.addf %5, %7 : vector<16x128xf32>
    %cst_7 = arith.constant dense<0.000000e+00> : vector<16xf32>
    %9 = vector.multi_reduction <add>, %8, %cst_7 [1] : vector<16x128xf32> to vector<16xf32>
    %10 = vector.shape_cast %9 : vector<16xf32> to vector<16x1xf32>
    %cst_8 = arith.constant 1.280000e+02 : f32
    %11 = vector.broadcast %cst_8 : f32 to vector<16x1xf32>
    %12 = arith.divf %10, %11 : vector<16x1xf32>
    %13 = vector.broadcast %12 : vector<16x1xf32> to vector<16x128xf32>
    %14 = arith.subf %8, %13 : vector<16x128xf32>
    %15 = arith.mulf %14, %14 : vector<16x128xf32>
    %cst_9 = arith.constant dense<0.000000e+00> : vector<16xf32>
    %16 = vector.multi_reduction <add>, %15, %cst_9 [1] : vector<16x128xf32> to vector<16xf32>
    %17 = vector.shape_cast %16 : vector<16xf32> to vector<16x1xf32>
    %cst_10 = arith.constant 1.280000e+02 : f32
    %18 = vector.broadcast %cst_10 : f32 to vector<16x1xf32>
    %19 = arith.divf %17, %18 : vector<16x1xf32>
    %20 = vector.broadcast %12 : vector<16x1xf32> to vector<16x128xf32>
    %21 = arith.subf %8, %20 : vector<16x128xf32>
    %cst_11 = arith.constant 9.99999996E-13 : f32
    %22 = vector.broadcast %cst_11 : f32 to vector<16x1xf32>
    %23 = arith.addf %19, %22 : vector<16x1xf32>
    %24 = math.rsqrt %23 : vector<16x1xf32>
    %25 = vector.broadcast %24 : vector<16x1xf32> to vector<16x128xf32>
    %26 = arith.mulf %21, %25 : vector<16x128xf32>
    %c0_12 = arith.constant 0 : index
    %c0_13 = arith.constant 0 : index
    %27 = vector.load %arg5[%c0_12, %c0_13] : memref<1x128xf32, #tpu.memory_space<vmem>>, vector<1x128xf32>
    %28 = vector.broadcast %27 : vector<1x128xf32> to vector<16x128xf32>
    %29 = arith.mulf %26, %28 : vector<16x128xf32>
    %c0_14 = arith.constant 0 : index
    %c0_15 = arith.constant 0 : index
    %30 = vector.load %arg6[%c0_14, %c0_15] : memref<1x128xf32, #tpu.memory_space<vmem>>, vector<1x128xf32>
    %31 = vector.broadcast %30 : vector<1x128xf32> to vector<16x128xf32>
    %32 = arith.addf %29, %31 : vector<16x128xf32>
    %33 = arith.truncf %32 : vector<16x128xf32> to vector<16x128xbf16>
    %c0_16 = arith.constant 0 : index
    %c0_17 = arith.constant 0 : index
    %34 = vector.load %arg7[%c0_16, %c0_17] : memref<16x128xbf16, #tpu.memory_space<vmem>>, vector<16x128xbf16>
    tpu.vector_store %arg7[%c0_16, %c0_17], %33 {strides = array<i32>} : memref<16x128xbf16, #tpu.memory_space<vmem>>, vector<16x128xbf16>,
    return
  }
  func.func @transform_0(%arg0: i32) -> (i32, i32) {
    %c0_i32 = arith.constant 0 : i32
    %c0_i32_0 = arith.constant 0 : i32
    return %arg0, %c0_i32 : i32, i32
  }
  func.func @transform_1(%arg0: i32) -> (i32, i32) {
    %c0_i32 = arith.constant 0 : i32
    %c0_i32_0 = arith.constant 0 : i32
    %c0_i32_1 = arith.constant 0 : i32
    return %c0_i32, %c0_i32_0 : i32, i32
  }
  func.func @transform_2(%arg0: i32) -> (i32, i32) {
    %c0_i32 = arith.constant 0 : i32
    %c0_i32_0 = arith.constant 0 : i32
    %c0_i32_1 = arith.constant 0 : i32
    return %c0_i32, %c0_i32_0 : i32, i32
  }
  func.func @transform_3(%arg0: i32) -> (i32, i32) {
    %c0_i32 = arith.constant 0 : i32
    %c0_i32_0 = arith.constant 0 : i32
    return %arg0, %c0_i32 : i32, i32
  }
  func.func @transform_4(%arg0: i32) -> (i32, i32) {
    %c0_i32 = arith.constant 0 : i32
    %c0_i32_0 = arith.constant 0 : i32
    %c0_i32_1 = arith.constant 0 : i32
    return %c0_i32, %c0_i32_0 : i32, i32
  }
  func.func @transform_5(%arg0: i32) -> (i32, i32) {
    %c0_i32 = arith.constant 0 : i32
    %c0_i32_0 = arith.constant 0 : i32
    %c0_i32_1 = arith.constant 0 : i32
    return %c0_i32, %c0_i32_0 : i32, i32
  }
  func.func @transform_6(%arg0: i32) -> (i32, i32) {
    %c0_i32 = arith.constant 0 : i32
    %c0_i32_0 = arith.constant 0 : i32
    return %arg0, %c0_i32 : i32, i32
  }
}

module attributes {stable_mosaic.version = 11 : i64} {
  func.func @_fused_linear_kernel(%arg0: i32, %arg1: memref<16x256xbf16, #tpu.memory_space<vmem>>, %arg2: memref<1x256xf32, #tpu.memory_space<vmem>>, %arg3: memref<256x768xbf16, #tpu.memory_space<vmem>>, %arg4: memref<16x768xbf16, #tpu.memory_space<vmem>>) attributes {dimension_semantics = [#tpu.dimension_semantics<parallel>], iteration_bounds = array<i64: 2>, scalar_prefetch = 0 : i64, scratch_operands = 0 : i64, tpu.core_type = #tpu.core_type<tc>, window_params = [{transform_indices = @transform_0, window_bounds = array<i64: 16, 256>}, {pipeline_mode = #tpu.pipeline_mode<synchronous>, transform_indices = @transform_1, window_bounds = array<i64: 1, 256>}, {pipeline_mode = #tpu.pipeline_mode<synchronous>, transform_indices = @transform_2, window_bounds = array<i64: 256, 768>}, {transform_indices = @transform_3, window_bounds = array<i64: 16, 768>}]} {
    %c0 = arith.constant 0 : index
    %c0_0 = arith.constant 0 : index
    %0 = vector.load %arg1[%c0, %c0_0] : memref<16x256xbf16, #tpu.memory_space<vmem>>, vector<16x256xbf16>
    %1 = arith.extf %0 : vector<16x256xbf16> to vector<16x256xf32>
    %2 = arith.mulf %1, %1 : vector<16x256xf32>
    %cst = arith.constant dense<0.000000e+00> : vector<16xf32>
    %3 = vector.multi_reduction <add>, %2, %cst [1] : vector<16x256xf32> to vector<16xf32>
    %4 = vector.shape_cast %3 : vector<16xf32> to vector<16x1xf32>
    %cst_1 = arith.constant 2.560000e+02 : f32
    %5 = vector.broadcast %cst_1 : f32 to vector<16x1xf32>
    %6 = arith.divf %4, %5 : vector<16x1xf32>
    %cst_2 = arith.constant 9.99999974E-6 : f32
    %7 = vector.broadcast %cst_2 : f32 to vector<16x1xf32>
    %8 = arith.addf %6, %7 : vector<16x1xf32>
    %9 = math.rsqrt %8 : vector<16x1xf32>
    %10 = vector.broadcast %9 : vector<16x1xf32> to vector<16x256xf32>
    %11 = arith.mulf %1, %10 : vector<16x256xf32>
    %c0_3 = arith.constant 0 : index
    %c0_4 = arith.constant 0 : index
    %12 = vector.load %arg2[%c0_3, %c0_4] : memref<1x256xf32, #tpu.memory_space<vmem>>, vector<1x256xf32>
    %13 = vector.broadcast %12 : vector<1x256xf32> to vector<16x256xf32>
    %14 = arith.mulf %11, %13 : vector<16x256xf32>
    %15 = arith.truncf %14 : vector<16x256xf32> to vector<16x256xbf16>
    %c0_5 = arith.constant 0 : index
    %c0_6 = arith.constant 0 : index
    %16 = vector.load %arg3[%c0_5, %c0_6] : memref<256x768xbf16, #tpu.memory_space<vmem>>, vector<256x768xbf16>
    %cst_7 = arith.constant dense<0.000000e+00> : vector<16x768xf32>
    %17 = tpu.matmul %15, %16, %cst_7 {dimension_numbers = #tpu.dot_dimension_numbers<[1], [0], [0], [1], [0, 0, 1, 1], [], []>} : vector<16x256xbf16>, vector<256x768xbf16>, vector<16x768xf32> -> vector<16x768xf32>
    %18 = arith.truncf %17 : vector<16x768xf32> to vector<16x768xbf16>
    %c0_8 = arith.constant 0 : index
    %c0_9 = arith.constant 0 : index
    %19 = vector.load %arg4[%c0_8, %c0_9] : memref<16x768xbf16, #tpu.memory_space<vmem>>, vector<16x768xbf16>
    tpu.vector_store %arg4[%c0_8, %c0_9], %18 {strides = array<i32>} : memref<16x768xbf16, #tpu.memory_space<vmem>>, vector<16x768xbf16>,
    return
  }
  func.func @transform_0(%arg0: i32) -> (i32, i32) {
    %c0_i32 = arith.constant 0 : i32
    %c0_i32_0 = arith.constant 0 : i32
    return %arg0, %c0_i32 : i32, i32
  }
  func.func @transform_1(%arg0: i32) -> (i32, i32) {
    %c0_i32 = arith.constant 0 : i32
    %c0_i32_0 = arith.constant 0 : i32
    %c0_i32_1 = arith.constant 0 : i32
    return %c0_i32, %c0_i32_0 : i32, i32
  }
  func.func @transform_2(%arg0: i32) -> (i32, i32) {
    %c0_i32 = arith.constant 0 : i32
    %c0_i32_0 = arith.constant 0 : i32
    %c0_i32_1 = arith.constant 0 : i32
    return %c0_i32, %c0_i32_0 : i32, i32
  }
  func.func @transform_3(%arg0: i32) -> (i32, i32) {
    %c0_i32 = arith.constant 0 : i32
    %c0_i32_0 = arith.constant 0 : i32
    return %arg0, %c0_i32 : i32, i32
  }
}

module attributes {stable_mosaic.version = 11 : i64} {
  func.func @_fused_linear_kernel(%arg0: i32, %arg1: memref<16x128xbf16, #tpu.memory_space<vmem>>, %arg2: memref<128x256xbf16, #tpu.memory_space<vmem>>, %arg3: memref<1x256xf32, #tpu.memory_space<vmem>>, %arg4: memref<16x256xbf16, #tpu.memory_space<vmem>>) attributes {dimension_semantics = [#tpu.dimension_semantics<parallel>], iteration_bounds = array<i64: 2>, scalar_prefetch = 0 : i64, scratch_operands = 0 : i64, tpu.core_type = #tpu.core_type<tc>, window_params = [{transform_indices = @transform_0, window_bounds = array<i64: 16, 128>}, {pipeline_mode = #tpu.pipeline_mode<synchronous>, transform_indices = @transform_1, window_bounds = array<i64: 128, 256>}, {pipeline_mode = #tpu.pipeline_mode<synchronous>, transform_indices = @transform_2, window_bounds = array<i64: 1, 256>}, {transform_indices = @transform_3, window_bounds = array<i64: 16, 256>}]} {
    %c0 = arith.constant 0 : index
    %c0_0 = arith.constant 0 : index
    %0 = vector.load %arg1[%c0, %c0_0] : memref<16x128xbf16, #tpu.memory_space<vmem>>, vector<16x128xbf16>
    %c0_1 = arith.constant 0 : index
    %c0_2 = arith.constant 0 : index
    %1 = vector.load %arg2[%c0_1, %c0_2] : memref<128x256xbf16, #tpu.memory_space<vmem>>, vector<128x256xbf16>
    %cst = arith.constant dense<0.000000e+00> : vector<16x256xf32>
    %2 = tpu.matmul %0, %1, %cst {dimension_numbers = #tpu.dot_dimension_numbers<[1], [0], [0], [1], [0, 0, 1, 1], [], []>} : vector<16x128xbf16>, vector<128x256xbf16>, vector<16x256xf32> -> vector<16x256xf32>
    %c0_3 = arith.constant 0 : index
    %c0_4 = arith.constant 0 : index
    %3 = vector.load %arg3[%c0_3, %c0_4] : memref<1x256xf32, #tpu.memory_space<vmem>>, vector<1x256xf32>
    %4 = vector.broadcast %3 : vector<1x256xf32> to vector<16x256xf32>
    %5 = arith.addf %2, %4 : vector<16x256xf32>
    %6 = arith.truncf %5 : vector<16x256xf32> to vector<16x256xbf16>
    %c0_5 = arith.constant 0 : index
    %c0_6 = arith.constant 0 : index
    %7 = vector.load %arg4[%c0_5, %c0_6] : memref<16x256xbf16, #tpu.memory_space<vmem>>, vector<16x256xbf16>
    tpu.vector_store %arg4[%c0_5, %c0_6], %6 {strides = array<i32>} : memref<16x256xbf16, #tpu.memory_space<vmem>>, vector<16x256xbf16>,
    return
  }
  func.func @transform_0(%arg0: i32) -> (i32, i32) {
    %c0_i32 = arith.constant 0 : i32
    %c0_i32_0 = arith.constant 0 : i32
    return %arg0, %c0_i32 : i32, i32
  }
  func.func @transform_1(%arg0: i32) -> (i32, i32) {
    %c0_i32 = arith.constant 0 : i32
    %c0_i32_0 = arith.constant 0 : i32
    %c0_i32_1 = arith.constant 0 : i32
    return %c0_i32, %c0_i32_0 : i32, i32
  }
  func.func @transform_2(%arg0: i32) -> (i32, i32) {
    %c0_i32 = arith.constant 0 : i32
    %c0_i32_0 = arith.constant 0 : i32
    %c0_i32_1 = arith.constant 0 : i32
    return %c0_i32, %c0_i32_0 : i32, i32
  }
  func.func @transform_3(%arg0: i32) -> (i32, i32) {
    %c0_i32 = arith.constant 0 : i32
    %c0_i32_0 = arith.constant 0 : i32
    return %arg0, %c0_i32 : i32, i32
  }
}

module attributes {stable_mosaic.version = 11 : i64} {
  func.func @_mha_kernel(%arg0: i32, %arg1: memref<1x4x16x64xbf16, #tpu.memory_space<vmem>>, %arg2: memref<1x4x16x64xbf16, #tpu.memory_space<vmem>>, %arg3: memref<1x4x16x64xbf16, #tpu.memory_space<vmem>>, %arg4: memref<1x16x16xf32, #tpu.memory_space<vmem>>, %arg5: memref<1x4x16x64xbf16, #tpu.memory_space<vmem>>) attributes {dimension_semantics = [#tpu.dimension_semantics<parallel>], iteration_bounds = array<i64: 2>, scalar_prefetch = 0 : i64, scratch_operands = 0 : i64, tpu.core_type = #tpu.core_type<tc>, window_params = [{transform_indices = @transform_0, window_bounds = array<i64: 1, 4, 16, 64>}, {transform_indices = @transform_1, window_bounds = array<i64: 1, 4, 16, 64>}, {transform_indices = @transform_2, window_bounds = array<i64: 1, 4, 16, 64>}, {transform_indices = @transform_3, window_bounds = array<i64: 1, 16, 16>}, {transform_indices = @transform_4, window_bounds = array<i64: 1, 4, 16, 64>}]} {
    %c0 = arith.constant 0 : index
    %c0_0 = arith.constant 0 : index
    %c0_1 = arith.constant 0 : index
    %c0_2 = arith.constant 0 : index
    %0 = vector.load %arg1[%c0, %c0_0, %c0_1, %c0_2] : memref<1x4x16x64xbf16, #tpu.memory_space<vmem>>, vector<1x4x16x64xbf16>
    %1 = vector.shape_cast %0 : vector<1x4x16x64xbf16> to vector<4x16x64xbf16>
    %c0_3 = arith.constant 0 : index
    %c0_4 = arith.constant 0 : index
    %c0_5 = arith.constant 0 : index
    %c0_6 = arith.constant 0 : index
    %2 = vector.load %arg2[%c0_3, %c0_4, %c0_5, %c0_6] : memref<1x4x16x64xbf16, #tpu.memory_space<vmem>>, vector<1x4x16x64xbf16>
    %3 = vector.shape_cast %2 : vector<1x4x16x64xbf16> to vector<4x16x64xbf16>
    %c0_7 = arith.constant 0 : index
    %c0_8 = arith.constant 0 : index
    %c0_9 = arith.constant 0 : index
    %c0_10 = arith.constant 0 : index
    %4 = vector.load %arg3[%c0_7, %c0_8, %c0_9, %c0_10] : memref<1x4x16x64xbf16, #tpu.memory_space<vmem>>, vector<1x4x16x64xbf16>
    %5 = vector.shape_cast %4 : vector<1x4x16x64xbf16> to vector<4x16x64xbf16>
    %c0_11 = arith.constant 0 : index
    %c0_12 = arith.constant 0 : index
    %c0_13 = arith.constant 0 : index
    %6 = vector.load %arg4[%c0_11, %c0_12, %c0_13] : memref<1x16x16xf32, #tpu.memory_space<vmem>>, vector<1x16x16xf32>
    %7 = vector.shape_cast %6 : vector<1x16x16xf32> to vector<16x16xf32>
    %cst = arith.constant dense<0.000000e+00> : vector<4x16x16xf32>
    %8 = tpu.matmul %1, %3, %cst {dimension_numbers = #tpu.dot_dimension_numbers<[2], [2], [1], [1], [0, 0, 0, 1, 1, 1], [0], [0]>} : vector<4x16x64xbf16>, vector<4x16x64xbf16>, vector<4x16x16xf32> -> vector<4x16x16xf32>
    %cst_14 = arith.constant 1.250000e-01 : f32
    %9 = vector.broadcast %cst_14 : f32 to vector<4x16x16xf32>
    %10 = arith.mulf %8, %9 : vector<4x16x16xf32>
    %11 = vector.shape_cast %7 : vector<16x16xf32> to vector<1x16x16xf32>
    %12 = vector.broadcast %11 : vector<1x16x16xf32> to vector<4x16x16xf32>
    %13 = arith.addf %10, %12 : vector<4x16x16xf32>
    %cst_15 = arith.constant dense<0xFF800000> : vector<4x16xf32>
    %14 = vector.multi_reduction <maximumf>, %13, %cst_15 [2] : vector<4x16x16xf32> to vector<4x16xf32>
    %15 = vector.shape_cast %14 : vector<4x16xf32> to vector<4x16x1xf32>
    %16 = vector.broadcast %15 : vector<4x16x1xf32> to vector<4x16x16xf32>
    %17 = arith.subf %13, %16 : vector<4x16x16xf32>
    %18 = math.exp %17 : vector<4x16x16xf32>
    %cst_16 = arith.constant dense<0.000000e+00> : vector<4x16xf32>
    %19 = vector.multi_reduction <add>, %18, %cst_16 [2] : vector<4x16x16xf32> to vector<4x16xf32>
    %20 = vector.shape_cast %19 : vector<4x16xf32> to vector<4x16x1xf32>
    %21 = tpu.reciprocal %20 {approx = true} : vector<4x16x1xf32> -> vector<4x16x1xf32>
    %22 = vector.broadcast %21 : vector<4x16x1xf32> to vector<4x16x16xf32>
    %23 = arith.mulf %18, %22 : vector<4x16x16xf32>
    %24 = arith.truncf %23 : vector<4x16x16xf32> to vector<4x16x16xbf16>
    %cst_17 = arith.constant dense<0.000000e+00> : vector<4x16x64xf32>
    %25 = tpu.matmul %24, %5, %cst_17 {dimension_numbers = #tpu.dot_dimension_numbers<[2], [1], [1], [2], [0, 0, 0, 1, 1, 2], [0], [0]>} : vector<4x16x16xbf16>, vector<4x16x64xbf16>, vector<4x16x64xf32> -> vector<4x16x64xf32>
    %26 = arith.truncf %25 : vector<4x16x64xf32> to vector<4x16x64xbf16>
    %c0_18 = arith.constant 0 : index
    %c0_19 = arith.constant 0 : index
    %c0_20 = arith.constant 0 : index
    %c0_21 = arith.constant 0 : index
    %27 = vector.load %arg5[%c0_18, %c0_19, %c0_20, %c0_21] : memref<1x4x16x64xbf16, #tpu.memory_space<vmem>>, vector<1x4x16x64xbf16>
    %28 = vector.shape_cast %27 : vector<1x4x16x64xbf16> to vector<4x16x64xbf16>
    %29 = vector.shape_cast %26 : vector<4x16x64xbf16> to vector<1x4x16x64xbf16>
    tpu.vector_store %arg5[%c0_18, %c0_19, %c0_20, %c0_21], %29 {strides = array<i32>} : memref<1x4x16x64xbf16, #tpu.memory_space<vmem>>, vector<1x4x16x64xbf16>,
    return
  }
  func.func @transform_0(%arg0: i32) -> (i32, i32, i32, i32) {
    %c0_i32 = arith.constant 0 : i32
    %c0_i32_0 = arith.constant 0 : i32
    %c0_i32_1 = arith.constant 0 : i32
    %c0_i32_2 = arith.constant 0 : i32
    return %arg0, %c0_i32, %c0_i32_0, %c0_i32_1 : i32, i32, i32, i32
  }
  func.func @transform_1(%arg0: i32) -> (i32, i32, i32, i32) {
    %c0_i32 = arith.constant 0 : i32
    %c0_i32_0 = arith.constant 0 : i32
    %c0_i32_1 = arith.constant 0 : i32
    %c0_i32_2 = arith.constant 0 : i32
    return %arg0, %c0_i32, %c0_i32_0, %c0_i32_1 : i32, i32, i32, i32
  }
  func.func @transform_2(%arg0: i32) -> (i32, i32, i32, i32) {
    %c0_i32 = arith.constant 0 : i32
    %c0_i32_0 = arith.constant 0 : i32
    %c0_i32_1 = arith.constant 0 : i32
    %c0_i32_2 = arith.constant 0 : i32
    return %arg0, %c0_i32, %c0_i32_0, %c0_i32_1 : i32, i32, i32, i32
  }
  func.func @transform_3(%arg0: i32) -> (i32, i32, i32) {
    %c0_i32 = arith.constant 0 : i32
    %c0_i32_0 = arith.constant 0 : i32
    %c0_i32_1 = arith.constant 0 : i32
    return %arg0, %c0_i32, %c0_i32_0 : i32, i32, i32
  }
  func.func @transform_4(%arg0: i32) -> (i32, i32, i32, i32) {
    %c0_i32 = arith.constant 0 : i32
    %c0_i32_0 = arith.constant 0 : i32
    %c0_i32_1 = arith.constant 0 : i32
    %c0_i32_2 = arith.constant 0 : i32
    return %arg0, %c0_i32, %c0_i32_0, %c0_i32_1 : i32, i32, i32, i32
  }
}

module attributes {stable_mosaic.version = 11 : i64} {
  func.func @_fused_linear_kernel(%arg0: i32, %arg1: memref<16x256xbf16, #tpu.memory_space<vmem>>, %arg2: memref<256x256xbf16, #tpu.memory_space<vmem>>, %arg3: memref<16x256xbf16, #tpu.memory_space<vmem>>, %arg4: memref<16x256xbf16, #tpu.memory_space<vmem>>) attributes {dimension_semantics = [#tpu.dimension_semantics<parallel>], iteration_bounds = array<i64: 2>, scalar_prefetch = 0 : i64, scratch_operands = 0 : i64, tpu.core_type = #tpu.core_type<tc>, window_params = [{transform_indices = @transform_0, window_bounds = array<i64: 16, 256>}, {pipeline_mode = #tpu.pipeline_mode<synchronous>, transform_indices = @transform_1, window_bounds = array<i64: 256, 256>}, {transform_indices = @transform_2, window_bounds = array<i64: 16, 256>}, {transform_indices = @transform_3, window_bounds = array<i64: 16, 256>}]} {
    %c0 = arith.constant 0 : index
    %c0_0 = arith.constant 0 : index
    %0 = vector.load %arg1[%c0, %c0_0] : memref<16x256xbf16, #tpu.memory_space<vmem>>, vector<16x256xbf16>
    %c0_1 = arith.constant 0 : index
    %c0_2 = arith.constant 0 : index
    %1 = vector.load %arg2[%c0_1, %c0_2] : memref<256x256xbf16, #tpu.memory_space<vmem>>, vector<256x256xbf16>
    %cst = arith.constant dense<0.000000e+00> : vector<16x256xf32>
    %2 = tpu.matmul %0, %1, %cst {dimension_numbers = #tpu.dot_dimension_numbers<[1], [0], [0], [1], [0, 0, 1, 1], [], []>} : vector<16x256xbf16>, vector<256x256xbf16>, vector<16x256xf32> -> vector<16x256xf32>
    %c0_3 = arith.constant 0 : index
    %c0_4 = arith.constant 0 : index
    %3 = vector.load %arg3[%c0_3, %c0_4] : memref<16x256xbf16, #tpu.memory_space<vmem>>, vector<16x256xbf16>
    %4 = arith.extf %3 : vector<16x256xbf16> to vector<16x256xf32>
    %5 = arith.addf %2, %4 : vector<16x256xf32>
    %6 = arith.truncf %5 : vector<16x256xf32> to vector<16x256xbf16>
    %c0_5 = arith.constant 0 : index
    %c0_6 = arith.constant 0 : index
    %7 = vector.load %arg4[%c0_5, %c0_6] : memref<16x256xbf16, #tpu.memory_space<vmem>>, vector<16x256xbf16>
    tpu.vector_store %arg4[%c0_5, %c0_6], %6 {strides = array<i32>} : memref<16x256xbf16, #tpu.memory_space<vmem>>, vector<16x256xbf16>,
    return
  }
  func.func @transform_0(%arg0: i32) -> (i32, i32) {
    %c0_i32 = arith.constant 0 : i32
    %c0_i32_0 = arith.constant 0 : i32
    return %arg0, %c0_i32 : i32, i32
  }
  func.func @transform_1(%arg0: i32) -> (i32, i32) {
    %c0_i32 = arith.constant 0 : i32
    %c0_i32_0 = arith.constant 0 : i32
    %c0_i32_1 = arith.constant 0 : i32
    return %c0_i32, %c0_i32_0 : i32, i32
  }
  func.func @transform_2(%arg0: i32) -> (i32, i32) {
    %c0_i32 = arith.constant 0 : i32
    %c0_i32_0 = arith.constant 0 : i32
    return %arg0, %c0_i32 : i32, i32
  }
  func.func @transform_3(%arg0: i32) -> (i32, i32) {
    %c0_i32 = arith.constant 0 : i32
    %c0_i32_0 = arith.constant 0 : i32
    return %arg0, %c0_i32 : i32, i32
  }
}

module attributes {stable_mosaic.version = 11 : i64} {
  func.func @_fused_linear_kernel(%arg0: i32, %arg1: memref<16x256xbf16, #tpu.memory_space<vmem>>, %arg2: memref<1x256xf32, #tpu.memory_space<vmem>>, %arg3: memref<256x1024xbf16, #tpu.memory_space<vmem>>, %arg4: memref<16x512xbf16, #tpu.memory_space<vmem>>) attributes {dimension_semantics = [#tpu.dimension_semantics<parallel>], iteration_bounds = array<i64: 2>, scalar_prefetch = 0 : i64, scratch_operands = 0 : i64, tpu.core_type = #tpu.core_type<tc>, window_params = [{transform_indices = @transform_0, window_bounds = array<i64: 16, 256>}, {pipeline_mode = #tpu.pipeline_mode<synchronous>, transform_indices = @transform_1, window_bounds = array<i64: 1, 256>}, {pipeline_mode = #tpu.pipeline_mode<synchronous>, transform_indices = @transform_2, window_bounds = array<i64: 256, 1024>}, {transform_indices = @transform_3, window_bounds = array<i64: 16, 512>}]} {
    %c0 = arith.constant 0 : index
    %c0_0 = arith.constant 0 : index
    %0 = vector.load %arg1[%c0, %c0_0] : memref<16x256xbf16, #tpu.memory_space<vmem>>, vector<16x256xbf16>
    %1 = arith.extf %0 : vector<16x256xbf16> to vector<16x256xf32>
    %2 = arith.mulf %1, %1 : vector<16x256xf32>
    %cst = arith.constant dense<0.000000e+00> : vector<16xf32>
    %3 = vector.multi_reduction <add>, %2, %cst [1] : vector<16x256xf32> to vector<16xf32>
    %4 = vector.shape_cast %3 : vector<16xf32> to vector<16x1xf32>
    %cst_1 = arith.constant 2.560000e+02 : f32
    %5 = vector.broadcast %cst_1 : f32 to vector<16x1xf32>
    %6 = arith.divf %4, %5 : vector<16x1xf32>
    %cst_2 = arith.constant 9.99999974E-6 : f32
    %7 = vector.broadcast %cst_2 : f32 to vector<16x1xf32>
    %8 = arith.addf %6, %7 : vector<16x1xf32>
    %9 = math.rsqrt %8 : vector<16x1xf32>
    %10 = vector.broadcast %9 : vector<16x1xf32> to vector<16x256xf32>
    %11 = arith.mulf %1, %10 : vector<16x256xf32>
    %c0_3 = arith.constant 0 : index
    %c0_4 = arith.constant 0 : index
    %12 = vector.load %arg2[%c0_3, %c0_4] : memref<1x256xf32, #tpu.memory_space<vmem>>, vector<1x256xf32>
    %13 = vector.broadcast %12 : vector<1x256xf32> to vector<16x256xf32>
    %14 = arith.mulf %11, %13 : vector<16x256xf32>
    %15 = arith.truncf %14 : vector<16x256xf32> to vector<16x256xbf16>
    %c0_5 = arith.constant 0 : index
    %c0_6 = arith.constant 0 : index
    %16 = vector.load %arg3[%c0_5, %c0_6] : memref<256x1024xbf16, #tpu.memory_space<vmem>>, vector<256x1024xbf16>
    %cst_7 = arith.constant dense<0.000000e+00> : vector<16x1024xf32>
    %17 = tpu.matmul %15, %16, %cst_7 {dimension_numbers = #tpu.dot_dimension_numbers<[1], [0], [0], [1], [0, 0, 1, 1], [], []>} : vector<16x256xbf16>, vector<256x1024xbf16>, vector<16x1024xf32> -> vector<16x1024xf32>
    %18 = vector.extract_strided_slice %17 {offsets = [0, 0], sizes = [16, 512], strides = [1, 1]} : vector<16x1024xf32> to vector<16x512xf32>
    %19 = vector.extract_strided_slice %17 {offsets = [0, 512], sizes = [16, 512], strides = [1, 1]} : vector<16x1024xf32> to vector<16x512xf32>
    %20 = arith.negf %18 : vector<16x512xf32>
    %21 = math.exp %20 : vector<16x512xf32>
    %cst_8 = arith.constant 1.000000e+00 : f32
    %22 = vector.broadcast %cst_8 : f32 to vector<16x512xf32>
    %23 = arith.addf %22, %21 : vector<16x512xf32>
    %24 = arith.divf %22, %23 : vector<16x512xf32>
    %25 = arith.mulf %18, %24 : vector<16x512xf32>
    %26 = arith.mulf %25, %19 : vector<16x512xf32>
    %27 = arith.truncf %26 : vector<16x512xf32> to vector<16x512xbf16>
    %c0_9 = arith.constant 0 : index
    %c0_10 = arith.constant 0 : index
    %28 = vector.load %arg4[%c0_9, %c0_10] : memref<16x512xbf16, #tpu.memory_space<vmem>>, vector<16x512xbf16>
    tpu.vector_store %arg4[%c0_9, %c0_10], %27 {strides = array<i32>} : memref<16x512xbf16, #tpu.memory_space<vmem>>, vector<16x512xbf16>,
    return
  }
  func.func @transform_0(%arg0: i32) -> (i32, i32) {
    %c0_i32 = arith.constant 0 : i32
    %c0_i32_0 = arith.constant 0 : i32
    return %arg0, %c0_i32 : i32, i32
  }
  func.func @transform_1(%arg0: i32) -> (i32, i32) {
    %c0_i32 = arith.constant 0 : i32
    %c0_i32_0 = arith.constant 0 : i32
    %c0_i32_1 = arith.constant 0 : i32
    return %c0_i32, %c0_i32_0 : i32, i32
  }
  func.func @transform_2(%arg0: i32) -> (i32, i32) {
    %c0_i32 = arith.constant 0 : i32
    %c0_i32_0 = arith.constant 0 : i32
    %c0_i32_1 = arith.constant 0 : i32
    return %c0_i32, %c0_i32_0 : i32, i32
  }
  func.func @transform_3(%arg0: i32) -> (i32, i32) {
    %c0_i32 = arith.constant 0 : i32
    %c0_i32_0 = arith.constant 0 : i32
    return %arg0, %c0_i32 : i32, i32
  }
}

module attributes {stable_mosaic.version = 11 : i64} {
  func.func @_fused_linear_kernel(%arg0: i32, %arg1: memref<16x512xbf16, #tpu.memory_space<vmem>>, %arg2: memref<512x256xbf16, #tpu.memory_space<vmem>>, %arg3: memref<16x256xbf16, #tpu.memory_space<vmem>>, %arg4: memref<16x256xbf16, #tpu.memory_space<vmem>>) attributes {dimension_semantics = [#tpu.dimension_semantics<parallel>], iteration_bounds = array<i64: 2>, scalar_prefetch = 0 : i64, scratch_operands = 0 : i64, tpu.core_type = #tpu.core_type<tc>, window_params = [{transform_indices = @transform_0, window_bounds = array<i64: 16, 512>}, {pipeline_mode = #tpu.pipeline_mode<synchronous>, transform_indices = @transform_1, window_bounds = array<i64: 512, 256>}, {transform_indices = @transform_2, window_bounds = array<i64: 16, 256>}, {transform_indices = @transform_3, window_bounds = array<i64: 16, 256>}]} {
    %c0 = arith.constant 0 : index
    %c0_0 = arith.constant 0 : index
    %0 = vector.load %arg1[%c0, %c0_0] : memref<16x512xbf16, #tpu.memory_space<vmem>>, vector<16x512xbf16>
    %c0_1 = arith.constant 0 : index
    %c0_2 = arith.constant 0 : index
    %1 = vector.load %arg2[%c0_1, %c0_2] : memref<512x256xbf16, #tpu.memory_space<vmem>>, vector<512x256xbf16>
    %cst = arith.constant dense<0.000000e+00> : vector<16x256xf32>
    %2 = tpu.matmul %0, %1, %cst {dimension_numbers = #tpu.dot_dimension_numbers<[1], [0], [0], [1], [0, 0, 1, 1], [], []>} : vector<16x512xbf16>, vector<512x256xbf16>, vector<16x256xf32> -> vector<16x256xf32>
    %c0_3 = arith.constant 0 : index
    %c0_4 = arith.constant 0 : index
    %3 = vector.load %arg3[%c0_3, %c0_4] : memref<16x256xbf16, #tpu.memory_space<vmem>>, vector<16x256xbf16>
    %4 = arith.extf %3 : vector<16x256xbf16> to vector<16x256xf32>
    %5 = arith.addf %2, %4 : vector<16x256xf32>
    %6 = arith.truncf %5 : vector<16x256xf32> to vector<16x256xbf16>
    %c0_5 = arith.constant 0 : index
    %c0_6 = arith.constant 0 : index
    %7 = vector.load %arg4[%c0_5, %c0_6] : memref<16x256xbf16, #tpu.memory_space<vmem>>, vector<16x256xbf16>
    tpu.vector_store %arg4[%c0_5, %c0_6], %6 {strides = array<i32>} : memref<16x256xbf16, #tpu.memory_space<vmem>>, vector<16x256xbf16>,
    return
  }
  func.func @transform_0(%arg0: i32) -> (i32, i32) {
    %c0_i32 = arith.constant 0 : i32
    %c0_i32_0 = arith.constant 0 : i32
    return %arg0, %c0_i32 : i32, i32
  }
  func.func @transform_1(%arg0: i32) -> (i32, i32) {
    %c0_i32 = arith.constant 0 : i32
    %c0_i32_0 = arith.constant 0 : i32
    %c0_i32_1 = arith.constant 0 : i32
    return %c0_i32, %c0_i32_0 : i32, i32
  }
  func.func @transform_2(%arg0: i32) -> (i32, i32) {
    %c0_i32 = arith.constant 0 : i32
    %c0_i32_0 = arith.constant 0 : i32
    return %arg0, %c0_i32 : i32, i32
  }
  func.func @transform_3(%arg0: i32) -> (i32, i32) {
    %c0_i32 = arith.constant 0 : i32
    %c0_i32_0 = arith.constant 0 : i32
    return %arg0, %c0_i32 : i32, i32
  }
}

module attributes {stable_mosaic.version = 11 : i64} {
  func.func @_head_ce_kernel(%arg0: i32, %arg1: memref<16x256xbf16, #tpu.memory_space<vmem>>, %arg2: memref<1x256xf32, #tpu.memory_space<vmem>>, %arg3: memref<256x512xbf16, #tpu.memory_space<vmem>>, %arg4: memref<16x1xi32, #tpu.memory_space<vmem>>, %arg5: memref<16x512xf32, #tpu.memory_space<vmem>>, %arg6: memref<16x128xf32, #tpu.memory_space<vmem>>) attributes {dimension_semantics = [#tpu.dimension_semantics<parallel>], iteration_bounds = array<i64: 2>, scalar_prefetch = 0 : i64, scratch_operands = 0 : i64, tpu.core_type = #tpu.core_type<tc>, window_params = [{transform_indices = @transform_0, window_bounds = array<i64: 16, 256>}, {pipeline_mode = #tpu.pipeline_mode<synchronous>, transform_indices = @transform_1, window_bounds = array<i64: 1, 256>}, {pipeline_mode = #tpu.pipeline_mode<synchronous>, transform_indices = @transform_2, window_bounds = array<i64: 256, 512>}, {transform_indices = @transform_3, window_bounds = array<i64: 16, 1>}, {transform_indices = @transform_4, window_bounds = array<i64: 16, 512>}, {transform_indices = @transform_5, window_bounds = array<i64: 16, 128>}]} {
    %c0 = arith.constant 0 : index
    %c0_0 = arith.constant 0 : index
    %0 = vector.load %arg1[%c0, %c0_0] : memref<16x256xbf16, #tpu.memory_space<vmem>>, vector<16x256xbf16>
    %1 = arith.extf %0 : vector<16x256xbf16> to vector<16x256xf32>
    %2 = arith.mulf %1, %1 : vector<16x256xf32>
    %cst = arith.constant dense<0.000000e+00> : vector<16xf32>
    %3 = vector.multi_reduction <add>, %2, %cst [1] : vector<16x256xf32> to vector<16xf32>
    %4 = vector.shape_cast %3 : vector<16xf32> to vector<16x1xf32>
    %cst_1 = arith.constant 2.560000e+02 : f32
    %5 = vector.broadcast %cst_1 : f32 to vector<16x1xf32>
    %6 = arith.divf %4, %5 : vector<16x1xf32>
    %cst_2 = arith.constant 9.99999974E-6 : f32
    %7 = vector.broadcast %cst_2 : f32 to vector<16x1xf32>
    %8 = arith.addf %6, %7 : vector<16x1xf32>
    %9 = math.rsqrt %8 : vector<16x1xf32>
    %10 = vector.broadcast %9 : vector<16x1xf32> to vector<16x256xf32>
    %11 = arith.mulf %1, %10 : vector<16x256xf32>
    %c0_3 = arith.constant 0 : index
    %c0_4 = arith.constant 0 : index
    %12 = vector.load %arg2[%c0_3, %c0_4] : memref<1x256xf32, #tpu.memory_space<vmem>>, vector<1x256xf32>
    %13 = vector.broadcast %12 : vector<1x256xf32> to vector<16x256xf32>
    %14 = arith.mulf %11, %13 : vector<16x256xf32>
    %15 = arith.truncf %14 : vector<16x256xf32> to vector<16x256xbf16>
    %c0_5 = arith.constant 0 : index
    %c0_6 = arith.constant 0 : index
    %16 = vector.load %arg3[%c0_5, %c0_6] : memref<256x512xbf16, #tpu.memory_space<vmem>>, vector<256x512xbf16>
    %cst_7 = arith.constant dense<0.000000e+00> : vector<16x512xf32>
    %17 = tpu.matmul %15, %16, %cst_7 {dimension_numbers = #tpu.dot_dimension_numbers<[1], [0], [0], [1], [0, 0, 1, 1], [], []>} : vector<16x256xbf16>, vector<256x512xbf16>, vector<16x512xf32> -> vector<16x512xf32>
    %c0_8 = arith.constant 0 : index
    %c0_9 = arith.constant 0 : index
    %18 = vector.load %arg5[%c0_8, %c0_9] : memref<16x512xf32, #tpu.memory_space<vmem>>, vector<16x512xf32>
    tpu.vector_store %arg5[%c0_8, %c0_9], %17 {strides = array<i32>} : memref<16x512xf32, #tpu.memory_space<vmem>>, vector<16x512xf32>,
    %cst_10 = arith.constant dense<0xFF800000> : vector<16xf32>
    %19 = vector.multi_reduction <maximumf>, %17, %cst_10 [1] : vector<16x512xf32> to vector<16xf32>
    %20 = vector.shape_cast %19 : vector<16xf32> to vector<16x1xf32>
    %21 = vector.broadcast %20 : vector<16x1xf32> to vector<16x512xf32>
    %22 = arith.subf %17, %21 : vector<16x512xf32>
    %23 = math.exp %22 : vector<16x512xf32>
    %cst_11 = arith.constant dense<0.000000e+00> : vector<16xf32>
    %24 = vector.multi_reduction <add>, %23, %cst_11 [1] : vector<16x512xf32> to vector<16xf32>
    %25 = vector.shape_cast %24 : vector<16xf32> to vector<16x1xf32>
    %26 = math.log %25 : vector<16x1xf32>
    %27 = arith.addf %26, %20 : vector<16x1xf32>
    %c0_12 = arith.constant 0 : index
    %c0_13 = arith.constant 0 : index
    %28 = vector.load %arg4[%c0_12, %c0_13] : memref<16x1xi32, #tpu.memory_space<vmem>>, vector<16x1xi32>
    %29 = tpu.iota {dimensions = array<i32: 1>} : vector<16x512xi32>
    %30 = vector.broadcast %28 : vector<16x1xi32> to vector<16x512xi32>
    %31 = arith.cmpi eq, %29, %30 : vector<16x512xi32>
    %cst_14 = arith.constant 0.000000e+00 : f32
    %32 = vector.broadcast %cst_14 : f32 to vector<16x512xf32>
    %33 = arith.select %31, %17, %32 : vector<16x512xi1>, vector<16x512xf32>
    %cst_15 = arith.constant dense<0.000000e+00> : vector<16xf32>
    %34 = vector.multi_reduction <add>, %33, %cst_15 [1] : vector<16x512xf32> to vector<16xf32>
    %35 = vector.shape_cast %34 : vector<16xf32> to vector<16x1xf32>
    %36 = arith.subf %27, %35 : vector<16x1xf32>
    %37 = vector.shape_cast %36 : vector<16x1xf32> to vector<16x1xf32>
    %38 = vector.broadcast %37 : vector<16x1xf32> to vector<16x128xf32>
    %c0_16 = arith.constant 0 : index
    %c0_17 = arith.constant 0 : index
    %39 = vector.load %arg6[%c0_16, %c0_17] : memref<16x128xf32, #tpu.memory_space<vmem>>, vector<16x128xf32>
    tpu.vector_store %arg6[%c0_16, %c0_17], %38 {strides = array<i32>} : memref<16x128xf32, #tpu.memory_space<vmem>>, vector<16x128xf32>,
    return
  }
  func.func @transform_0(%arg0: i32) -> (i32, i32) {
    %c0_i32 = arith.constant 0 : i32
    %c0_i32_0 = arith.constant 0 : i32
    return %arg0, %c0_i32 : i32, i32
  }
  func.func @transform_1(%arg0: i32) -> (i32, i32) {
    %c0_i32 = arith.constant 0 : i32
    %c0_i32_0 = arith.constant 0 : i32
    %c0_i32_1 = arith.constant 0 : i32
    return %c0_i32, %c0_i32_0 : i32, i32
  }
  func.func @transform_2(%arg0: i32) -> (i32, i32) {
    %c0_i32 = arith.constant 0 : i32
    %c0_i32_0 = arith.constant 0 : i32
    %c0_i32_1 = arith.constant 0 : i32
    return %c0_i32, %c0_i32_0 : i32, i32
  }
  func.func @transform_3(%arg0: i32) -> (i32, i32) {
    %c0_i32 = arith.constant 0 : i32
    %c0_i32_0 = arith.constant 0 : i32
    return %arg0, %c0_i32 : i32, i32
  }
  func.func @transform_4(%arg0: i32) -> (i32, i32) {
    %c0_i32 = arith.constant 0 : i32
    %c0_i32_0 = arith.constant 0 : i32
    return %arg0, %c0_i32 : i32, i32
  }
  func.func @transform_5(%arg0: i32) -> (i32, i32) {
    %c0_i32 = arith.constant 0 : i32
    %c0_i32_0 = arith.constant 0 : i32
    return %arg0, %c0_i32 : i32, i32
  }
}

</mosaic_0001>

<llo_original>
// kernel: e5smollm_forward.23
$region0: #{e5smollm_forward.23}
  #allocation0 [shape = 'u32[]', space=smem, size = 0x4, offset = 0x4, fixed_abs, tag = 'smem constant byte address 0x4 - core index']
  #allocation1 [shape = 'u32[144,128]{1,0:T(1,128)}', space=vmem, size = 0x12000, scoped, tag = 'internal scratch']
  %s0 = inlined_call_operand.vmem [shape: bf16[32,128], index: 0, kind: input, shape index: {}]
  %s1 = inlined_call_operand.vmem [shape: f32[1,128], index: 1, kind: input, shape index: {}]
  %s2 = inlined_call_operand.vmem [shape: f32[1,128], index: 2, kind: input, shape index: {}]
  %s3 = inlined_call_operand.vmem [shape: bf16[32,128], index: 3, kind: output, shape index: {}]
  %s4 = sld [smem:[#allocation0]]
  $region45: #{e5smollm_forward.23} parent=0
    _
  %s6 = ssub.s32 1, %s4
  %s7 = scalar_select 0, %s6, %s4
  loop: start=0, step=1, limit=4
  $region2: #{e5smollm_forward.23} parent=0 // loop_pre_header
    _
  $region3: #{e5smollm_forward.23} parent=0 // loop_header
    %s9 = sphi 0, %s13
    %p10 = scmp.ge.s32.totalorder %s9, 4
    %s19 = sphi 0, %s21
    %s22 = sphi 0, %s19
    %s23 = sphi 0, %s22
    %s39 = sphi 0, %s23
    %s43 = sphi 0, %s43
    %s45 = sphi 0, %s43
    %s46 = sphi 0, %s45
    %s60 = sphi 0, %s46
    %s64 = sphi 0, %s64
    %s66 = sphi 0, %s64
    %s67 = sphi 0, %s66
    %s81 = sphi 0, %s67
    %s87 = sphi 0, %s89
    %s90 = sphi 0, %s87
    %s91 = sphi 0, %s90
    %s107 = sphi 0, %s91
  $region4: #{e5smollm_forward.23} parent=0 // loop_header_branch
    %12 = sbr.rel (%p10) target = $region8
  $region5: #{e5smollm_forward.23} parent=0 // loop_body
    %s14 = ssub.s32 %s9, 1
    %s15 = ssub.s32 %s9, 2
    %s16 = sadd.s32 %s9, 1
    %s17 = ssub.s32 %s9, %s16
    %p18 = scmp.eq.s32.totalorder %s17, 0
    %s20 = sadd.s32 %s19, 1
    %s21 = scalar_select %p18, %s19, %s20
    %p24 = pneg %p18
    %p25 = scmp.eq.s32.totalorder %s9, 1
    %p26 = por %p24, %p25
    %p27 = scmp.ne.s32.totalorder %s19, %s22
    %p28 = scmp.eq.s32.totalorder %s9, 0
    %p29 = por %p27, %p28
    %p30 = scmp.ne.s32.totalorder %s19, %s22
    %p31 = scmp.eq.s32.totalorder %s14, 1
    %p32 = por %p30, %p31
    %p33 = scmp.ne.s32.totalorder %s22, %s23
    %p34 = scmp.eq.s32.totalorder %s14, 0
    %p35 = por %p33, %p34
    %p36 = scmp.ne.s32.totalorder %s22, %s23
    %p37 = scmp.eq.s32.totalorder %s15, 1
    %p38 = por %p36, %p37
    %p40 = scmp.ne.s32.totalorder %s23, %s39
    %p41 = scmp.eq.s32.totalorder %s15, 0
    %p42 = por %p40, %p41
    %s44 = sadd.s32 %s43, 1
    %p47 = scmp.eq.s32.totalorder %s9, 1
    %p48 = scmp.ne.s32.totalorder %s43, %s45
    %p49 = scmp.eq.s32.totalorder %s9, 0
    %p50 = por %p48, %p49
    %p51 = scmp.ne.s32.totalorder %s43, %s45
    %p52 = scmp.eq.s32.totalorder %s14, 1
    %p53 = por %p51, %p52
    %p54 = scmp.ne.s32.totalorder %s45, %s46
    %p55 = scmp.eq.s32.totalorder %s14, 0
    %p56 = por %p54, %p55
    %p57 = scmp.ne.s32.totalorder %s45, %s46
    %p58 = scmp.eq.s32.totalorder %s15, 1
    %p59 = por %p57, %p58
    %p61 = scmp.ne.s32.totalorder %s46, %s60
    %p62 = scmp.eq.s32.totalorder %s15, 0
    %p63 = por %p61, %p62
    %s65 = sadd.s32 %s64, 1
    %p68 = scmp.eq.s32.totalorder %s9, 1
    %p69 = scmp.ne.s32.totalorder %s64, %s66
    %p70 = scmp.eq.s32.totalorder %s9, 0
    %p71 = por %p69, %p70
    %p72 = scmp.ne.s32.totalorder %s64, %s66
    %p73 = scmp.eq.s32.totalorder %s14, 1
    %p74 = por %p72, %p73
    %p75 = scmp.ne.s32.totalorder %s66, %s67
    %p76 = scmp.eq.s32.totalorder %s14, 0
    %p77 = por %p75, %p76
    %p78 = scmp.ne.s32.totalorder %s66, %s67
    %p79 = scmp.eq.s32.totalorder %s15, 1
    %p80 = por %p78, %p79
    %p82 = scmp.ne.s32.totalorder %s67, %s81
    %p83 = scmp.eq.s32.totalorder %s15, 0
    %p84 = por %p82, %p83
    %s85 = ssub.s32 %s9, %s16
    %p86 = scmp.eq.s32.totalorder %s85, 0
    %s88 = sadd.s32 %s87, 1
    %s89 = scalar_select %p86, %s87, %s88
    %p92 = pneg %p86
    %p93 = scmp.eq.s32.totalorder %s9, 1
    %p94 = por %p92, %p93
    %p95 = scmp.ne.s32.totalorder %s87, %s90
    %p96 = scmp.eq.s32.totalorder %s9, 0
    %p97 = por %p95, %p96
    %p98 = scmp.ne.s32.totalorder %s87, %s90
    %p99 = scmp.eq.s32.totalorder %s14, 1
    %p100 = por %p98, %p99
    %p101 = scmp.ne.s32.totalorder %s90, %s91
    %p102 = scmp.eq.s32.totalorder %s14, 0
    %p103 = por %p101, %p102
    %p104 = scmp.ne.s32.totalorder %s90, %s91
    %p105 = scmp.eq.s32.totalorder %s15, 1
    %p106 = por %p104, %p105
    %p108 = scmp.ne.s32.totalorder %s91, %s107
    %p109 = scmp.eq.s32.totalorder %s15, 0
    %p110 = por %p108, %p109
    %p111 = scmp.le.s32.totalorder 1, %s9
    %p112 = scmp.lt.s32.totalorder %s9, 3
    %p113 = pnand %p111, %p112
    %p114 = pneg %p113
    // Predicated region
    $region9: #{e5smollm_forward.23} parent=5 // pred_check
      _
    $region10: #{e5smollm_forward.23} parent=5 // pred_check_branch
      %116 = sbr.rel (%p113) target = $region12
    $region11: #{e5smollm_forward.23} parent=5 // pred_region
      %s117 = ssub.s32 %s9, 1
      // Predicated region
      $region13: #{e5smollm_forward.23} parent=11 // pred_check
        %p118 = pneg %p56
      $region14: #{e5smollm_forward.23} parent=11 // pred_check_branch
        %120 = sbr.rel (%p118) target = $region16
      $region15: #{e5smollm_forward.23} parent=11 // pred_region
        _
      $region16: #{e5smollm_forward.23} parent=11 // pred_fallthru
        _
      // Predicated region
      $region17: #{e5smollm_forward.23} parent=11 // pred_check
        %p121 = pneg %p77
      $region18: #{e5smollm_forward.23} parent=11 // pred_check_branch
        %123 = sbr.rel (%p121) target = $region20
      $region19: #{e5smollm_forward.23} parent=11 // pred_region
        _
      $region20: #{e5smollm_forward.23} parent=11 // pred_fallthru
        _
    $region12: #{e5smollm_forward.23} parent=5 // pred_fallthru
      _
    %p124 = scmp.lt.s32.totalorder %s9, 2
    // Predicated region
    $region21: #{e5smollm_forward.23} parent=5 // pred_check
      %p125 = pneg %p124
    $region22: #{e5smollm_forward.23} parent=5 // pred_check_branch
      %127 = sbr.rel (%p125) target = $region24
    $region23: #{e5smollm_forward.23} parent=5 // pred_region
      // Predicated region
      $region25: #{e5smollm_forward.23} parent=23 // pred_check
        %p128 = pneg %p29
      $region26: #{e5smollm_forward.23} parent=23 // pred_check_branch
        %130 = sbr.rel (%p128) target = $region28
      $region27: #{e5smollm_forward.23} parent=23 // pred_region
        %s131 = smul.u32 2, %s9
        %p132 = scmp.lt.s32.totalorder %s131, 3
        %s133 = scalar_select %p132, %s131, 3
        %s134 = smul.addr %s133, 4
        %s135 = scalar_lea.vmem %s0, %s134
        %s136 = smul.u32 2, %s9
      $region28: #{e5smollm_forward.23} parent=23 // pred_fallthru
        _
    $region24: #{e5smollm_forward.23} parent=5 // pred_fallthru
      _
    %p137 = scmp.le.s32.totalorder 1, %s9
    %p138 = scmp.lt.s32.totalorder %s9, 3
    %p139 = pnand %p137, %p138
    %p140 = pneg %p139
    // Predicated region
    $region29: #{e5smollm_forward.23} parent=5 // pred_check
      _
    $region30: #{e5smollm_forward.23} parent=5 // pred_check_branch
      %142 = sbr.rel (%p139) target = $region32
    $region31: #{e5smollm_forward.23} parent=5 // pred_region
      %s143 = ssub.s32 %s9, 1
      %s144 = smul.u32 2, %s14
      %p145 = scmp.lt.s32.totalorder %s144, 3
      %s146 = scalar_select %p145, %s144, 3
      %s147 = smul.addr %s146, 4
      %s148 = scalar_lea.vmem %s0, %s147
      %p149 = pneg %p35
      %p150 = pneg %p32
      %p151 = pneg %p56
      %p152 = pneg %p53
      %p153 = pneg %p77
      %p154 = pneg %p74
      %p155 = pneg %p103
      %p156 = pneg %p100
      %s157 = smul.u32 2, %s14
      %p158 = scmp.lt.s32.totalorder %s157, 3
      %s159 = scalar_select %p158, %s157, 3
      %s160 = smul.addr %s159, 4
      %s161 = scalar_lea.vmem %s3, %s160
      %s162 = smul.u32 2, %s14
      %p163 = scmp.lt.s32.totalorder %s162, 3
      %s164 = scalar_select %p163, %s162, 3
      %s165 = smul.addr %s164, 4
      %s166 = scalar_lea.vmem %s0, %s165
      %s167 = smul.u32 2, %s14
      %s168 = smul.u32 2, %s14
      %p169 = scmp.lt.s32.totalorder %s168, 3
      %s170 = scalar_select %p169, %s168, 3
      %s171 = smul.addr %s170, 4
      %s172 = scalar_lea.vmem %s3, %s171
      %s173 = smul.u32 2, %s14
      %v174 = vld [vmem:[%s166] sm:$0xf]
      %v175 = vld [vmem:[%s166 + $0x4] sm:$0xf]
      %v176 = vunpack.c.l.bf16 %v174
      %v177 = vunpack.c.l.bf16 %v175
      %178 = vadd.xlane.f32.xlu0 %v176
      %v179 = vpop.xlane.xlu0 %178
      %180 = vadd.xlane.f32.xlu0 %v177
      %v181 = vpop.xlane.xlu0 %180
      %v182 = vrcp.pop 128.0
      %v183 = vmul.f32 %v179, %v182
      %v184 = vmul.f32 %v181, %v182
      %v185 = vsub.f32 %v176, %v183
      %v186 = vsub.f32 %v177, %v184
      %v187 = vmul.f32 %v185, %v185
      %v188 = vmul.f32 %v186, %v186
      %189 = vadd.xlane.f32.xlu0 %v187
      %v190 = vpop.xlane.xlu0 %189
      %191 = vadd.xlane.f32.xlu0 %v188
      %v192 = vpop.xlane.xlu0 %191
      %v193 = vmul.f32 %v190, %v182
      %v194 = vmul.f32 %v192, %v182
      %v195 = vadd.f32 %v193, 1e-12
      %v196 = vadd.f32 %v194, 1e-12
      %v197 = vrsqrt.pop %v195
      %v198 = vrsqrt.pop %v196
      %v199 = vmul.f32 %v185, %v197
      %v200 = vmul.f32 %v186, %v198
      %v201 = vld [vmem:[%s1] sm:$0x1]
      %v203 = vlaneseq
      %v204 = vshrl.u32 %v203, 7
      %v205 = vsub.s32 0, %v204
      %v206 = vrot.slane %v201, %v205
      %v208 = vmul.f32 %v199, %v206
      %v209 = vmul.f32 %v200, %v206
      %v210 = vld [vmem:[%s2] sm:$0x1]
      %v212 = vlaneseq
      %v213 = vshrl.u32 %v212, 7
      %v214 = vsub.s32 0, %v213
      %v215 = vrot.slane %v210, %v214
      %v217 = vadd.f32 %v208, %v215
      %v218 = vadd.f32 %v209, %v215
      %v219 = vpack.c.bf16 %v218, %v217
      %v221 = vunpack.c.l.b16 %v219
      %v222 = vunpack.c.h.b16 %v219
      %v223 = vpack.c.b16 %v221, %v221
      %v224 = vpack.c.b16 %v222, %v222
      %227 = vst [vmem:[%s172] sm:$0xf] %v223
      %228 = vst [vmem:[%s172 + $0x4] sm:$0xf] %v224
      %s229 = smul.u32 2, %s14
      %p230 = scmp.lt.s32.totalorder %s229, 3
      %s231 = scalar_select %p230, %s229, 3
      %s232 = smul.addr %s231, 4
      %s233 = scalar_lea.vmem %s3, %s232
      // Predicated region
      $region33: #{e5smollm_forward.23} parent=31 // pred_check
        %p234 = pneg %p100
      $region34: #{e5smollm_forward.23} parent=31 // pred_check_branch
        %236 = sbr.rel (%p234) target = $region36
      $region35: #{e5smollm_forward.23} parent=31 // pred_region
        %s237 = smul.u32 2, %s14
      $region36: #{e5smollm_forward.23} parent=31 // pred_fallthru
        _
    $region32: #{e5smollm_forward.23} parent=5 // pred_fallthru
      _
    %p238 = scmp.le.s32.totalorder 2, %s9
    // Predicated region
    $region37: #{e5smollm_forward.23} parent=5 // pred_check
      %p239 = pneg %p238
    $region38: #{e5smollm_forward.23} parent=5 // pred_check_branch
      %241 = sbr.rel (%p239) target = $region40
    $region39: #{e5smollm_forward.23} parent=5 // pred_region
      %s242 = ssub.s32 %s9, 2
      // Predicated region
      $region41: #{e5smollm_forward.23} parent=39 // pred_check
        %p243 = pneg %p106
      $region42: #{e5smollm_forward.23} parent=39 // pred_check_branch
        %245 = sbr.rel (%p243) target = $region44
      $region43: #{e5smollm_forward.23} parent=39 // pred_region
        %s246 = smul.u32 2, %s15
        %p247 = scmp.lt.s32.totalorder %s246, 3
        %s248 = scalar_select %p247, %s246, 3
        %s249 = smul.addr %s248, 4
        %s250 = scalar_lea.vmem %s3, %s249
      $region44: #{e5smollm_forward.23} parent=39 // pred_fallthru
        _
    $region40: #{e5smollm_forward.23} parent=5 // pred_fallthru
      _
  $region6: #{e5smollm_forward.23} parent=0 // loop_footer
    %s13 = sadd.s32 1, %s9
  $region7: #{e5smollm_forward.23} parent=0 // loop_footer_branch
    %8 = sbr.rel target = $region3
  $region8: #{e5smollm_forward.23} parent=0 // loop_exit
    _

// kernel: e5smollm_forward.24
$region0: #{e5smollm_forward.24}
  #allocation0 [shape = 'u32[]', space=smem, size = 0x4, offset = 0x4, fixed_abs, tag = 'smem constant byte address 0x4 - core index']
  #allocation1 [shape = 'u32[144,128]{1,0:T(1,128)}', space=vmem, size = 0x12000, scoped, tag = 'internal scratch']
  %s0 = inlined_call_operand.vmem [shape: bf16[32,128], index: 0, kind: input, shape index: {}]
  %s1 = inlined_call_operand.vmem [shape: bf16[128,384], index: 1, kind: input, shape index: {}]
  %s2 = inlined_call_operand.vmem [shape: f32[1,384], index: 2, kind: input, shape index: {}]
  %s3 = inlined_call_operand.vmem [shape: bf16[32,384], index: 3, kind: output, shape index: {}]
  %s4 = sld [smem:[#allocation0]]
  $region45: #{e5smollm_forward.24} parent=0
    _
  %s6 = ssub.s32 1, %s4
  %s7 = scalar_select 0, %s6, %s4
  loop: start=0, step=1, limit=4
  $region2: #{e5smollm_forward.24} parent=0 // loop_pre_header
    _
  $region3: #{e5smollm_forward.24} parent=0 // loop_header
    %s9 = sphi 0, %s13
    %p10 = scmp.ge.s32.totalorder %s9, 4
    %s19 = sphi 0, %s21
    %s22 = sphi 0, %s19
    %s23 = sphi 0, %s22
    %s39 = sphi 0, %s23
    %s43 = sphi 0, %s43
    %s45 = sphi 0, %s43
    %s46 = sphi 0, %s45
    %s60 = sphi 0, %s46
    %s64 = sphi 0, %s64
    %s66 = sphi 0, %s64
    %s67 = sphi 0, %s66
    %s81 = sphi 0, %s67
    %s87 = sphi 0, %s89
    %s90 = sphi 0, %s87
    %s91 = sphi 0, %s90
    %s107 = sphi 0, %s91
  $region4: #{e5smollm_forward.24} parent=0 // loop_header_branch
    %12 = sbr.rel (%p10) target = $region8
  $region5: #{e5smollm_forward.24} parent=0 // loop_body
    %s14 = ssub.s32 %s9, 1
    %s15 = ssub.s32 %s9, 2
    %s16 = sadd.s32 %s9, 1
    %s17 = ssub.s32 %s9, %s16
    %p18 = scmp.eq.s32.totalorder %s17, 0
    %s20 = sadd.s32 %s19, 1
    %s21 = scalar_select %p18, %s19, %s20
    %p24 = pneg %p18
    %p25 = scmp.eq.s32.totalorder %s9, 1
    %p26 = por %p24, %p25
    %p27 = scmp.ne.s32.totalorder %s19, %s22
    %p28 = scmp.eq.s32.totalorder %s9, 0
    %p29 = por %p27, %p28
    %p30 = scmp.ne.s32.totalorder %s19, %s22
    %p31 = scmp.eq.s32.totalorder %s14, 1
    %p32 = por %p30, %p31
    %p33 = scmp.ne.s32.totalorder %s22, %s23
    %p34 = scmp.eq.s32.totalorder %s14, 0
    %p35 = por %p33, %p34
    %p36 = scmp.ne.s32.totalorder %s22, %s23
    %p37 = scmp.eq.s32.totalorder %s15, 1
    %p38 = por %p36, %p37
    %p40 = scmp.ne.s32.totalorder %s23, %s39
    %p41 = scmp.eq.s32.totalorder %s15, 0
    %p42 = por %p40, %p41
    %s44 = sadd.s32 %s43, 1
    %p47 = scmp.eq.s32.totalorder %s9, 1
    %p48 = scmp.ne.s32.totalorder %s43, %s45
    %p49 = scmp.eq.s32.totalorder %s9, 0
    %p50 = por %p48, %p49
    %p51 = scmp.ne.s32.totalorder %s43, %s45
    %p52 = scmp.eq.s32.totalorder %s14, 1
    %p53 = por %p51, %p52
    %p54 = scmp.ne.s32.totalorder %s45, %s46
    %p55 = scmp.eq.s32.totalorder %s14, 0
    %p56 = por %p54, %p55
    %p57 = scmp.ne.s32.totalorder %s45, %s46
    %p58 = scmp.eq.s32.totalorder %s15, 1
    %p59 = por %p57, %p58
    %p61 = scmp.ne.s32.totalorder %s46, %s60
    %p62 = scmp.eq.s32.totalorder %s15, 0
    %p63 = por %p61, %p62
    %s65 = sadd.s32 %s64, 1
    %p68 = scmp.eq.s32.totalorder %s9, 1
    %p69 = scmp.ne.s32.totalorder %s64, %s66
    %p70 = scmp.eq.s32.totalorder %s9, 0
    %p71 = por %p69, %p70
    %p72 = scmp.ne.s32.totalorder %s64, %s66
    %p73 = scmp.eq.s32.totalorder %s14, 1
    %p74 = por %p72, %p73
    %p75 = scmp.ne.s32.totalorder %s66, %s67
    %p76 = scmp.eq.s32.totalorder %s14, 0
    %p77 = por %p75, %p76
    %p78 = scmp.ne.s32.totalorder %s66, %s67
    %p79 = scmp.eq.s32.totalorder %s15, 1
    %p80 = por %p78, %p79
    %p82 = scmp.ne.s32.totalorder %s67, %s81
    %p83 = scmp.eq.s32.totalorder %s15, 0
    %p84 = por %p82, %p83
    %s85 = ssub.s32 %s9, %s16
    %p86 = scmp.eq.s32.totalorder %s85, 0
    %s88 = sadd.s32 %s87, 1
    %s89 = scalar_select %p86, %s87, %s88
    %p92 = pneg %p86
    %p93 = scmp.eq.s32.totalorder %s9, 1
    %p94 = por %p92, %p93
    %p95 = scmp.ne.s32.totalorder %s87, %s90
    %p96 = scmp.eq.s32.totalorder %s9, 0
    %p97 = por %p95, %p96
    %p98 = scmp.ne.s32.totalorder %s87, %s90
    %p99 = scmp.eq.s32.totalorder %s14, 1
    %p100 = por %p98, %p99
    %p101 = scmp.ne.s32.totalorder %s90, %s91
    %p102 = scmp.eq.s32.totalorder %s14, 0
    %p103 = por %p101, %p102
    %p104 = scmp.ne.s32.totalorder %s90, %s91
    %p105 = scmp.eq.s32.totalorder %s15, 1
    %p106 = por %p104, %p105
    %p108 = scmp.ne.s32.totalorder %s91, %s107
    %p109 = scmp.eq.s32.totalorder %s15, 0
    %p110 = por %p108, %p109
    %p111 = scmp.le.s32.totalorder 1, %s9
    %p112 = scmp.lt.s32.totalorder %s9, 3
    %p113 = pnand %p111, %p112
    %p114 = pneg %p113
    // Predicated region
    $region9: #{e5smollm_forward.24} parent=5 // pred_check
      _
    $region10: #{e5smollm_forward.24} parent=5 // pred_check_branch
      %116 = sbr.rel (%p113) target = $region12
    $region11: #{e5smollm_forward.24} parent=5 // pred_region
      %s117 = ssub.s32 %s9, 1
      // Predicated region
      $region13: #{e5smollm_forward.24} parent=11 // pred_check
        %p118 = pneg %p56
      $region14: #{e5smollm_forward.24} parent=11 // pred_check_branch
        %120 = sbr.rel (%p118) target = $region16
      $region15: #{e5smollm_forward.24} parent=11 // pred_region
        _
      $region16: #{e5smollm_forward.24} parent=11 // pred_fallthru
        _
      // Predicated region
      $region17: #{e5smollm_forward.24} parent=11 // pred_check
        %p121 = pneg %p77
      $region18: #{e5smollm_forward.24} parent=11 // pred_check_branch
        %123 = sbr.rel (%p121) target = $region20
      $region19: #{e5smollm_forward.24} parent=11 // pred_region
        _
      $region20: #{e5smollm_forward.24} parent=11 // pred_fallthru
        _
    $region12: #{e5smollm_forward.24} parent=5 // pred_fallthru
      _
    %p124 = scmp.lt.s32.totalorder %s9, 2
    // Predicated region
    $region21: #{e5smollm_forward.24} parent=5 // pred_check
      %p125 = pneg %p124
    $region22: #{e5smollm_forward.24} parent=5 // pred_check_branch
      %127 = sbr.rel (%p125) target = $region24
    $region23: #{e5smollm_forward.24} parent=5 // pred_region
      // Predicated region
      $region25: #{e5smollm_forward.24} parent=23 // pred_check
        %p128 = pneg %p29
      $region26: #{e5smollm_forward.24} parent=23 // pred_check_branch
        %130 = sbr.rel (%p128) target = $region28
      $region27: #{e5smollm_forward.24} parent=23 // pred_region
        %s131 = smul.u32 2, %s9
        %p132 = scmp.lt.s32.totalorder %s131, 3
        %s133 = scalar_select %p132, %s131, 3
        %s134 = smul.addr %s133, 4
        %s135 = scalar_lea.vmem %s0, %s134
        %s136 = smul.u32 2, %s9
      $region28: #{e5smollm_forward.24} parent=23 // pred_fallthru
        _
    $region24: #{e5smollm_forward.24} parent=5 // pred_fallthru
      _
    %p137 = scmp.le.s32.totalorder 1, %s9
    %p138 = scmp.lt.s32.totalorder %s9, 3
    %p139 = pnand %p137, %p138
    %p140 = pneg %p139
    // Predicated region
    $region29: #{e5smollm_forward.24} parent=5 // pred_check
      _
    $region30: #{e5smollm_forward.24} parent=5 // pred_check_branch
      %142 = sbr.rel (%p139) target = $region32
    $region31: #{e5smollm_forward.24} parent=5 // pred_region
      %s143 = ssub.s32 %s9, 1
      %s144 = smul.u32 2, %s14
      %p145 = scmp.lt.s32.totalorder %s144, 3
      %s146 = scalar_select %p145, %s144, 3
      %s147 = smul.addr %s146, 4
      %s148 = scalar_lea.vmem %s0, %s147
      %p149 = pneg %p35
      %p150 = pneg %p32
      %p151 = pneg %p56
      %p152 = pneg %p53
      %p153 = pneg %p77
      %p154 = pneg %p74
      %p155 = pneg %p103
      %p156 = pneg %p100
      %s157 = smul.u32 2, %s14
      %p158 = scmp.lt.s32.totalorder %s157, 3
      %s159 = scalar_select %p158, %s157, 3
      %s160 = smul.addr %s159, 3
      %s161 = smul.addr %s160, 4
      %s162 = scalar_lea.vmem %s3, %s161
      %s163 = smul.u32 2, %s14
      %p164 = scmp.lt.s32.totalorder %s163, 3
      %s165 = scalar_select %p164, %s163, 3
      %s166 = smul.addr %s165, 4
      %s167 = scalar_lea.vmem %s0, %s166
      %s168 = smul.u32 2, %s14
      %s169 = smul.u32 2, %s14
      %p170 = scmp.lt.s32.totalorder %s169, 3
      %s171 = scalar_select %p170, %s169, 3
      %s172 = smul.addr %s171, 3
      %s173 = smul.addr %s172, 4
      %s174 = scalar_lea.vmem %s3, %s173
      %s175 = smul.u32 2, %s14
      %v177 = vld [vmem:[%s167] sm:$0xf]
      %v178 = vld [vmem:[%s167 + $0x4] sm:$0xf]
      %v179 = vld [vmem:[%s1] sm:$0xff]
      %v180 = vld [vmem:[%s1 + $0x8] sm:$0xf]
      %v181 = vld [vmem:[%s1 + $0xc] sm:$0xff]
      %v182 = vld [vmem:[%s1 + $0x14] sm:$0xf]
      %v183 = vld [vmem:[%s1 + $0x18] sm:$0xff]
      %v184 = vld [vmem:[%s1 + $0x20] sm:$0xf]
      %v185 = vld [vmem:[%s1 + $0x24] sm:$0xff]
      %v186 = vld [vmem:[%s1 + $0x2c] sm:$0xf]
      %v187 = vld [vmem:[%s1 + $0x30] sm:$0xff]
      %v188 = vld [vmem:[%s1 + $0x38] sm:$0xf]
      %v189 = vld [vmem:[%s1 + $0x3c] sm:$0xff]
      %v190 = vld [vmem:[%s1 + $0x44] sm:$0xf]
      %v191 = vld [vmem:[%s1 + $0x48] sm:$0xff]
      %v192 = vld [vmem:[%s1 + $0x50] sm:$0xf]
      %v193 = vld [vmem:[%s1 + $0x54] sm:$0xff]
      %v194 = vld [vmem:[%s1 + $0x5c] sm:$0xf]
      %v195 = vld [vmem:[%s1 + $0x60] sm:$0xff]
      %v196 = vld [vmem:[%s1 + $0x68] sm:$0xf]
      %v197 = vld [vmem:[%s1 + $0x6c] sm:$0xff]
      %v198 = vld [vmem:[%s1 + $0x74] sm:$0xf]
      %v199 = vld [vmem:[%s1 + $0x78] sm:$0xff]
      %v200 = vld [vmem:[%s1 + $0x80] sm:$0xf]
      %v201 = vld [vmem:[%s1 + $0x84] sm:$0xff]
      %v202 = vld [vmem:[%s1 + $0x8c] sm:$0xf]
      %v203 = vld [vmem:[%s1 + $0x90] sm:$0xff]
      %v204 = vld [vmem:[%s1 + $0x98] sm:$0xf]
      %v205 = vld [vmem:[%s1 + $0x9c] sm:$0xff]
      %v206 = vld [vmem:[%s1 + $0xa4] sm:$0xf]
      %v207 = vld [vmem:[%s1 + $0xa8] sm:$0xff]
      %v208 = vld [vmem:[%s1 + $0xb0] sm:$0xf]
      %v209 = vld [vmem:[%s1 + $0xb4] sm:$0xff]
      %v210 = vld [vmem:[%s1 + $0xbc] sm:$0xf]
      %v211 = vld [vmem:[%s2] sm:$0x7]
      %v213 = vlaneseq
      %v214 = vshrl.u32 %v213, 7
      %v215 = vsub.s32 0, %v214
      %v216 = vrot.slane %v211, %v215
      %v217 = vlaneseq
      %v218 = vshrl.u32 %v217, 7
      %v219 = vsub.s32 1, %v218
      %v220 = vrot.slane %v211, %v219
      %v221 = vlaneseq
      %v222 = vshrl.u32 %v221, 7
      %v223 = vsub.s32 2, %v222
      %v224 = vrot.slane %v211, %v223
      %v230 = vunpack.c.l.b16 %v177
      %v231 = vunpack.c.l.b16 %v178
      %v232 = vpack.c.b16 %v231, %v230
      %v266 = vunpack.c.l.b16 %v179
      %v267 = vunpack.c.h.b16 %v179
      %v268 = vunpack.c.l.b16 %v180
      %v269 = vunpack.c.l.b16 %v181
      %v270 = vunpack.c.h.b16 %v181
      %v271 = vunpack.c.l.b16 %v182
      %v272 = vunpack.c.l.b16 %v183
      %v273 = vunpack.c.h.b16 %v183
      %v274 = vunpack.c.l.b16 %v184
      %v275 = vunpack.c.l.b16 %v185
      %v276 = vunpack.c.h.b16 %v185
      %v277 = vunpack.c.l.b16 %v186
      %v278 = vunpack.c.l.b16 %v187
      %v279 = vunpack.c.h.b16 %v187
      %v280 = vunpack.c.l.b16 %v188
      %v281 = vunpack.c.l.b16 %v189
      %v282 = vunpack.c.h.b16 %v189
      %v283 = vunpack.c.l.b16 %v190
      %v284 = vunpack.c.l.b16 %v191
      %v285 = vunpack.c.h.b16 %v191
      %v286 = vunpack.c.l.b16 %v192
      %v287 = vunpack.c.l.b16 %v193
      %v288 = vunpack.c.h.b16 %v193
      %v289 = vunpack.c.l.b16 %v194
      %v290 = vunpack.c.l.b16 %v195
      %v291 = vunpack.c.h.b16 %v195
      %v292 = vunpack.c.l.b16 %v196
      %v293 = vunpack.c.l.b16 %v197
      %v294 = vunpack.c.h.b16 %v197
      %v295 = vunpack.c.l.b16 %v198
      %v296 = vunpack.c.l.b16 %v199
      %v297 = vunpack.c.h.b16 %v199
      %v298 = vunpack.c.l.b16 %v200
      %v299 = vunpack.c.l.b16 %v201
      %v300 = vunpack.c.h.b16 %v201
      %v301 = vunpack.c.l.b16 %v202
      %v302 = vunpack.c.l.b16 %v203
      %v303 = vunpack.c.h.b16 %v203
      %v304 = vunpack.c.l.b16 %v204
      %v305 = vunpack.c.l.b16 %v205
      %v306 = vunpack.c.h.b16 %v205
      %v307 = vunpack.c.l.b16 %v206
      %v308 = vunpack.c.l.b16 %v207
      %v309 = vunpack.c.h.b16 %v207
      %v310 = vunpack.c.l.b16 %v208
      %v311 = vunpack.c.l.b16 %v209
      %v312 = vunpack.c.h.b16 %v209
      %v313 = vunpack.c.l.b16 %v210
      %v314 = vpack.c.b16 %v269, %v266
      %v315 = vpack.c.b16 %v270, %v267
      %v316 = vpack.c.b16 %v271, %v268
      %v317 = vpack.c.b16 %v275, %v272
      %v318 = vpack.c.b16 %v276, %v273
      %v319 = vpack.c.b16 %v277, %v274
      %v320 = vpack.c.b16 %v281, %v278
      %v321 = vpack.c.b16 %v282, %v279
      %v322 = vpack.c.b16 %v283, %v280
      %v323 = vpack.c.b16 %v287, %v284
      %v324 = vpack.c.b16 %v288, %v285
      %v325 = vpack.c.b16 %v289, %v286
      %v326 = vpack.c.b16 %v293, %v290
      %v327 = vpack.c.b16 %v294, %v291
      %v328 = vpack.c.b16 %v295, %v292
      %v329 = vpack.c.b16 %v299, %v296
      %v330 = vpack.c.b16 %v300, %v297
      %v331 = vpack.c.b16 %v301, %v298
      %v332 = vpack.c.b16 %v305, %v302
      %v333 = vpack.c.b16 %v306, %v303
      %v334 = vpack.c.b16 %v307, %v304
      %v335 = vpack.c.b16 %v311, %v308
      %v336 = vpack.c.b16 %v312, %v309
      %v337 = vpack.c.b16 %v313, %v310
      %362 = vmatprep.subr.bf16.mxu0 %v315
      %363 = vmatpush1.bf16.msra.mxu0 %v314
      %364 = vmatprep.subr.bf16.mxu0 %v318
      %365 = vmatpush1.bf16.msra.mxu0 %v317
      %366 = vmatprep.subr.bf16.mxu0 %v321
      %367 = vmatpush1.bf16.msra.mxu0 %v320
      %368 = vmatprep.subr.bf16.mxu0 %v324
      %369 = vmatpush1.bf16.msra.mxu0 %v323
      %370 = vmatprep.subr.bf16.mxu0 %v327
      %371 = vmatpush1.bf16.msra.mxu0 %v326
      %372 = vmatprep.subr.bf16.mxu0 %v330
      %373 = vmatpush1.bf16.msra.mxu0 %v329
      %374 = vmatprep.subr.bf16.mxu0 %v333
      %375 = vmatpush1.bf16.msra.mxu0 %v332
      %376 = vmatprep.subr.bf16.mxu0 %v336
      %377 = vmatpush1.bf16.msra.mxu0 %v335
      %378 = vmatprep.subr.bf16.mxu0 0
      %379 = vmatpush1.bf16.msra.mxu0 0
      %380 = vmatprep.subr.bf16.mxu0 0
      %381 = vmatpush1.bf16.msra.mxu0 0
      %382 = vmatprep.subr.bf16.mxu0 0
      %383 = vmatpush1.bf16.msra.mxu0 0
      %384 = vmatprep.subr.bf16.mxu0 0
      %385 = vmatpush1.bf16.msra.mxu0 0
      %386 = vmatprep.subr.bf16.mxu0 0
      %387 = vmatpush1.bf16.msra.mxu0 0
      %388 = vmatprep.subr.bf16.mxu0 0
      %389 = vmatpush1.bf16.msra.mxu0 0
      %390 = vmatprep.subr.bf16.mxu0 0
      %391 = vmatpush1.bf16.msra.mxu0 0
      %392 = vmatprep.subr.bf16.mxu0 0
      %393 = vmatpush1.bf16.msra.mxu0 0
      %394 = vmatprep.mubr.bf16.mxu0 0
      %395 = vmatmul.mubr.bf16.gmra.mrb[0].mxu0 %v232
      %v396 = vpop.f32.mrb[0].mxu0
      %v397 = vadd.f32 %v216, %v396
      %v398 = vpop.f32.mrb[0].mxu0
      %v399 = vadd.f32 %v220, %v398
      %v400 = vpop.f32.mrb[0].mxu0
      %v401 = vadd.f32 %v216, %v400
      %v402 = vpop.f32.mrb[0].mxu0
      %v403 = vadd.f32 %v220, %v402
      %404 = vdwg.mxu0
      %405 = vmatprep.subr.bf16.mxu0 0
      %406 = vmatpush1.bf16.msra.mxu0 %v316
      %407 = vmatprep.subr.bf16.mxu0 0
      %408 = vmatpush1.bf16.msra.mxu0 %v319
      %409 = vmatprep.subr.bf16.mxu0 0
      %410 = vmatpush1.bf16.msra.mxu0 %v322
      %411 = vmatprep.subr.bf16.mxu0 0
      %412 = vmatpush1.bf16.msra.mxu0 %v325
      %413 = vmatprep.subr.bf16.mxu0 0
      %414 = vmatpush1.bf16.msra.mxu0 %v328
      %415 = vmatprep.subr.bf16.mxu0 0
      %416 = vmatpush1.bf16.msra.mxu0 %v331
      %417 = vmatprep.subr.bf16.mxu0 0
      %418 = vmatpush1.bf16.msra.mxu0 %v334
      %419 = vmatprep.subr.bf16.mxu0 0
      %420 = vmatpush1.bf16.msra.mxu0 %v337
      %421 = vmatprep.subr.bf16.mxu0 0
      %422 = vmatpush1.bf16.msra.mxu0 0
      %423 = vmatprep.subr.bf16.mxu0 0
      %424 = vmatpush1.bf16.msra.mxu0 0
      %425 = vmatprep.subr.bf16.mxu0 0
      %426 = vmatpush1.bf16.msra.mxu0 0
      %427 = vmatprep.subr.bf16.mxu0 0
      %428 = vmatpush1.bf16.msra.mxu0 0
      %429 = vmatprep.subr.bf16.mxu0 0
      %430 = vmatpush1.bf16.msra.mxu0 0
      %431 = vmatprep.subr.bf16.mxu0 0
      %432 = vmatpush1.bf16.msra.mxu0 0
      %433 = vmatprep.subr.bf16.mxu0 0
      %434 = vmatpush1.bf16.msra.mxu0 0
      %435 = vmatprep.subr.bf16.mxu0 0
      %436 = vmatpush1.bf16.msra.mxu0 0
      %437 = vmatprep.mubr.bf16.mxu0 0
      %438 = vmatmul.mubr.bf16.gmra.mrb[0].mxu0 %v232
      %v439 = vpop.f32.mrb[0].mxu0
      %v440 = vadd.f32 %v224, %v439
      %v441 = vpop.f32.mrb[0].mxu0
      %v442 = vpop.f32.mrb[0].mxu0
      %v443 = vadd.f32 %v224, %v442
      %v444 = vpop.f32.mrb[0].mxu0
      %445 = vdwg.mxu0
      %v446 = vpack.c.bf16 %v401, %v397
      %v447 = vpack.c.bf16 %v403, %v399
      %v448 = vpack.c.bf16 %v443, %v440
      %v452 = vunpack.c.l.b16 %v446
      %v453 = vunpack.c.l.b16 %v447
      %v454 = vunpack.c.l.b16 %v448
      %v455 = vunpack.c.h.b16 %v446
      %v456 = vunpack.c.h.b16 %v447
      %v457 = vunpack.c.h.b16 %v448
      %v458 = vpack.c.b16 %v453, %v452
      %v459 = vpack.c.b16 %v454, %v454
      %v460 = vpack.c.b16 %v456, %v455
      %v461 = vpack.c.b16 %v457, %v457
      %466 = vst [vmem:[%s174] sm:$0xff] %v458
      %467 = vst [vmem:[%s174 + $0x8] sm:$0xf] %v459
      %468 = vst [vmem:[%s174 + $0xc] sm:$0xff] %v460
      %469 = vst [vmem:[%s174 + $0x14] sm:$0xf] %v461
      %s470 = smul.u32 2, %s14
      %p471 = scmp.lt.s32.totalorder %s470, 3
      %s472 = scalar_select %p471, %s470, 3
      %s473 = smul.addr %s472, 3
      %s474 = smul.addr %s473, 4
      %s475 = scalar_lea.vmem %s3, %s474
      // Predicated region
      $region33: #{e5smollm_forward.24} parent=31 // pred_check
        %p476 = pneg %p100
      $region34: #{e5smollm_forward.24} parent=31 // pred_check_branch
        %478 = sbr.rel (%p476) target = $region36
      $region35: #{e5smollm_forward.24} parent=31 // pred_region
        %s479 = smul.u32 2, %s14
      $region36: #{e5smollm_forward.24} parent=31 // pred_fallthru
        _
    $region32: #{e5smollm_forward.24} parent=5 // pred_fallthru
      _
    %p480 = scmp.le.s32.totalorder 2, %s9
    // Predicated region
    $region37: #{e5smollm_forward.24} parent=5 // pred_check
      %p481 = pneg %p480
    $region38: #{e5smollm_forward.24} parent=5 // pred_check_branch
      %483 = sbr.rel (%p481) target = $region40
    $region39: #{e5smollm_forward.24} parent=5 // pred_region
      %s484 = ssub.s32 %s9, 2
      // Predicated region
      $region41: #{e5smollm_forward.24} parent=39 // pred_check
        %p485 = pneg %p106
      $region42: #{e5smollm_forward.24} parent=39 // pred_check_branch
        %487 = sbr.rel (%p485) target = $region44
      $region43: #{e5smollm_forward.24} parent=39 // pred_region
        %s488 = smul.u32 2, %s15
        %p489 = scmp.lt.s32.totalorder %s488, 3
        %s490 = scalar_select %p489, %s488, 3
        %s491 = smul.addr %s490, 3
        %s492 = smul.addr %s491, 4
        %s493 = scalar_lea.vmem %s3, %s492
      $region44: #{e5smollm_forward.24} parent=39 // pred_fallthru
        _
    $region40: #{e5smollm_forward.24} parent=5 // pred_fallthru
      _
  $region6: #{e5smollm_forward.24} parent=0 // loop_footer
    %s13 = sadd.s32 1, %s9
  $region7: #{e5smollm_forward.24} parent=0 // loop_footer_branch
    %8 = sbr.rel target = $region3
  $region8: #{e5smollm_forward.24} parent=0 // loop_exit
    _

// kernel: e5smollm_forward.25
$region0: #{e5smollm_forward.25}
  #allocation0 [shape = 'u32[]', space=smem, size = 0x4, offset = 0x4, fixed_abs, tag = 'smem constant byte address 0x4 - core index']
  #allocation1 [shape = 'u32[144,128]{1,0:T(1,128)}', space=vmem, size = 0x12000, scoped, tag = 'internal scratch']
  %s0 = inlined_call_operand.vmem [shape: bf16[2,4,16,32], index: 0, kind: input, shape index: {}]
  %s1 = inlined_call_operand.vmem [shape: bf16[2,4,16,32], index: 1, kind: input, shape index: {}]
  %s2 = inlined_call_operand.vmem [shape: bf16[2,4,16,32], index: 2, kind: input, shape index: {}]
  %s3 = inlined_call_operand.vmem [shape: f32[2,16,16], index: 3, kind: input, shape index: {}]
  %s4 = inlined_call_operand.vmem [shape: bf16[2,4,16,32], index: 4, kind: output, shape index: {}]
  %s5 = sld [smem:[#allocation0]]
  $region49: #{e5smollm_forward.25} parent=0
    _
  %s7 = ssub.s32 1, %s5
  %s8 = scalar_select 0, %s7, %s5
  loop: start=0, step=1, limit=4
  $region2: #{e5smollm_forward.25} parent=0 // loop_pre_header
    _
  $region3: #{e5smollm_forward.25} parent=0 // loop_header
    %s10 = sphi 0, %s14
    %p11 = scmp.ge.s32.totalorder %s10, 4
    %s20 = sphi 0, %s22
    %s23 = sphi 0, %s20
    %s24 = sphi 0, %s23
    %s40 = sphi 0, %s24
    %s46 = sphi 0, %s48
    %s49 = sphi 0, %s46
    %s50 = sphi 0, %s49
    %s66 = sphi 0, %s50
    %s72 = sphi 0, %s74
    %s75 = sphi 0, %s72
    %s76 = sphi 0, %s75
    %s92 = sphi 0, %s76
    %s98 = sphi 0, %s100
    %s101 = sphi 0, %s98
    %s102 = sphi 0, %s101
    %s118 = sphi 0, %s102
    %s124 = sphi 0, %s126
    %s127 = sphi 0, %s124
    %s128 = sphi 0, %s127
    %s144 = sphi 0, %s128
  $region4: #{e5smollm_forward.25} parent=0 // loop_header_branch
    %13 = sbr.rel (%p11) target = $region8
  $region5: #{e5smollm_forward.25} parent=0 // loop_body
    %s15 = ssub.s32 %s10, 1
    %s16 = ssub.s32 %s10, 2
    %s17 = sadd.s32 %s10, 1
    %s18 = ssub.s32 %s10, %s17
    %p19 = scmp.eq.s32.totalorder %s18, 0
    %s21 = sadd.s32 %s20, 1
    %s22 = scalar_select %p19, %s20, %s21
    %p25 = pneg %p19
    %p26 = scmp.eq.s32.totalorder %s10, 1
    %p27 = por %p25, %p26
    %p28 = scmp.ne.s32.totalorder %s20, %s23
    %p29 = scmp.eq.s32.totalorder %s10, 0
    %p30 = por %p28, %p29
    %p31 = scmp.ne.s32.totalorder %s20, %s23
    %p32 = scmp.eq.s32.totalorder %s15, 1
    %p33 = por %p31, %p32
    %p34 = scmp.ne.s32.totalorder %s23, %s24
    %p35 = scmp.eq.s32.totalorder %s15, 0
    %p36 = por %p34, %p35
    %p37 = scmp.ne.s32.totalorder %s23, %s24
    %p38 = scmp.eq.s32.totalorder %s16, 1
    %p39 = por %p37, %p38
    %p41 = scmp.ne.s32.totalorder %s24, %s40
    %p42 = scmp.eq.s32.totalorder %s16, 0
    %p43 = por %p41, %p42
    %s44 = ssub.s32 %s10, %s17
    %p45 = scmp.eq.s32.totalorder %s44, 0
    %s47 = sadd.s32 %s46, 1
    %s48 = scalar_select %p45, %s46, %s47
    %p51 = pneg %p45
    %p52 = scmp.eq.s32.totalorder %s10, 1
    %p53 = por %p51, %p52
    %p54 = scmp.ne.s32.totalorder %s46, %s49
    %p55 = scmp.eq.s32.totalorder %s10, 0
    %p56 = por %p54, %p55
    %p57 = scmp.ne.s32.totalorder %s46, %s49
    %p58 = scmp.eq.s32.totalorder %s15, 1
    %p59 = por %p57, %p58
    %p60 = scmp.ne.s32.totalorder %s49, %s50
    %p61 = scmp.eq.s32.totalorder %s15, 0
    %p62 = por %p60, %p61
    %p63 = scmp.ne.s32.totalorder %s49, %s50
    %p64 = scmp.eq.s32.totalorder %s16, 1
    %p65 = por %p63, %p64
    %p67 = scmp.ne.s32.totalorder %s50, %s66
    %p68 = scmp.eq.s32.totalorder %s16, 0
    %p69 = por %p67, %p68
    %s70 = ssub.s32 %s10, %s17
    %p71 = scmp.eq.s32.totalorder %s70, 0
    %s73 = sadd.s32 %s72, 1
    %s74 = scalar_select %p71, %s72, %s73
    %p77 = pneg %p71
    %p78 = scmp.eq.s32.totalorder %s10, 1
    %p79 = por %p77, %p78
    %p80 = scmp.ne.s32.totalorder %s72, %s75
    %p81 = scmp.eq.s32.totalorder %s10, 0
    %p82 = por %p80, %p81
    %p83 = scmp.ne.s32.totalorder %s72, %s75
    %p84 = scmp.eq.s32.totalorder %s15, 1
    %p85 = por %p83, %p84
    %p86 = scmp.ne.s32.totalorder %s75, %s76
    %p87 = scmp.eq.s32.totalorder %s15, 0
    %p88 = por %p86, %p87
    %p89 = scmp.ne.s32.totalorder %s75, %s76
    %p90 = scmp.eq.s32.totalorder %s16, 1
    %p91 = por %p89, %p90
    %p93 = scmp.ne.s32.totalorder %s76, %s92
    %p94 = scmp.eq.s32.totalorder %s16, 0
    %p95 = por %p93, %p94
    %s96 = ssub.s32 %s10, %s17
    %p97 = scmp.eq.s32.totalorder %s96, 0
    %s99 = sadd.s32 %s98, 1
    %s100 = scalar_select %p97, %s98, %s99
    %p103 = pneg %p97
    %p104 = scmp.eq.s32.totalorder %s10, 1
    %p105 = por %p103, %p104
    %p106 = scmp.ne.s32.totalorder %s98, %s101
    %p107 = scmp.eq.s32.totalorder %s10, 0
    %p108 = por %p106, %p107
    %p109 = scmp.ne.s32.totalorder %s98, %s101
    %p110 = scmp.eq.s32.totalorder %s15, 1
    %p111 = por %p109, %p110
    %p112 = scmp.ne.s32.totalorder %s101, %s102
    %p113 = scmp.eq.s32.totalorder %s15, 0
    %p114 = por %p112, %p113
    %p115 = scmp.ne.s32.totalorder %s101, %s102
    %p116 = scmp.eq.s32.totalorder %s16, 1
    %p117 = por %p115, %p116
    %p119 = scmp.ne.s32.totalorder %s102, %s118
    %p120 = scmp.eq.s32.totalorder %s16, 0
    %p121 = por %p119, %p120
    %s122 = ssub.s32 %s10, %s17
    %p123 = scmp.eq.s32.totalorder %s122, 0
    %s125 = sadd.s32 %s124, 1
    %s126 = scalar_select %p123, %s124, %s125
    %p129 = pneg %p123
    %p130 = scmp.eq.s32.totalorder %s10, 1
    %p131 = por %p129, %p130
    %p132 = scmp.ne.s32.totalorder %s124, %s127
    %p133 = scmp.eq.s32.totalorder %s10, 0
    %p134 = por %p132, %p133
    %p135 = scmp.ne.s32.totalorder %s124, %s127
    %p136 = scmp.eq.s32.totalorder %s15, 1
    %p137 = por %p135, %p136
    %p138 = scmp.ne.s32.totalorder %s127, %s128
    %p139 = scmp.eq.s32.totalorder %s15, 0
    %p140 = por %p138, %p139
    %p141 = scmp.ne.s32.totalorder %s127, %s128
    %p142 = scmp.eq.s32.totalorder %s16, 1
    %p143 = por %p141, %p142
    %p145 = scmp.ne.s32.totalorder %s128, %s144
    %p146 = scmp.eq.s32.totalorder %s16, 0
    %p147 = por %p145, %p146
    %p148 = scmp.le.s32.totalorder 1, %s10
    %p149 = scmp.lt.s32.totalorder %s10, 3
    %p150 = pnand %p148, %p149
    %p151 = pneg %p150
    // Predicated region
    $region9: #{e5smollm_forward.25} parent=5 // pred_check
      _
    $region10: #{e5smollm_forward.25} parent=5 // pred_check_branch
      %153 = sbr.rel (%p150) target = $region12
    $region11: #{e5smollm_forward.25} parent=5 // pred_region
      %s154 = ssub.s32 %s10, 1
    $region12: #{e5smollm_forward.25} parent=5 // pred_fallthru
      _
    %p155 = scmp.lt.s32.totalorder %s10, 2
    // Predicated region
    $region13: #{e5smollm_forward.25} parent=5 // pred_check
      %p156 = pneg %p155
    $region14: #{e5smollm_forward.25} parent=5 // pred_check_branch
      %158 = sbr.rel (%p156) target = $region16
    $region15: #{e5smollm_forward.25} parent=5 // pred_region
      // Predicated region
      $region17: #{e5smollm_forward.25} parent=15 // pred_check
        %p159 = pneg %p30
      $region18: #{e5smollm_forward.25} parent=15 // pred_check_branch
        %161 = sbr.rel (%p159) target = $region20
      $region19: #{e5smollm_forward.25} parent=15 // pred_region
        %p162 = scmp.lt.s32.totalorder %s10, 1
        %s163 = scalar_select %p162, %s10, 1
        %s164 = smul.addr %s163, 8
        %s165 = smul.addr %s164, 4
        %s166 = scalar_lea.vmem %s0, %s165
      $region20: #{e5smollm_forward.25} parent=15 // pred_fallthru
        _
      // Predicated region
      $region21: #{e5smollm_forward.25} parent=15 // pred_check
        %p167 = pneg %p56
      $region22: #{e5smollm_forward.25} parent=15 // pred_check_branch
        %169 = sbr.rel (%p167) target = $region24
      $region23: #{e5smollm_forward.25} parent=15 // pred_region
        %p170 = scmp.lt.s32.totalorder %s10, 1
        %s171 = scalar_select %p170, %s10, 1
        %s172 = smul.addr %s171, 8
        %s173 = smul.addr %s172, 4
        %s174 = scalar_lea.vmem %s1, %s173
      $region24: #{e5smollm_forward.25} parent=15 // pred_fallthru
        _
      // Predicated region
      $region25: #{e5smollm_forward.25} parent=15 // pred_check
        %p175 = pneg %p82
      $region26: #{e5smollm_forward.25} parent=15 // pred_check_branch
        %177 = sbr.rel (%p175) target = $region28
      $region27: #{e5smollm_forward.25} parent=15 // pred_region
        %p178 = scmp.lt.s32.totalorder %s10, 1
        %s179 = scalar_select %p178, %s10, 1
        %s180 = smul.addr %s179, 8
        %s181 = smul.addr %s180, 4
        %s182 = scalar_lea.vmem %s2, %s181
      $region28: #{e5smollm_forward.25} parent=15 // pred_fallthru
        _
      // Predicated region
      $region29: #{e5smollm_forward.25} parent=15 // pred_check
        %p183 = pneg %p108
      $region30: #{e5smollm_forward.25} parent=15 // pred_check_branch
        %185 = sbr.rel (%p183) target = $region32
      $region31: #{e5smollm_forward.25} parent=15 // pred_region
        %p186 = scmp.lt.s32.totalorder %s10, 1
        %s187 = scalar_select %p186, %s10, 1
        %s188 = smul.addr %s187, 2
        %s189 = smul.addr %s188, 8
        %s190 = scalar_lea.vmem %s3, %s189
      $region32: #{e5smollm_forward.25} parent=15 // pred_fallthru
        _
    $region16: #{e5smollm_forward.25} parent=5 // pred_fallthru
      _
    %p191 = scmp.le.s32.totalorder 1, %s10
    %p192 = scmp.lt.s32.totalorder %s10, 3
    %p193 = pnand %p191, %p192
    %p194 = pneg %p193
    // Predicated region
    $region33: #{e5smollm_forward.25} parent=5 // pred_check
      _
    $region34: #{e5smollm_forward.25} parent=5 // pred_check_branch
      %196 = sbr.rel (%p193) target = $region36
    $region35: #{e5smollm_forward.25} parent=5 // pred_region
      %s197 = ssub.s32 %s10, 1
      %p198 = scmp.lt.s32.totalorder %s15, 1
      %s199 = scalar_select %p198, %s15, 1
      %s200 = smul.addr %s199, 8
      %s201 = smul.addr %s200, 4
      %s202 = scalar_lea.vmem %s0, %s201
      %p203 = pneg %p36
      %p204 = pneg %p33
      %p205 = scmp.lt.s32.totalorder %s15, 1
      %s206 = scalar_select %p205, %s15, 1
      %s207 = smul.addr %s206, 8
      %s208 = smul.addr %s207, 4
      %s209 = scalar_lea.vmem %s1, %s208
      %p210 = pneg %p62
      %p211 = pneg %p59
      %p212 = scmp.lt.s32.totalorder %s15, 1
      %s213 = scalar_select %p212, %s15, 1
      %s214 = smul.addr %s213, 8
      %s215 = smul.addr %s214, 4
      %s216 = scalar_lea.vmem %s2, %s215
      %p217 = pneg %p88
      %p218 = pneg %p85
      %p219 = scmp.lt.s32.totalorder %s15, 1
      %s220 = scalar_select %p219, %s15, 1
      %s221 = smul.addr %s220, 2
      %s222 = smul.addr %s221, 8
      %s223 = scalar_lea.vmem %s3, %s222
      %p224 = pneg %p114
      %p225 = pneg %p111
      %p226 = pneg %p140
      %p227 = pneg %p137
      %p228 = scmp.lt.s32.totalorder %s15, 1
      %s229 = scalar_select %p228, %s15, 1
      %s230 = smul.addr %s229, 8
      %s231 = smul.addr %s230, 4
      %s232 = scalar_lea.vmem %s4, %s231
      %p233 = scmp.lt.s32.totalorder %s15, 1
      %s234 = scalar_select %p233, %s15, 1
      %s235 = smul.addr %s234, 8
      %s236 = smul.addr %s235, 4
      %s237 = scalar_lea.vmem %s0, %s236
      %p238 = scmp.lt.s32.totalorder %s15, 1
      %s239 = scalar_select %p238, %s15, 1
      %s240 = smul.addr %s239, 8
      %s241 = smul.addr %s240, 4
      %s242 = scalar_lea.vmem %s1, %s241
      %p243 = scmp.lt.s32.totalorder %s15, 1
      %s244 = scalar_select %p243, %s15, 1
      %s245 = smul.addr %s244, 8
      %s246 = smul.addr %s245, 4
      %s247 = scalar_lea.vmem %s2, %s246
      %p248 = scmp.lt.s32.totalorder %s15, 1
      %s249 = scalar_select %p248, %s15, 1
      %s250 = smul.addr %s249, 2
      %s251 = smul.addr %s250, 8
      %s252 = scalar_lea.vmem %s3, %s251
      %p253 = scmp.lt.s32.totalorder %s15, 1
      %s254 = scalar_select %p253, %s15, 1
      %s255 = smul.addr %s254, 8
      %s256 = smul.addr %s255, 4
      %s257 = scalar_lea.vmem %s4, %s256
      %v259 = vld [vmem:[%s237] sm:$0xf]
      %v260 = vld [vmem:[%s237 + $0x4] sm:$0xf]
      %v261 = vld [vmem:[%s237 + $0x8] sm:$0xf]
      %v262 = vld [vmem:[%s237 + $0xc] sm:$0xf]
      %v263 = vld [vmem:[%s237 + $0x10] sm:$0xf]
      %v264 = vld [vmem:[%s237 + $0x14] sm:$0xf]
      %v265 = vld [vmem:[%s237 + $0x18] sm:$0xf]
      %v266 = vld [vmem:[%s237 + $0x1c] sm:$0xf]
      %v267 = vld [vmem:[%s242] sm:$0xf]
      %v268 = vld [vmem:[%s242 + $0x4] sm:$0xf]
      %v269 = vld [vmem:[%s242 + $0x8] sm:$0xf]
      %v270 = vld [vmem:[%s242 + $0xc] sm:$0xf]
      %v271 = vld [vmem:[%s242 + $0x10] sm:$0xf]
      %v272 = vld [vmem:[%s242 + $0x14] sm:$0xf]
      %v273 = vld [vmem:[%s242 + $0x18] sm:$0xf]
      %v274 = vld [vmem:[%s242 + $0x1c] sm:$0xf]
      %v275 = vld [vmem:[%s247] sm:$0xf]
      %v276 = vld [vmem:[%s247 + $0x4] sm:$0xf]
      %v277 = vld [vmem:[%s247 + $0x8] sm:$0xf]
      %v278 = vld [vmem:[%s247 + $0xc] sm:$0xf]
      %v279 = vld [vmem:[%s247 + $0x10] sm:$0xf]
      %v280 = vld [vmem:[%s247 + $0x14] sm:$0xf]
      %v281 = vld [vmem:[%s247 + $0x18] sm:$0xf]
      %v282 = vld [vmem:[%s247 + $0x1c] sm:$0xf]
      %v283 = vld [vmem:[%s252] sm:$0xff]
      %v284 = vld [vmem:[%s252 + $0x8] sm:$0xff]
      %v287 = vunpack.c.l.b16 %v259
      %v288 = vunpack.c.l.b16 %v260
      %v289 = vpack.c.b16 %v288, %v287
      %v292 = vunpack.c.l.b16 %v267
      %v293 = vunpack.c.l.b16 %v268
      %v294 = vpack.c.b16 %v293, %v292
      %vm295 = vcmask 261120
      %v297 = vsel %vm295, %v289, 0
      %v300 = vsel %vm295, %v294, 0
      %302 = vmatprep.subr.bf16.mxu0 0
      %303 = vmatpush1.bf16.xpose.msra.mxu0 %v300
      %304 = vmatprep.subr.bf16.mxu0 0
      %305 = vmatpush1.bf16.xpose.msra.mxu0 0
      %306 = vmatprep.subr.bf16.mxu0 0
      %307 = vmatpush1.bf16.xpose.msra.mxu0 0
      %308 = vmatprep.subr.bf16.mxu0 0
      %309 = vmatpush1.bf16.xpose.msra.mxu0 0
      %310 = vmatprep.subr.bf16.mxu0 0
      %311 = vmatpush1.bf16.xpose.msra.mxu0 0
      %312 = vmatprep.subr.bf16.mxu0 0
      %313 = vmatpush1.bf16.xpose.msra.mxu0 0
      %314 = vmatprep.subr.bf16.mxu0 0
      %315 = vmatpush1.bf16.xpose.msra.mxu0 0
      %316 = vmatprep.subr.bf16.mxu0 0
      %317 = vmatpush1.bf16.xpose.msra.mxu0 0
      %318 = vmatprep.subr.bf16.mxu0 0
      %319 = vmatpush1.bf16.xpose.msra.mxu0 0
      %320 = vmatprep.subr.bf16.mxu0 0
      %321 = vmatpush1.bf16.xpose.msra.mxu0 0
      %322 = vmatprep.subr.bf16.mxu0 0
      %323 = vmatpush1.bf16.xpose.msra.mxu0 0
      %324 = vmatprep.subr.bf16.mxu0 0
      %325 = vmatpush1.bf16.xpose.msra.mxu0 0
      %326 = vmatprep.subr.bf16.mxu0 0
      %327 = vmatpush1.bf16.xpose.msra.mxu0 0
      %328 = vmatprep.subr.bf16.mxu0 0
      %329 = vmatpush1.bf16.xpose.msra.mxu0 0
      %330 = vmatprep.subr.bf16.mxu0 0
      %331 = vmatpush1.bf16.xpose.msra.mxu0 0
      %332 = vmatprep.subr.bf16.mxu0 0
      %333 = vmatpush1.bf16.xpose.msra.mxu0 0
      %334 = vmatprep.mubr.bf16.mxu0 0
      %335 = vmatmul.mubr.bf16.gmra.mrb[0].mxu0 %v297
      %v336 = vpop.f32.mrb[0].mxu0
      %v337 = vadd.f32 0.0, %v336
      %v338 = vpop.f32.mrb[0].mxu0
      %v339 = vpop.f32.mrb[0].mxu0
      %v340 = vadd.f32 0.0, %v339
      %v341 = vpop.f32.mrb[0].mxu0
      %342 = vdwg.mxu0
      %v345 = vunpack.c.l.b16 %v261
      %v346 = vunpack.c.l.b16 %v262
      %v347 = vpack.c.b16 %v346, %v345
      %v350 = vunpack.c.l.b16 %v269
      %v351 = vunpack.c.l.b16 %v270
      %v352 = vpack.c.b16 %v351, %v350
      %v354 = vsel %vm295, %v347, 0
      %v357 = vsel %vm295, %v352, 0
      %359 = vmatprep.subr.bf16.mxu0 0
      %360 = vmatpush1.bf16.xpose.msra.mxu0 %v357
      %361 = vmatprep.subr.bf16.mxu0 0
      %362 = vmatpush1.bf16.xpose.msra.mxu0 0
      %363 = vmatprep.subr.bf16.mxu0 0
      %364 = vmatpush1.bf16.xpose.msra.mxu0 0
      %365 = vmatprep.subr.bf16.mxu0 0
      %366 = vmatpush1.bf16.xpose.msra.mxu0 0
      %367 = vmatprep.subr.bf16.mxu0 0
      %368 = vmatpush1.bf16.xpose.msra.mxu0 0
      %369 = vmatprep.subr.bf16.mxu0 0
      %370 = vmatpush1.bf16.xpose.msra.mxu0 0
      %371 = vmatprep.subr.bf16.mxu0 0
      %372 = vmatpush1.bf16.xpose.msra.mxu0 0
      %373 = vmatprep.subr.bf16.mxu0 0
      %374 = vmatpush1.bf16.xpose.msra.mxu0 0
      %375 = vmatprep.subr.bf16.mxu0 0
      %376 = vmatpush1.bf16.xpose.msra.mxu0 0
      %377 = vmatprep.subr.bf16.mxu0 0
      %378 = vmatpush1.bf16.xpose.msra.mxu0 0
      %379 = vmatprep.subr.bf16.mxu0 0
      %380 = vmatpush1.bf16.xpose.msra.mxu0 0
      %381 = vmatprep.subr.bf16.mxu0 0
      %382 = vmatpush1.bf16.xpose.msra.mxu0 0
      %383 = vmatprep.subr.bf16.mxu0 0
      %384 = vmatpush1.bf16.xpose.msra.mxu0 0
      %385 = vmatprep.subr.bf16.mxu0 0
      %386 = vmatpush1.bf16.xpose.msra.mxu0 0
      %387 = vmatprep.subr.bf16.mxu0 0
      %388 = vmatpush1.bf16.xpose.msra.mxu0 0
      %389 = vmatprep.subr.bf16.mxu0 0
      %390 = vmatpush1.bf16.xpose.msra.mxu0 0
      %391 = vmatprep.mubr.bf16.mxu0 0
      %392 = vmatmul.mubr.bf16.gmra.mrb[0].mxu0 %v354
      %v393 = vpop.f32.mrb[0].mxu0
      %v394 = vadd.f32 0.0, %v393
      %v395 = vpop.f32.mrb[0].mxu0
      %v396 = vpop.f32.mrb[0].mxu0
      %v397 = vadd.f32 0.0, %v396
      %v398 = vpop.f32.mrb[0].mxu0
      %399 = vdwg.mxu0
      %v402 = vunpack.c.l.b16 %v263
      %v403 = vunpack.c.l.b16 %v264
      %v404 = vpack.c.b16 %v403, %v402
      %v407 = vunpack.c.l.b16 %v271
      %v408 = vunpack.c.l.b16 %v272
      %v409 = vpack.c.b16 %v408, %v407
      %v411 = vsel %vm295, %v404, 0
      %v414 = vsel %vm295, %v409, 0
      %416 = vmatprep.subr.bf16.mxu0 0
      %417 = vmatpush1.bf16.xpose.msra.mxu0 %v414
      %418 = vmatprep.subr.bf16.mxu0 0
      %419 = vmatpush1.bf16.xpose.msra.mxu0 0
      %420 = vmatprep.subr.bf16.mxu0 0
      %421 = vmatpush1.bf16.xpose.msra.mxu0 0
      %422 = vmatprep.subr.bf16.mxu0 0
      %423 = vmatpush1.bf16.xpose.msra.mxu0 0
      %424 = vmatprep.subr.bf16.mxu0 0
      %425 = vmatpush1.bf16.xpose.msra.mxu0 0
      %426 = vmatprep.subr.bf16.mxu0 0
      %427 = vmatpush1.bf16.xpose.msra.mxu0 0
      %428 = vmatprep.subr.bf16.mxu0 0
      %429 = vmatpush1.bf16.xpose.msra.mxu0 0
      %430 = vmatprep.subr.bf16.mxu0 0
      %431 = vmatpush1.bf16.xpose.msra.mxu0 0
      %432 = vmatprep.subr.bf16.mxu0 0
      %433 = vmatpush1.bf16.xpose.msra.mxu0 0
      %434 = vmatprep.subr.bf16.mxu0 0
      %435 = vmatpush1.bf16.xpose.msra.mxu0 0
      %436 = vmatprep.subr.bf16.mxu0 0
      %437 = vmatpush1.bf16.xpose.msra.mxu0 0
      %438 = vmatprep.subr.bf16.mxu0 0
      %439 = vmatpush1.bf16.xpose.msra.mxu0 0
      %440 = vmatprep.subr.bf16.mxu0 0
      %441 = vmatpush1.bf16.xpose.msra.mxu0 0
      %442 = vmatprep.subr.bf16.mxu0 0
      %443 = vmatpush1.bf16.xpose.msra.mxu0 0
      %444 = vmatprep.subr.bf16.mxu0 0
      %445 = vmatpush1.bf16.xpose.msra.mxu0 0
      %446 = vmatprep.subr.bf16.mxu0 0
      %447 = vmatpush1.bf16.xpose.msra.mxu0 0
      %448 = vmatprep.mubr.bf16.mxu0 0
      %449 = vmatmul.mubr.bf16.gmra.mrb[0].mxu0 %v411
      %v450 = vpop.f32.mrb[0].mxu0
      %v451 = vadd.f32 0.0, %v450
      %v452 = vpop.f32.mrb[0].mxu0
      %v453 = vpop.f32.mrb[0].mxu0
      %v454 = vadd.f32 0.0, %v453
      %v455 = vpop.f32.mrb[0].mxu0
      %456 = vdwg.mxu0
      %v459 = vunpack.c.l.b16 %v265
      %v460 = vunpack.c.l.b16 %v266
      %v461 = vpack.c.b16 %v460, %v459
      %v464 = vunpack.c.l.b16 %v273
      %v465 = vunpack.c.l.b16 %v274
      %v466 = vpack.c.b16 %v465, %v464
      %v468 = vsel %vm295, %v461, 0
      %v471 = vsel %vm295, %v466, 0
      %473 = vmatprep.subr.bf16.mxu0 0
      %474 = vmatpush1.bf16.xpose.msra.mxu0 %v471
      %475 = vmatprep.subr.bf16.mxu0 0
      %476 = vmatpush1.bf16.xpose.msra.mxu0 0
      %477 = vmatprep.subr.bf16.mxu0 0
      %478 = vmatpush1.bf16.xpose.msra.mxu0 0
      %479 = vmatprep.subr.bf16.mxu0 0
      %480 = vmatpush1.bf16.xpose.msra.mxu0 0
      %481 = vmatprep.subr.bf16.mxu0 0
      %482 = vmatpush1.bf16.xpose.msra.mxu0 0
      %483 = vmatprep.subr.bf16.mxu0 0
      %484 = vmatpush1.bf16.xpose.msra.mxu0 0
      %485 = vmatprep.subr.bf16.mxu0 0
      %486 = vmatpush1.bf16.xpose.msra.mxu0 0
      %487 = vmatprep.subr.bf16.mxu0 0
      %488 = vmatpush1.bf16.xpose.msra.mxu0 0
      %489 = vmatprep.subr.bf16.mxu0 0
      %490 = vmatpush1.bf16.xpose.msra.mxu0 0
      %491 = vmatprep.subr.bf16.mxu0 0
      %492 = vmatpush1.bf16.xpose.msra.mxu0 0
      %493 = vmatprep.subr.bf16.mxu0 0
      %494 = vmatpush1.bf16.xpose.msra.mxu0 0
      %495 = vmatprep.subr.bf16.mxu0 0
      %496 = vmatpush1.bf16.xpose.msra.mxu0 0
      %497 = vmatprep.subr.bf16.mxu0 0
      %498 = vmatpush1.bf16.xpose.msra.mxu0 0
      %499 = vmatprep.subr.bf16.mxu0 0
      %500 = vmatpush1.bf16.xpose.msra.mxu0 0
      %501 = vmatprep.subr.bf16.mxu0 0
      %502 = vmatpush1.bf16.xpose.msra.mxu0 0
      %503 = vmatprep.subr.bf16.mxu0 0
      %504 = vmatpush1.bf16.xpose.msra.mxu0 0
      %505 = vmatprep.mubr.bf16.mxu0 0
      %506 = vmatmul.mubr.bf16.gmra.mrb[0].mxu0 %v468
      %v507 = vpop.f32.mrb[0].mxu0
      %v508 = vadd.f32 0.0, %v507
      %v509 = vpop.f32.mrb[0].mxu0
      %v510 = vpop.f32.mrb[0].mxu0
      %v511 = vadd.f32 0.0, %v510
      %v512 = vpop.f32.mrb[0].mxu0
      %513 = vdwg.mxu0
      %v514 = vmul.f32 %v337, 0.17677669
      %v515 = vmul.f32 %v340, 0.17677669
      %v516 = vmul.f32 %v394, 0.17677669
      %v517 = vmul.f32 %v397, 0.17677669
      %v518 = vmul.f32 %v451, 0.17677669
      %v519 = vmul.f32 %v454, 0.17677669
      %v520 = vmul.f32 %v508, 0.17677669
      %v521 = vmul.f32 %v511, 0.17677669
      %v522 = vadd.f32 %v514, %v283
      %v523 = vadd.f32 %v515, %v284
      %v524 = vadd.f32 %v516, %v283
      %v525 = vadd.f32 %v517, %v284
      %v526 = vadd.f32 %v518, %v283
      %v527 = vadd.f32 %v519, %v284
      %v528 = vadd.f32 %v520, %v283
      %v529 = vadd.f32 %v521, %v284
      %vm530 = vcmask 130048
      %v531 = vsel %vm530, %v522, -inf
      %532 = vmax.xlane.f32.xlu0 %v531
      %v533 = vpop.xlane.xlu0 %532
      %v534 = vsel %vm530, %v523, -inf
      %535 = vmax.xlane.f32.xlu0 %v534
      %v536 = vpop.xlane.xlu0 %535
      %v537 = vsel %vm530, %v524, -inf
      %538 = vmax.xlane.f32.xlu0 %v537
      %v539 = vpop.xlane.xlu0 %538
      %v540 = vsel %vm530, %v525, -inf
      %541 = vmax.xlane.f32.xlu0 %v540
      %v542 = vpop.xlane.xlu0 %541
      %v543 = vsel %vm530, %v526, -inf
      %544 = vmax.xlane.f32.xlu0 %v543
      %v545 = vpop.xlane.xlu0 %544
      %v546 = vsel %vm530, %v527, -inf
      %547 = vmax.xlane.f32.xlu0 %v546
      %v548 = vpop.xlane.xlu0 %547
      %v549 = vsel %vm530, %v528, -inf
      %550 = vmax.xlane.f32.xlu0 %v549
      %v551 = vpop.xlane.xlu0 %550
      %v552 = vsel %vm530, %v529, -inf
      %553 = vmax.xlane.f32.xlu0 %v552
      %v554 = vpop.xlane.xlu0 %553
      %v555 = vsub.f32 %v522, %v533
      %v556 = vsub.f32 %v523, %v536
      %v557 = vsub.f32 %v524, %v539
      %v558 = vsub.f32 %v525, %v542
      %v559 = vsub.f32 %v526, %v545
      %v560 = vsub.f32 %v527, %v548
      %v561 = vsub.f32 %v528, %v551
      %v562 = vsub.f32 %v529, %v554
      %v563 = vmul.f32 %v555, 1.442695
      %v564 = vpow.pop %v563
      %v565 = vmul.f32 %v556, 1.442695
      %v566 = vpow.pop %v565
      %v567 = vmul.f32 %v557, 1.442695
      %v568 = vpow.pop %v567
      %v569 = vmul.f32 %v558, 1.442695
      %v570 = vpow.pop %v569
      %v571 = vmul.f32 %v559, 1.442695
      %v572 = vpow.pop %v571
      %v573 = vmul.f32 %v560, 1.442695
      %v574 = vpow.pop %v573
      %v575 = vmul.f32 %v561, 1.442695
      %v576 = vpow.pop %v575
      %v577 = vmul.f32 %v562, 1.442695
      %v578 = vpow.pop %v577
      %v579 = vsel %vm530, %v564, 0.0
      %580 = vadd.xlane.f32.xlu0 %v579
      %v581 = vpop.xlane.xlu0 %580
      %v582 = vsel %vm530, %v566, 0.0
      %583 = vadd.xlane.f32.xlu0 %v582
      %v584 = vpop.xlane.xlu0 %583
      %v585 = vsel %vm530, %v568, 0.0
      %586 = vadd.xlane.f32.xlu0 %v585
      %v587 = vpop.xlane.xlu0 %586
      %v588 = vsel %vm530, %v570, 0.0
      %589 = vadd.xlane.f32.xlu0 %v588
      %v590 = vpop.xlane.xlu0 %589
      %v591 = vsel %vm530, %v572, 0.0
      %592 = vadd.xlane.f32.xlu0 %v591
      %v593 = vpop.xlane.xlu0 %592
      %v594 = vsel %vm530, %v574, 0.0
      %595 = vadd.xlane.f32.xlu0 %v594
      %v596 = vpop.xlane.xlu0 %595
      %v597 = vsel %vm530, %v576, 0.0
      %598 = vadd.xlane.f32.xlu0 %v597
      %v599 = vpop.xlane.xlu0 %598
      %v600 = vsel %vm530, %v578, 0.0
      %601 = vadd.xlane.f32.xlu0 %v600
      %v602 = vpop.xlane.xlu0 %601
      %v603 = vrcp.pop %v581
      %v604 = vrcp.pop %v584
      %v605 = vrcp.pop %v587
      %v606 = vrcp.pop %v590
      %v607 = vrcp.pop %v593
      %v608 = vrcp.pop %v596
      %v609 = vrcp.pop %v599
      %v610 = vrcp.pop %v602
      %v611 = vmul.f32 %v564, %v603
      %v612 = vmul.f32 %v566, %v604
      %v613 = vmul.f32 %v568, %v605
      %v614 = vmul.f32 %v570, %v606
      %v615 = vmul.f32 %v572, %v607
      %v616 = vmul.f32 %v574, %v608
      %v617 = vmul.f32 %v576, %v609
      %v618 = vmul.f32 %v578, %v610
      %v619 = vpack.c.bf16 %v612, %v611
      %v620 = vpack.c.bf16 %v614, %v613
      %v621 = vpack.c.bf16 %v616, %v615
      %v622 = vpack.c.bf16 %v618, %v617
      %v625 = vunpack.c.l.b16 %v275
      %v626 = vunpack.c.l.b16 %v276
      %v627 = vpack.c.b16 %v626, %v625
      %v630 = vsel %vm530, %v619, 0
      %632 = vmatprep.subr.bf16.mxu0 0
      %633 = vmatpush1.bf16.msra.mxu0 %v627
      %634 = vmatprep.subr.bf16.mxu0 0
      %635 = vmatpush1.bf16.msra.mxu0 0
      %636 = vmatprep.subr.bf16.mxu0 0
      %637 = vmatpush1.bf16.msra.mxu0 0
      %638 = vmatprep.subr.bf16.mxu0 0
      %639 = vmatpush1.bf16.msra.mxu0 0
      %640 = vmatprep.subr.bf16.mxu0 0
      %641 = vmatpush1.bf16.msra.mxu0 0
      %642 = vmatprep.subr.bf16.mxu0 0
      %643 = vmatpush1.bf16.msra.mxu0 0
      %644 = vmatprep.subr.bf16.mxu0 0
      %645 = vmatpush1.bf16.msra.mxu0 0
      %646 = vmatprep.subr.bf16.mxu0 0
      %647 = vmatpush1.bf16.msra.mxu0 0
      %648 = vmatprep.subr.bf16.mxu0 0
      %649 = vmatpush1.bf16.msra.mxu0 0
      %650 = vmatprep.subr.bf16.mxu0 0
      %651 = vmatpush1.bf16.msra.mxu0 0
      %652 = vmatprep.subr.bf16.mxu0 0
      %653 = vmatpush1.bf16.msra.mxu0 0
      %654 = vmatprep.subr.bf16.mxu0 0
      %655 = vmatpush1.bf16.msra.mxu0 0
      %656 = vmatprep.subr.bf16.mxu0 0
      %657 = vmatpush1.bf16.msra.mxu0 0
      %658 = vmatprep.subr.bf16.mxu0 0
      %659 = vmatpush1.bf16.msra.mxu0 0
      %660 = vmatprep.subr.bf16.mxu0 0
      %661 = vmatpush1.bf16.msra.mxu0 0
      %662 = vmatprep.subr.bf16.mxu0 0
      %663 = vmatpush1.bf16.msra.mxu0 0
      %664 = vmatprep.mubr.bf16.mxu0 0
      %665 = vmatmul.mubr.bf16.gmra.mrb[0].mxu0 %v630
      %v666 = vpop.f32.mrb[0].mxu0
      %v667 = vadd.f32 0.0, %v666
      %v668 = vpop.f32.mrb[0].mxu0
      %v669 = vpop.f32.mrb[0].mxu0
      %v670 = vadd.f32 0.0, %v669
      %v671 = vpop.f32.mrb[0].mxu0
      %672 = vdwg.mxu0
      %v675 = vunpack.c.l.b16 %v277
      %v676 = vunpack.c.l.b16 %v278
      %v677 = vpack.c.b16 %v676, %v675
      %v680 = vsel %vm530, %v620, 0
      %682 = vmatprep.subr.bf16.mxu0 0
      %683 = vmatpush1.bf16.msra.mxu0 %v677
      %684 = vmatprep.subr.bf16.mxu0 0
      %685 = vmatpush1.bf16.msra.mxu0 0
      %686 = vmatprep.subr.bf16.mxu0 0
      %687 = vmatpush1.bf16.msra.mxu0 0
      %688 = vmatprep.subr.bf16.mxu0 0
      %689 = vmatpush1.bf16.msra.mxu0 0
      %690 = vmatprep.subr.bf16.mxu0 0
      %691 = vmatpush1.bf16.msra.mxu0 0
      %692 = vmatprep.subr.bf16.mxu0 0
      %693 = vmatpush1.bf16.msra.mxu0 0
      %694 = vmatprep.subr.bf16.mxu0 0
      %695 = vmatpush1.bf16.msra.mxu0 0
      %696 = vmatprep.subr.bf16.mxu0 0
      %697 = vmatpush1.bf16.msra.mxu0 0
      %698 = vmatprep.subr.bf16.mxu0 0
      %699 = vmatpush1.bf16.msra.mxu0 0
      %700 = vmatprep.subr.bf16.mxu0 0
      %701 = vmatpush1.bf16.msra.mxu0 0
      %702 = vmatprep.subr.bf16.mxu0 0
      %703 = vmatpush1.bf16.msra.mxu0 0
      %704 = vmatprep.subr.bf16.mxu0 0
      %705 = vmatpush1.bf16.msra.mxu0 0
      %706 = vmatprep.subr.bf16.mxu0 0
      %707 = vmatpush1.bf16.msra.mxu0 0
      %708 = vmatprep.subr.bf16.mxu0 0
      %709 = vmatpush1.bf16.msra.mxu0 0
      %710 = vmatprep.subr.bf16.mxu0 0
      %711 = vmatpush1.bf16.msra.mxu0 0
      %712 = vmatprep.subr.bf16.mxu0 0
      %713 = vmatpush1.bf16.msra.mxu0 0
      %714 = vmatprep.mubr.bf16.mxu0 0
      %715 = vmatmul.mubr.bf16.gmra.mrb[0].mxu0 %v680
      %v716 = vpop.f32.mrb[0].mxu0
      %v717 = vadd.f32 0.0, %v716
      %v718 = vpop.f32.mrb[0].mxu0
      %v719 = vpop.f32.mrb[0].mxu0
      %v720 = vadd.f32 0.0, %v719
      %v721 = vpop.f32.mrb[0].mxu0
      %722 = vdwg.mxu0
      %v725 = vunpack.c.l.b16 %v279
      %v726 = vunpack.c.l.b16 %v280
      %v727 = vpack.c.b16 %v726, %v725
      %v730 = vsel %vm530, %v621, 0
      %732 = vmatprep.subr.bf16.mxu0 0
      %733 = vmatpush1.bf16.msra.mxu0 %v727
      %734 = vmatprep.subr.bf16.mxu0 0
      %735 = vmatpush1.bf16.msra.mxu0 0
      %736 = vmatprep.subr.bf16.mxu0 0
      %737 = vmatpush1.bf16.msra.mxu0 0
      %738 = vmatprep.subr.bf16.mxu0 0
      %739 = vmatpush1.bf16.msra.mxu0 0
      %740 = vmatprep.subr.bf16.mxu0 0
      %741 = vmatpush1.bf16.msra.mxu0 0
      %742 = vmatprep.subr.bf16.mxu0 0
      %743 = vmatpush1.bf16.msra.mxu0 0
      %744 = vmatprep.subr.bf16.mxu0 0
      %745 = vmatpush1.bf16.msra.mxu0 0
      %746 = vmatprep.subr.bf16.mxu0 0
      %747 = vmatpush1.bf16.msra.mxu0 0
      %748 = vmatprep.subr.bf16.mxu0 0
      %749 = vmatpush1.bf16.msra.mxu0 0
      %750 = vmatprep.subr.bf16.mxu0 0
      %751 = vmatpush1.bf16.msra.mxu0 0
      %752 = vmatprep.subr.bf16.mxu0 0
      %753 = vmatpush1.bf16.msra.mxu0 0
      %754 = vmatprep.subr.bf16.mxu0 0
      %755 = vmatpush1.bf16.msra.mxu0 0
      %756 = vmatprep.subr.bf16.mxu0 0
      %757 = vmatpush1.bf16.msra.mxu0 0
      %758 = vmatprep.subr.bf16.mxu0 0
      %759 = vmatpush1.bf16.msra.mxu0 0
      %760 = vmatprep.subr.bf16.mxu0 0
      %761 = vmatpush1.bf16.msra.mxu0 0
      %762 = vmatprep.subr.bf16.mxu0 0
      %763 = vmatpush1.bf16.msra.mxu0 0
      %764 = vmatprep.mubr.bf16.mxu0 0
      %765 = vmatmul.mubr.bf16.gmra.mrb[0].mxu0 %v730
      %v766 = vpop.f32.mrb[0].mxu0
      %v767 = vadd.f32 0.0, %v766
      %v768 = vpop.f32.mrb[0].mxu0
      %v769 = vpop.f32.mrb[0].mxu0
      %v770 = vadd.f32 0.0, %v769
      %v771 = vpop.f32.mrb[0].mxu0
      %772 = vdwg.mxu0
      %v775 = vunpack.c.l.b16 %v281
      %v776 = vunpack.c.l.b16 %v282
      %v777 = vpack.c.b16 %v776, %v775
      %v780 = vsel %vm530, %v622, 0
      %782 = vmatprep.subr.bf16.mxu0 0
      %783 = vmatpush1.bf16.msra.mxu0 %v777
      %784 = vmatprep.subr.bf16.mxu0 0
      %785 = vmatpush1.bf16.msra.mxu0 0
      %786 = vmatprep.subr.bf16.mxu0 0
      %787 = vmatpush1.bf16.msra.mxu0 0
      %788 = vmatprep.subr.bf16.mxu0 0
      %789 = vmatpush1.bf16.msra.mxu0 0
      %790 = vmatprep.subr.bf16.mxu0 0
      %791 = vmatpush1.bf16.msra.mxu0 0
      %792 = vmatprep.subr.bf16.mxu0 0
      %793 = vmatpush1.bf16.msra.mxu0 0
      %794 = vmatprep.subr.bf16.mxu0 0
      %795 = vmatpush1.bf16.msra.mxu0 0
      %796 = vmatprep.subr.bf16.mxu0 0
      %797 = vmatpush1.bf16.msra.mxu0 0
      %798 = vmatprep.subr.bf16.mxu0 0
      %799 = vmatpush1.bf16.msra.mxu0 0
      %800 = vmatprep.subr.bf16.mxu0 0
      %801 = vmatpush1.bf16.msra.mxu0 0
      %802 = vmatprep.subr.bf16.mxu0 0
      %803 = vmatpush1.bf16.msra.mxu0 0
      %804 = vmatprep.subr.bf16.mxu0 0
      %805 = vmatpush1.bf16.msra.mxu0 0
      %806 = vmatprep.subr.bf16.mxu0 0
      %807 = vmatpush1.bf16.msra.mxu0 0
      %808 = vmatprep.subr.bf16.mxu0 0
      %809 = vmatpush1.bf16.msra.mxu0 0
      %810 = vmatprep.subr.bf16.mxu0 0
      %811 = vmatpush1.bf16.msra.mxu0 0
      %812 = vmatprep.subr.bf16.mxu0 0
      %813 = vmatpush1.bf16.msra.mxu0 0
      %814 = vmatprep.mubr.bf16.mxu0 0
      %815 = vmatmul.mubr.bf16.gmra.mrb[0].mxu0 %v780
      %v816 = vpop.f32.mrb[0].mxu0
      %v817 = vadd.f32 0.0, %v816
      %v818 = vpop.f32.mrb[0].mxu0
      %v819 = vpop.f32.mrb[0].mxu0
      %v820 = vadd.f32 0.0, %v819
      %v821 = vpop.f32.mrb[0].mxu0
      %822 = vdwg.mxu0
      %v823 = vpack.c.bf16 %v670, %v667
      %v824 = vpack.c.bf16 %v720, %v717
      %v825 = vpack.c.bf16 %v770, %v767
      %v826 = vpack.c.bf16 %v820, %v817
      %v831 = vunpack.c.l.b16 %v823
      %v832 = vunpack.c.h.b16 %v823
      %v833 = vunpack.c.l.b16 %v824
      %v834 = vunpack.c.h.b16 %v824
      %v835 = vunpack.c.l.b16 %v825
      %v836 = vunpack.c.h.b16 %v825
      %v837 = vunpack.c.l.b16 %v826
      %v838 = vunpack.c.h.b16 %v826
      %v839 = vpack.c.b16 %v831, %v831
      %v840 = vpack.c.b16 %v832, %v832
      %v841 = vpack.c.b16 %v833, %v833
      %v842 = vpack.c.b16 %v834, %v834
      %v843 = vpack.c.b16 %v835, %v835
      %v844 = vpack.c.b16 %v836, %v836
      %v845 = vpack.c.b16 %v837, %v837
      %v846 = vpack.c.b16 %v838, %v838
      %vm855 = vcmask 257024
      %856 = vst.msk [vmem:[%s257] sm:$0xf] %vm855, %v839
      %857 = vst.msk [vmem:[%s257 + $0x4] sm:$0xf] %vm855, %v840
      %858 = vst.msk [vmem:[%s257 + $0x8] sm:$0xf] %vm855, %v841
      %859 = vst.msk [vmem:[%s257 + $0xc] sm:$0xf] %vm855, %v842
      %860 = vst.msk [vmem:[%s257 + $0x10] sm:$0xf] %vm855, %v843
      %861 = vst.msk [vmem:[%s257 + $0x14] sm:$0xf] %vm855, %v844
      %862 = vst.msk [vmem:[%s257 + $0x18] sm:$0xf] %vm855, %v845
      %863 = vst.msk [vmem:[%s257 + $0x1c] sm:$0xf] %vm855, %v846
      %p864 = scmp.lt.s32.totalorder %s15, 1
      %s865 = scalar_select %p864, %s15, 1
      %s866 = smul.addr %s865, 8
      %s867 = smul.addr %s866, 4
      %s868 = scalar_lea.vmem %s4, %s867
      // Predicated region
      $region37: #{e5smollm_forward.25} parent=35 // pred_check
        %p869 = pneg %p137
      $region38: #{e5smollm_forward.25} parent=35 // pred_check_branch
        %871 = sbr.rel (%p869) target = $region40
      $region39: #{e5smollm_forward.25} parent=35 // pred_region
        _
      $region40: #{e5smollm_forward.25} parent=35 // pred_fallthru
        _
    $region36: #{e5smollm_forward.25} parent=5 // pred_fallthru
      _
    %p872 = scmp.le.s32.totalorder 2, %s10
    // Predicated region
    $region41: #{e5smollm_forward.25} parent=5 // pred_check
      %p873 = pneg %p872
    $region42: #{e5smollm_forward.25} parent=5 // pred_check_branch
      %875 = sbr.rel (%p873) target = $region44
    $region43: #{e5smollm_forward.25} parent=5 // pred_region
      %s876 = ssub.s32 %s10, 2
      // Predicated region
      $region45: #{e5smollm_forward.25} parent=43 // pred_check
        %p877 = pneg %p143
      $region46: #{e5smollm_forward.25} parent=43 // pred_check_branch
        %879 = sbr.rel (%p877) target = $region48
      $region47: #{e5smollm_forward.25} parent=43 // pred_region
        %p880 = scmp.lt.s32.totalorder %s16, 1
        %s881 = scalar_select %p880, %s16, 1
        %s882 = smul.addr %s881, 8
        %s883 = smul.addr %s882, 4
        %s884 = scalar_lea.vmem %s4, %s883
      $region48: #{e5smollm_forward.25} parent=43 // pred_fallthru
        _
    $region44: #{e5smollm_forward.25} parent=5 // pred_fallthru
      _
  $region6: #{e5smollm_forward.25} parent=0 // loop_footer
    %s14 = sadd.s32 1, %s10
  $region7: #{e5smollm_forward.25} parent=0 // loop_footer_branch
    %9 = sbr.rel target = $region3
  $region8: #{e5smollm_forward.25} parent=0 // loop_exit
    _

// kernel: e5smollm_forward.26
$region0: #{e5smollm_forward.26}
  #allocation0 [shape = 'u32[]', space=smem, size = 0x4, offset = 0x4, fixed_abs, tag = 'smem constant byte address 0x4 - core index']
  #allocation1 [shape = 'u32[144,128]{1,0:T(1,128)}', space=vmem, size = 0x12000, scoped, tag = 'internal scratch']
  %s0 = inlined_call_operand.vmem [shape: bf16[32,128], index: 0, kind: input, shape index: {}]
  %s1 = inlined_call_operand.vmem [shape: bf16[128,128], index: 1, kind: input, shape index: {}]
  %s2 = inlined_call_operand.vmem [shape: f32[1,128], index: 2, kind: input, shape index: {}]
  %s3 = inlined_call_operand.vmem [shape: bf16[32,128], index: 3, kind: input, shape index: {}]
  %s4 = inlined_call_operand.vmem [shape: f32[1,128], index: 4, kind: input, shape index: {}]
  %s5 = inlined_call_operand.vmem [shape: f32[1,128], index: 5, kind: input, shape index: {}]
  %s6 = inlined_call_operand.vmem [shape: bf16[32,128], index: 6, kind: output, shape index: {}]
  %s7 = sld [smem:[#allocation0]]
  $region57: #{e5smollm_forward.26} parent=0
    _
  %s9 = ssub.s32 1, %s7
  %s10 = scalar_select 0, %s9, %s7
  loop: start=0, step=1, limit=4
  $region2: #{e5smollm_forward.26} parent=0 // loop_pre_header
    _
  $region3: #{e5smollm_forward.26} parent=0 // loop_header
    %s12 = sphi 0, %s16
    %p13 = scmp.ge.s32.totalorder %s12, 4
    %s22 = sphi 0, %s24
    %s25 = sphi 0, %s22
    %s26 = sphi 0, %s25
    %s42 = sphi 0, %s26
    %s46 = sphi 0, %s46
    %s48 = sphi 0, %s46
    %s49 = sphi 0, %s48
    %s63 = sphi 0, %s49
    %s67 = sphi 0, %s67
    %s69 = sphi 0, %s67
    %s70 = sphi 0, %s69
    %s84 = sphi 0, %s70
    %s90 = sphi 0, %s92
    %s93 = sphi 0, %s90
    %s94 = sphi 0, %s93
    %s110 = sphi 0, %s94
    %s114 = sphi 0, %s114
    %s116 = sphi 0, %s114
    %s117 = sphi 0, %s116
    %s131 = sphi 0, %s117
    %s135 = sphi 0, %s135
    %s137 = sphi 0, %s135
    %s138 = sphi 0, %s137
    %s152 = sphi 0, %s138
    %s158 = sphi 0, %s160
    %s161 = sphi 0, %s158
    %s162 = sphi 0, %s161
    %s178 = sphi 0, %s162
  $region4: #{e5smollm_forward.26} parent=0 // loop_header_branch
    %15 = sbr.rel (%p13) target = $region8
  $region5: #{e5smollm_forward.26} parent=0 // loop_body
    %s17 = ssub.s32 %s12, 1
    %s18 = ssub.s32 %s12, 2
    %s19 = sadd.s32 %s12, 1
    %s20 = ssub.s32 %s12, %s19
    %p21 = scmp.eq.s32.totalorder %s20, 0
    %s23 = sadd.s32 %s22, 1
    %s24 = scalar_select %p21, %s22, %s23
    %p27 = pneg %p21
    %p28 = scmp.eq.s32.totalorder %s12, 1
    %p29 = por %p27, %p28
    %p30 = scmp.ne.s32.totalorder %s22, %s25
    %p31 = scmp.eq.s32.totalorder %s12, 0
    %p32 = por %p30, %p31
    %p33 = scmp.ne.s32.totalorder %s22, %s25
    %p34 = scmp.eq.s32.totalorder %s17, 1
    %p35 = por %p33, %p34
    %p36 = scmp.ne.s32.totalorder %s25, %s26
    %p37 = scmp.eq.s32.totalorder %s17, 0
    %p38 = por %p36, %p37
    %p39 = scmp.ne.s32.totalorder %s25, %s26
    %p40 = scmp.eq.s32.totalorder %s18, 1
    %p41 = por %p39, %p40
    %p43 = scmp.ne.s32.totalorder %s26, %s42
    %p44 = scmp.eq.s32.totalorder %s18, 0
    %p45 = por %p43, %p44
    %s47 = sadd.s32 %s46, 1
    %p50 = scmp.eq.s32.totalorder %s12, 1
    %p51 = scmp.ne.s32.totalorder %s46, %s48
    %p52 = scmp.eq.s32.totalorder %s12, 0
    %p53 = por %p51, %p52
    %p54 = scmp.ne.s32.totalorder %s46, %s48
    %p55 = scmp.eq.s32.totalorder %s17, 1
    %p56 = por %p54, %p55
    %p57 = scmp.ne.s32.totalorder %s48, %s49
    %p58 = scmp.eq.s32.totalorder %s17, 0
    %p59 = por %p57, %p58
    %p60 = scmp.ne.s32.totalorder %s48, %s49
    %p61 = scmp.eq.s32.totalorder %s18, 1
    %p62 = por %p60, %p61
    %p64 = scmp.ne.s32.totalorder %s49, %s63
    %p65 = scmp.eq.s32.totalorder %s18, 0
    %p66 = por %p64, %p65
    %s68 = sadd.s32 %s67, 1
    %p71 = scmp.eq.s32.totalorder %s12, 1
    %p72 = scmp.ne.s32.totalorder %s67, %s69
    %p73 = scmp.eq.s32.totalorder %s12, 0
    %p74 = por %p72, %p73
    %p75 = scmp.ne.s32.totalorder %s67, %s69
    %p76 = scmp.eq.s32.totalorder %s17, 1
    %p77 = por %p75, %p76
    %p78 = scmp.ne.s32.totalorder %s69, %s70
    %p79 = scmp.eq.s32.totalorder %s17, 0
    %p80 = por %p78, %p79
    %p81 = scmp.ne.s32.totalorder %s69, %s70
    %p82 = scmp.eq.s32.totalorder %s18, 1
    %p83 = por %p81, %p82
    %p85 = scmp.ne.s32.totalorder %s70, %s84
    %p86 = scmp.eq.s32.totalorder %s18, 0
    %p87 = por %p85, %p86
    %s88 = ssub.s32 %s12, %s19
    %p89 = scmp.eq.s32.totalorder %s88, 0
    %s91 = sadd.s32 %s90, 1
    %s92 = scalar_select %p89, %s90, %s91
    %p95 = pneg %p89
    %p96 = scmp.eq.s32.totalorder %s12, 1
    %p97 = por %p95, %p96
    %p98 = scmp.ne.s32.totalorder %s90, %s93
    %p99 = scmp.eq.s32.totalorder %s12, 0
    %p100 = por %p98, %p99
    %p101 = scmp.ne.s32.totalorder %s90, %s93
    %p102 = scmp.eq.s32.totalorder %s17, 1
    %p103 = por %p101, %p102
    %p104 = scmp.ne.s32.totalorder %s93, %s94
    %p105 = scmp.eq.s32.totalorder %s17, 0
    %p106 = por %p104, %p105
    %p107 = scmp.ne.s32.totalorder %s93, %s94
    %p108 = scmp.eq.s32.totalorder %s18, 1
    %p109 = por %p107, %p108
    %p111 = scmp.ne.s32.totalorder %s94, %s110
    %p112 = scmp.eq.s32.totalorder %s18, 0
    %p113 = por %p111, %p112
    %s115 = sadd.s32 %s114, 1
    %p118 = scmp.eq.s32.totalorder %s12, 1
    %p119 = scmp.ne.s32.totalorder %s114, %s116
    %p120 = scmp.eq.s32.totalorder %s12, 0
    %p121 = por %p119, %p120
    %p122 = scmp.ne.s32.totalorder %s114, %s116
    %p123 = scmp.eq.s32.totalorder %s17, 1
    %p124 = por %p122, %p123
    %p125 = scmp.ne.s32.totalorder %s116, %s117
    %p126 = scmp.eq.s32.totalorder %s17, 0
    %p127 = por %p125, %p126
    %p128 = scmp.ne.s32.totalorder %s116, %s117
    %p129 = scmp.eq.s32.totalorder %s18, 1
    %p130 = por %p128, %p129
    %p132 = scmp.ne.s32.totalorder %s117, %s131
    %p133 = scmp.eq.s32.totalorder %s18, 0
    %p134 = por %p132, %p133
    %s136 = sadd.s32 %s135, 1
    %p139 = scmp.eq.s32.totalorder %s12, 1
    %p140 = scmp.ne.s32.totalorder %s135, %s137
    %p141 = scmp.eq.s32.totalorder %s12, 0
    %p142 = por %p140, %p141
    %p143 = scmp.ne.s32.totalorder %s135, %s137
    %p144 = scmp.eq.s32.totalorder %s17, 1
    %p145 = por %p143, %p144
    %p146 = scmp.ne.s32.totalorder %s137, %s138
    %p147 = scmp.eq.s32.totalorder %s17, 0
    %p148 = por %p146, %p147
    %p149 = scmp.ne.s32.totalorder %s137, %s138
    %p150 = scmp.eq.s32.totalorder %s18, 1
    %p151 = por %p149, %p150
    %p153 = scmp.ne.s32.totalorder %s138, %s152
    %p154 = scmp.eq.s32.totalorder %s18, 0
    %p155 = por %p153, %p154
    %s156 = ssub.s32 %s12, %s19
    %p157 = scmp.eq.s32.totalorder %s156, 0
    %s159 = sadd.s32 %s158, 1
    %s160 = scalar_select %p157, %s158, %s159
    %p163 = pneg %p157
    %p164 = scmp.eq.s32.totalorder %s12, 1
    %p165 = por %p163, %p164
    %p166 = scmp.ne.s32.totalorder %s158, %s161
    %p167 = scmp.eq.s32.totalorder %s12, 0
    %p168 = por %p166, %p167
    %p169 = scmp.ne.s32.totalorder %s158, %s161
    %p170 = scmp.eq.s32.totalorder %s17, 1
    %p171 = por %p169, %p170
    %p172 = scmp.ne.s32.totalorder %s161, %s162
    %p173 = scmp.eq.s32.totalorder %s17, 0
    %p174 = por %p172, %p173
    %p175 = scmp.ne.s32.totalorder %s161, %s162
    %p176 = scmp.eq.s32.totalorder %s18, 1
    %p177 = por %p175, %p176
    %p179 = scmp.ne.s32.totalorder %s162, %s178
    %p180 = scmp.eq.s32.totalorder %s18, 0
    %p181 = por %p179, %p180
    %p182 = scmp.le.s32.totalorder 1, %s12
    %p183 = scmp.lt.s32.totalorder %s12, 3
    %p184 = pnand %p182, %p183
    %p185 = pneg %p184
    // Predicated region
    $region9: #{e5smollm_forward.26} parent=5 // pred_check
      _
    $region10: #{e5smollm_forward.26} parent=5 // pred_check_branch
      %187 = sbr.rel (%p184) target = $region12
    $region11: #{e5smollm_forward.26} parent=5 // pred_region
      %s188 = ssub.s32 %s12, 1
      // Predicated region
      $region13: #{e5smollm_forward.26} parent=11 // pred_check
        %p189 = pneg %p59
      $region14: #{e5smollm_forward.26} parent=11 // pred_check_branch
        %191 = sbr.rel (%p189) target = $region16
      $region15: #{e5smollm_forward.26} parent=11 // pred_region
        _
      $region16: #{e5smollm_forward.26} parent=11 // pred_fallthru
        _
      // Predicated region
      $region17: #{e5smollm_forward.26} parent=11 // pred_check
        %p192 = pneg %p80
      $region18: #{e5smollm_forward.26} parent=11 // pred_check_branch
        %194 = sbr.rel (%p192) target = $region20
      $region19: #{e5smollm_forward.26} parent=11 // pred_region
        _
      $region20: #{e5smollm_forward.26} parent=11 // pred_fallthru
        _
      // Predicated region
      $region21: #{e5smollm_forward.26} parent=11 // pred_check
        %p195 = pneg %p127
      $region22: #{e5smollm_forward.26} parent=11 // pred_check_branch
        %197 = sbr.rel (%p195) target = $region24
      $region23: #{e5smollm_forward.26} parent=11 // pred_region
        _
      $region24: #{e5smollm_forward.26} parent=11 // pred_fallthru
        _
      // Predicated region
      $region25: #{e5smollm_forward.26} parent=11 // pred_check
        %p198 = pneg %p148
      $region26: #{e5smollm_forward.26} parent=11 // pred_check_branch
        %200 = sbr.rel (%p198) target = $region28
      $region27: #{e5smollm_forward.26} parent=11 // pred_region
        _
      $region28: #{e5smollm_forward.26} parent=11 // pred_fallthru
        _
    $region12: #{e5smollm_forward.26} parent=5 // pred_fallthru
      _
    %p201 = scmp.lt.s32.totalorder %s12, 2
    // Predicated region
    $region29: #{e5smollm_forward.26} parent=5 // pred_check
      %p202 = pneg %p201
    $region30: #{e5smollm_forward.26} parent=5 // pred_check_branch
      %204 = sbr.rel (%p202) target = $region32
    $region31: #{e5smollm_forward.26} parent=5 // pred_region
      // Predicated region
      $region33: #{e5smollm_forward.26} parent=31 // pred_check
        %p205 = pneg %p32
      $region34: #{e5smollm_forward.26} parent=31 // pred_check_branch
        %207 = sbr.rel (%p205) target = $region36
      $region35: #{e5smollm_forward.26} parent=31 // pred_region
        %s208 = smul.u32 2, %s12
        %p209 = scmp.lt.s32.totalorder %s208, 3
        %s210 = scalar_select %p209, %s208, 3
        %s211 = smul.addr %s210, 4
        %s212 = scalar_lea.vmem %s0, %s211
        %s213 = smul.u32 2, %s12
      $region36: #{e5smollm_forward.26} parent=31 // pred_fallthru
        _
      // Predicated region
      $region37: #{e5smollm_forward.26} parent=31 // pred_check
        %p214 = pneg %p100
      $region38: #{e5smollm_forward.26} parent=31 // pred_check_branch
        %216 = sbr.rel (%p214) target = $region40
      $region39: #{e5smollm_forward.26} parent=31 // pred_region
        %s217 = smul.u32 2, %s12
        %p218 = scmp.lt.s32.totalorder %s217, 3
        %s219 = scalar_select %p218, %s217, 3
        %s220 = smul.addr %s219, 4
        %s221 = scalar_lea.vmem %s3, %s220
        %s222 = smul.u32 2, %s12
      $region40: #{e5smollm_forward.26} parent=31 // pred_fallthru
        _
    $region32: #{e5smollm_forward.26} parent=5 // pred_fallthru
      _
    %p223 = scmp.le.s32.totalorder 1, %s12
    %p224 = scmp.lt.s32.totalorder %s12, 3
    %p225 = pnand %p223, %p224
    %p226 = pneg %p225
    // Predicated region
    $region41: #{e5smollm_forward.26} parent=5 // pred_check
      _
    $region42: #{e5smollm_forward.26} parent=5 // pred_check_branch
      %228 = sbr.rel (%p225) target = $region44
    $region43: #{e5smollm_forward.26} parent=5 // pred_region
      %s229 = ssub.s32 %s12, 1
      %s230 = smul.u32 2, %s17
      %p231 = scmp.lt.s32.totalorder %s230, 3
      %s232 = scalar_select %p231, %s230, 3
      %s233 = smul.addr %s232, 4
      %s234 = scalar_lea.vmem %s0, %s233
      %p235 = pneg %p38
      %p236 = pneg %p35
      %p237 = pneg %p59
      %p238 = pneg %p56
      %p239 = pneg %p80
      %p240 = pneg %p77
      %s241 = smul.u32 2, %s17
      %p242 = scmp.lt.s32.totalorder %s241, 3
      %s243 = scalar_select %p242, %s241, 3
      %s244 = smul.addr %s243, 4
      %s245 = scalar_lea.vmem %s3, %s244
      %p246 = pneg %p106
      %p247 = pneg %p103
      %p248 = pneg %p127
      %p249 = pneg %p124
      %p250 = pneg %p148
      %p251 = pneg %p145
      %p252 = pneg %p174
      %p253 = pneg %p171
      %s254 = smul.u32 2, %s17
      %p255 = scmp.lt.s32.totalorder %s254, 3
      %s256 = scalar_select %p255, %s254, 3
      %s257 = smul.addr %s256, 4
      %s258 = scalar_lea.vmem %s6, %s257
      %s259 = smul.u32 2, %s17
      %p260 = scmp.lt.s32.totalorder %s259, 3
      %s261 = scalar_select %p260, %s259, 3
      %s262 = smul.addr %s261, 4
      %s263 = scalar_lea.vmem %s0, %s262
      %s264 = smul.u32 2, %s17
      %s265 = smul.u32 2, %s17
      %p266 = scmp.lt.s32.totalorder %s265, 3
      %s267 = scalar_select %p266, %s265, 3
      %s268 = smul.addr %s267, 4
      %s269 = scalar_lea.vmem %s3, %s268
      %s270 = smul.u32 2, %s17
      %s271 = smul.u32 2, %s17
      %p272 = scmp.lt.s32.totalorder %s271, 3
      %s273 = scalar_select %p272, %s271, 3
      %s274 = smul.addr %s273, 4
      %s275 = scalar_lea.vmem %s6, %s274
      %s276 = smul.u32 2, %s17
      %v278 = vld [vmem:[%s263] sm:$0xf]
      %v279 = vld [vmem:[%s263 + $0x4] sm:$0xf]
      %v280 = vld [vmem:[%s1] sm:$0xf]
      %v281 = vld [vmem:[%s1 + $0x4] sm:$0xf]
      %v282 = vld [vmem:[%s1 + $0x8] sm:$0xf]
      %v283 = vld [vmem:[%s1 + $0xc] sm:$0xf]
      %v284 = vld [vmem:[%s1 + $0x10] sm:$0xf]
      %v285 = vld [vmem:[%s1 + $0x14] sm:$0xf]
      %v286 = vld [vmem:[%s1 + $0x18] sm:$0xf]
      %v287 = vld [vmem:[%s1 + $0x1c] sm:$0xf]
      %v288 = vld [vmem:[%s1 + $0x20] sm:$0xf]
      %v289 = vld [vmem:[%s1 + $0x24] sm:$0xf]
      %v290 = vld [vmem:[%s1 + $0x28] sm:$0xf]
      %v291 = vld [vmem:[%s1 + $0x2c] sm:$0xf]
      %v292 = vld [vmem:[%s1 + $0x30] sm:$0xf]
      %v293 = vld [vmem:[%s1 + $0x34] sm:$0xf]
      %v294 = vld [vmem:[%s1 + $0x38] sm:$0xf]
      %v295 = vld [vmem:[%s1 + $0x3c] sm:$0xf]
      %v296 = vld [vmem:[%s2] sm:$0x1]
      %v298 = vlaneseq
      %v299 = vshrl.u32 %v298, 7
      %v300 = vsub.s32 0, %v299
      %v301 = vrot.slane %v296, %v300
      %v305 = vunpack.c.l.b16 %v278
      %v306 = vunpack.c.l.b16 %v279
      %v307 = vpack.c.b16 %v306, %v305
      %v325 = vunpack.c.l.b16 %v280
      %v326 = vunpack.c.l.b16 %v281
      %v327 = vunpack.c.l.b16 %v282
      %v328 = vunpack.c.l.b16 %v283
      %v329 = vunpack.c.l.b16 %v284
      %v330 = vunpack.c.l.b16 %v285
      %v331 = vunpack.c.l.b16 %v286
      %v332 = vunpack.c.l.b16 %v287
      %v333 = vunpack.c.l.b16 %v288
      %v334 = vunpack.c.l.b16 %v289
      %v335 = vunpack.c.l.b16 %v290
      %v336 = vunpack.c.l.b16 %v291
      %v337 = vunpack.c.l.b16 %v292
      %v338 = vunpack.c.l.b16 %v293
      %v339 = vunpack.c.l.b16 %v294
      %v340 = vunpack.c.l.b16 %v295
      %v341 = vpack.c.b16 %v326, %v325
      %v342 = vpack.c.b16 %v328, %v327
      %v343 = vpack.c.b16 %v330, %v329
      %v344 = vpack.c.b16 %v332, %v331
      %v345 = vpack.c.b16 %v334, %v333
      %v346 = vpack.c.b16 %v336, %v335
      %v347 = vpack.c.b16 %v338, %v337
      %v348 = vpack.c.b16 %v340, %v339
      %357 = vmatprep.subr.bf16.mxu0 0
      %358 = vmatpush1.bf16.msra.mxu0 %v341
      %359 = vmatprep.subr.bf16.mxu0 0
      %360 = vmatpush1.bf16.msra.mxu0 %v342
      %361 = vmatprep.subr.bf16.mxu0 0
      %362 = vmatpush1.bf16.msra.mxu0 %v343
      %363 = vmatprep.subr.bf16.mxu0 0
      %364 = vmatpush1.bf16.msra.mxu0 %v344
      %365 = vmatprep.subr.bf16.mxu0 0
      %366 = vmatpush1.bf16.msra.mxu0 %v345
      %367 = vmatprep.subr.bf16.mxu0 0
      %368 = vmatpush1.bf16.msra.mxu0 %v346
      %369 = vmatprep.subr.bf16.mxu0 0
      %370 = vmatpush1.bf16.msra.mxu0 %v347
      %371 = vmatprep.subr.bf16.mxu0 0
      %372 = vmatpush1.bf16.msra.mxu0 %v348
      %373 = vmatprep.subr.bf16.mxu0 0
      %374 = vmatpush1.bf16.msra.mxu0 0
      %375 = vmatprep.subr.bf16.mxu0 0
      %376 = vmatpush1.bf16.msra.mxu0 0
      %377 = vmatprep.subr.bf16.mxu0 0
      %378 = vmatpush1.bf16.msra.mxu0 0
      %379 = vmatprep.subr.bf16.mxu0 0
      %380 = vmatpush1.bf16.msra.mxu0 0
      %381 = vmatprep.subr.bf16.mxu0 0
      %382 = vmatpush1.bf16.msra.mxu0 0
      %383 = vmatprep.subr.bf16.mxu0 0
      %384 = vmatpush1.bf16.msra.mxu0 0
      %385 = vmatprep.subr.bf16.mxu0 0
      %386 = vmatpush1.bf16.msra.mxu0 0
      %387 = vmatprep.subr.bf16.mxu0 0
      %388 = vmatpush1.bf16.msra.mxu0 0
      %389 = vmatprep.mubr.bf16.mxu0 0
      %390 = vmatmul.mubr.bf16.gmra.mrb[0].mxu0 %v307
      %v391 = vpop.f32.mrb[0].mxu0
      %v392 = vadd.f32 %v301, %v391
      %v393 = vpop.f32.mrb[0].mxu0
      %v394 = vpop.f32.mrb[0].mxu0
      %v395 = vadd.f32 %v301, %v394
      %v396 = vpop.f32.mrb[0].mxu0
      %397 = vdwg.mxu0
      %v398 = vld [vmem:[%s269] sm:$0xf]
      %v399 = vld [vmem:[%s269 + $0x4] sm:$0xf]
      %v400 = vunpack.c.l.bf16 %v398
      %v401 = vunpack.c.l.bf16 %v399
      %v402 = vadd.f32 %v392, %v400
      %v403 = vadd.f32 %v395, %v401
      %404 = vadd.xlane.f32.xlu0 %v402
      %v405 = vpop.xlane.xlu0 %404
      %406 = vadd.xlane.f32.xlu0 %v403
      %v407 = vpop.xlane.xlu0 %406
      %v408 = vrcp.pop 128.0
      %v409 = vmul.f32 %v405, %v408
      %v410 = vmul.f32 %v407, %v408
      %v411 = vsub.f32 %v402, %v409
      %v412 = vsub.f32 %v403, %v410
      %v413 = vmul.f32 %v411, %v411
      %v414 = vmul.f32 %v412, %v412
      %415 = vadd.xlane.f32.xlu0 %v413
      %v416 = vpop.xlane.xlu0 %415
      %417 = vadd.xlane.f32.xlu0 %v414
      %v418 = vpop.xlane.xlu0 %417
      %v419 = vmul.f32 %v416, %v408
      %v420 = vmul.f32 %v418, %v408
      %v421 = vadd.f32 %v419, 1e-12
      %v422 = vadd.f32 %v420, 1e-12
      %v423 = vrsqrt.pop %v421
      %v424 = vrsqrt.pop %v422
      %v425 = vmul.f32 %v411, %v423
      %v426 = vmul.f32 %v412, %v424
      %v427 = vld [vmem:[%s4] sm:$0x1]
      %v429 = vlaneseq
      %v430 = vshrl.u32 %v429, 7
      %v431 = vsub.s32 0, %v430
      %v432 = vrot.slane %v427, %v431
      %v434 = vmul.f32 %v425, %v432
      %v435 = vmul.f32 %v426, %v432
      %v436 = vld [vmem:[%s5] sm:$0x1]
      %v438 = vlaneseq
      %v439 = vshrl.u32 %v438, 7
      %v440 = vsub.s32 0, %v439
      %v441 = vrot.slane %v436, %v440
      %v443 = vadd.f32 %v434, %v441
      %v444 = vadd.f32 %v435, %v441
      %v445 = vpack.c.bf16 %v444, %v443
      %v447 = vunpack.c.l.b16 %v445
      %v448 = vunpack.c.h.b16 %v445
      %v449 = vpack.c.b16 %v447, %v447
      %v450 = vpack.c.b16 %v448, %v448
      %453 = vst [vmem:[%s275] sm:$0xf] %v449
      %454 = vst [vmem:[%s275 + $0x4] sm:$0xf] %v450
      %s455 = smul.u32 2, %s17
      %p456 = scmp.lt.s32.totalorder %s455, 3
      %s457 = scalar_select %p456, %s455, 3
      %s458 = smul.addr %s457, 4
      %s459 = scalar_lea.vmem %s6, %s458
      // Predicated region
      $region45: #{e5smollm_forward.26} parent=43 // pred_check
        %p460 = pneg %p171
      $region46: #{e5smollm_forward.26} parent=43 // pred_check_branch
        %462 = sbr.rel (%p460) target = $region48
      $region47: #{e5smollm_forward.26} parent=43 // pred_region
        %s463 = smul.u32 2, %s17
      $region48: #{e5smollm_forward.26} parent=43 // pred_fallthru
        _
    $region44: #{e5smollm_forward.26} parent=5 // pred_fallthru
      _
    %p464 = scmp.le.s32.totalorder 2, %s12
    // Predicated region
    $region49: #{e5smollm_forward.26} parent=5 // pred_check
      %p465 = pneg %p464
    $region50: #{e5smollm_forward.26} parent=5 // pred_check_branch
      %467 = sbr.rel (%p465) target = $region52
    $region51: #{e5smollm_forward.26} parent=5 // pred_region
      %s468 = ssub.s32 %s12, 2
      // Predicated region
      $region53: #{e5smollm_forward.26} parent=51 // pred_check
        %p469 = pneg %p177
      $region54: #{e5smollm_forward.26} parent=51 // pred_check_branch
        %471 = sbr.rel (%p469) target = $region56
      $region55: #{e5smollm_forward.26} parent=51 // pred_region
        %s472 = smul.u32 2, %s18
        %p473 = scmp.lt.s32.totalorder %s472, 3
        %s474 = scalar_select %p473, %s472, 3
        %s475 = smul.addr %s474, 4
        %s476 = scalar_lea.vmem %s6, %s475
      $region56: #{e5smollm_forward.26} parent=51 // pred_fallthru
        _
    $region52: #{e5smollm_forward.26} parent=5 // pred_fallthru
      _
  $region6: #{e5smollm_forward.26} parent=0 // loop_footer
    %s16 = sadd.s32 1, %s12
  $region7: #{e5smollm_forward.26} parent=0 // loop_footer_branch
    %11 = sbr.rel target = $region3
  $region8: #{e5smollm_forward.26} parent=0 // loop_exit
    _

// kernel: e5smollm_forward.27
$region0: #{e5smollm_forward.27}
  #allocation0 [shape = 'u32[]', space=smem, size = 0x4, offset = 0x4, fixed_abs, tag = 'smem constant byte address 0x4 - core index']
  #allocation1 [shape = 'u32[144,128]{1,0:T(1,128)}', space=vmem, size = 0x12000, scoped, tag = 'internal scratch']
  %s0 = inlined_call_operand.vmem [shape: bf16[32,128], index: 0, kind: input, shape index: {}]
  %s1 = inlined_call_operand.vmem [shape: bf16[128,256], index: 1, kind: input, shape index: {}]
  %s2 = inlined_call_operand.vmem [shape: f32[1,256], index: 2, kind: input, shape index: {}]
  %s3 = inlined_call_operand.vmem [shape: bf16[32,256], index: 3, kind: output, shape index: {}]
  %s4 = sld [smem:[#allocation0]]
  $region45: #{e5smollm_forward.27} parent=0
    _
  %s6 = ssub.s32 1, %s4
  %s7 = scalar_select 0, %s6, %s4
  loop: start=0, step=1, limit=4
  $region2: #{e5smollm_forward.27} parent=0 // loop_pre_header
    _
  $region3: #{e5smollm_forward.27} parent=0 // loop_header
    %s9 = sphi 0, %s13
    %p10 = scmp.ge.s32.totalorder %s9, 4
    %s19 = sphi 0, %s21
    %s22 = sphi 0, %s19
    %s23 = sphi 0, %s22
    %s39 = sphi 0, %s23
    %s43 = sphi 0, %s43
    %s45 = sphi 0, %s43
    %s46 = sphi 0, %s45
    %s60 = sphi 0, %s46
    %s64 = sphi 0, %s64
    %s66 = sphi 0, %s64
    %s67 = sphi 0, %s66
    %s81 = sphi 0, %s67
    %s87 = sphi 0, %s89
    %s90 = sphi 0, %s87
    %s91 = sphi 0, %s90
    %s107 = sphi 0, %s91
  $region4: #{e5smollm_forward.27} parent=0 // loop_header_branch
    %12 = sbr.rel (%p10) target = $region8
  $region5: #{e5smollm_forward.27} parent=0 // loop_body
    %s14 = ssub.s32 %s9, 1
    %s15 = ssub.s32 %s9, 2
    %s16 = sadd.s32 %s9, 1
    %s17 = ssub.s32 %s9, %s16
    %p18 = scmp.eq.s32.totalorder %s17, 0
    %s20 = sadd.s32 %s19, 1
    %s21 = scalar_select %p18, %s19, %s20
    %p24 = pneg %p18
    %p25 = scmp.eq.s32.totalorder %s9, 1
    %p26 = por %p24, %p25
    %p27 = scmp.ne.s32.totalorder %s19, %s22
    %p28 = scmp.eq.s32.totalorder %s9, 0
    %p29 = por %p27, %p28
    %p30 = scmp.ne.s32.totalorder %s19, %s22
    %p31 = scmp.eq.s32.totalorder %s14, 1
    %p32 = por %p30, %p31
    %p33 = scmp.ne.s32.totalorder %s22, %s23
    %p34 = scmp.eq.s32.totalorder %s14, 0
    %p35 = por %p33, %p34
    %p36 = scmp.ne.s32.totalorder %s22, %s23
    %p37 = scmp.eq.s32.totalorder %s15, 1
    %p38 = por %p36, %p37
    %p40 = scmp.ne.s32.totalorder %s23, %s39
    %p41 = scmp.eq.s32.totalorder %s15, 0
    %p42 = por %p40, %p41
    %s44 = sadd.s32 %s43, 1
    %p47 = scmp.eq.s32.totalorder %s9, 1
    %p48 = scmp.ne.s32.totalorder %s43, %s45
    %p49 = scmp.eq.s32.totalorder %s9, 0
    %p50 = por %p48, %p49
    %p51 = scmp.ne.s32.totalorder %s43, %s45
    %p52 = scmp.eq.s32.totalorder %s14, 1
    %p53 = por %p51, %p52
    %p54 = scmp.ne.s32.totalorder %s45, %s46
    %p55 = scmp.eq.s32.totalorder %s14, 0
    %p56 = por %p54, %p55
    %p57 = scmp.ne.s32.totalorder %s45, %s46
    %p58 = scmp.eq.s32.totalorder %s15, 1
    %p59 = por %p57, %p58
    %p61 = scmp.ne.s32.totalorder %s46, %s60
    %p62 = scmp.eq.s32.totalorder %s15, 0
    %p63 = por %p61, %p62
    %s65 = sadd.s32 %s64, 1
    %p68 = scmp.eq.s32.totalorder %s9, 1
    %p69 = scmp.ne.s32.totalorder %s64, %s66
    %p70 = scmp.eq.s32.totalorder %s9, 0
    %p71 = por %p69, %p70
    %p72 = scmp.ne.s32.totalorder %s64, %s66
    %p73 = scmp.eq.s32.totalorder %s14, 1
    %p74 = por %p72, %p73
    %p75 = scmp.ne.s32.totalorder %s66, %s67
    %p76 = scmp.eq.s32.totalorder %s14, 0
    %p77 = por %p75, %p76
    %p78 = scmp.ne.s32.totalorder %s66, %s67
    %p79 = scmp.eq.s32.totalorder %s15, 1
    %p80 = por %p78, %p79
    %p82 = scmp.ne.s32.totalorder %s67, %s81
    %p83 = scmp.eq.s32.totalorder %s15, 0
    %p84 = por %p82, %p83
    %s85 = ssub.s32 %s9, %s16
    %p86 = scmp.eq.s32.totalorder %s85, 0
    %s88 = sadd.s32 %s87, 1
    %s89 = scalar_select %p86, %s87, %s88
    %p92 = pneg %p86
    %p93 = scmp.eq.s32.totalorder %s9, 1
    %p94 = por %p92, %p93
    %p95 = scmp.ne.s32.totalorder %s87, %s90
    %p96 = scmp.eq.s32.totalorder %s9, 0
    %p97 = por %p95, %p96
    %p98 = scmp.ne.s32.totalorder %s87, %s90
    %p99 = scmp.eq.s32.totalorder %s14, 1
    %p100 = por %p98, %p99
    %p101 = scmp.ne.s32.totalorder %s90, %s91
    %p102 = scmp.eq.s32.totalorder %s14, 0
    %p103 = por %p101, %p102
    %p104 = scmp.ne.s32.totalorder %s90, %s91
    %p105 = scmp.eq.s32.totalorder %s15, 1
    %p106 = por %p104, %p105
    %p108 = scmp.ne.s32.totalorder %s91, %s107
    %p109 = scmp.eq.s32.totalorder %s15, 0
    %p110 = por %p108, %p109
    %p111 = scmp.le.s32.totalorder 1, %s9
    %p112 = scmp.lt.s32.totalorder %s9, 3
    %p113 = pnand %p111, %p112
    %p114 = pneg %p113
    // Predicated region
    $region9: #{e5smollm_forward.27} parent=5 // pred_check
      _
    $region10: #{e5smollm_forward.27} parent=5 // pred_check_branch
      %116 = sbr.rel (%p113) target = $region12
    $region11: #{e5smollm_forward.27} parent=5 // pred_region
      %s117 = ssub.s32 %s9, 1
      // Predicated region
      $region13: #{e5smollm_forward.27} parent=11 // pred_check
        %p118 = pneg %p56
      $region14: #{e5smollm_forward.27} parent=11 // pred_check_branch
        %120 = sbr.rel (%p118) target = $region16
      $region15: #{e5smollm_forward.27} parent=11 // pred_region
        _
      $region16: #{e5smollm_forward.27} parent=11 // pred_fallthru
        _
      // Predicated region
      $region17: #{e5smollm_forward.27} parent=11 // pred_check
        %p121 = pneg %p77
      $region18: #{e5smollm_forward.27} parent=11 // pred_check_branch
        %123 = sbr.rel (%p121) target = $region20
      $region19: #{e5smollm_forward.27} parent=11 // pred_region
        _
      $region20: #{e5smollm_forward.27} parent=11 // pred_fallthru
        _
    $region12: #{e5smollm_forward.27} parent=5 // pred_fallthru
      _
    %p124 = scmp.lt.s32.totalorder %s9, 2
    // Predicated region
    $region21: #{e5smollm_forward.27} parent=5 // pred_check
      %p125 = pneg %p124
    $region22: #{e5smollm_forward.27} parent=5 // pred_check_branch
      %127 = sbr.rel (%p125) target = $region24
    $region23: #{e5smollm_forward.27} parent=5 // pred_region
      // Predicated region
      $region25: #{e5smollm_forward.27} parent=23 // pred_check
        %p128 = pneg %p29
      $region26: #{e5smollm_forward.27} parent=23 // pred_check_branch
        %130 = sbr.rel (%p128) target = $region28
      $region27: #{e5smollm_forward.27} parent=23 // pred_region
        %s131 = smul.u32 2, %s9
        %p132 = scmp.lt.s32.totalorder %s131, 3
        %s133 = scalar_select %p132, %s131, 3
        %s134 = smul.addr %s133, 4
        %s135 = scalar_lea.vmem %s0, %s134
        %s136 = smul.u32 2, %s9
      $region28: #{e5smollm_forward.27} parent=23 // pred_fallthru
        _
    $region24: #{e5smollm_forward.27} parent=5 // pred_fallthru
      _
    %p137 = scmp.le.s32.totalorder 1, %s9
    %p138 = scmp.lt.s32.totalorder %s9, 3
    %p139 = pnand %p137, %p138
    %p140 = pneg %p139
    // Predicated region
    $region29: #{e5smollm_forward.27} parent=5 // pred_check
      _
    $region30: #{e5smollm_forward.27} parent=5 // pred_check_branch
      %142 = sbr.rel (%p139) target = $region32
    $region31: #{e5smollm_forward.27} parent=5 // pred_region
      %s143 = ssub.s32 %s9, 1
      %s144 = smul.u32 2, %s14
      %p145 = scmp.lt.s32.totalorder %s144, 3
      %s146 = scalar_select %p145, %s144, 3
      %s147 = smul.addr %s146, 4
      %s148 = scalar_lea.vmem %s0, %s147
      %p149 = pneg %p35
      %p150 = pneg %p32
      %p151 = pneg %p56
      %p152 = pneg %p53
      %p153 = pneg %p77
      %p154 = pneg %p74
      %p155 = pneg %p103
      %p156 = pneg %p100
      %s157 = smul.u32 2, %s14
      %p158 = scmp.lt.s32.totalorder %s157, 3
      %s159 = scalar_select %p158, %s157, 3
      %s160 = smul.addr %s159, 2
      %s161 = smul.addr %s160, 4
      %s162 = scalar_lea.vmem %s3, %s161
      %s163 = smul.u32 2, %s14
      %p164 = scmp.lt.s32.totalorder %s163, 3
      %s165 = scalar_select %p164, %s163, 3
      %s166 = smul.addr %s165, 4
      %s167 = scalar_lea.vmem %s0, %s166
      %s168 = smul.u32 2, %s14
      %s169 = smul.u32 2, %s14
      %p170 = scmp.lt.s32.totalorder %s169, 3
      %s171 = scalar_select %p170, %s169, 3
      %s172 = smul.addr %s171, 2
      %s173 = smul.addr %s172, 4
      %s174 = scalar_lea.vmem %s3, %s173
      %s175 = smul.u32 2, %s14
      %v177 = vld [vmem:[%s167] sm:$0xf]
      %v178 = vld [vmem:[%s167 + $0x4] sm:$0xf]
      %v179 = vld [vmem:[%s1] sm:$0xff]
      %v180 = vld [vmem:[%s1 + $0x8] sm:$0xff]
      %v181 = vld [vmem:[%s1 + $0x10] sm:$0xff]
      %v182 = vld [vmem:[%s1 + $0x18] sm:$0xff]
      %v183 = vld [vmem:[%s1 + $0x20] sm:$0xff]
      %v184 = vld [vmem:[%s1 + $0x28] sm:$0xff]
      %v185 = vld [vmem:[%s1 + $0x30] sm:$0xff]
      %v186 = vld [vmem:[%s1 + $0x38] sm:$0xff]
      %v187 = vld [vmem:[%s1 + $0x40] sm:$0xff]
      %v188 = vld [vmem:[%s1 + $0x48] sm:$0xff]
      %v189 = vld [vmem:[%s1 + $0x50] sm:$0xff]
      %v190 = vld [vmem:[%s1 + $0x58] sm:$0xff]
      %v191 = vld [vmem:[%s1 + $0x60] sm:$0xff]
      %v192 = vld [vmem:[%s1 + $0x68] sm:$0xff]
      %v193 = vld [vmem:[%s1 + $0x70] sm:$0xff]
      %v194 = vld [vmem:[%s1 + $0x78] sm:$0xff]
      %v195 = vld [vmem:[%s2] sm:$0x3]
      %v197 = vlaneseq
      %v198 = vshrl.u32 %v197, 7
      %v199 = vsub.s32 0, %v198
      %v200 = vrot.slane %v195, %v199
      %v201 = vlaneseq
      %v202 = vshrl.u32 %v201, 7
      %v203 = vsub.s32 1, %v202
      %v204 = vrot.slane %v195, %v203
      %v209 = vunpack.c.l.b16 %v177
      %v210 = vunpack.c.l.b16 %v178
      %v211 = vpack.c.b16 %v210, %v209
      %v229 = vunpack.c.l.b16 %v179
      %v230 = vunpack.c.h.b16 %v179
      %v231 = vunpack.c.l.b16 %v180
      %v232 = vunpack.c.h.b16 %v180
      %v233 = vunpack.c.l.b16 %v181
      %v234 = vunpack.c.h.b16 %v181
      %v235 = vunpack.c.l.b16 %v182
      %v236 = vunpack.c.h.b16 %v182
      %v237 = vunpack.c.l.b16 %v183
      %v238 = vunpack.c.h.b16 %v183
      %v239 = vunpack.c.l.b16 %v184
      %v240 = vunpack.c.h.b16 %v184
      %v241 = vunpack.c.l.b16 %v185
      %v242 = vunpack.c.h.b16 %v185
      %v243 = vunpack.c.l.b16 %v186
      %v244 = vunpack.c.h.b16 %v186
      %v245 = vunpack.c.l.b16 %v187
      %v246 = vunpack.c.h.b16 %v187
      %v247 = vunpack.c.l.b16 %v188
      %v248 = vunpack.c.h.b16 %v188
      %v249 = vunpack.c.l.b16 %v189
      %v250 = vunpack.c.h.b16 %v189
      %v251 = vunpack.c.l.b16 %v190
      %v252 = vunpack.c.h.b16 %v190
      %v253 = vunpack.c.l.b16 %v191
      %v254 = vunpack.c.h.b16 %v191
      %v255 = vunpack.c.l.b16 %v192
      %v256 = vunpack.c.h.b16 %v192
      %v257 = vunpack.c.l.b16 %v193
      %v258 = vunpack.c.h.b16 %v193
      %v259 = vunpack.c.l.b16 %v194
      %v260 = vunpack.c.h.b16 %v194
      %v261 = vpack.c.b16 %v231, %v229
      %v262 = vpack.c.b16 %v232, %v230
      %v263 = vpack.c.b16 %v235, %v233
      %v264 = vpack.c.b16 %v236, %v234
      %v265 = vpack.c.b16 %v239, %v237
      %v266 = vpack.c.b16 %v240, %v238
      %v267 = vpack.c.b16 %v243, %v241
      %v268 = vpack.c.b16 %v244, %v242
      %v269 = vpack.c.b16 %v247, %v245
      %v270 = vpack.c.b16 %v248, %v246
      %v271 = vpack.c.b16 %v251, %v249
      %v272 = vpack.c.b16 %v252, %v250
      %v273 = vpack.c.b16 %v255, %v253
      %v274 = vpack.c.b16 %v256, %v254
      %v275 = vpack.c.b16 %v259, %v257
      %v276 = vpack.c.b16 %v260, %v258
      %293 = vmatprep.subr.bf16.mxu0 %v262
      %294 = vmatpush1.bf16.msra.mxu0 %v261
      %295 = vmatprep.subr.bf16.mxu0 %v264
      %296 = vmatpush1.bf16.msra.mxu0 %v263
      %297 = vmatprep.subr.bf16.mxu0 %v266
      %298 = vmatpush1.bf16.msra.mxu0 %v265
      %299 = vmatprep.subr.bf16.mxu0 %v268
      %300 = vmatpush1.bf16.msra.mxu0 %v267
      %301 = vmatprep.subr.bf16.mxu0 %v270
      %302 = vmatpush1.bf16.msra.mxu0 %v269
      %303 = vmatprep.subr.bf16.mxu0 %v272
      %304 = vmatpush1.bf16.msra.mxu0 %v271
      %305 = vmatprep.subr.bf16.mxu0 %v274
      %306 = vmatpush1.bf16.msra.mxu0 %v273
      %307 = vmatprep.subr.bf16.mxu0 %v276
      %308 = vmatpush1.bf16.msra.mxu0 %v275
      %309 = vmatprep.subr.bf16.mxu0 0
      %310 = vmatpush1.bf16.msra.mxu0 0
      %311 = vmatprep.subr.bf16.mxu0 0
      %312 = vmatpush1.bf16.msra.mxu0 0
      %313 = vmatprep.subr.bf16.mxu0 0
      %314 = vmatpush1.bf16.msra.mxu0 0
      %315 = vmatprep.subr.bf16.mxu0 0
      %316 = vmatpush1.bf16.msra.mxu0 0
      %317 = vmatprep.subr.bf16.mxu0 0
      %318 = vmatpush1.bf16.msra.mxu0 0
      %319 = vmatprep.subr.bf16.mxu0 0
      %320 = vmatpush1.bf16.msra.mxu0 0
      %321 = vmatprep.subr.bf16.mxu0 0
      %322 = vmatpush1.bf16.msra.mxu0 0
      %323 = vmatprep.subr.bf16.mxu0 0
      %324 = vmatpush1.bf16.msra.mxu0 0
      %325 = vmatprep.mubr.bf16.mxu0 0
      %326 = vmatmul.mubr.bf16.gmra.mrb[0].mxu0 %v211
      %v327 = vpop.f32.mrb[0].mxu0
      %v328 = vadd.f32 %v200, %v327
      %v329 = vpop.f32.mrb[0].mxu0
      %v330 = vadd.f32 %v204, %v329
      %v331 = vpop.f32.mrb[0].mxu0
      %v332 = vadd.f32 %v200, %v331
      %v333 = vpop.f32.mrb[0].mxu0
      %v334 = vadd.f32 %v204, %v333
      %335 = vdwg.mxu0
      %v336 = vmul.f32 %v328, %v328
      %v337 = vmul.f32 %v330, %v330
      %v338 = vmul.f32 %v332, %v332
      %v339 = vmul.f32 %v334, %v334
      %v340 = vmul.f32 %v328, %v336
      %v341 = vmul.f32 %v330, %v337
      %v342 = vmul.f32 %v332, %v338
      %v343 = vmul.f32 %v334, %v339
      %v344 = vmul.f32 %v340, 0.044715
      %v345 = vmul.f32 %v341, 0.044715
      %v346 = vmul.f32 %v342, 0.044715
      %v347 = vmul.f32 %v343, 0.044715
      %v348 = vadd.f32 %v328, %v344
      %v349 = vadd.f32 %v330, %v345
      %v350 = vadd.f32 %v332, %v346
      %v351 = vadd.f32 %v334, %v347
      %v352 = vmul.f32 %v348, 0.7978846
      %v353 = vmul.f32 %v349, 0.7978846
      %v354 = vmul.f32 %v350, 0.7978846
      %v355 = vmul.f32 %v351, 0.7978846
      %v356 = vtanh.pop %v352
      %v357 = vtanh.pop %v353
      %v358 = vtanh.pop %v354
      %v359 = vtanh.pop %v355
      %v360 = vadd.f32 %v356, 1.0
      %v361 = vadd.f32 %v357, 1.0
      %v362 = vadd.f32 %v358, 1.0
      %v363 = vadd.f32 %v359, 1.0
      %v364 = vmul.f32 %v360, 0.5
      %v365 = vmul.f32 %v361, 0.5
      %v366 = vmul.f32 %v362, 0.5
      %v367 = vmul.f32 %v363, 0.5
      %v368 = vmul.f32 %v328, %v364
      %v369 = vmul.f32 %v330, %v365
      %v370 = vmul.f32 %v332, %v366
      %v371 = vmul.f32 %v334, %v367
      %v372 = vpack.c.bf16 %v370, %v368
      %v373 = vpack.c.bf16 %v371, %v369
      %v376 = vunpack.c.l.b16 %v372
      %v377 = vunpack.c.l.b16 %v373
      %v378 = vunpack.c.h.b16 %v372
      %v379 = vunpack.c.h.b16 %v373
      %v380 = vpack.c.b16 %v377, %v376
      %v381 = vpack.c.b16 %v379, %v378
      %384 = vst [vmem:[%s174] sm:$0xff] %v380
      %385 = vst [vmem:[%s174 + $0x8] sm:$0xff] %v381
      %s386 = smul.u32 2, %s14
      %p387 = scmp.lt.s32.totalorder %s386, 3
      %s388 = scalar_select %p387, %s386, 3
      %s389 = smul.addr %s388, 2
      %s390 = smul.addr %s389, 4
      %s391 = scalar_lea.vmem %s3, %s390
      // Predicated region
      $region33: #{e5smollm_forward.27} parent=31 // pred_check
        %p392 = pneg %p100
      $region34: #{e5smollm_forward.27} parent=31 // pred_check_branch
        %394 = sbr.rel (%p392) target = $region36
      $region35: #{e5smollm_forward.27} parent=31 // pred_region
        %s395 = smul.u32 2, %s14
      $region36: #{e5smollm_forward.27} parent=31 // pred_fallthru
        _
    $region32: #{e5smollm_forward.27} parent=5 // pred_fallthru
      _
    %p396 = scmp.le.s32.totalorder 2, %s9
    // Predicated region
    $region37: #{e5smollm_forward.27} parent=5 // pred_check
      %p397 = pneg %p396
    $region38: #{e5smollm_forward.27} parent=5 // pred_check_branch
      %399 = sbr.rel (%p397) target = $region40
    $region39: #{e5smollm_forward.27} parent=5 // pred_region
      %s400 = ssub.s32 %s9, 2
      // Predicated region
      $region41: #{e5smollm_forward.27} parent=39 // pred_check
        %p401 = pneg %p106
      $region42: #{e5smollm_forward.27} parent=39 // pred_check_branch
        %403 = sbr.rel (%p401) target = $region44
      $region43: #{e5smollm_forward.27} parent=39 // pred_region
        %s404 = smul.u32 2, %s15
        %p405 = scmp.lt.s32.totalorder %s404, 3
        %s406 = scalar_select %p405, %s404, 3
        %s407 = smul.addr %s406, 2
        %s408 = smul.addr %s407, 4
        %s409 = scalar_lea.vmem %s3, %s408
      $region44: #{e5smollm_forward.27} parent=39 // pred_fallthru
        _
    $region40: #{e5smollm_forward.27} parent=5 // pred_fallthru
      _
  $region6: #{e5smollm_forward.27} parent=0 // loop_footer
    %s13 = sadd.s32 1, %s9
  $region7: #{e5smollm_forward.27} parent=0 // loop_footer_branch
    %8 = sbr.rel target = $region3
  $region8: #{e5smollm_forward.27} parent=0 // loop_exit
    _

// kernel: e5smollm_forward.28
$region0: #{e5smollm_forward.28}
  #allocation0 [shape = 'u32[]', space=smem, size = 0x4, offset = 0x4, fixed_abs, tag = 'smem constant byte address 0x4 - core index']
  #allocation1 [shape = 'u32[144,128]{1,0:T(1,128)}', space=vmem, size = 0x12000, scoped, tag = 'internal scratch']
  %s0 = inlined_call_operand.vmem [shape: bf16[32,256], index: 0, kind: input, shape index: {}]
  %s1 = inlined_call_operand.vmem [shape: bf16[256,128], index: 1, kind: input, shape index: {}]
  %s2 = inlined_call_operand.vmem [shape: f32[1,128], index: 2, kind: input, shape index: {}]
  %s3 = inlined_call_operand.vmem [shape: bf16[32,128], index: 3, kind: input, shape index: {}]
  %s4 = inlined_call_operand.vmem [shape: f32[1,128], index: 4, kind: input, shape index: {}]
  %s5 = inlined_call_operand.vmem [shape: f32[1,128], index: 5, kind: input, shape index: {}]
  %s6 = inlined_call_operand.vmem [shape: bf16[32,128], index: 6, kind: output, shape index: {}]
  %s7 = sld [smem:[#allocation0]]
  $region57: #{e5smollm_forward.28} parent=0
    _
  %s9 = ssub.s32 1, %s7
  %s10 = scalar_select 0, %s9, %s7
  loop: start=0, step=1, limit=4
  $region2: #{e5smollm_forward.28} parent=0 // loop_pre_header
    _
  $region3: #{e5smollm_forward.28} parent=0 // loop_header
    %s12 = sphi 0, %s16
    %p13 = scmp.ge.s32.totalorder %s12, 4
    %s22 = sphi 0, %s24
    %s25 = sphi 0, %s22
    %s26 = sphi 0, %s25
    %s42 = sphi 0, %s26
    %s46 = sphi 0, %s46
    %s48 = sphi 0, %s46
    %s49 = sphi 0, %s48
    %s63 = sphi 0, %s49
    %s67 = sphi 0, %s67
    %s69 = sphi 0, %s67
    %s70 = sphi 0, %s69
    %s84 = sphi 0, %s70
    %s90 = sphi 0, %s92
    %s93 = sphi 0, %s90
    %s94 = sphi 0, %s93
    %s110 = sphi 0, %s94
    %s114 = sphi 0, %s114
    %s116 = sphi 0, %s114
    %s117 = sphi 0, %s116
    %s131 = sphi 0, %s117
    %s135 = sphi 0, %s135
    %s137 = sphi 0, %s135
    %s138 = sphi 0, %s137
    %s152 = sphi 0, %s138
    %s158 = sphi 0, %s160
    %s161 = sphi 0, %s158
    %s162 = sphi 0, %s161
    %s178 = sphi 0, %s162
  $region4: #{e5smollm_forward.28} parent=0 // loop_header_branch
    %15 = sbr.rel (%p13) target = $region8
  $region5: #{e5smollm_forward.28} parent=0 // loop_body
    %s17 = ssub.s32 %s12, 1
    %s18 = ssub.s32 %s12, 2
    %s19 = sadd.s32 %s12, 1
    %s20 = ssub.s32 %s12, %s19
    %p21 = scmp.eq.s32.totalorder %s20, 0
    %s23 = sadd.s32 %s22, 1
    %s24 = scalar_select %p21, %s22, %s23
    %p27 = pneg %p21
    %p28 = scmp.eq.s32.totalorder %s12, 1
    %p29 = por %p27, %p28
    %p30 = scmp.ne.s32.totalorder %s22, %s25
    %p31 = scmp.eq.s32.totalorder %s12, 0
    %p32 = por %p30, %p31
    %p33 = scmp.ne.s32.totalorder %s22, %s25
    %p34 = scmp.eq.s32.totalorder %s17, 1
    %p35 = por %p33, %p34
    %p36 = scmp.ne.s32.totalorder %s25, %s26
    %p37 = scmp.eq.s32.totalorder %s17, 0
    %p38 = por %p36, %p37
    %p39 = scmp.ne.s32.totalorder %s25, %s26
    %p40 = scmp.eq.s32.totalorder %s18, 1
    %p41 = por %p39, %p40
    %p43 = scmp.ne.s32.totalorder %s26, %s42
    %p44 = scmp.eq.s32.totalorder %s18, 0
    %p45 = por %p43, %p44
    %s47 = sadd.s32 %s46, 1
    %p50 = scmp.eq.s32.totalorder %s12, 1
    %p51 = scmp.ne.s32.totalorder %s46, %s48
    %p52 = scmp.eq.s32.totalorder %s12, 0
    %p53 = por %p51, %p52
    %p54 = scmp.ne.s32.totalorder %s46, %s48
    %p55 = scmp.eq.s32.totalorder %s17, 1
    %p56 = por %p54, %p55
    %p57 = scmp.ne.s32.totalorder %s48, %s49
    %p58 = scmp.eq.s32.totalorder %s17, 0
    %p59 = por %p57, %p58
    %p60 = scmp.ne.s32.totalorder %s48, %s49
    %p61 = scmp.eq.s32.totalorder %s18, 1
    %p62 = por %p60, %p61
    %p64 = scmp.ne.s32.totalorder %s49, %s63
    %p65 = scmp.eq.s32.totalorder %s18, 0
    %p66 = por %p64, %p65
    %s68 = sadd.s32 %s67, 1
    %p71 = scmp.eq.s32.totalorder %s12, 1
    %p72 = scmp.ne.s32.totalorder %s67, %s69
    %p73 = scmp.eq.s32.totalorder %s12, 0
    %p74 = por %p72, %p73
    %p75 = scmp.ne.s32.totalorder %s67, %s69
    %p76 = scmp.eq.s32.totalorder %s17, 1
    %p77 = por %p75, %p76
    %p78 = scmp.ne.s32.totalorder %s69, %s70
    %p79 = scmp.eq.s32.totalorder %s17, 0
    %p80 = por %p78, %p79
    %p81 = scmp.ne.s32.totalorder %s69, %s70
    %p82 = scmp.eq.s32.totalorder %s18, 1
    %p83 = por %p81, %p82
    %p85 = scmp.ne.s32.totalorder %s70, %s84
    %p86 = scmp.eq.s32.totalorder %s18, 0
    %p87 = por %p85, %p86
    %s88 = ssub.s32 %s12, %s19
    %p89 = scmp.eq.s32.totalorder %s88, 0
    %s91 = sadd.s32 %s90, 1
    %s92 = scalar_select %p89, %s90, %s91
    %p95 = pneg %p89
    %p96 = scmp.eq.s32.totalorder %s12, 1
    %p97 = por %p95, %p96
    %p98 = scmp.ne.s32.totalorder %s90, %s93
    %p99 = scmp.eq.s32.totalorder %s12, 0
    %p100 = por %p98, %p99
    %p101 = scmp.ne.s32.totalorder %s90, %s93
    %p102 = scmp.eq.s32.totalorder %s17, 1
    %p103 = por %p101, %p102
    %p104 = scmp.ne.s32.totalorder %s93, %s94
    %p105 = scmp.eq.s32.totalorder %s17, 0
    %p106 = por %p104, %p105
    %p107 = scmp.ne.s32.totalorder %s93, %s94
    %p108 = scmp.eq.s32.totalorder %s18, 1
    %p109 = por %p107, %p108
    %p111 = scmp.ne.s32.totalorder %s94, %s110
    %p112 = scmp.eq.s32.totalorder %s18, 0
    %p113 = por %p111, %p112
    %s115 = sadd.s32 %s114, 1
    %p118 = scmp.eq.s32.totalorder %s12, 1
    %p119 = scmp.ne.s32.totalorder %s114, %s116
    %p120 = scmp.eq.s32.totalorder %s12, 0
    %p121 = por %p119, %p120
    %p122 = scmp.ne.s32.totalorder %s114, %s116
    %p123 = scmp.eq.s32.totalorder %s17, 1
    %p124 = por %p122, %p123
    %p125 = scmp.ne.s32.totalorder %s116, %s117
    %p126 = scmp.eq.s32.totalorder %s17, 0
    %p127 = por %p125, %p126
    %p128 = scmp.ne.s32.totalorder %s116, %s117
    %p129 = scmp.eq.s32.totalorder %s18, 1
    %p130 = por %p128, %p129
    %p132 = scmp.ne.s32.totalorder %s117, %s131
    %p133 = scmp.eq.s32.totalorder %s18, 0
    %p134 = por %p132, %p133
    %s136 = sadd.s32 %s135, 1
    %p139 = scmp.eq.s32.totalorder %s12, 1
    %p140 = scmp.ne.s32.totalorder %s135, %s137
    %p141 = scmp.eq.s32.totalorder %s12, 0
    %p142 = por %p140, %p141
    %p143 = scmp.ne.s32.totalorder %s135, %s137
    %p144 = scmp.eq.s32.totalorder %s17, 1
    %p145 = por %p143, %p144
    %p146 = scmp.ne.s32.totalorder %s137, %s138
    %p147 = scmp.eq.s32.totalorder %s17, 0
    %p148 = por %p146, %p147
    %p149 = scmp.ne.s32.totalorder %s137, %s138
    %p150 = scmp.eq.s32.totalorder %s18, 1
    %p151 = por %p149, %p150
    %p153 = scmp.ne.s32.totalorder %s138, %s152
    %p154 = scmp.eq.s32.totalorder %s18, 0
    %p155 = por %p153, %p154
    %s156 = ssub.s32 %s12, %s19
    %p157 = scmp.eq.s32.totalorder %s156, 0
    %s159 = sadd.s32 %s158, 1
    %s160 = scalar_select %p157, %s158, %s159
    %p163 = pneg %p157
    %p164 = scmp.eq.s32.totalorder %s12, 1
    %p165 = por %p163, %p164
    %p166 = scmp.ne.s32.totalorder %s158, %s161
    %p167 = scmp.eq.s32.totalorder %s12, 0
    %p168 = por %p166, %p167
    %p169 = scmp.ne.s32.totalorder %s158, %s161
    %p170 = scmp.eq.s32.totalorder %s17, 1
    %p171 = por %p169, %p170
    %p172 = scmp.ne.s32.totalorder %s161, %s162
    %p173 = scmp.eq.s32.totalorder %s17, 0
    %p174 = por %p172, %p173
    %p175 = scmp.ne.s32.totalorder %s161, %s162
    %p176 = scmp.eq.s32.totalorder %s18, 1
    %p177 = por %p175, %p176
    %p179 = scmp.ne.s32.totalorder %s162, %s178
    %p180 = scmp.eq.s32.totalorder %s18, 0
    %p181 = por %p179, %p180
    %p182 = scmp.le.s32.totalorder 1, %s12
    %p183 = scmp.lt.s32.totalorder %s12, 3
    %p184 = pnand %p182, %p183
    %p185 = pneg %p184
    // Predicated region
    $region9: #{e5smollm_forward.28} parent=5 // pred_check
      _
    $region10: #{e5smollm_forward.28} parent=5 // pred_check_branch
      %187 = sbr.rel (%p184) target = $region12
    $region11: #{e5smollm_forward.28} parent=5 // pred_region
      %s188 = ssub.s32 %s12, 1
      // Predicated region
      $region13: #{e5smollm_forward.28} parent=11 // pred_check
        %p189 = pneg %p59
      $region14: #{e5smollm_forward.28} parent=11 // pred_check_branch
        %191 = sbr.rel (%p189) target = $region16
      $region15: #{e5smollm_forward.28} parent=11 // pred_region
        _
      $region16: #{e5smollm_forward.28} parent=11 // pred_fallthru
        _
      // Predicated region
      $region17: #{e5smollm_forward.28} parent=11 // pred_check
        %p192 = pneg %p80
      $region18: #{e5smollm_forward.28} parent=11 // pred_check_branch
        %194 = sbr.rel (%p192) target = $region20
      $region19: #{e5smollm_forward.28} parent=11 // pred_region
        _
      $region20: #{e5smollm_forward.28} parent=11 // pred_fallthru
        _
      // Predicated region
      $region21: #{e5smollm_forward.28} parent=11 // pred_check
        %p195 = pneg %p127
      $region22: #{e5smollm_forward.28} parent=11 // pred_check_branch
        %197 = sbr.rel (%p195) target = $region24
      $region23: #{e5smollm_forward.28} parent=11 // pred_region
        _
      $region24: #{e5smollm_forward.28} parent=11 // pred_fallthru
        _
      // Predicated region
      $region25: #{e5smollm_forward.28} parent=11 // pred_check
        %p198 = pneg %p148
      $region26: #{e5smollm_forward.28} parent=11 // pred_check_branch
        %200 = sbr.rel (%p198) target = $region28
      $region27: #{e5smollm_forward.28} parent=11 // pred_region
        _
      $region28: #{e5smollm_forward.28} parent=11 // pred_fallthru
        _
    $region12: #{e5smollm_forward.28} parent=5 // pred_fallthru
      _
    %p201 = scmp.lt.s32.totalorder %s12, 2
    // Predicated region
    $region29: #{e5smollm_forward.28} parent=5 // pred_check
      %p202 = pneg %p201
    $region30: #{e5smollm_forward.28} parent=5 // pred_check_branch
      %204 = sbr.rel (%p202) target = $region32
    $region31: #{e5smollm_forward.28} parent=5 // pred_region
      // Predicated region
      $region33: #{e5smollm_forward.28} parent=31 // pred_check
        %p205 = pneg %p32
      $region34: #{e5smollm_forward.28} parent=31 // pred_check_branch
        %207 = sbr.rel (%p205) target = $region36
      $region35: #{e5smollm_forward.28} parent=31 // pred_region
        %s208 = smul.u32 2, %s12
        %p209 = scmp.lt.s32.totalorder %s208, 3
        %s210 = scalar_select %p209, %s208, 3
        %s211 = smul.addr %s210, 2
        %s212 = smul.addr %s211, 4
        %s213 = scalar_lea.vmem %s0, %s212
        %s214 = smul.u32 2, %s12
      $region36: #{e5smollm_forward.28} parent=31 // pred_fallthru
        _
      // Predicated region
      $region37: #{e5smollm_forward.28} parent=31 // pred_check
        %p215 = pneg %p100
      $region38: #{e5smollm_forward.28} parent=31 // pred_check_branch
        %217 = sbr.rel (%p215) target = $region40
      $region39: #{e5smollm_forward.28} parent=31 // pred_region
        %s218 = smul.u32 2, %s12
        %p219 = scmp.lt.s32.totalorder %s218, 3
        %s220 = scalar_select %p219, %s218, 3
        %s221 = smul.addr %s220, 4
        %s222 = scalar_lea.vmem %s3, %s221
        %s223 = smul.u32 2, %s12
      $region40: #{e5smollm_forward.28} parent=31 // pred_fallthru
        _
    $region32: #{e5smollm_forward.28} parent=5 // pred_fallthru
      _
    %p224 = scmp.le.s32.totalorder 1, %s12
    %p225 = scmp.lt.s32.totalorder %s12, 3
    %p226 = pnand %p224, %p225
    %p227 = pneg %p226
    // Predicated region
    $region41: #{e5smollm_forward.28} parent=5 // pred_check
      _
    $region42: #{e5smollm_forward.28} parent=5 // pred_check_branch
      %229 = sbr.rel (%p226) target = $region44
    $region43: #{e5smollm_forward.28} parent=5 // pred_region
      %s230 = ssub.s32 %s12, 1
      %s231 = smul.u32 2, %s17
      %p232 = scmp.lt.s32.totalorder %s231, 3
      %s233 = scalar_select %p232, %s231, 3
      %s234 = smul.addr %s233, 2
      %s235 = smul.addr %s234, 4
      %s236 = scalar_lea.vmem %s0, %s235
      %p237 = pneg %p38
      %p238 = pneg %p35
      %p239 = pneg %p59
      %p240 = pneg %p56
      %p241 = pneg %p80
      %p242 = pneg %p77
      %s243 = smul.u32 2, %s17
      %p244 = scmp.lt.s32.totalorder %s243, 3
      %s245 = scalar_select %p244, %s243, 3
      %s246 = smul.addr %s245, 4
      %s247 = scalar_lea.vmem %s3, %s246
      %p248 = pneg %p106
      %p249 = pneg %p103
      %p250 = pneg %p127
      %p251 = pneg %p124
      %p252 = pneg %p148
      %p253 = pneg %p145
      %p254 = pneg %p174
      %p255 = pneg %p171
      %s256 = smul.u32 2, %s17
      %p257 = scmp.lt.s32.totalorder %s256, 3
      %s258 = scalar_select %p257, %s256, 3
      %s259 = smul.addr %s258, 4
      %s260 = scalar_lea.vmem %s6, %s259
      %s261 = smul.u32 2, %s17
      %p262 = scmp.lt.s32.totalorder %s261, 3
      %s263 = scalar_select %p262, %s261, 3
      %s264 = smul.addr %s263, 2
      %s265 = smul.addr %s264, 4
      %s266 = scalar_lea.vmem %s0, %s265
      %s267 = smul.u32 2, %s17
      %s268 = smul.u32 2, %s17
      %p269 = scmp.lt.s32.totalorder %s268, 3
      %s270 = scalar_select %p269, %s268, 3
      %s271 = smul.addr %s270, 4
      %s272 = scalar_lea.vmem %s3, %s271
      %s273 = smul.u32 2, %s17
      %s274 = smul.u32 2, %s17
      %p275 = scmp.lt.s32.totalorder %s274, 3
      %s276 = scalar_select %p275, %s274, 3
      %s277 = smul.addr %s276, 4
      %s278 = scalar_lea.vmem %s6, %s277
      %s279 = smul.u32 2, %s17
      %v281 = vld [vmem:[%s266] sm:$0xff]
      %v282 = vld [vmem:[%s266 + $0x8] sm:$0xff]
      %v283 = vld [vmem:[%s1] sm:$0xf]
      %v284 = vld [vmem:[%s1 + $0x4] sm:$0xf]
      %v285 = vld [vmem:[%s1 + $0x8] sm:$0xf]
      %v286 = vld [vmem:[%s1 + $0xc] sm:$0xf]
      %v287 = vld [vmem:[%s1 + $0x10] sm:$0xf]
      %v288 = vld [vmem:[%s1 + $0x14] sm:$0xf]
      %v289 = vld [vmem:[%s1 + $0x18] sm:$0xf]
      %v290 = vld [vmem:[%s1 + $0x1c] sm:$0xf]
      %v291 = vld [vmem:[%s1 + $0x20] sm:$0xf]
      %v292 = vld [vmem:[%s1 + $0x24] sm:$0xf]
      %v293 = vld [vmem:[%s1 + $0x28] sm:$0xf]
      %v294 = vld [vmem:[%s1 + $0x2c] sm:$0xf]
      %v295 = vld [vmem:[%s1 + $0x30] sm:$0xf]
      %v296 = vld [vmem:[%s1 + $0x34] sm:$0xf]
      %v297 = vld [vmem:[%s1 + $0x38] sm:$0xf]
      %v298 = vld [vmem:[%s1 + $0x3c] sm:$0xf]
      %v299 = vld [vmem:[%s1 + $0x40] sm:$0xf]
      %v300 = vld [vmem:[%s1 + $0x44] sm:$0xf]
      %v301 = vld [vmem:[%s1 + $0x48] sm:$0xf]
      %v302 = vld [vmem:[%s1 + $0x4c] sm:$0xf]
      %v303 = vld [vmem:[%s1 + $0x50] sm:$0xf]
      %v304 = vld [vmem:[%s1 + $0x54] sm:$0xf]
      %v305 = vld [vmem:[%s1 + $0x58] sm:$0xf]
      %v306 = vld [vmem:[%s1 + $0x5c] sm:$0xf]
      %v307 = vld [vmem:[%s1 + $0x60] sm:$0xf]
      %v308 = vld [vmem:[%s1 + $0x64] sm:$0xf]
      %v309 = vld [vmem:[%s1 + $0x68] sm:$0xf]
      %v310 = vld [vmem:[%s1 + $0x6c] sm:$0xf]
      %v311 = vld [vmem:[%s1 + $0x70] sm:$0xf]
      %v312 = vld [vmem:[%s1 + $0x74] sm:$0xf]
      %v313 = vld [vmem:[%s1 + $0x78] sm:$0xf]
      %v314 = vld [vmem:[%s1 + $0x7c] sm:$0xf]
      %v315 = vld [vmem:[%s2] sm:$0x1]
      %v317 = vlaneseq
      %v318 = vshrl.u32 %v317, 7
      %v319 = vsub.s32 0, %v318
      %v320 = vrot.slane %v315, %v319
      %v324 = vunpack.c.l.b16 %v281
      %v325 = vunpack.c.h.b16 %v281
      %v326 = vunpack.c.l.b16 %v282
      %v327 = vunpack.c.h.b16 %v282
      %v328 = vpack.c.b16 %v326, %v324
      %v329 = vpack.c.b16 %v327, %v325
      %v364 = vunpack.c.l.b16 %v283
      %v365 = vunpack.c.l.b16 %v284
      %v366 = vunpack.c.l.b16 %v285
      %v367 = vunpack.c.l.b16 %v286
      %v368 = vunpack.c.l.b16 %v287
      %v369 = vunpack.c.l.b16 %v288
      %v370 = vunpack.c.l.b16 %v289
      %v371 = vunpack.c.l.b16 %v290
      %v372 = vunpack.c.l.b16 %v291
      %v373 = vunpack.c.l.b16 %v292
      %v374 = vunpack.c.l.b16 %v293
      %v375 = vunpack.c.l.b16 %v294
      %v376 = vunpack.c.l.b16 %v295
      %v377 = vunpack.c.l.b16 %v296
      %v378 = vunpack.c.l.b16 %v297
      %v379 = vunpack.c.l.b16 %v298
      %v380 = vunpack.c.l.b16 %v299
      %v381 = vunpack.c.l.b16 %v300
      %v382 = vunpack.c.l.b16 %v301
      %v383 = vunpack.c.l.b16 %v302
      %v384 = vunpack.c.l.b16 %v303
      %v385 = vunpack.c.l.b16 %v304
      %v386 = vunpack.c.l.b16 %v305
      %v387 = vunpack.c.l.b16 %v306
      %v388 = vunpack.c.l.b16 %v307
      %v389 = vunpack.c.l.b16 %v308
      %v390 = vunpack.c.l.b16 %v309
      %v391 = vunpack.c.l.b16 %v310
      %v392 = vunpack.c.l.b16 %v311
      %v393 = vunpack.c.l.b16 %v312
      %v394 = vunpack.c.l.b16 %v313
      %v395 = vunpack.c.l.b16 %v314
      %v396 = vpack.c.b16 %v365, %v364
      %v397 = vpack.c.b16 %v367, %v366
      %v398 = vpack.c.b16 %v369, %v368
      %v399 = vpack.c.b16 %v371, %v370
      %v400 = vpack.c.b16 %v373, %v372
      %v401 = vpack.c.b16 %v375, %v374
      %v402 = vpack.c.b16 %v377, %v376
      %v403 = vpack.c.b16 %v379, %v378
      %v404 = vpack.c.b16 %v381, %v380
      %v405 = vpack.c.b16 %v383, %v382
      %v406 = vpack.c.b16 %v385, %v384
      %v407 = vpack.c.b16 %v387, %v386
      %v408 = vpack.c.b16 %v389, %v388
      %v409 = vpack.c.b16 %v391, %v390
      %v410 = vpack.c.b16 %v393, %v392
      %v411 = vpack.c.b16 %v395, %v394
      %428 = vmatprep.subr.bf16.mxu0 0
      %429 = vmatpush1.bf16.msra.mxu0 %v396
      %430 = vmatprep.subr.bf16.mxu0 0
      %431 = vmatpush1.bf16.msra.mxu0 %v397
      %432 = vmatprep.subr.bf16.mxu0 0
      %433 = vmatpush1.bf16.msra.mxu0 %v398
      %434 = vmatprep.subr.bf16.mxu0 0
      %435 = vmatpush1.bf16.msra.mxu0 %v399
      %436 = vmatprep.subr.bf16.mxu0 0
      %437 = vmatpush1.bf16.msra.mxu0 %v400
      %438 = vmatprep.subr.bf16.mxu0 0
      %439 = vmatpush1.bf16.msra.mxu0 %v401
      %440 = vmatprep.subr.bf16.mxu0 0
      %441 = vmatpush1.bf16.msra.mxu0 %v402
      %442 = vmatprep.subr.bf16.mxu0 0
      %443 = vmatpush1.bf16.msra.mxu0 %v403
      %444 = vmatprep.subr.bf16.mxu0 0
      %445 = vmatpush1.bf16.msra.mxu0 %v404
      %446 = vmatprep.subr.bf16.mxu0 0
      %447 = vmatpush1.bf16.msra.mxu0 %v405
      %448 = vmatprep.subr.bf16.mxu0 0
      %449 = vmatpush1.bf16.msra.mxu0 %v406
      %450 = vmatprep.subr.bf16.mxu0 0
      %451 = vmatpush1.bf16.msra.mxu0 %v407
      %452 = vmatprep.subr.bf16.mxu0 0
      %453 = vmatpush1.bf16.msra.mxu0 %v408
      %454 = vmatprep.subr.bf16.mxu0 0
      %455 = vmatpush1.bf16.msra.mxu0 %v409
      %456 = vmatprep.subr.bf16.mxu0 0
      %457 = vmatpush1.bf16.msra.mxu0 %v410
      %458 = vmatprep.subr.bf16.mxu0 0
      %459 = vmatpush1.bf16.msra.mxu0 %v411
      %460 = vmatprep.mubr.bf16.mxu0 %v329
      %461 = vmatmul.mubr.bf16.gmra.mrb[0].mxu0 %v328
      %v462 = vpop.f32.mrb[0].mxu0
      %v463 = vadd.f32 %v320, %v462
      %v464 = vpop.f32.mrb[0].mxu0
      %v465 = vpop.f32.mrb[0].mxu0
      %v466 = vadd.f32 %v320, %v465
      %v467 = vpop.f32.mrb[0].mxu0
      %468 = vdwg.mxu0
      %v469 = vld [vmem:[%s272] sm:$0xf]
      %v470 = vld [vmem:[%s272 + $0x4] sm:$0xf]
      %v471 = vunpack.c.l.bf16 %v469
      %v472 = vunpack.c.l.bf16 %v470
      %v473 = vadd.f32 %v463, %v471
      %v474 = vadd.f32 %v466, %v472
      %475 = vadd.xlane.f32.xlu0 %v473
      %v476 = vpop.xlane.xlu0 %475
      %477 = vadd.xlane.f32.xlu0 %v474
      %v478 = vpop.xlane.xlu0 %477
      %v479 = vrcp.pop 128.0
      %v480 = vmul.f32 %v476, %v479
      %v481 = vmul.f32 %v478, %v479
      %v482 = vsub.f32 %v473, %v480
      %v483 = vsub.f32 %v474, %v481
      %v484 = vmul.f32 %v482, %v482
      %v485 = vmul.f32 %v483, %v483
      %486 = vadd.xlane.f32.xlu0 %v484
      %v487 = vpop.xlane.xlu0 %486
      %488 = vadd.xlane.f32.xlu0 %v485
      %v489 = vpop.xlane.xlu0 %488
      %v490 = vmul.f32 %v487, %v479
      %v491 = vmul.f32 %v489, %v479
      %v492 = vadd.f32 %v490, 1e-12
      %v493 = vadd.f32 %v491, 1e-12
      %v494 = vrsqrt.pop %v492
      %v495 = vrsqrt.pop %v493
      %v496 = vmul.f32 %v482, %v494
      %v497 = vmul.f32 %v483, %v495
      %v498 = vld [vmem:[%s4] sm:$0x1]
      %v500 = vlaneseq
      %v501 = vshrl.u32 %v500, 7
      %v502 = vsub.s32 0, %v501
      %v503 = vrot.slane %v498, %v502
      %v505 = vmul.f32 %v496, %v503
      %v506 = vmul.f32 %v497, %v503
      %v507 = vld [vmem:[%s5] sm:$0x1]
      %v509 = vlaneseq
      %v510 = vshrl.u32 %v509, 7
      %v511 = vsub.s32 0, %v510
      %v512 = vrot.slane %v507, %v511
      %v514 = vadd.f32 %v505, %v512
      %v515 = vadd.f32 %v506, %v512
      %v516 = vpack.c.bf16 %v515, %v514
      %v518 = vunpack.c.l.b16 %v516
      %v519 = vunpack.c.h.b16 %v516
      %v520 = vpack.c.b16 %v518, %v518
      %v521 = vpack.c.b16 %v519, %v519
      %524 = vst [vmem:[%s278] sm:$0xf] %v520
      %525 = vst [vmem:[%s278 + $0x4] sm:$0xf] %v521
      %s526 = smul.u32 2, %s17
      %p527 = scmp.lt.s32.totalorder %s526, 3
      %s528 = scalar_select %p527, %s526, 3
      %s529 = smul.addr %s528, 4
      %s530 = scalar_lea.vmem %s6, %s529
      // Predicated region
      $region45: #{e5smollm_forward.28} parent=43 // pred_check
        %p531 = pneg %p171
      $region46: #{e5smollm_forward.28} parent=43 // pred_check_branch
        %533 = sbr.rel (%p531) target = $region48
      $region47: #{e5smollm_forward.28} parent=43 // pred_region
        %s534 = smul.u32 2, %s17
      $region48: #{e5smollm_forward.28} parent=43 // pred_fallthru
        _
    $region44: #{e5smollm_forward.28} parent=5 // pred_fallthru
      _
    %p535 = scmp.le.s32.totalorder 2, %s12
    // Predicated region
    $region49: #{e5smollm_forward.28} parent=5 // pred_check
      %p536 = pneg %p535
    $region50: #{e5smollm_forward.28} parent=5 // pred_check_branch
      %538 = sbr.rel (%p536) target = $region52
    $region51: #{e5smollm_forward.28} parent=5 // pred_region
      %s539 = ssub.s32 %s12, 2
      // Predicated region
      $region53: #{e5smollm_forward.28} parent=51 // pred_check
        %p540 = pneg %p177
      $region54: #{e5smollm_forward.28} parent=51 // pred_check_branch
        %542 = sbr.rel (%p540) target = $region56
      $region55: #{e5smollm_forward.28} parent=51 // pred_region
        %s543 = smul.u32 2, %s18
        %p544 = scmp.lt.s32.totalorder %s543, 3
        %s545 = scalar_select %p544, %s543, 3
        %s546 = smul.addr %s545, 4
        %s547 = scalar_lea.vmem %s6, %s546
      $region56: #{e5smollm_forward.28} parent=51 // pred_fallthru
        _
    $region52: #{e5smollm_forward.28} parent=5 // pred_fallthru
      _
  $region6: #{e5smollm_forward.28} parent=0 // loop_footer
    %s16 = sadd.s32 1, %s12
  $region7: #{e5smollm_forward.28} parent=0 // loop_footer_branch
    %11 = sbr.rel target = $region3
  $region8: #{e5smollm_forward.28} parent=0 // loop_exit
    _

// kernel: e5smollm_forward.34
$region0: #{e5smollm_forward.34}
  #allocation0 [shape = 'u32[]', space=smem, size = 0x4, offset = 0x4, fixed_abs, tag = 'smem constant byte address 0x4 - core index']
  #allocation1 [shape = 'u32[144,128]{1,0:T(1,128)}', space=vmem, size = 0x12000, scoped, tag = 'internal scratch']
  %s0 = inlined_call_operand.vmem [shape: bf16[32,128], index: 0, kind: input, shape index: {}]
  %s1 = inlined_call_operand.vmem [shape: bf16[128,256], index: 1, kind: input, shape index: {}]
  %s2 = inlined_call_operand.vmem [shape: f32[1,256], index: 2, kind: input, shape index: {}]
  %s3 = inlined_call_operand.vmem [shape: bf16[32,256], index: 3, kind: output, shape index: {}]
  %s4 = sld [smem:[#allocation0]]
  $region45: #{e5smollm_forward.34} parent=0
    _
  %s6 = ssub.s32 1, %s4
  %s7 = scalar_select 0, %s6, %s4
  loop: start=0, step=1, limit=4
  $region2: #{e5smollm_forward.34} parent=0 // loop_pre_header
    _
  $region3: #{e5smollm_forward.34} parent=0 // loop_header
    %s9 = sphi 0, %s13
    %p10 = scmp.ge.s32.totalorder %s9, 4
    %s19 = sphi 0, %s21
    %s22 = sphi 0, %s19
    %s23 = sphi 0, %s22
    %s39 = sphi 0, %s23
    %s43 = sphi 0, %s43
    %s45 = sphi 0, %s43
    %s46 = sphi 0, %s45
    %s60 = sphi 0, %s46
    %s64 = sphi 0, %s64
    %s66 = sphi 0, %s64
    %s67 = sphi 0, %s66
    %s81 = sphi 0, %s67
    %s87 = sphi 0, %s89
    %s90 = sphi 0, %s87
    %s91 = sphi 0, %s90
    %s107 = sphi 0, %s91
  $region4: #{e5smollm_forward.34} parent=0 // loop_header_branch
    %12 = sbr.rel (%p10) target = $region8
  $region5: #{e5smollm_forward.34} parent=0 // loop_body
    %s14 = ssub.s32 %s9, 1
    %s15 = ssub.s32 %s9, 2
    %s16 = sadd.s32 %s9, 1
    %s17 = ssub.s32 %s9, %s16
    %p18 = scmp.eq.s32.totalorder %s17, 0
    %s20 = sadd.s32 %s19, 1
    %s21 = scalar_select %p18, %s19, %s20
    %p24 = pneg %p18
    %p25 = scmp.eq.s32.totalorder %s9, 1
    %p26 = por %p24, %p25
    %p27 = scmp.ne.s32.totalorder %s19, %s22
    %p28 = scmp.eq.s32.totalorder %s9, 0
    %p29 = por %p27, %p28
    %p30 = scmp.ne.s32.totalorder %s19, %s22
    %p31 = scmp.eq.s32.totalorder %s14, 1
    %p32 = por %p30, %p31
    %p33 = scmp.ne.s32.totalorder %s22, %s23
    %p34 = scmp.eq.s32.totalorder %s14, 0
    %p35 = por %p33, %p34
    %p36 = scmp.ne.s32.totalorder %s22, %s23
    %p37 = scmp.eq.s32.totalorder %s15, 1
    %p38 = por %p36, %p37
    %p40 = scmp.ne.s32.totalorder %s23, %s39
    %p41 = scmp.eq.s32.totalorder %s15, 0
    %p42 = por %p40, %p41
    %s44 = sadd.s32 %s43, 1
    %p47 = scmp.eq.s32.totalorder %s9, 1
    %p48 = scmp.ne.s32.totalorder %s43, %s45
    %p49 = scmp.eq.s32.totalorder %s9, 0
    %p50 = por %p48, %p49
    %p51 = scmp.ne.s32.totalorder %s43, %s45
    %p52 = scmp.eq.s32.totalorder %s14, 1
    %p53 = por %p51, %p52
    %p54 = scmp.ne.s32.totalorder %s45, %s46
    %p55 = scmp.eq.s32.totalorder %s14, 0
    %p56 = por %p54, %p55
    %p57 = scmp.ne.s32.totalorder %s45, %s46
    %p58 = scmp.eq.s32.totalorder %s15, 1
    %p59 = por %p57, %p58
    %p61 = scmp.ne.s32.totalorder %s46, %s60
    %p62 = scmp.eq.s32.totalorder %s15, 0
    %p63 = por %p61, %p62
    %s65 = sadd.s32 %s64, 1
    %p68 = scmp.eq.s32.totalorder %s9, 1
    %p69 = scmp.ne.s32.totalorder %s64, %s66
    %p70 = scmp.eq.s32.totalorder %s9, 0
    %p71 = por %p69, %p70
    %p72 = scmp.ne.s32.totalorder %s64, %s66
    %p73 = scmp.eq.s32.totalorder %s14, 1
    %p74 = por %p72, %p73
    %p75 = scmp.ne.s32.totalorder %s66, %s67
    %p76 = scmp.eq.s32.totalorder %s14, 0
    %p77 = por %p75, %p76
    %p78 = scmp.ne.s32.totalorder %s66, %s67
    %p79 = scmp.eq.s32.totalorder %s15, 1
    %p80 = por %p78, %p79
    %p82 = scmp.ne.s32.totalorder %s67, %s81
    %p83 = scmp.eq.s32.totalorder %s15, 0
    %p84 = por %p82, %p83
    %s85 = ssub.s32 %s9, %s16
    %p86 = scmp.eq.s32.totalorder %s85, 0
    %s88 = sadd.s32 %s87, 1
    %s89 = scalar_select %p86, %s87, %s88
    %p92 = pneg %p86
    %p93 = scmp.eq.s32.totalorder %s9, 1
    %p94 = por %p92, %p93
    %p95 = scmp.ne.s32.totalorder %s87, %s90
    %p96 = scmp.eq.s32.totalorder %s9, 0
    %p97 = por %p95, %p96
    %p98 = scmp.ne.s32.totalorder %s87, %s90
    %p99 = scmp.eq.s32.totalorder %s14, 1
    %p100 = por %p98, %p99
    %p101 = scmp.ne.s32.totalorder %s90, %s91
    %p102 = scmp.eq.s32.totalorder %s14, 0
    %p103 = por %p101, %p102
    %p104 = scmp.ne.s32.totalorder %s90, %s91
    %p105 = scmp.eq.s32.totalorder %s15, 1
    %p106 = por %p104, %p105
    %p108 = scmp.ne.s32.totalorder %s91, %s107
    %p109 = scmp.eq.s32.totalorder %s15, 0
    %p110 = por %p108, %p109
    %p111 = scmp.le.s32.totalorder 1, %s9
    %p112 = scmp.lt.s32.totalorder %s9, 3
    %p113 = pnand %p111, %p112
    %p114 = pneg %p113
    // Predicated region
    $region9: #{e5smollm_forward.34} parent=5 // pred_check
      _
    $region10: #{e5smollm_forward.34} parent=5 // pred_check_branch
      %116 = sbr.rel (%p113) target = $region12
    $region11: #{e5smollm_forward.34} parent=5 // pred_region
      %s117 = ssub.s32 %s9, 1
      // Predicated region
      $region13: #{e5smollm_forward.34} parent=11 // pred_check
        %p118 = pneg %p56
      $region14: #{e5smollm_forward.34} parent=11 // pred_check_branch
        %120 = sbr.rel (%p118) target = $region16
      $region15: #{e5smollm_forward.34} parent=11 // pred_region
        _
      $region16: #{e5smollm_forward.34} parent=11 // pred_fallthru
        _
      // Predicated region
      $region17: #{e5smollm_forward.34} parent=11 // pred_check
        %p121 = pneg %p77
      $region18: #{e5smollm_forward.34} parent=11 // pred_check_branch
        %123 = sbr.rel (%p121) target = $region20
      $region19: #{e5smollm_forward.34} parent=11 // pred_region
        _
      $region20: #{e5smollm_forward.34} parent=11 // pred_fallthru
        _
    $region12: #{e5smollm_forward.34} parent=5 // pred_fallthru
      _
    %p124 = scmp.lt.s32.totalorder %s9, 2
    // Predicated region
    $region21: #{e5smollm_forward.34} parent=5 // pred_check
      %p125 = pneg %p124
    $region22: #{e5smollm_forward.34} parent=5 // pred_check_branch
      %127 = sbr.rel (%p125) target = $region24
    $region23: #{e5smollm_forward.34} parent=5 // pred_region
      // Predicated region
      $region25: #{e5smollm_forward.34} parent=23 // pred_check
        %p128 = pneg %p29
      $region26: #{e5smollm_forward.34} parent=23 // pred_check_branch
        %130 = sbr.rel (%p128) target = $region28
      $region27: #{e5smollm_forward.34} parent=23 // pred_region
        %s131 = smul.u32 2, %s9
        %p132 = scmp.lt.s32.totalorder %s131, 3
        %s133 = scalar_select %p132, %s131, 3
        %s134 = smul.addr %s133, 4
        %s135 = scalar_lea.vmem %s0, %s134
        %s136 = smul.u32 2, %s9
      $region28: #{e5smollm_forward.34} parent=23 // pred_fallthru
        _
    $region24: #{e5smollm_forward.34} parent=5 // pred_fallthru
      _
    %p137 = scmp.le.s32.totalorder 1, %s9
    %p138 = scmp.lt.s32.totalorder %s9, 3
    %p139 = pnand %p137, %p138
    %p140 = pneg %p139
    // Predicated region
    $region29: #{e5smollm_forward.34} parent=5 // pred_check
      _
    $region30: #{e5smollm_forward.34} parent=5 // pred_check_branch
      %142 = sbr.rel (%p139) target = $region32
    $region31: #{e5smollm_forward.34} parent=5 // pred_region
      %s143 = ssub.s32 %s9, 1
      %s144 = smul.u32 2, %s14
      %p145 = scmp.lt.s32.totalorder %s144, 3
      %s146 = scalar_select %p145, %s144, 3
      %s147 = smul.addr %s146, 4
      %s148 = scalar_lea.vmem %s0, %s147
      %p149 = pneg %p35
      %p150 = pneg %p32
      %p151 = pneg %p56
      %p152 = pneg %p53
      %p153 = pneg %p77
      %p154 = pneg %p74
      %p155 = pneg %p103
      %p156 = pneg %p100
      %s157 = smul.u32 2, %s14
      %p158 = scmp.lt.s32.totalorder %s157, 3
      %s159 = scalar_select %p158, %s157, 3
      %s160 = smul.addr %s159, 2
      %s161 = smul.addr %s160, 4
      %s162 = scalar_lea.vmem %s3, %s161
      %s163 = smul.u32 2, %s14
      %p164 = scmp.lt.s32.totalorder %s163, 3
      %s165 = scalar_select %p164, %s163, 3
      %s166 = smul.addr %s165, 4
      %s167 = scalar_lea.vmem %s0, %s166
      %s168 = smul.u32 2, %s14
      %s169 = smul.u32 2, %s14
      %p170 = scmp.lt.s32.totalorder %s169, 3
      %s171 = scalar_select %p170, %s169, 3
      %s172 = smul.addr %s171, 2
      %s173 = smul.addr %s172, 4
      %s174 = scalar_lea.vmem %s3, %s173
      %s175 = smul.u32 2, %s14
      %v177 = vld [vmem:[%s167] sm:$0xf]
      %v178 = vld [vmem:[%s167 + $0x4] sm:$0xf]
      %v179 = vld [vmem:[%s1] sm:$0xff]
      %v180 = vld [vmem:[%s1 + $0x8] sm:$0xff]
      %v181 = vld [vmem:[%s1 + $0x10] sm:$0xff]
      %v182 = vld [vmem:[%s1 + $0x18] sm:$0xff]
      %v183 = vld [vmem:[%s1 + $0x20] sm:$0xff]
      %v184 = vld [vmem:[%s1 + $0x28] sm:$0xff]
      %v185 = vld [vmem:[%s1 + $0x30] sm:$0xff]
      %v186 = vld [vmem:[%s1 + $0x38] sm:$0xff]
      %v187 = vld [vmem:[%s1 + $0x40] sm:$0xff]
      %v188 = vld [vmem:[%s1 + $0x48] sm:$0xff]
      %v189 = vld [vmem:[%s1 + $0x50] sm:$0xff]
      %v190 = vld [vmem:[%s1 + $0x58] sm:$0xff]
      %v191 = vld [vmem:[%s1 + $0x60] sm:$0xff]
      %v192 = vld [vmem:[%s1 + $0x68] sm:$0xff]
      %v193 = vld [vmem:[%s1 + $0x70] sm:$0xff]
      %v194 = vld [vmem:[%s1 + $0x78] sm:$0xff]
      %v195 = vld [vmem:[%s2] sm:$0x3]
      %v197 = vlaneseq
      %v198 = vshrl.u32 %v197, 7
      %v199 = vsub.s32 0, %v198
      %v200 = vrot.slane %v195, %v199
      %v201 = vlaneseq
      %v202 = vshrl.u32 %v201, 7
      %v203 = vsub.s32 1, %v202
      %v204 = vrot.slane %v195, %v203
      %v209 = vunpack.c.l.b16 %v177
      %v210 = vunpack.c.l.b16 %v178
      %v211 = vpack.c.b16 %v210, %v209
      %v229 = vunpack.c.l.b16 %v179
      %v230 = vunpack.c.h.b16 %v179
      %v231 = vunpack.c.l.b16 %v180
      %v232 = vunpack.c.h.b16 %v180
      %v233 = vunpack.c.l.b16 %v181
      %v234 = vunpack.c.h.b16 %v181
      %v235 = vunpack.c.l.b16 %v182
      %v236 = vunpack.c.h.b16 %v182
      %v237 = vunpack.c.l.b16 %v183
      %v238 = vunpack.c.h.b16 %v183
      %v239 = vunpack.c.l.b16 %v184
      %v240 = vunpack.c.h.b16 %v184
      %v241 = vunpack.c.l.b16 %v185
      %v242 = vunpack.c.h.b16 %v185
      %v243 = vunpack.c.l.b16 %v186
      %v244 = vunpack.c.h.b16 %v186
      %v245 = vunpack.c.l.b16 %v187
      %v246 = vunpack.c.h.b16 %v187
      %v247 = vunpack.c.l.b16 %v188
      %v248 = vunpack.c.h.b16 %v188
      %v249 = vunpack.c.l.b16 %v189
      %v250 = vunpack.c.h.b16 %v189
      %v251 = vunpack.c.l.b16 %v190
      %v252 = vunpack.c.h.b16 %v190
      %v253 = vunpack.c.l.b16 %v191
      %v254 = vunpack.c.h.b16 %v191
      %v255 = vunpack.c.l.b16 %v192
      %v256 = vunpack.c.h.b16 %v192
      %v257 = vunpack.c.l.b16 %v193
      %v258 = vunpack.c.h.b16 %v193
      %v259 = vunpack.c.l.b16 %v194
      %v260 = vunpack.c.h.b16 %v194
      %v261 = vpack.c.b16 %v231, %v229
      %v262 = vpack.c.b16 %v232, %v230
      %v263 = vpack.c.b16 %v235, %v233
      %v264 = vpack.c.b16 %v236, %v234
      %v265 = vpack.c.b16 %v239, %v237
      %v266 = vpack.c.b16 %v240, %v238
      %v267 = vpack.c.b16 %v243, %v241
      %v268 = vpack.c.b16 %v244, %v242
      %v269 = vpack.c.b16 %v247, %v245
      %v270 = vpack.c.b16 %v248, %v246
      %v271 = vpack.c.b16 %v251, %v249
      %v272 = vpack.c.b16 %v252, %v250
      %v273 = vpack.c.b16 %v255, %v253
      %v274 = vpack.c.b16 %v256, %v254
      %v275 = vpack.c.b16 %v259, %v257
      %v276 = vpack.c.b16 %v260, %v258
      %293 = vmatprep.subr.bf16.mxu0 %v262
      %294 = vmatpush1.bf16.msra.mxu0 %v261
      %295 = vmatprep.subr.bf16.mxu0 %v264
      %296 = vmatpush1.bf16.msra.mxu0 %v263
      %297 = vmatprep.subr.bf16.mxu0 %v266
      %298 = vmatpush1.bf16.msra.mxu0 %v265
      %299 = vmatprep.subr.bf16.mxu0 %v268
      %300 = vmatpush1.bf16.msra.mxu0 %v267
      %301 = vmatprep.subr.bf16.mxu0 %v270
      %302 = vmatpush1.bf16.msra.mxu0 %v269
      %303 = vmatprep.subr.bf16.mxu0 %v272
      %304 = vmatpush1.bf16.msra.mxu0 %v271
      %305 = vmatprep.subr.bf16.mxu0 %v274
      %306 = vmatpush1.bf16.msra.mxu0 %v273
      %307 = vmatprep.subr.bf16.mxu0 %v276
      %308 = vmatpush1.bf16.msra.mxu0 %v275
      %309 = vmatprep.subr.bf16.mxu0 0
      %310 = vmatpush1.bf16.msra.mxu0 0
      %311 = vmatprep.subr.bf16.mxu0 0
      %312 = vmatpush1.bf16.msra.mxu0 0
      %313 = vmatprep.subr.bf16.mxu0 0
      %314 = vmatpush1.bf16.msra.mxu0 0
      %315 = vmatprep.subr.bf16.mxu0 0
      %316 = vmatpush1.bf16.msra.mxu0 0
      %317 = vmatprep.subr.bf16.mxu0 0
      %318 = vmatpush1.bf16.msra.mxu0 0
      %319 = vmatprep.subr.bf16.mxu0 0
      %320 = vmatpush1.bf16.msra.mxu0 0
      %321 = vmatprep.subr.bf16.mxu0 0
      %322 = vmatpush1.bf16.msra.mxu0 0
      %323 = vmatprep.subr.bf16.mxu0 0
      %324 = vmatpush1.bf16.msra.mxu0 0
      %325 = vmatprep.mubr.bf16.mxu0 0
      %326 = vmatmul.mubr.bf16.gmra.mrb[0].mxu0 %v211
      %v327 = vpop.f32.mrb[0].mxu0
      %v328 = vadd.f32 %v200, %v327
      %v329 = vpop.f32.mrb[0].mxu0
      %v330 = vadd.f32 %v204, %v329
      %v331 = vpop.f32.mrb[0].mxu0
      %v332 = vadd.f32 %v200, %v331
      %v333 = vpop.f32.mrb[0].mxu0
      %v334 = vadd.f32 %v204, %v333
      %335 = vdwg.mxu0
      %v336 = vpack.c.bf16 %v332, %v328
      %v337 = vpack.c.bf16 %v334, %v330
      %v340 = vunpack.c.l.b16 %v336
      %v341 = vunpack.c.l.b16 %v337
      %v342 = vunpack.c.h.b16 %v336
      %v343 = vunpack.c.h.b16 %v337
      %v344 = vpack.c.b16 %v341, %v340
      %v345 = vpack.c.b16 %v343, %v342
      %348 = vst [vmem:[%s174] sm:$0xff] %v344
      %349 = vst [vmem:[%s174 + $0x8] sm:$0xff] %v345
      %s350 = smul.u32 2, %s14
      %p351 = scmp.lt.s32.totalorder %s350, 3
      %s352 = scalar_select %p351, %s350, 3
      %s353 = smul.addr %s352, 2
      %s354 = smul.addr %s353, 4
      %s355 = scalar_lea.vmem %s3, %s354
      // Predicated region
      $region33: #{e5smollm_forward.34} parent=31 // pred_check
        %p356 = pneg %p100
      $region34: #{e5smollm_forward.34} parent=31 // pred_check_branch
        %358 = sbr.rel (%p356) target = $region36
      $region35: #{e5smollm_forward.34} parent=31 // pred_region
        %s359 = smul.u32 2, %s14
      $region36: #{e5smollm_forward.34} parent=31 // pred_fallthru
        _
    $region32: #{e5smollm_forward.34} parent=5 // pred_fallthru
      _
    %p360 = scmp.le.s32.totalorder 2, %s9
    // Predicated region
    $region37: #{e5smollm_forward.34} parent=5 // pred_check
      %p361 = pneg %p360
    $region38: #{e5smollm_forward.34} parent=5 // pred_check_branch
      %363 = sbr.rel (%p361) target = $region40
    $region39: #{e5smollm_forward.34} parent=5 // pred_region
      %s364 = ssub.s32 %s9, 2
      // Predicated region
      $region41: #{e5smollm_forward.34} parent=39 // pred_check
        %p365 = pneg %p106
      $region42: #{e5smollm_forward.34} parent=39 // pred_check_branch
        %367 = sbr.rel (%p365) target = $region44
      $region43: #{e5smollm_forward.34} parent=39 // pred_region
        %s368 = smul.u32 2, %s15
        %p369 = scmp.lt.s32.totalorder %s368, 3
        %s370 = scalar_select %p369, %s368, 3
        %s371 = smul.addr %s370, 2
        %s372 = smul.addr %s371, 4
        %s373 = scalar_lea.vmem %s3, %s372
      $region44: #{e5smollm_forward.34} parent=39 // pred_fallthru
        _
    $region40: #{e5smollm_forward.34} parent=5 // pred_fallthru
      _
  $region6: #{e5smollm_forward.34} parent=0 // loop_footer
    %s13 = sadd.s32 1, %s9
  $region7: #{e5smollm_forward.34} parent=0 // loop_footer_branch
    %8 = sbr.rel target = $region3
  $region8: #{e5smollm_forward.34} parent=0 // loop_exit
    _

// kernel: e5smollm_forward.35
$region0: #{e5smollm_forward.35}
  #allocation0 [shape = 'u32[]', space=smem, size = 0x4, offset = 0x4, fixed_abs, tag = 'smem constant byte address 0x4 - core index']
  #allocation1 [shape = 'u32[144,128]{1,0:T(1,128)}', space=vmem, size = 0x12000, scoped, tag = 'internal scratch']
  %s0 = inlined_call_operand.vmem [shape: bf16[32,256], index: 0, kind: input, shape index: {}]
  %s1 = inlined_call_operand.vmem [shape: f32[1,256], index: 1, kind: input, shape index: {}]
  %s2 = inlined_call_operand.vmem [shape: bf16[256,768], index: 2, kind: input, shape index: {}]
  %s3 = inlined_call_operand.vmem [shape: bf16[32,768], index: 3, kind: output, shape index: {}]
  %s4 = sld [smem:[#allocation0]]
  $region45: #{e5smollm_forward.35} parent=0
    _
  %s6 = ssub.s32 1, %s4
  %s7 = scalar_select 0, %s6, %s4
  loop: start=0, step=1, limit=4
  $region2: #{e5smollm_forward.35} parent=0 // loop_pre_header
    _
  $region3: #{e5smollm_forward.35} parent=0 // loop_header
    %s9 = sphi 0, %s13
    %p10 = scmp.ge.s32.totalorder %s9, 4
    %s19 = sphi 0, %s21
    %s22 = sphi 0, %s19
    %s23 = sphi 0, %s22
    %s39 = sphi 0, %s23
    %s43 = sphi 0, %s43
    %s45 = sphi 0, %s43
    %s46 = sphi 0, %s45
    %s60 = sphi 0, %s46
    %s64 = sphi 0, %s64
    %s66 = sphi 0, %s64
    %s67 = sphi 0, %s66
    %s81 = sphi 0, %s67
    %s87 = sphi 0, %s89
    %s90 = sphi 0, %s87
    %s91 = sphi 0, %s90
    %s107 = sphi 0, %s91
  $region4: #{e5smollm_forward.35} parent=0 // loop_header_branch
    %12 = sbr.rel (%p10) target = $region8
  $region5: #{e5smollm_forward.35} parent=0 // loop_body
    %s14 = ssub.s32 %s9, 1
    %s15 = ssub.s32 %s9, 2
    %s16 = sadd.s32 %s9, 1
    %s17 = ssub.s32 %s9, %s16
    %p18 = scmp.eq.s32.totalorder %s17, 0
    %s20 = sadd.s32 %s19, 1
    %s21 = scalar_select %p18, %s19, %s20
    %p24 = pneg %p18
    %p25 = scmp.eq.s32.totalorder %s9, 1
    %p26 = por %p24, %p25
    %p27 = scmp.ne.s32.totalorder %s19, %s22
    %p28 = scmp.eq.s32.totalorder %s9, 0
    %p29 = por %p27, %p28
    %p30 = scmp.ne.s32.totalorder %s19, %s22
    %p31 = scmp.eq.s32.totalorder %s14, 1
    %p32 = por %p30, %p31
    %p33 = scmp.ne.s32.totalorder %s22, %s23
    %p34 = scmp.eq.s32.totalorder %s14, 0
    %p35 = por %p33, %p34
    %p36 = scmp.ne.s32.totalorder %s22, %s23
    %p37 = scmp.eq.s32.totalorder %s15, 1
    %p38 = por %p36, %p37
    %p40 = scmp.ne.s32.totalorder %s23, %s39
    %p41 = scmp.eq.s32.totalorder %s15, 0
    %p42 = por %p40, %p41
    %s44 = sadd.s32 %s43, 1
    %p47 = scmp.eq.s32.totalorder %s9, 1
    %p48 = scmp.ne.s32.totalorder %s43, %s45
    %p49 = scmp.eq.s32.totalorder %s9, 0
    %p50 = por %p48, %p49
    %p51 = scmp.ne.s32.totalorder %s43, %s45
    %p52 = scmp.eq.s32.totalorder %s14, 1
    %p53 = por %p51, %p52
    %p54 = scmp.ne.s32.totalorder %s45, %s46
    %p55 = scmp.eq.s32.totalorder %s14, 0
    %p56 = por %p54, %p55
    %p57 = scmp.ne.s32.totalorder %s45, %s46
    %p58 = scmp.eq.s32.totalorder %s15, 1
    %p59 = por %p57, %p58
    %p61 = scmp.ne.s32.totalorder %s46, %s60
    %p62 = scmp.eq.s32.totalorder %s15, 0
    %p63 = por %p61, %p62
    %s65 = sadd.s32 %s64, 1
    %p68 = scmp.eq.s32.totalorder %s9, 1
    %p69 = scmp.ne.s32.totalorder %s64, %s66
    %p70 = scmp.eq.s32.totalorder %s9, 0
    %p71 = por %p69, %p70
    %p72 = scmp.ne.s32.totalorder %s64, %s66
    %p73 = scmp.eq.s32.totalorder %s14, 1
    %p74 = por %p72, %p73
    %p75 = scmp.ne.s32.totalorder %s66, %s67
    %p76 = scmp.eq.s32.totalorder %s14, 0
    %p77 = por %p75, %p76
    %p78 = scmp.ne.s32.totalorder %s66, %s67
    %p79 = scmp.eq.s32.totalorder %s15, 1
    %p80 = por %p78, %p79
    %p82 = scmp.ne.s32.totalorder %s67, %s81
    %p83 = scmp.eq.s32.totalorder %s15, 0
    %p84 = por %p82, %p83
    %s85 = ssub.s32 %s9, %s16
    %p86 = scmp.eq.s32.totalorder %s85, 0
    %s88 = sadd.s32 %s87, 1
    %s89 = scalar_select %p86, %s87, %s88
    %p92 = pneg %p86
    %p93 = scmp.eq.s32.totalorder %s9, 1
    %p94 = por %p92, %p93
    %p95 = scmp.ne.s32.totalorder %s87, %s90
    %p96 = scmp.eq.s32.totalorder %s9, 0
    %p97 = por %p95, %p96
    %p98 = scmp.ne.s32.totalorder %s87, %s90
    %p99 = scmp.eq.s32.totalorder %s14, 1
    %p100 = por %p98, %p99
    %p101 = scmp.ne.s32.totalorder %s90, %s91
    %p102 = scmp.eq.s32.totalorder %s14, 0
    %p103 = por %p101, %p102
    %p104 = scmp.ne.s32.totalorder %s90, %s91
    %p105 = scmp.eq.s32.totalorder %s15, 1
    %p106 = por %p104, %p105
    %p108 = scmp.ne.s32.totalorder %s91, %s107
    %p109 = scmp.eq.s32.totalorder %s15, 0
    %p110 = por %p108, %p109
    %p111 = scmp.le.s32.totalorder 1, %s9
    %p112 = scmp.lt.s32.totalorder %s9, 3
    %p113 = pnand %p111, %p112
    %p114 = pneg %p113
    // Predicated region
    $region9: #{e5smollm_forward.35} parent=5 // pred_check
      _
    $region10: #{e5smollm_forward.35} parent=5 // pred_check_branch
      %116 = sbr.rel (%p113) target = $region12
    $region11: #{e5smollm_forward.35} parent=5 // pred_region
      %s117 = ssub.s32 %s9, 1
      // Predicated region
      $region13: #{e5smollm_forward.35} parent=11 // pred_check
        %p118 = pneg %p56
      $region14: #{e5smollm_forward.35} parent=11 // pred_check_branch
        %120 = sbr.rel (%p118) target = $region16
      $region15: #{e5smollm_forward.35} parent=11 // pred_region
        _
      $region16: #{e5smollm_forward.35} parent=11 // pred_fallthru
        _
      // Predicated region
      $region17: #{e5smollm_forward.35} parent=11 // pred_check
        %p121 = pneg %p77
      $region18: #{e5smollm_forward.35} parent=11 // pred_check_branch
        %123 = sbr.rel (%p121) target = $region20
      $region19: #{e5smollm_forward.35} parent=11 // pred_region
        _
      $region20: #{e5smollm_forward.35} parent=11 // pred_fallthru
        _
    $region12: #{e5smollm_forward.35} parent=5 // pred_fallthru
      _
    %p124 = scmp.lt.s32.totalorder %s9, 2
    // Predicated region
    $region21: #{e5smollm_forward.35} parent=5 // pred_check
      %p125 = pneg %p124
    $region22: #{e5smollm_forward.35} parent=5 // pred_check_branch
      %127 = sbr.rel (%p125) target = $region24
    $region23: #{e5smollm_forward.35} parent=5 // pred_region
      // Predicated region
      $region25: #{e5smollm_forward.35} parent=23 // pred_check
        %p128 = pneg %p29
      $region26: #{e5smollm_forward.35} parent=23 // pred_check_branch
        %130 = sbr.rel (%p128) target = $region28
      $region27: #{e5smollm_forward.35} parent=23 // pred_region
        %s131 = smul.u32 2, %s9
        %p132 = scmp.lt.s32.totalorder %s131, 3
        %s133 = scalar_select %p132, %s131, 3
        %s134 = smul.addr %s133, 2
        %s135 = smul.addr %s134, 4
        %s136 = scalar_lea.vmem %s0, %s135
        %s137 = smul.u32 2, %s9
      $region28: #{e5smollm_forward.35} parent=23 // pred_fallthru
        _
    $region24: #{e5smollm_forward.35} parent=5 // pred_fallthru
      _
    %p138 = scmp.le.s32.totalorder 1, %s9
    %p139 = scmp.lt.s32.totalorder %s9, 3
    %p140 = pnand %p138, %p139
    %p141 = pneg %p140
    // Predicated region
    $region29: #{e5smollm_forward.35} parent=5 // pred_check
      _
    $region30: #{e5smollm_forward.35} parent=5 // pred_check_branch
      %143 = sbr.rel (%p140) target = $region32
    $region31: #{e5smollm_forward.35} parent=5 // pred_region
      %s144 = ssub.s32 %s9, 1
      %s145 = smul.u32 2, %s14
      %p146 = scmp.lt.s32.totalorder %s145, 3
      %s147 = scalar_select %p146, %s145, 3
      %s148 = smul.addr %s147, 2
      %s149 = smul.addr %s148, 4
      %s150 = scalar_lea.vmem %s0, %s149
      %p151 = pneg %p35
      %p152 = pneg %p32
      %p153 = pneg %p56
      %p154 = pneg %p53
      %p155 = pneg %p77
      %p156 = pneg %p74
      %p157 = pneg %p103
      %p158 = pneg %p100
      %s159 = smul.u32 2, %s14
      %p160 = scmp.lt.s32.totalorder %s159, 3
      %s161 = scalar_select %p160, %s159, 3
      %s162 = smul.addr %s161, 6
      %s163 = smul.addr %s162, 4
      %s164 = scalar_lea.vmem %s3, %s163
      %s165 = smul.u32 2, %s14
      %p166 = scmp.lt.s32.totalorder %s165, 3
      %s167 = scalar_select %p166, %s165, 3
      %s168 = smul.addr %s167, 2
      %s169 = smul.addr %s168, 4
      %s170 = scalar_lea.vmem %s0, %s169
      %s171 = smul.u32 2, %s14
      %s172 = smul.u32 2, %s14
      %p173 = scmp.lt.s32.totalorder %s172, 3
      %s174 = scalar_select %p173, %s172, 3
      %s175 = smul.addr %s174, 6
      %s176 = smul.addr %s175, 4
      %s177 = scalar_lea.vmem %s3, %s176
      %s178 = smul.u32 2, %s14
      %v179 = vld [vmem:[%s170] sm:$0xff]
      %v180 = vld [vmem:[%s170 + $0x8] sm:$0xff]
      %v181 = vunpack.c.l.bf16 %v179
      %v182 = vunpack.c.h.bf16 %v179
      %v183 = vunpack.c.l.bf16 %v180
      %v184 = vunpack.c.h.bf16 %v180
      %v185 = vmul.f32 %v181, %v181
      %v186 = vmul.f32 %v182, %v182
      %v187 = vmul.f32 %v183, %v183
      %v188 = vmul.f32 %v184, %v184
      %v189 = vadd.f32 %v185, %v186
      %190 = vadd.xlane.f32.xlu0 %v189
      %v191 = vpop.xlane.xlu0 %190
      %v192 = vadd.f32 %v187, %v188
      %193 = vadd.xlane.f32.xlu0 %v192
      %v194 = vpop.xlane.xlu0 %193
      %v195 = vrcp.pop 256.0
      %v196 = vmul.f32 %v191, %v195
      %v197 = vmul.f32 %v194, %v195
      %v198 = vadd.f32 %v196, 1e-05
      %v199 = vadd.f32 %v197, 1e-05
      %v200 = vrsqrt.pop %v198
      %v201 = vrsqrt.pop %v199
      %v202 = vmul.f32 %v181, %v200
      %v203 = vmul.f32 %v182, %v200
      %v204 = vmul.f32 %v183, %v201
      %v205 = vmul.f32 %v184, %v201
      %v206 = vld [vmem:[%s1] sm:$0x3]
      %v208 = vlaneseq
      %v209 = vshrl.u32 %v208, 7
      %v210 = vsub.s32 0, %v209
      %v211 = vrot.slane %v206, %v210
      %v212 = vlaneseq
      %v213 = vshrl.u32 %v212, 7
      %v214 = vsub.s32 1, %v213
      %v215 = vrot.slane %v206, %v214
      %v218 = vmul.f32 %v202, %v211
      %v219 = vmul.f32 %v203, %v215
      %v220 = vmul.f32 %v204, %v211
      %v221 = vmul.f32 %v205, %v215
      %v222 = vpack.c.bf16 %v220, %v218
      %v223 = vpack.c.bf16 %v221, %v219
      %v224 = vld [vmem:[%s2] sm:$0xff]
      %v225 = vld [vmem:[%s2 + $0x8] sm:$0xff]
      %v226 = vld [vmem:[%s2 + $0x10] sm:$0xff]
      %v227 = vld [vmem:[%s2 + $0x18] sm:$0xff]
      %v228 = vld [vmem:[%s2 + $0x20] sm:$0xff]
      %v229 = vld [vmem:[%s2 + $0x28] sm:$0xff]
      %v230 = vld [vmem:[%s2 + $0x30] sm:$0xff]
      %v231 = vld [vmem:[%s2 + $0x38] sm:$0xff]
      %v232 = vld [vmem:[%s2 + $0x40] sm:$0xff]
      %v233 = vld [vmem:[%s2 + $0x48] sm:$0xff]
      %v234 = vld [vmem:[%s2 + $0x50] sm:$0xff]
      %v235 = vld [vmem:[%s2 + $0x58] sm:$0xff]
      %v236 = vld [vmem:[%s2 + $0x60] sm:$0xff]
      %v237 = vld [vmem:[%s2 + $0x68] sm:$0xff]
      %v238 = vld [vmem:[%s2 + $0x70] sm:$0xff]
      %v239 = vld [vmem:[%s2 + $0x78] sm:$0xff]
      %v240 = vld [vmem:[%s2 + $0x80] sm:$0xff]
      %v241 = vld [vmem:[%s2 + $0x88] sm:$0xff]
      %v242 = vld [vmem:[%s2 + $0x90] sm:$0xff]
      %v243 = vld [vmem:[%s2 + $0x98] sm:$0xff]
      %v244 = vld [vmem:[%s2 + $0xa0] sm:$0xff]
      %v245 = vld [vmem:[%s2 + $0xa8] sm:$0xff]
      %v246 = vld [vmem:[%s2 + $0xb0] sm:$0xff]
      %v247 = vld [vmem:[%s2 + $0xb8] sm:$0xff]
      %v248 = vld [vmem:[%s2 + $0xc0] sm:$0xff]
      %v249 = vld [vmem:[%s2 + $0xc8] sm:$0xff]
      %v250 = vld [vmem:[%s2 + $0xd0] sm:$0xff]
      %v251 = vld [vmem:[%s2 + $0xd8] sm:$0xff]
      %v252 = vld [vmem:[%s2 + $0xe0] sm:$0xff]
      %v253 = vld [vmem:[%s2 + $0xe8] sm:$0xff]
      %v254 = vld [vmem:[%s2 + $0xf0] sm:$0xff]
      %v255 = vld [vmem:[%s2 + $0xf8] sm:$0xff]
      %v256 = vld [vmem:[%s2 + $0x100] sm:$0xff]
      %v257 = vld [vmem:[%s2 + $0x108] sm:$0xff]
      %v258 = vld [vmem:[%s2 + $0x110] sm:$0xff]
      %v259 = vld [vmem:[%s2 + $0x118] sm:$0xff]
      %v260 = vld [vmem:[%s2 + $0x120] sm:$0xff]
      %v261 = vld [vmem:[%s2 + $0x128] sm:$0xff]
      %v262 = vld [vmem:[%s2 + $0x130] sm:$0xff]
      %v263 = vld [vmem:[%s2 + $0x138] sm:$0xff]
      %v264 = vld [vmem:[%s2 + $0x140] sm:$0xff]
      %v265 = vld [vmem:[%s2 + $0x148] sm:$0xff]
      %v266 = vld [vmem:[%s2 + $0x150] sm:$0xff]
      %v267 = vld [vmem:[%s2 + $0x158] sm:$0xff]
      %v268 = vld [vmem:[%s2 + $0x160] sm:$0xff]
      %v269 = vld [vmem:[%s2 + $0x168] sm:$0xff]
      %v270 = vld [vmem:[%s2 + $0x170] sm:$0xff]
      %v271 = vld [vmem:[%s2 + $0x178] sm:$0xff]
      %v272 = vld [vmem:[%s2 + $0x180] sm:$0xff]
      %v273 = vld [vmem:[%s2 + $0x188] sm:$0xff]
      %v274 = vld [vmem:[%s2 + $0x190] sm:$0xff]
      %v275 = vld [vmem:[%s2 + $0x198] sm:$0xff]
      %v276 = vld [vmem:[%s2 + $0x1a0] sm:$0xff]
      %v277 = vld [vmem:[%s2 + $0x1a8] sm:$0xff]
      %v278 = vld [vmem:[%s2 + $0x1b0] sm:$0xff]
      %v279 = vld [vmem:[%s2 + $0x1b8] sm:$0xff]
      %v280 = vld [vmem:[%s2 + $0x1c0] sm:$0xff]
      %v281 = vld [vmem:[%s2 + $0x1c8] sm:$0xff]
      %v282 = vld [vmem:[%s2 + $0x1d0] sm:$0xff]
      %v283 = vld [vmem:[%s2 + $0x1d8] sm:$0xff]
      %v284 = vld [vmem:[%s2 + $0x1e0] sm:$0xff]
      %v285 = vld [vmem:[%s2 + $0x1e8] sm:$0xff]
      %v286 = vld [vmem:[%s2 + $0x1f0] sm:$0xff]
      %v287 = vld [vmem:[%s2 + $0x1f8] sm:$0xff]
      %v288 = vld [vmem:[%s2 + $0x200] sm:$0xff]
      %v289 = vld [vmem:[%s2 + $0x208] sm:$0xff]
      %v290 = vld [vmem:[%s2 + $0x210] sm:$0xff]
      %v291 = vld [vmem:[%s2 + $0x218] sm:$0xff]
      %v292 = vld [vmem:[%s2 + $0x220] sm:$0xff]
      %v293 = vld [vmem:[%s2 + $0x228] sm:$0xff]
      %v294 = vld [vmem:[%s2 + $0x230] sm:$0xff]
      %v295 = vld [vmem:[%s2 + $0x238] sm:$0xff]
      %v296 = vld [vmem:[%s2 + $0x240] sm:$0xff]
      %v297 = vld [vmem:[%s2 + $0x248] sm:$0xff]
      %v298 = vld [vmem:[%s2 + $0x250] sm:$0xff]
      %v299 = vld [vmem:[%s2 + $0x258] sm:$0xff]
      %v300 = vld [vmem:[%s2 + $0x260] sm:$0xff]
      %v301 = vld [vmem:[%s2 + $0x268] sm:$0xff]
      %v302 = vld [vmem:[%s2 + $0x270] sm:$0xff]
      %v303 = vld [vmem:[%s2 + $0x278] sm:$0xff]
      %v304 = vld [vmem:[%s2 + $0x280] sm:$0xff]
      %v305 = vld [vmem:[%s2 + $0x288] sm:$0xff]
      %v306 = vld [vmem:[%s2 + $0x290] sm:$0xff]
      %v307 = vld [vmem:[%s2 + $0x298] sm:$0xff]
      %v308 = vld [vmem:[%s2 + $0x2a0] sm:$0xff]
      %v309 = vld [vmem:[%s2 + $0x2a8] sm:$0xff]
      %v310 = vld [vmem:[%s2 + $0x2b0] sm:$0xff]
      %v311 = vld [vmem:[%s2 + $0x2b8] sm:$0xff]
      %v312 = vld [vmem:[%s2 + $0x2c0] sm:$0xff]
      %v313 = vld [vmem:[%s2 + $0x2c8] sm:$0xff]
      %v314 = vld [vmem:[%s2 + $0x2d0] sm:$0xff]
      %v315 = vld [vmem:[%s2 + $0x2d8] sm:$0xff]
      %v316 = vld [vmem:[%s2 + $0x2e0] sm:$0xff]
      %v317 = vld [vmem:[%s2 + $0x2e8] sm:$0xff]
      %v318 = vld [vmem:[%s2 + $0x2f0] sm:$0xff]
      %v319 = vld [vmem:[%s2 + $0x2f8] sm:$0xff]
      %v416 = vunpack.c.l.b16 %v224
      %v417 = vunpack.c.h.b16 %v224
      %v418 = vunpack.c.l.b16 %v225
      %v419 = vunpack.c.h.b16 %v225
      %v420 = vunpack.c.l.b16 %v226
      %v421 = vunpack.c.h.b16 %v226
      %v422 = vunpack.c.l.b16 %v227
      %v423 = vunpack.c.h.b16 %v227
      %v424 = vunpack.c.l.b16 %v228
      %v425 = vunpack.c.h.b16 %v228
      %v426 = vunpack.c.l.b16 %v229
      %v427 = vunpack.c.h.b16 %v229
      %v428 = vunpack.c.l.b16 %v230
      %v429 = vunpack.c.h.b16 %v230
      %v430 = vunpack.c.l.b16 %v231
      %v431 = vunpack.c.h.b16 %v231
      %v432 = vunpack.c.l.b16 %v232
      %v433 = vunpack.c.h.b16 %v232
      %v434 = vunpack.c.l.b16 %v233
      %v435 = vunpack.c.h.b16 %v233
      %v436 = vunpack.c.l.b16 %v234
      %v437 = vunpack.c.h.b16 %v234
      %v438 = vunpack.c.l.b16 %v235
      %v439 = vunpack.c.h.b16 %v235
      %v440 = vunpack.c.l.b16 %v236
      %v441 = vunpack.c.h.b16 %v236
      %v442 = vunpack.c.l.b16 %v237
      %v443 = vunpack.c.h.b16 %v237
      %v444 = vunpack.c.l.b16 %v238
      %v445 = vunpack.c.h.b16 %v238
      %v446 = vunpack.c.l.b16 %v239
      %v447 = vunpack.c.h.b16 %v239
      %v448 = vunpack.c.l.b16 %v240
      %v449 = vunpack.c.h.b16 %v240
      %v450 = vunpack.c.l.b16 %v241
      %v451 = vunpack.c.h.b16 %v241
      %v452 = vunpack.c.l.b16 %v242
      %v453 = vunpack.c.h.b16 %v242
      %v454 = vunpack.c.l.b16 %v243
      %v455 = vunpack.c.h.b16 %v243
      %v456 = vunpack.c.l.b16 %v244
      %v457 = vunpack.c.h.b16 %v244
      %v458 = vunpack.c.l.b16 %v245
      %v459 = vunpack.c.h.b16 %v245
      %v460 = vunpack.c.l.b16 %v246
      %v461 = vunpack.c.h.b16 %v246
      %v462 = vunpack.c.l.b16 %v247
      %v463 = vunpack.c.h.b16 %v247
      %v464 = vunpack.c.l.b16 %v248
      %v465 = vunpack.c.h.b16 %v248
      %v466 = vunpack.c.l.b16 %v249
      %v467 = vunpack.c.h.b16 %v249
      %v468 = vunpack.c.l.b16 %v250
      %v469 = vunpack.c.h.b16 %v250
      %v470 = vunpack.c.l.b16 %v251
      %v471 = vunpack.c.h.b16 %v251
      %v472 = vunpack.c.l.b16 %v252
      %v473 = vunpack.c.h.b16 %v252
      %v474 = vunpack.c.l.b16 %v253
      %v475 = vunpack.c.h.b16 %v253
      %v476 = vunpack.c.l.b16 %v254
      %v477 = vunpack.c.h.b16 %v254
      %v478 = vunpack.c.l.b16 %v255
      %v479 = vunpack.c.h.b16 %v255
      %v480 = vunpack.c.l.b16 %v256
      %v481 = vunpack.c.h.b16 %v256
      %v482 = vunpack.c.l.b16 %v257
      %v483 = vunpack.c.h.b16 %v257
      %v484 = vunpack.c.l.b16 %v258
      %v485 = vunpack.c.h.b16 %v258
      %v486 = vunpack.c.l.b16 %v259
      %v487 = vunpack.c.h.b16 %v259
      %v488 = vunpack.c.l.b16 %v260
      %v489 = vunpack.c.h.b16 %v260
      %v490 = vunpack.c.l.b16 %v261
      %v491 = vunpack.c.h.b16 %v261
      %v492 = vunpack.c.l.b16 %v262
      %v493 = vunpack.c.h.b16 %v262
      %v494 = vunpack.c.l.b16 %v263
      %v495 = vunpack.c.h.b16 %v263
      %v496 = vunpack.c.l.b16 %v264
      %v497 = vunpack.c.h.b16 %v264
      %v498 = vunpack.c.l.b16 %v265
      %v499 = vunpack.c.h.b16 %v265
      %v500 = vunpack.c.l.b16 %v266
      %v501 = vunpack.c.h.b16 %v266
      %v502 = vunpack.c.l.b16 %v267
      %v503 = vunpack.c.h.b16 %v267
      %v504 = vunpack.c.l.b16 %v268
      %v505 = vunpack.c.h.b16 %v268
      %v506 = vunpack.c.l.b16 %v269
      %v507 = vunpack.c.h.b16 %v269
      %v508 = vunpack.c.l.b16 %v270
      %v509 = vunpack.c.h.b16 %v270
      %v510 = vunpack.c.l.b16 %v271
      %v511 = vunpack.c.h.b16 %v271
      %v512 = vunpack.c.l.b16 %v272
      %v513 = vunpack.c.h.b16 %v272
      %v514 = vunpack.c.l.b16 %v273
      %v515 = vunpack.c.h.b16 %v273
      %v516 = vunpack.c.l.b16 %v274
      %v517 = vunpack.c.h.b16 %v274
      %v518 = vunpack.c.l.b16 %v275
      %v519 = vunpack.c.h.b16 %v275
      %v520 = vunpack.c.l.b16 %v276
      %v521 = vunpack.c.h.b16 %v276
      %v522 = vunpack.c.l.b16 %v277
      %v523 = vunpack.c.h.b16 %v277
      %v524 = vunpack.c.l.b16 %v278
      %v525 = vunpack.c.h.b16 %v278
      %v526 = vunpack.c.l.b16 %v279
      %v527 = vunpack.c.h.b16 %v279
      %v528 = vunpack.c.l.b16 %v280
      %v529 = vunpack.c.h.b16 %v280
      %v530 = vunpack.c.l.b16 %v281
      %v531 = vunpack.c.h.b16 %v281
      %v532 = vunpack.c.l.b16 %v282
      %v533 = vunpack.c.h.b16 %v282
      %v534 = vunpack.c.l.b16 %v283
      %v535 = vunpack.c.h.b16 %v283
      %v536 = vunpack.c.l.b16 %v284
      %v537 = vunpack.c.h.b16 %v284
      %v538 = vunpack.c.l.b16 %v285
      %v539 = vunpack.c.h.b16 %v285
      %v540 = vunpack.c.l.b16 %v286
      %v541 = vunpack.c.h.b16 %v286
      %v542 = vunpack.c.l.b16 %v287
      %v543 = vunpack.c.h.b16 %v287
      %v544 = vunpack.c.l.b16 %v288
      %v545 = vunpack.c.h.b16 %v288
      %v546 = vunpack.c.l.b16 %v289
      %v547 = vunpack.c.h.b16 %v289
      %v548 = vunpack.c.l.b16 %v290
      %v549 = vunpack.c.h.b16 %v290
      %v550 = vunpack.c.l.b16 %v291
      %v551 = vunpack.c.h.b16 %v291
      %v552 = vunpack.c.l.b16 %v292
      %v553 = vunpack.c.h.b16 %v292
      %v554 = vunpack.c.l.b16 %v293
      %v555 = vunpack.c.h.b16 %v293
      %v556 = vunpack.c.l.b16 %v294
      %v557 = vunpack.c.h.b16 %v294
      %v558 = vunpack.c.l.b16 %v295
      %v559 = vunpack.c.h.b16 %v295
      %v560 = vunpack.c.l.b16 %v296
      %v561 = vunpack.c.h.b16 %v296
      %v562 = vunpack.c.l.b16 %v297
      %v563 = vunpack.c.h.b16 %v297
      %v564 = vunpack.c.l.b16 %v298
      %v565 = vunpack.c.h.b16 %v298
      %v566 = vunpack.c.l.b16 %v299
      %v567 = vunpack.c.h.b16 %v299
      %v568 = vunpack.c.l.b16 %v300
      %v569 = vunpack.c.h.b16 %v300
      %v570 = vunpack.c.l.b16 %v301
      %v571 = vunpack.c.h.b16 %v301
      %v572 = vunpack.c.l.b16 %v302
      %v573 = vunpack.c.h.b16 %v302
      %v574 = vunpack.c.l.b16 %v303
      %v575 = vunpack.c.h.b16 %v303
      %v576 = vunpack.c.l.b16 %v304
      %v577 = vunpack.c.h.b16 %v304
      %v578 = vunpack.c.l.b16 %v305
      %v579 = vunpack.c.h.b16 %v305
      %v580 = vunpack.c.l.b16 %v306
      %v581 = vunpack.c.h.b16 %v306
      %v582 = vunpack.c.l.b16 %v307
      %v583 = vunpack.c.h.b16 %v307
      %v584 = vunpack.c.l.b16 %v308
      %v585 = vunpack.c.h.b16 %v308
      %v586 = vunpack.c.l.b16 %v309
      %v587 = vunpack.c.h.b16 %v309
      %v588 = vunpack.c.l.b16 %v310
      %v589 = vunpack.c.h.b16 %v310
      %v590 = vunpack.c.l.b16 %v311
      %v591 = vunpack.c.h.b16 %v311
      %v592 = vunpack.c.l.b16 %v312
      %v593 = vunpack.c.h.b16 %v312
      %v594 = vunpack.c.l.b16 %v313
      %v595 = vunpack.c.h.b16 %v313
      %v596 = vunpack.c.l.b16 %v314
      %v597 = vunpack.c.h.b16 %v314
      %v598 = vunpack.c.l.b16 %v315
      %v599 = vunpack.c.h.b16 %v315
      %v600 = vunpack.c.l.b16 %v316
      %v601 = vunpack.c.h.b16 %v316
      %v602 = vunpack.c.l.b16 %v317
      %v603 = vunpack.c.h.b16 %v317
      %v604 = vunpack.c.l.b16 %v318
      %v605 = vunpack.c.h.b16 %v318
      %v606 = vunpack.c.l.b16 %v319
      %v607 = vunpack.c.h.b16 %v319
      %v608 = vpack.c.b16 %v422, %v416
      %v609 = vpack.c.b16 %v423, %v417
      %v610 = vpack.c.b16 %v424, %v418
      %v611 = vpack.c.b16 %v425, %v419
      %v612 = vpack.c.b16 %v426, %v420
      %v613 = vpack.c.b16 %v427, %v421
      %v614 = vpack.c.b16 %v434, %v428
      %v615 = vpack.c.b16 %v435, %v429
      %v616 = vpack.c.b16 %v436, %v430
      %v617 = vpack.c.b16 %v437, %v431
      %v618 = vpack.c.b16 %v438, %v432
      %v619 = vpack.c.b16 %v439, %v433
      %v620 = vpack.c.b16 %v446, %v440
      %v621 = vpack.c.b16 %v447, %v441
      %v622 = vpack.c.b16 %v448, %v442
      %v623 = vpack.c.b16 %v449, %v443
      %v624 = vpack.c.b16 %v450, %v444
      %v625 = vpack.c.b16 %v451, %v445
      %v626 = vpack.c.b16 %v458, %v452
      %v627 = vpack.c.b16 %v459, %v453
      %v628 = vpack.c.b16 %v460, %v454
      %v629 = vpack.c.b16 %v461, %v455
      %v630 = vpack.c.b16 %v462, %v456
      %v631 = vpack.c.b16 %v463, %v457
      %v632 = vpack.c.b16 %v470, %v464
      %v633 = vpack.c.b16 %v471, %v465
      %v634 = vpack.c.b16 %v472, %v466
      %v635 = vpack.c.b16 %v473, %v467
      %v636 = vpack.c.b16 %v474, %v468
      %v637 = vpack.c.b16 %v475, %v469
      %v638 = vpack.c.b16 %v482, %v476
      %v639 = vpack.c.b16 %v483, %v477
      %v640 = vpack.c.b16 %v484, %v478
      %v641 = vpack.c.b16 %v485, %v479
      %v642 = vpack.c.b16 %v486, %v480
      %v643 = vpack.c.b16 %v487, %v481
      %v644 = vpack.c.b16 %v494, %v488
      %v645 = vpack.c.b16 %v495, %v489
      %v646 = vpack.c.b16 %v496, %v490
      %v647 = vpack.c.b16 %v497, %v491
      %v648 = vpack.c.b16 %v498, %v492
      %v649 = vpack.c.b16 %v499, %v493
      %v650 = vpack.c.b16 %v506, %v500
      %v651 = vpack.c.b16 %v507, %v501
      %v652 = vpack.c.b16 %v508, %v502
      %v653 = vpack.c.b16 %v509, %v503
      %v654 = vpack.c.b16 %v510, %v504
      %v655 = vpack.c.b16 %v511, %v505
      %v656 = vpack.c.b16 %v518, %v512
      %v657 = vpack.c.b16 %v519, %v513
      %v658 = vpack.c.b16 %v520, %v514
      %v659 = vpack.c.b16 %v521, %v515
      %v660 = vpack.c.b16 %v522, %v516
      %v661 = vpack.c.b16 %v523, %v517
      %v662 = vpack.c.b16 %v530, %v524
      %v663 = vpack.c.b16 %v531, %v525
      %v664 = vpack.c.b16 %v532, %v526
      %v665 = vpack.c.b16 %v533, %v527
      %v666 = vpack.c.b16 %v534, %v528
      %v667 = vpack.c.b16 %v535, %v529
      %v668 = vpack.c.b16 %v542, %v536
      %v669 = vpack.c.b16 %v543, %v537
      %v670 = vpack.c.b16 %v544, %v538
      %v671 = vpack.c.b16 %v545, %v539
      %v672 = vpack.c.b16 %v546, %v540
      %v673 = vpack.c.b16 %v547, %v541
      %v674 = vpack.c.b16 %v554, %v548
      %v675 = vpack.c.b16 %v555, %v549
      %v676 = vpack.c.b16 %v556, %v550
      %v677 = vpack.c.b16 %v557, %v551
      %v678 = vpack.c.b16 %v558, %v552
      %v679 = vpack.c.b16 %v559, %v553
      %v680 = vpack.c.b16 %v566, %v560
      %v681 = vpack.c.b16 %v567, %v561
      %v682 = vpack.c.b16 %v568, %v562
      %v683 = vpack.c.b16 %v569, %v563
      %v684 = vpack.c.b16 %v570, %v564
      %v685 = vpack.c.b16 %v571, %v565
      %v686 = vpack.c.b16 %v578, %v572
      %v687 = vpack.c.b16 %v579, %v573
      %v688 = vpack.c.b16 %v580, %v574
      %v689 = vpack.c.b16 %v581, %v575
      %v690 = vpack.c.b16 %v582, %v576
      %v691 = vpack.c.b16 %v583, %v577
      %v692 = vpack.c.b16 %v590, %v584
      %v693 = vpack.c.b16 %v591, %v585
      %v694 = vpack.c.b16 %v592, %v586
      %v695 = vpack.c.b16 %v593, %v587
      %v696 = vpack.c.b16 %v594, %v588
      %v697 = vpack.c.b16 %v595, %v589
      %v698 = vpack.c.b16 %v602, %v596
      %v699 = vpack.c.b16 %v603, %v597
      %v700 = vpack.c.b16 %v604, %v598
      %v701 = vpack.c.b16 %v605, %v599
      %v702 = vpack.c.b16 %v606, %v600
      %v703 = vpack.c.b16 %v607, %v601
      %800 = vmatprep.subr.bf16.mxu0 %v609
      %801 = vmatpush1.bf16.msra.mxu0 %v608
      %802 = vmatprep.subr.bf16.mxu0 %v615
      %803 = vmatpush1.bf16.msra.mxu0 %v614
      %804 = vmatprep.subr.bf16.mxu0 %v621
      %805 = vmatpush1.bf16.msra.mxu0 %v620
      %806 = vmatprep.subr.bf16.mxu0 %v627
      %807 = vmatpush1.bf16.msra.mxu0 %v626
      %808 = vmatprep.subr.bf16.mxu0 %v633
      %809 = vmatpush1.bf16.msra.mxu0 %v632
      %810 = vmatprep.subr.bf16.mxu0 %v639
      %811 = vmatpush1.bf16.msra.mxu0 %v638
      %812 = vmatprep.subr.bf16.mxu0 %v645
      %813 = vmatpush1.bf16.msra.mxu0 %v644
      %814 = vmatprep.subr.bf16.mxu0 %v651
      %815 = vmatpush1.bf16.msra.mxu0 %v650
      %816 = vmatprep.subr.bf16.mxu0 %v657
      %817 = vmatpush1.bf16.msra.mxu0 %v656
      %818 = vmatprep.subr.bf16.mxu0 %v663
      %819 = vmatpush1.bf16.msra.mxu0 %v662
      %820 = vmatprep.subr.bf16.mxu0 %v669
      %821 = vmatpush1.bf16.msra.mxu0 %v668
      %822 = vmatprep.subr.bf16.mxu0 %v675
      %823 = vmatpush1.bf16.msra.mxu0 %v674
      %824 = vmatprep.subr.bf16.mxu0 %v681
      %825 = vmatpush1.bf16.msra.mxu0 %v680
      %826 = vmatprep.subr.bf16.mxu0 %v687
      %827 = vmatpush1.bf16.msra.mxu0 %v686
      %828 = vmatprep.subr.bf16.mxu0 %v693
      %829 = vmatpush1.bf16.msra.mxu0 %v692
      %830 = vmatprep.subr.bf16.mxu0 %v699
      %831 = vmatpush1.bf16.msra.mxu0 %v698
      %832 = vmatprep.mubr.bf16.mxu0 %v223
      %833 = vmatmul.mubr.bf16.gmra.mrb[0].mxu0 %v222
      %v834 = vpop.f32.mrb[0].mxu0
      %v835 = vadd.f32 0.0, %v834
      %v836 = vpop.f32.mrb[0].mxu0
      %v837 = vadd.f32 0.0, %v836
      %v838 = vpop.f32.mrb[0].mxu0
      %v839 = vadd.f32 0.0, %v838
      %v840 = vpop.f32.mrb[0].mxu0
      %v841 = vadd.f32 0.0, %v840
      %842 = vdwg.mxu0
      %843 = vmatprep.subr.bf16.mxu0 %v611
      %844 = vmatpush1.bf16.msra.mxu0 %v610
      %845 = vmatprep.subr.bf16.mxu0 %v617
      %846 = vmatpush1.bf16.msra.mxu0 %v616
      %847 = vmatprep.subr.bf16.mxu0 %v623
      %848 = vmatpush1.bf16.msra.mxu0 %v622
      %849 = vmatprep.subr.bf16.mxu0 %v629
      %850 = vmatpush1.bf16.msra.mxu0 %v628
      %851 = vmatprep.subr.bf16.mxu0 %v635
      %852 = vmatpush1.bf16.msra.mxu0 %v634
      %853 = vmatprep.subr.bf16.mxu0 %v641
      %854 = vmatpush1.bf16.msra.mxu0 %v640
      %855 = vmatprep.subr.bf16.mxu0 %v647
      %856 = vmatpush1.bf16.msra.mxu0 %v646
      %857 = vmatprep.subr.bf16.mxu0 %v653
      %858 = vmatpush1.bf16.msra.mxu0 %v652
      %859 = vmatprep.subr.bf16.mxu0 %v659
      %860 = vmatpush1.bf16.msra.mxu0 %v658
      %861 = vmatprep.subr.bf16.mxu0 %v665
      %862 = vmatpush1.bf16.msra.mxu0 %v664
      %863 = vmatprep.subr.bf16.mxu0 %v671
      %864 = vmatpush1.bf16.msra.mxu0 %v670
      %865 = vmatprep.subr.bf16.mxu0 %v677
      %866 = vmatpush1.bf16.msra.mxu0 %v676
      %867 = vmatprep.subr.bf16.mxu0 %v683
      %868 = vmatpush1.bf16.msra.mxu0 %v682
      %869 = vmatprep.subr.bf16.mxu0 %v689
      %870 = vmatpush1.bf16.msra.mxu0 %v688
      %871 = vmatprep.subr.bf16.mxu0 %v695
      %872 = vmatpush1.bf16.msra.mxu0 %v694
      %873 = vmatprep.subr.bf16.mxu0 %v701
      %874 = vmatpush1.bf16.msra.mxu0 %v700
      %875 = vmatprep.mubr.bf16.mxu0 %v223
      %876 = vmatmul.mubr.bf16.gmra.mrb[0].mxu0 %v222
      %v877 = vpop.f32.mrb[0].mxu0
      %v878 = vadd.f32 0.0, %v877
      %v879 = vpop.f32.mrb[0].mxu0
      %v880 = vadd.f32 0.0, %v879
      %v881 = vpop.f32.mrb[0].mxu0
      %v882 = vadd.f32 0.0, %v881
      %v883 = vpop.f32.mrb[0].mxu0
      %v884 = vadd.f32 0.0, %v883
      %885 = vdwg.mxu0
      %886 = vmatprep.subr.bf16.mxu0 %v613
      %887 = vmatpush1.bf16.msra.mxu0 %v612
      %888 = vmatprep.subr.bf16.mxu0 %v619
      %889 = vmatpush1.bf16.msra.mxu0 %v618
      %890 = vmatprep.subr.bf16.mxu0 %v625
      %891 = vmatpush1.bf16.msra.mxu0 %v624
      %892 = vmatprep.subr.bf16.mxu0 %v631
      %893 = vmatpush1.bf16.msra.mxu0 %v630
      %894 = vmatprep.subr.bf16.mxu0 %v637
      %895 = vmatpush1.bf16.msra.mxu0 %v636
      %896 = vmatprep.subr.bf16.mxu0 %v643
      %897 = vmatpush1.bf16.msra.mxu0 %v642
      %898 = vmatprep.subr.bf16.mxu0 %v649
      %899 = vmatpush1.bf16.msra.mxu0 %v648
      %900 = vmatprep.subr.bf16.mxu0 %v655
      %901 = vmatpush1.bf16.msra.mxu0 %v654
      %902 = vmatprep.subr.bf16.mxu0 %v661
      %903 = vmatpush1.bf16.msra.mxu0 %v660
      %904 = vmatprep.subr.bf16.mxu0 %v667
      %905 = vmatpush1.bf16.msra.mxu0 %v666
      %906 = vmatprep.subr.bf16.mxu0 %v673
      %907 = vmatpush1.bf16.msra.mxu0 %v672
      %908 = vmatprep.subr.bf16.mxu0 %v679
      %909 = vmatpush1.bf16.msra.mxu0 %v678
      %910 = vmatprep.subr.bf16.mxu0 %v685
      %911 = vmatpush1.bf16.msra.mxu0 %v684
      %912 = vmatprep.subr.bf16.mxu0 %v691
      %913 = vmatpush1.bf16.msra.mxu0 %v690
      %914 = vmatprep.subr.bf16.mxu0 %v697
      %915 = vmatpush1.bf16.msra.mxu0 %v696
      %916 = vmatprep.subr.bf16.mxu0 %v703
      %917 = vmatpush1.bf16.msra.mxu0 %v702
      %918 = vmatprep.mubr.bf16.mxu0 %v223
      %919 = vmatmul.mubr.bf16.gmra.mrb[0].mxu0 %v222
      %v920 = vpop.f32.mrb[0].mxu0
      %v921 = vadd.f32 0.0, %v920
      %v922 = vpop.f32.mrb[0].mxu0
      %v923 = vadd.f32 0.0, %v922
      %v924 = vpop.f32.mrb[0].mxu0
      %v925 = vadd.f32 0.0, %v924
      %v926 = vpop.f32.mrb[0].mxu0
      %v927 = vadd.f32 0.0, %v926
      %928 = vdwg.mxu0
      %v929 = vpack.c.bf16 %v839, %v835
      %v930 = vpack.c.bf16 %v841, %v837
      %v931 = vpack.c.bf16 %v882, %v878
      %v932 = vpack.c.bf16 %v884, %v880
      %v933 = vpack.c.bf16 %v925, %v921
      %v934 = vpack.c.bf16 %v927, %v923
      %v941 = vunpack.c.l.b16 %v929
      %v942 = vunpack.c.l.b16 %v930
      %v943 = vunpack.c.l.b16 %v931
      %v944 = vunpack.c.l.b16 %v932
      %v945 = vunpack.c.l.b16 %v933
      %v946 = vunpack.c.l.b16 %v934
      %v947 = vunpack.c.h.b16 %v929
      %v948 = vunpack.c.h.b16 %v930
      %v949 = vunpack.c.h.b16 %v931
      %v950 = vunpack.c.h.b16 %v932
      %v951 = vunpack.c.h.b16 %v933
      %v952 = vunpack.c.h.b16 %v934
      %v953 = vpack.c.b16 %v942, %v941
      %v954 = vpack.c.b16 %v944, %v943
      %v955 = vpack.c.b16 %v946, %v945
      %v956 = vpack.c.b16 %v948, %v947
      %v957 = vpack.c.b16 %v950, %v949
      %v958 = vpack.c.b16 %v952, %v951
      %965 = vst [vmem:[%s177] sm:$0xff] %v953
      %966 = vst [vmem:[%s177 + $0x8] sm:$0xff] %v954
      %967 = vst [vmem:[%s177 + $0x10] sm:$0xff] %v955
      %968 = vst [vmem:[%s177 + $0x18] sm:$0xff] %v956
      %969 = vst [vmem:[%s177 + $0x20] sm:$0xff] %v957
      %970 = vst [vmem:[%s177 + $0x28] sm:$0xff] %v958
      %s971 = smul.u32 2, %s14
      %p972 = scmp.lt.s32.totalorder %s971, 3
      %s973 = scalar_select %p972, %s971, 3
      %s974 = smul.addr %s973, 6
      %s975 = smul.addr %s974, 4
      %s976 = scalar_lea.vmem %s3, %s975
      // Predicated region
      $region33: #{e5smollm_forward.35} parent=31 // pred_check
        %p977 = pneg %p100
      $region34: #{e5smollm_forward.35} parent=31 // pred_check_branch
        %979 = sbr.rel (%p977) target = $region36
      $region35: #{e5smollm_forward.35} parent=31 // pred_region
        %s980 = smul.u32 2, %s14
      $region36: #{e5smollm_forward.35} parent=31 // pred_fallthru
        _
    $region32: #{e5smollm_forward.35} parent=5 // pred_fallthru
      _
    %p981 = scmp.le.s32.totalorder 2, %s9
    // Predicated region
    $region37: #{e5smollm_forward.35} parent=5 // pred_check
      %p982 = pneg %p981
    $region38: #{e5smollm_forward.35} parent=5 // pred_check_branch
      %984 = sbr.rel (%p982) target = $region40
    $region39: #{e5smollm_forward.35} parent=5 // pred_region
      %s985 = ssub.s32 %s9, 2
      // Predicated region
      $region41: #{e5smollm_forward.35} parent=39 // pred_check
        %p986 = pneg %p106
      $region42: #{e5smollm_forward.35} parent=39 // pred_check_branch
        %988 = sbr.rel (%p986) target = $region44
      $region43: #{e5smollm_forward.35} parent=39 // pred_region
        %s989 = smul.u32 2, %s15
        %p990 = scmp.lt.s32.totalorder %s989, 3
        %s991 = scalar_select %p990, %s989, 3
        %s992 = smul.addr %s991, 6
        %s993 = smul.addr %s992, 4
        %s994 = scalar_lea.vmem %s3, %s993
      $region44: #{e5smollm_forward.35} parent=39 // pred_fallthru
        _
    $region40: #{e5smollm_forward.35} parent=5 // pred_fallthru
      _
  $region6: #{e5smollm_forward.35} parent=0 // loop_footer
    %s13 = sadd.s32 1, %s9
  $region7: #{e5smollm_forward.35} parent=0 // loop_footer_branch
    %8 = sbr.rel target = $region3
  $region8: #{e5smollm_forward.35} parent=0 // loop_exit
    _

// kernel: e5smollm_forward.37
$region0: #{e5smollm_forward.37}
  #allocation0 [shape = 'u32[]', space=smem, size = 0x4, offset = 0x4, fixed_abs, tag = 'smem constant byte address 0x4 - core index']
  #allocation1 [shape = 'u32[144,128]{1,0:T(1,128)}', space=vmem, size = 0x12000, scoped, tag = 'internal scratch']
  %s0 = inlined_call_operand.vmem [shape: bf16[32,256], index: 0, kind: input, shape index: {}]
  %s1 = inlined_call_operand.vmem [shape: bf16[256,256], index: 1, kind: input, shape index: {}]
  %s2 = inlined_call_operand.vmem [shape: bf16[32,256], index: 2, kind: input, shape index: {}]
  %s3 = inlined_call_operand.vmem [shape: bf16[32,256], index: 3, kind: output, shape index: {}]
  %s4 = sld [smem:[#allocation0]]
  $region45: #{e5smollm_forward.37} parent=0
    _
  %s6 = ssub.s32 1, %s4
  %s7 = scalar_select 0, %s6, %s4
  loop: start=0, step=1, limit=4
  $region2: #{e5smollm_forward.37} parent=0 // loop_pre_header
    _
  $region3: #{e5smollm_forward.37} parent=0 // loop_header
    %s9 = sphi 0, %s13
    %p10 = scmp.ge.s32.totalorder %s9, 4
    %s19 = sphi 0, %s21
    %s22 = sphi 0, %s19
    %s23 = sphi 0, %s22
    %s39 = sphi 0, %s23
    %s43 = sphi 0, %s43
    %s45 = sphi 0, %s43
    %s46 = sphi 0, %s45
    %s60 = sphi 0, %s46
    %s66 = sphi 0, %s68
    %s69 = sphi 0, %s66
    %s70 = sphi 0, %s69
    %s86 = sphi 0, %s70
    %s92 = sphi 0, %s94
    %s95 = sphi 0, %s92
    %s96 = sphi 0, %s95
    %s112 = sphi 0, %s96
  $region4: #{e5smollm_forward.37} parent=0 // loop_header_branch
    %12 = sbr.rel (%p10) target = $region8
  $region5: #{e5smollm_forward.37} parent=0 // loop_body
    %s14 = ssub.s32 %s9, 1
    %s15 = ssub.s32 %s9, 2
    %s16 = sadd.s32 %s9, 1
    %s17 = ssub.s32 %s9, %s16
    %p18 = scmp.eq.s32.totalorder %s17, 0
    %s20 = sadd.s32 %s19, 1
    %s21 = scalar_select %p18, %s19, %s20
    %p24 = pneg %p18
    %p25 = scmp.eq.s32.totalorder %s9, 1
    %p26 = por %p24, %p25
    %p27 = scmp.ne.s32.totalorder %s19, %s22
    %p28 = scmp.eq.s32.totalorder %s9, 0
    %p29 = por %p27, %p28
    %p30 = scmp.ne.s32.totalorder %s19, %s22
    %p31 = scmp.eq.s32.totalorder %s14, 1
    %p32 = por %p30, %p31
    %p33 = scmp.ne.s32.totalorder %s22, %s23
    %p34 = scmp.eq.s32.totalorder %s14, 0
    %p35 = por %p33, %p34
    %p36 = scmp.ne.s32.totalorder %s22, %s23
    %p37 = scmp.eq.s32.totalorder %s15, 1
    %p38 = por %p36, %p37
    %p40 = scmp.ne.s32.totalorder %s23, %s39
    %p41 = scmp.eq.s32.totalorder %s15, 0
    %p42 = por %p40, %p41
    %s44 = sadd.s32 %s43, 1
    %p47 = scmp.eq.s32.totalorder %s9, 1
    %p48 = scmp.ne.s32.totalorder %s43, %s45
    %p49 = scmp.eq.s32.totalorder %s9, 0
    %p50 = por %p48, %p49
    %p51 = scmp.ne.s32.totalorder %s43, %s45
    %p52 = scmp.eq.s32.totalorder %s14, 1
    %p53 = por %p51, %p52
    %p54 = scmp.ne.s32.totalorder %s45, %s46
    %p55 = scmp.eq.s32.totalorder %s14, 0
    %p56 = por %p54, %p55
    %p57 = scmp.ne.s32.totalorder %s45, %s46
    %p58 = scmp.eq.s32.totalorder %s15, 1
    %p59 = por %p57, %p58
    %p61 = scmp.ne.s32.totalorder %s46, %s60
    %p62 = scmp.eq.s32.totalorder %s15, 0
    %p63 = por %p61, %p62
    %s64 = ssub.s32 %s9, %s16
    %p65 = scmp.eq.s32.totalorder %s64, 0
    %s67 = sadd.s32 %s66, 1
    %s68 = scalar_select %p65, %s66, %s67
    %p71 = pneg %p65
    %p72 = scmp.eq.s32.totalorder %s9, 1
    %p73 = por %p71, %p72
    %p74 = scmp.ne.s32.totalorder %s66, %s69
    %p75 = scmp.eq.s32.totalorder %s9, 0
    %p76 = por %p74, %p75
    %p77 = scmp.ne.s32.totalorder %s66, %s69
    %p78 = scmp.eq.s32.totalorder %s14, 1
    %p79 = por %p77, %p78
    %p80 = scmp.ne.s32.totalorder %s69, %s70
    %p81 = scmp.eq.s32.totalorder %s14, 0
    %p82 = por %p80, %p81
    %p83 = scmp.ne.s32.totalorder %s69, %s70
    %p84 = scmp.eq.s32.totalorder %s15, 1
    %p85 = por %p83, %p84
    %p87 = scmp.ne.s32.totalorder %s70, %s86
    %p88 = scmp.eq.s32.totalorder %s15, 0
    %p89 = por %p87, %p88
    %s90 = ssub.s32 %s9, %s16
    %p91 = scmp.eq.s32.totalorder %s90, 0
    %s93 = sadd.s32 %s92, 1
    %s94 = scalar_select %p91, %s92, %s93
    %p97 = pneg %p91
    %p98 = scmp.eq.s32.totalorder %s9, 1
    %p99 = por %p97, %p98
    %p100 = scmp.ne.s32.totalorder %s92, %s95
    %p101 = scmp.eq.s32.totalorder %s9, 0
    %p102 = por %p100, %p101
    %p103 = scmp.ne.s32.totalorder %s92, %s95
    %p104 = scmp.eq.s32.totalorder %s14, 1
    %p105 = por %p103, %p104
    %p106 = scmp.ne.s32.totalorder %s95, %s96
    %p107 = scmp.eq.s32.totalorder %s14, 0
    %p108 = por %p106, %p107
    %p109 = scmp.ne.s32.totalorder %s95, %s96
    %p110 = scmp.eq.s32.totalorder %s15, 1
    %p111 = por %p109, %p110
    %p113 = scmp.ne.s32.totalorder %s96, %s112
    %p114 = scmp.eq.s32.totalorder %s15, 0
    %p115 = por %p113, %p114
    %p116 = scmp.le.s32.totalorder 1, %s9
    %p117 = scmp.lt.s32.totalorder %s9, 3
    %p118 = pnand %p116, %p117
    %p119 = pneg %p118
    // Predicated region
    $region9: #{e5smollm_forward.37} parent=5 // pred_check
      _
    $region10: #{e5smollm_forward.37} parent=5 // pred_check_branch
      %121 = sbr.rel (%p118) target = $region12
    $region11: #{e5smollm_forward.37} parent=5 // pred_region
      %s122 = ssub.s32 %s9, 1
      // Predicated region
      $region13: #{e5smollm_forward.37} parent=11 // pred_check
        %p123 = pneg %p56
      $region14: #{e5smollm_forward.37} parent=11 // pred_check_branch
        %125 = sbr.rel (%p123) target = $region16
      $region15: #{e5smollm_forward.37} parent=11 // pred_region
        _
      $region16: #{e5smollm_forward.37} parent=11 // pred_fallthru
        _
    $region12: #{e5smollm_forward.37} parent=5 // pred_fallthru
      _
    %p126 = scmp.lt.s32.totalorder %s9, 2
    // Predicated region
    $region17: #{e5smollm_forward.37} parent=5 // pred_check
      %p127 = pneg %p126
    $region18: #{e5smollm_forward.37} parent=5 // pred_check_branch
      %129 = sbr.rel (%p127) target = $region20
    $region19: #{e5smollm_forward.37} parent=5 // pred_region
      // Predicated region
      $region21: #{e5smollm_forward.37} parent=19 // pred_check
        %p130 = pneg %p29
      $region22: #{e5smollm_forward.37} parent=19 // pred_check_branch
        %132 = sbr.rel (%p130) target = $region24
      $region23: #{e5smollm_forward.37} parent=19 // pred_region
        %s133 = smul.u32 2, %s9
        %p134 = scmp.lt.s32.totalorder %s133, 3
        %s135 = scalar_select %p134, %s133, 3
        %s136 = smul.addr %s135, 2
        %s137 = smul.addr %s136, 4
        %s138 = scalar_lea.vmem %s0, %s137
        %s139 = smul.u32 2, %s9
      $region24: #{e5smollm_forward.37} parent=19 // pred_fallthru
        _
      // Predicated region
      $region25: #{e5smollm_forward.37} parent=19 // pred_check
        %p140 = pneg %p76
      $region26: #{e5smollm_forward.37} parent=19 // pred_check_branch
        %142 = sbr.rel (%p140) target = $region28
      $region27: #{e5smollm_forward.37} parent=19 // pred_region
        %s143 = smul.u32 2, %s9
        %p144 = scmp.lt.s32.totalorder %s143, 3
        %s145 = scalar_select %p144, %s143, 3
        %s146 = smul.addr %s145, 2
        %s147 = smul.addr %s146, 4
        %s148 = scalar_lea.vmem %s2, %s147
        %s149 = smul.u32 2, %s9
      $region28: #{e5smollm_forward.37} parent=19 // pred_fallthru
        _
    $region20: #{e5smollm_forward.37} parent=5 // pred_fallthru
      _
    %p150 = scmp.le.s32.totalorder 1, %s9
    %p151 = scmp.lt.s32.totalorder %s9, 3
    %p152 = pnand %p150, %p151
    %p153 = pneg %p152
    // Predicated region
    $region29: #{e5smollm_forward.37} parent=5 // pred_check
      _
    $region30: #{e5smollm_forward.37} parent=5 // pred_check_branch
      %155 = sbr.rel (%p152) target = $region32
    $region31: #{e5smollm_forward.37} parent=5 // pred_region
      %s156 = ssub.s32 %s9, 1
      %s157 = smul.u32 2, %s14
      %p158 = scmp.lt.s32.totalorder %s157, 3
      %s159 = scalar_select %p158, %s157, 3
      %s160 = smul.addr %s159, 2
      %s161 = smul.addr %s160, 4
      %s162 = scalar_lea.vmem %s0, %s161
      %p163 = pneg %p35
      %p164 = pneg %p32
      %p165 = pneg %p56
      %p166 = pneg %p53
      %s167 = smul.u32 2, %s14
      %p168 = scmp.lt.s32.totalorder %s167, 3
      %s169 = scalar_select %p168, %s167, 3
      %s170 = smul.addr %s169, 2
      %s171 = smul.addr %s170, 4
      %s172 = scalar_lea.vmem %s2, %s171
      %p173 = pneg %p82
      %p174 = pneg %p79
      %p175 = pneg %p108
      %p176 = pneg %p105
      %s177 = smul.u32 2, %s14
      %p178 = scmp.lt.s32.totalorder %s177, 3
      %s179 = scalar_select %p178, %s177, 3
      %s180 = smul.addr %s179, 2
      %s181 = smul.addr %s180, 4
      %s182 = scalar_lea.vmem %s3, %s181
      %s183 = smul.u32 2, %s14
      %p184 = scmp.lt.s32.totalorder %s183, 3
      %s185 = scalar_select %p184, %s183, 3
      %s186 = smul.addr %s185, 2
      %s187 = smul.addr %s186, 4
      %s188 = scalar_lea.vmem %s0, %s187
      %s189 = smul.u32 2, %s14
      %s190 = smul.u32 2, %s14
      %p191 = scmp.lt.s32.totalorder %s190, 3
      %s192 = scalar_select %p191, %s190, 3
      %s193 = smul.addr %s192, 2
      %s194 = smul.addr %s193, 4
      %s195 = scalar_lea.vmem %s2, %s194
      %s196 = smul.u32 2, %s14
      %s197 = smul.u32 2, %s14
      %p198 = scmp.lt.s32.totalorder %s197, 3
      %s199 = scalar_select %p198, %s197, 3
      %s200 = smul.addr %s199, 2
      %s201 = smul.addr %s200, 4
      %s202 = scalar_lea.vmem %s3, %s201
      %s203 = smul.u32 2, %s14
      %v204 = vld [vmem:[%s188] sm:$0xff]
      %v205 = vld [vmem:[%s188 + $0x8] sm:$0xff]
      %v206 = vld [vmem:[%s1] sm:$0xff]
      %v207 = vld [vmem:[%s1 + $0x8] sm:$0xff]
      %v208 = vld [vmem:[%s1 + $0x10] sm:$0xff]
      %v209 = vld [vmem:[%s1 + $0x18] sm:$0xff]
      %v210 = vld [vmem:[%s1 + $0x20] sm:$0xff]
      %v211 = vld [vmem:[%s1 + $0x28] sm:$0xff]
      %v212 = vld [vmem:[%s1 + $0x30] sm:$0xff]
      %v213 = vld [vmem:[%s1 + $0x38] sm:$0xff]
      %v214 = vld [vmem:[%s1 + $0x40] sm:$0xff]
      %v215 = vld [vmem:[%s1 + $0x48] sm:$0xff]
      %v216 = vld [vmem:[%s1 + $0x50] sm:$0xff]
      %v217 = vld [vmem:[%s1 + $0x58] sm:$0xff]
      %v218 = vld [vmem:[%s1 + $0x60] sm:$0xff]
      %v219 = vld [vmem:[%s1 + $0x68] sm:$0xff]
      %v220 = vld [vmem:[%s1 + $0x70] sm:$0xff]
      %v221 = vld [vmem:[%s1 + $0x78] sm:$0xff]
      %v222 = vld [vmem:[%s1 + $0x80] sm:$0xff]
      %v223 = vld [vmem:[%s1 + $0x88] sm:$0xff]
      %v224 = vld [vmem:[%s1 + $0x90] sm:$0xff]
      %v225 = vld [vmem:[%s1 + $0x98] sm:$0xff]
      %v226 = vld [vmem:[%s1 + $0xa0] sm:$0xff]
      %v227 = vld [vmem:[%s1 + $0xa8] sm:$0xff]
      %v228 = vld [vmem:[%s1 + $0xb0] sm:$0xff]
      %v229 = vld [vmem:[%s1 + $0xb8] sm:$0xff]
      %v230 = vld [vmem:[%s1 + $0xc0] sm:$0xff]
      %v231 = vld [vmem:[%s1 + $0xc8] sm:$0xff]
      %v232 = vld [vmem:[%s1 + $0xd0] sm:$0xff]
      %v233 = vld [vmem:[%s1 + $0xd8] sm:$0xff]
      %v234 = vld [vmem:[%s1 + $0xe0] sm:$0xff]
      %v235 = vld [vmem:[%s1 + $0xe8] sm:$0xff]
      %v236 = vld [vmem:[%s1 + $0xf0] sm:$0xff]
      %v237 = vld [vmem:[%s1 + $0xf8] sm:$0xff]
      %v238 = vld [vmem:[%s195] sm:$0xff]
      %v239 = vld [vmem:[%s195 + $0x8] sm:$0xff]
      %v240 = vunpack.c.l.bf16 %v238
      %v241 = vunpack.c.h.bf16 %v238
      %v242 = vunpack.c.l.bf16 %v239
      %v243 = vunpack.c.h.bf16 %v239
      %v246 = vunpack.c.l.b16 %v204
      %v247 = vunpack.c.h.b16 %v204
      %v248 = vunpack.c.l.b16 %v205
      %v249 = vunpack.c.h.b16 %v205
      %v250 = vpack.c.b16 %v248, %v246
      %v251 = vpack.c.b16 %v249, %v247
      %v286 = vunpack.c.l.b16 %v206
      %v287 = vunpack.c.h.b16 %v206
      %v288 = vunpack.c.l.b16 %v207
      %v289 = vunpack.c.h.b16 %v207
      %v290 = vunpack.c.l.b16 %v208
      %v291 = vunpack.c.h.b16 %v208
      %v292 = vunpack.c.l.b16 %v209
      %v293 = vunpack.c.h.b16 %v209
      %v294 = vunpack.c.l.b16 %v210
      %v295 = vunpack.c.h.b16 %v210
      %v296 = vunpack.c.l.b16 %v211
      %v297 = vunpack.c.h.b16 %v211
      %v298 = vunpack.c.l.b16 %v212
      %v299 = vunpack.c.h.b16 %v212
      %v300 = vunpack.c.l.b16 %v213
      %v301 = vunpack.c.h.b16 %v213
      %v302 = vunpack.c.l.b16 %v214
      %v303 = vunpack.c.h.b16 %v214
      %v304 = vunpack.c.l.b16 %v215
      %v305 = vunpack.c.h.b16 %v215
      %v306 = vunpack.c.l.b16 %v216
      %v307 = vunpack.c.h.b16 %v216
      %v308 = vunpack.c.l.b16 %v217
      %v309 = vunpack.c.h.b16 %v217
      %v310 = vunpack.c.l.b16 %v218
      %v311 = vunpack.c.h.b16 %v218
      %v312 = vunpack.c.l.b16 %v219
      %v313 = vunpack.c.h.b16 %v219
      %v314 = vunpack.c.l.b16 %v220
      %v315 = vunpack.c.h.b16 %v220
      %v316 = vunpack.c.l.b16 %v221
      %v317 = vunpack.c.h.b16 %v221
      %v318 = vunpack.c.l.b16 %v222
      %v319 = vunpack.c.h.b16 %v222
      %v320 = vunpack.c.l.b16 %v223
      %v321 = vunpack.c.h.b16 %v223
      %v322 = vunpack.c.l.b16 %v224
      %v323 = vunpack.c.h.b16 %v224
      %v324 = vunpack.c.l.b16 %v225
      %v325 = vunpack.c.h.b16 %v225
      %v326 = vunpack.c.l.b16 %v226
      %v327 = vunpack.c.h.b16 %v226
      %v328 = vunpack.c.l.b16 %v227
      %v329 = vunpack.c.h.b16 %v227
      %v330 = vunpack.c.l.b16 %v228
      %v331 = vunpack.c.h.b16 %v228
      %v332 = vunpack.c.l.b16 %v229
      %v333 = vunpack.c.h.b16 %v229
      %v334 = vunpack.c.l.b16 %v230
      %v335 = vunpack.c.h.b16 %v230
      %v336 = vunpack.c.l.b16 %v231
      %v337 = vunpack.c.h.b16 %v231
      %v338 = vunpack.c.l.b16 %v232
      %v339 = vunpack.c.h.b16 %v232
      %v340 = vunpack.c.l.b16 %v233
      %v341 = vunpack.c.h.b16 %v233
      %v342 = vunpack.c.l.b16 %v234
      %v343 = vunpack.c.h.b16 %v234
      %v344 = vunpack.c.l.b16 %v235
      %v345 = vunpack.c.h.b16 %v235
      %v346 = vunpack.c.l.b16 %v236
      %v347 = vunpack.c.h.b16 %v236
      %v348 = vunpack.c.l.b16 %v237
      %v349 = vunpack.c.h.b16 %v237
      %v350 = vpack.c.b16 %v288, %v286
      %v351 = vpack.c.b16 %v289, %v287
      %v352 = vpack.c.b16 %v292, %v290
      %v353 = vpack.c.b16 %v293, %v291
      %v354 = vpack.c.b16 %v296, %v294
      %v355 = vpack.c.b16 %v297, %v295
      %v356 = vpack.c.b16 %v300, %v298
      %v357 = vpack.c.b16 %v301, %v299
      %v358 = vpack.c.b16 %v304, %v302
      %v359 = vpack.c.b16 %v305, %v303
      %v360 = vpack.c.b16 %v308, %v306
      %v361 = vpack.c.b16 %v309, %v307
      %v362 = vpack.c.b16 %v312, %v310
      %v363 = vpack.c.b16 %v313, %v311
      %v364 = vpack.c.b16 %v316, %v314
      %v365 = vpack.c.b16 %v317, %v315
      %v366 = vpack.c.b16 %v320, %v318
      %v367 = vpack.c.b16 %v321, %v319
      %v368 = vpack.c.b16 %v324, %v322
      %v369 = vpack.c.b16 %v325, %v323
      %v370 = vpack.c.b16 %v328, %v326
      %v371 = vpack.c.b16 %v329, %v327
      %v372 = vpack.c.b16 %v332, %v330
      %v373 = vpack.c.b16 %v333, %v331
      %v374 = vpack.c.b16 %v336, %v334
      %v375 = vpack.c.b16 %v337, %v335
      %v376 = vpack.c.b16 %v340, %v338
      %v377 = vpack.c.b16 %v341, %v339
      %v378 = vpack.c.b16 %v344, %v342
      %v379 = vpack.c.b16 %v345, %v343
      %v380 = vpack.c.b16 %v348, %v346
      %v381 = vpack.c.b16 %v349, %v347
      %414 = vmatprep.subr.bf16.mxu0 %v351
      %415 = vmatpush1.bf16.msra.mxu0 %v350
      %416 = vmatprep.subr.bf16.mxu0 %v353
      %417 = vmatpush1.bf16.msra.mxu0 %v352
      %418 = vmatprep.subr.bf16.mxu0 %v355
      %419 = vmatpush1.bf16.msra.mxu0 %v354
      %420 = vmatprep.subr.bf16.mxu0 %v357
      %421 = vmatpush1.bf16.msra.mxu0 %v356
      %422 = vmatprep.subr.bf16.mxu0 %v359
      %423 = vmatpush1.bf16.msra.mxu0 %v358
      %424 = vmatprep.subr.bf16.mxu0 %v361
      %425 = vmatpush1.bf16.msra.mxu0 %v360
      %426 = vmatprep.subr.bf16.mxu0 %v363
      %427 = vmatpush1.bf16.msra.mxu0 %v362
      %428 = vmatprep.subr.bf16.mxu0 %v365
      %429 = vmatpush1.bf16.msra.mxu0 %v364
      %430 = vmatprep.subr.bf16.mxu0 %v367
      %431 = vmatpush1.bf16.msra.mxu0 %v366
      %432 = vmatprep.subr.bf16.mxu0 %v369
      %433 = vmatpush1.bf16.msra.mxu0 %v368
      %434 = vmatprep.subr.bf16.mxu0 %v371
      %435 = vmatpush1.bf16.msra.mxu0 %v370
      %436 = vmatprep.subr.bf16.mxu0 %v373
      %437 = vmatpush1.bf16.msra.mxu0 %v372
      %438 = vmatprep.subr.bf16.mxu0 %v375
      %439 = vmatpush1.bf16.msra.mxu0 %v374
      %440 = vmatprep.subr.bf16.mxu0 %v377
      %441 = vmatpush1.bf16.msra.mxu0 %v376
      %442 = vmatprep.subr.bf16.mxu0 %v379
      %443 = vmatpush1.bf16.msra.mxu0 %v378
      %444 = vmatprep.subr.bf16.mxu0 %v381
      %445 = vmatpush1.bf16.msra.mxu0 %v380
      %446 = vmatprep.mubr.bf16.mxu0 %v251
      %447 = vmatmul.mubr.bf16.gmra.mrb[0].mxu0 %v250
      %v448 = vpop.f32.mrb[0].mxu0
      %v449 = vadd.f32 %v240, %v448
      %v450 = vpop.f32.mrb[0].mxu0
      %v451 = vadd.f32 %v241, %v450
      %v452 = vpop.f32.mrb[0].mxu0
      %v453 = vadd.f32 %v242, %v452
      %v454 = vpop.f32.mrb[0].mxu0
      %v455 = vadd.f32 %v243, %v454
      %456 = vdwg.mxu0
      %v457 = vpack.c.bf16 %v453, %v449
      %v458 = vpack.c.bf16 %v455, %v451
      %v461 = vunpack.c.l.b16 %v457
      %v462 = vunpack.c.l.b16 %v458
      %v463 = vunpack.c.h.b16 %v457
      %v464 = vunpack.c.h.b16 %v458
      %v465 = vpack.c.b16 %v462, %v461
      %v466 = vpack.c.b16 %v464, %v463
      %469 = vst [vmem:[%s202] sm:$0xff] %v465
      %470 = vst [vmem:[%s202 + $0x8] sm:$0xff] %v466
      %s471 = smul.u32 2, %s14
      %p472 = scmp.lt.s32.totalorder %s471, 3
      %s473 = scalar_select %p472, %s471, 3
      %s474 = smul.addr %s473, 2
      %s475 = smul.addr %s474, 4
      %s476 = scalar_lea.vmem %s3, %s475
      // Predicated region
      $region33: #{e5smollm_forward.37} parent=31 // pred_check
        %p477 = pneg %p105
      $region34: #{e5smollm_forward.37} parent=31 // pred_check_branch
        %479 = sbr.rel (%p477) target = $region36
      $region35: #{e5smollm_forward.37} parent=31 // pred_region
        %s480 = smul.u32 2, %s14
      $region36: #{e5smollm_forward.37} parent=31 // pred_fallthru
        _
    $region32: #{e5smollm_forward.37} parent=5 // pred_fallthru
      _
    %p481 = scmp.le.s32.totalorder 2, %s9
    // Predicated region
    $region37: #{e5smollm_forward.37} parent=5 // pred_check
      %p482 = pneg %p481
    $region38: #{e5smollm_forward.37} parent=5 // pred_check_branch
      %484 = sbr.rel (%p482) target = $region40
    $region39: #{e5smollm_forward.37} parent=5 // pred_region
      %s485 = ssub.s32 %s9, 2
      // Predicated region
      $region41: #{e5smollm_forward.37} parent=39 // pred_check
        %p486 = pneg %p111
      $region42: #{e5smollm_forward.37} parent=39 // pred_check_branch
        %488 = sbr.rel (%p486) target = $region44
      $region43: #{e5smollm_forward.37} parent=39 // pred_region
        %s489 = smul.u32 2, %s15
        %p490 = scmp.lt.s32.totalorder %s489, 3
        %s491 = scalar_select %p490, %s489, 3
        %s492 = smul.addr %s491, 2
        %s493 = smul.addr %s492, 4
        %s494 = scalar_lea.vmem %s3, %s493
      $region44: #{e5smollm_forward.37} parent=39 // pred_fallthru
        _
    $region40: #{e5smollm_forward.37} parent=5 // pred_fallthru
      _
  $region6: #{e5smollm_forward.37} parent=0 // loop_footer
    %s13 = sadd.s32 1, %s9
  $region7: #{e5smollm_forward.37} parent=0 // loop_footer_branch
    %8 = sbr.rel target = $region3
  $region8: #{e5smollm_forward.37} parent=0 // loop_exit
    _

// kernel: e5smollm_forward.36
$region0: #{e5smollm_forward.36}
  #allocation0 [shape = 'u32[]', space=smem, size = 0x4, offset = 0x4, fixed_abs, tag = 'smem constant byte address 0x4 - core index']
  #allocation1 [shape = 'u32[144,128]{1,0:T(1,128)}', space=vmem, size = 0x12000, scoped, tag = 'internal scratch']
  %s0 = inlined_call_operand.vmem [shape: bf16[2,4,16,64], index: 0, kind: input, shape index: {}]
  %s1 = inlined_call_operand.vmem [shape: bf16[2,4,16,64], index: 1, kind: input, shape index: {}]
  %s2 = inlined_call_operand.vmem [shape: bf16[2,4,16,64], index: 2, kind: input, shape index: {}]
  %s3 = inlined_call_operand.vmem [shape: f32[2,16,16], index: 3, kind: input, shape index: {}]
  %s4 = inlined_call_operand.vmem [shape: bf16[2,4,16,64], index: 4, kind: output, shape index: {}]
  %s5 = sld [smem:[#allocation0]]
  $region49: #{e5smollm_forward.36} parent=0
    _
  %s7 = ssub.s32 1, %s5
  %s8 = scalar_select 0, %s7, %s5
  loop: start=0, step=1, limit=4
  $region2: #{e5smollm_forward.36} parent=0 // loop_pre_header
    _
  $region3: #{e5smollm_forward.36} parent=0 // loop_header
    %s10 = sphi 0, %s14
    %p11 = scmp.ge.s32.totalorder %s10, 4
    %s20 = sphi 0, %s22
    %s23 = sphi 0, %s20
    %s24 = sphi 0, %s23
    %s40 = sphi 0, %s24
    %s46 = sphi 0, %s48
    %s49 = sphi 0, %s46
    %s50 = sphi 0, %s49
    %s66 = sphi 0, %s50
    %s72 = sphi 0, %s74
    %s75 = sphi 0, %s72
    %s76 = sphi 0, %s75
    %s92 = sphi 0, %s76
    %s98 = sphi 0, %s100
    %s101 = sphi 0, %s98
    %s102 = sphi 0, %s101
    %s118 = sphi 0, %s102
    %s124 = sphi 0, %s126
    %s127 = sphi 0, %s124
    %s128 = sphi 0, %s127
    %s144 = sphi 0, %s128
  $region4: #{e5smollm_forward.36} parent=0 // loop_header_branch
    %13 = sbr.rel (%p11) target = $region8
  $region5: #{e5smollm_forward.36} parent=0 // loop_body
    %s15 = ssub.s32 %s10, 1
    %s16 = ssub.s32 %s10, 2
    %s17 = sadd.s32 %s10, 1
    %s18 = ssub.s32 %s10, %s17
    %p19 = scmp.eq.s32.totalorder %s18, 0
    %s21 = sadd.s32 %s20, 1
    %s22 = scalar_select %p19, %s20, %s21
    %p25 = pneg %p19
    %p26 = scmp.eq.s32.totalorder %s10, 1
    %p27 = por %p25, %p26
    %p28 = scmp.ne.s32.totalorder %s20, %s23
    %p29 = scmp.eq.s32.totalorder %s10, 0
    %p30 = por %p28, %p29
    %p31 = scmp.ne.s32.totalorder %s20, %s23
    %p32 = scmp.eq.s32.totalorder %s15, 1
    %p33 = por %p31, %p32
    %p34 = scmp.ne.s32.totalorder %s23, %s24
    %p35 = scmp.eq.s32.totalorder %s15, 0
    %p36 = por %p34, %p35
    %p37 = scmp.ne.s32.totalorder %s23, %s24
    %p38 = scmp.eq.s32.totalorder %s16, 1
    %p39 = por %p37, %p38
    %p41 = scmp.ne.s32.totalorder %s24, %s40
    %p42 = scmp.eq.s32.totalorder %s16, 0
    %p43 = por %p41, %p42
    %s44 = ssub.s32 %s10, %s17
    %p45 = scmp.eq.s32.totalorder %s44, 0
    %s47 = sadd.s32 %s46, 1
    %s48 = scalar_select %p45, %s46, %s47
    %p51 = pneg %p45
    %p52 = scmp.eq.s32.totalorder %s10, 1
    %p53 = por %p51, %p52
    %p54 = scmp.ne.s32.totalorder %s46, %s49
    %p55 = scmp.eq.s32.totalorder %s10, 0
    %p56 = por %p54, %p55
    %p57 = scmp.ne.s32.totalorder %s46, %s49
    %p58 = scmp.eq.s32.totalorder %s15, 1
    %p59 = por %p57, %p58
    %p60 = scmp.ne.s32.totalorder %s49, %s50
    %p61 = scmp.eq.s32.totalorder %s15, 0
    %p62 = por %p60, %p61
    %p63 = scmp.ne.s32.totalorder %s49, %s50
    %p64 = scmp.eq.s32.totalorder %s16, 1
    %p65 = por %p63, %p64
    %p67 = scmp.ne.s32.totalorder %s50, %s66
    %p68 = scmp.eq.s32.totalorder %s16, 0
    %p69 = por %p67, %p68
    %s70 = ssub.s32 %s10, %s17
    %p71 = scmp.eq.s32.totalorder %s70, 0
    %s73 = sadd.s32 %s72, 1
    %s74 = scalar_select %p71, %s72, %s73
    %p77 = pneg %p71
    %p78 = scmp.eq.s32.totalorder %s10, 1
    %p79 = por %p77, %p78
    %p80 = scmp.ne.s32.totalorder %s72, %s75
    %p81 = scmp.eq.s32.totalorder %s10, 0
    %p82 = por %p80, %p81
    %p83 = scmp.ne.s32.totalorder %s72, %s75
    %p84 = scmp.eq.s32.totalorder %s15, 1
    %p85 = por %p83, %p84
    %p86 = scmp.ne.s32.totalorder %s75, %s76
    %p87 = scmp.eq.s32.totalorder %s15, 0
    %p88 = por %p86, %p87
    %p89 = scmp.ne.s32.totalorder %s75, %s76
    %p90 = scmp.eq.s32.totalorder %s16, 1
    %p91 = por %p89, %p90
    %p93 = scmp.ne.s32.totalorder %s76, %s92
    %p94 = scmp.eq.s32.totalorder %s16, 0
    %p95 = por %p93, %p94
    %s96 = ssub.s32 %s10, %s17
    %p97 = scmp.eq.s32.totalorder %s96, 0
    %s99 = sadd.s32 %s98, 1
    %s100 = scalar_select %p97, %s98, %s99
    %p103 = pneg %p97
    %p104 = scmp.eq.s32.totalorder %s10, 1
    %p105 = por %p103, %p104
    %p106 = scmp.ne.s32.totalorder %s98, %s101
    %p107 = scmp.eq.s32.totalorder %s10, 0
    %p108 = por %p106, %p107
    %p109 = scmp.ne.s32.totalorder %s98, %s101
    %p110 = scmp.eq.s32.totalorder %s15, 1
    %p111 = por %p109, %p110
    %p112 = scmp.ne.s32.totalorder %s101, %s102
    %p113 = scmp.eq.s32.totalorder %s15, 0
    %p114 = por %p112, %p113
    %p115 = scmp.ne.s32.totalorder %s101, %s102
    %p116 = scmp.eq.s32.totalorder %s16, 1
    %p117 = por %p115, %p116
    %p119 = scmp.ne.s32.totalorder %s102, %s118
    %p120 = scmp.eq.s32.totalorder %s16, 0
    %p121 = por %p119, %p120
    %s122 = ssub.s32 %s10, %s17
    %p123 = scmp.eq.s32.totalorder %s122, 0
    %s125 = sadd.s32 %s124, 1
    %s126 = scalar_select %p123, %s124, %s125
    %p129 = pneg %p123
    %p130 = scmp.eq.s32.totalorder %s10, 1
    %p131 = por %p129, %p130
    %p132 = scmp.ne.s32.totalorder %s124, %s127
    %p133 = scmp.eq.s32.totalorder %s10, 0
    %p134 = por %p132, %p133
    %p135 = scmp.ne.s32.totalorder %s124, %s127
    %p136 = scmp.eq.s32.totalorder %s15, 1
    %p137 = por %p135, %p136
    %p138 = scmp.ne.s32.totalorder %s127, %s128
    %p139 = scmp.eq.s32.totalorder %s15, 0
    %p140 = por %p138, %p139
    %p141 = scmp.ne.s32.totalorder %s127, %s128
    %p142 = scmp.eq.s32.totalorder %s16, 1
    %p143 = por %p141, %p142
    %p145 = scmp.ne.s32.totalorder %s128, %s144
    %p146 = scmp.eq.s32.totalorder %s16, 0
    %p147 = por %p145, %p146
    %p148 = scmp.le.s32.totalorder 1, %s10
    %p149 = scmp.lt.s32.totalorder %s10, 3
    %p150 = pnand %p148, %p149
    %p151 = pneg %p150
    // Predicated region
    $region9: #{e5smollm_forward.36} parent=5 // pred_check
      _
    $region10: #{e5smollm_forward.36} parent=5 // pred_check_branch
      %153 = sbr.rel (%p150) target = $region12
    $region11: #{e5smollm_forward.36} parent=5 // pred_region
      %s154 = ssub.s32 %s10, 1
    $region12: #{e5smollm_forward.36} parent=5 // pred_fallthru
      _
    %p155 = scmp.lt.s32.totalorder %s10, 2
    // Predicated region
    $region13: #{e5smollm_forward.36} parent=5 // pred_check
      %p156 = pneg %p155
    $region14: #{e5smollm_forward.36} parent=5 // pred_check_branch
      %158 = sbr.rel (%p156) target = $region16
    $region15: #{e5smollm_forward.36} parent=5 // pred_region
      // Predicated region
      $region17: #{e5smollm_forward.36} parent=15 // pred_check
        %p159 = pneg %p30
      $region18: #{e5smollm_forward.36} parent=15 // pred_check_branch
        %161 = sbr.rel (%p159) target = $region20
      $region19: #{e5smollm_forward.36} parent=15 // pred_region
        %p162 = scmp.lt.s32.totalorder %s10, 1
        %s163 = scalar_select %p162, %s10, 1
        %s164 = smul.addr %s163, 8
        %s165 = smul.addr %s164, 4
        %s166 = scalar_lea.vmem %s0, %s165
      $region20: #{e5smollm_forward.36} parent=15 // pred_fallthru
        _
      // Predicated region
      $region21: #{e5smollm_forward.36} parent=15 // pred_check
        %p167 = pneg %p56
      $region22: #{e5smollm_forward.36} parent=15 // pred_check_branch
        %169 = sbr.rel (%p167) target = $region24
      $region23: #{e5smollm_forward.36} parent=15 // pred_region
        %p170 = scmp.lt.s32.totalorder %s10, 1
        %s171 = scalar_select %p170, %s10, 1
        %s172 = smul.addr %s171, 8
        %s173 = smul.addr %s172, 4
        %s174 = scalar_lea.vmem %s1, %s173
      $region24: #{e5smollm_forward.36} parent=15 // pred_fallthru
        _
      // Predicated region
      $region25: #{e5smollm_forward.36} parent=15 // pred_check
        %p175 = pneg %p82
      $region26: #{e5smollm_forward.36} parent=15 // pred_check_branch
        %177 = sbr.rel (%p175) target = $region28
      $region27: #{e5smollm_forward.36} parent=15 // pred_region
        %p178 = scmp.lt.s32.totalorder %s10, 1
        %s179 = scalar_select %p178, %s10, 1
        %s180 = smul.addr %s179, 8
        %s181 = smul.addr %s180, 4
        %s182 = scalar_lea.vmem %s2, %s181
      $region28: #{e5smollm_forward.36} parent=15 // pred_fallthru
        _
      // Predicated region
      $region29: #{e5smollm_forward.36} parent=15 // pred_check
        %p183 = pneg %p108
      $region30: #{e5smollm_forward.36} parent=15 // pred_check_branch
        %185 = sbr.rel (%p183) target = $region32
      $region31: #{e5smollm_forward.36} parent=15 // pred_region
        %p186 = scmp.lt.s32.totalorder %s10, 1
        %s187 = scalar_select %p186, %s10, 1
        %s188 = smul.addr %s187, 2
        %s189 = smul.addr %s188, 8
        %s190 = scalar_lea.vmem %s3, %s189
      $region32: #{e5smollm_forward.36} parent=15 // pred_fallthru
        _
    $region16: #{e5smollm_forward.36} parent=5 // pred_fallthru
      _
    %p191 = scmp.le.s32.totalorder 1, %s10
    %p192 = scmp.lt.s32.totalorder %s10, 3
    %p193 = pnand %p191, %p192
    %p194 = pneg %p193
    // Predicated region
    $region33: #{e5smollm_forward.36} parent=5 // pred_check
      _
    $region34: #{e5smollm_forward.36} parent=5 // pred_check_branch
      %196 = sbr.rel (%p193) target = $region36
    $region35: #{e5smollm_forward.36} parent=5 // pred_region
      %s197 = ssub.s32 %s10, 1
      %p198 = scmp.lt.s32.totalorder %s15, 1
      %s199 = scalar_select %p198, %s15, 1
      %s200 = smul.addr %s199, 8
      %s201 = smul.addr %s200, 4
      %s202 = scalar_lea.vmem %s0, %s201
      %p203 = pneg %p36
      %p204 = pneg %p33
      %p205 = scmp.lt.s32.totalorder %s15, 1
      %s206 = scalar_select %p205, %s15, 1
      %s207 = smul.addr %s206, 8
      %s208 = smul.addr %s207, 4
      %s209 = scalar_lea.vmem %s1, %s208
      %p210 = pneg %p62
      %p211 = pneg %p59
      %p212 = scmp.lt.s32.totalorder %s15, 1
      %s213 = scalar_select %p212, %s15, 1
      %s214 = smul.addr %s213, 8
      %s215 = smul.addr %s214, 4
      %s216 = scalar_lea.vmem %s2, %s215
      %p217 = pneg %p88
      %p218 = pneg %p85
      %p219 = scmp.lt.s32.totalorder %s15, 1
      %s220 = scalar_select %p219, %s15, 1
      %s221 = smul.addr %s220, 2
      %s222 = smul.addr %s221, 8
      %s223 = scalar_lea.vmem %s3, %s222
      %p224 = pneg %p114
      %p225 = pneg %p111
      %p226 = pneg %p140
      %p227 = pneg %p137
      %p228 = scmp.lt.s32.totalorder %s15, 1
      %s229 = scalar_select %p228, %s15, 1
      %s230 = smul.addr %s229, 8
      %s231 = smul.addr %s230, 4
      %s232 = scalar_lea.vmem %s4, %s231
      %p233 = scmp.lt.s32.totalorder %s15, 1
      %s234 = scalar_select %p233, %s15, 1
      %s235 = smul.addr %s234, 8
      %s236 = smul.addr %s235, 4
      %s237 = scalar_lea.vmem %s0, %s236
      %p238 = scmp.lt.s32.totalorder %s15, 1
      %s239 = scalar_select %p238, %s15, 1
      %s240 = smul.addr %s239, 8
      %s241 = smul.addr %s240, 4
      %s242 = scalar_lea.vmem %s1, %s241
      %p243 = scmp.lt.s32.totalorder %s15, 1
      %s244 = scalar_select %p243, %s15, 1
      %s245 = smul.addr %s244, 8
      %s246 = smul.addr %s245, 4
      %s247 = scalar_lea.vmem %s2, %s246
      %p248 = scmp.lt.s32.totalorder %s15, 1
      %s249 = scalar_select %p248, %s15, 1
      %s250 = smul.addr %s249, 2
      %s251 = smul.addr %s250, 8
      %s252 = scalar_lea.vmem %s3, %s251
      %p253 = scmp.lt.s32.totalorder %s15, 1
      %s254 = scalar_select %p253, %s15, 1
      %s255 = smul.addr %s254, 8
      %s256 = smul.addr %s255, 4
      %s257 = scalar_lea.vmem %s4, %s256
      %v259 = vld [vmem:[%s237] sm:$0xf]
      %v260 = vld [vmem:[%s237 + $0x4] sm:$0xf]
      %v261 = vld [vmem:[%s237 + $0x8] sm:$0xf]
      %v262 = vld [vmem:[%s237 + $0xc] sm:$0xf]
      %v263 = vld [vmem:[%s237 + $0x10] sm:$0xf]
      %v264 = vld [vmem:[%s237 + $0x14] sm:$0xf]
      %v265 = vld [vmem:[%s237 + $0x18] sm:$0xf]
      %v266 = vld [vmem:[%s237 + $0x1c] sm:$0xf]
      %v267 = vld [vmem:[%s242] sm:$0xf]
      %v268 = vld [vmem:[%s242 + $0x4] sm:$0xf]
      %v269 = vld [vmem:[%s242 + $0x8] sm:$0xf]
      %v270 = vld [vmem:[%s242 + $0xc] sm:$0xf]
      %v271 = vld [vmem:[%s242 + $0x10] sm:$0xf]
      %v272 = vld [vmem:[%s242 + $0x14] sm:$0xf]
      %v273 = vld [vmem:[%s242 + $0x18] sm:$0xf]
      %v274 = vld [vmem:[%s242 + $0x1c] sm:$0xf]
      %v275 = vld [vmem:[%s247] sm:$0xf]
      %v276 = vld [vmem:[%s247 + $0x4] sm:$0xf]
      %v277 = vld [vmem:[%s247 + $0x8] sm:$0xf]
      %v278 = vld [vmem:[%s247 + $0xc] sm:$0xf]
      %v279 = vld [vmem:[%s247 + $0x10] sm:$0xf]
      %v280 = vld [vmem:[%s247 + $0x14] sm:$0xf]
      %v281 = vld [vmem:[%s247 + $0x18] sm:$0xf]
      %v282 = vld [vmem:[%s247 + $0x1c] sm:$0xf]
      %v283 = vld [vmem:[%s252] sm:$0xff]
      %v284 = vld [vmem:[%s252 + $0x8] sm:$0xff]
      %v287 = vunpack.c.l.b16 %v259
      %v288 = vunpack.c.l.b16 %v260
      %v289 = vpack.c.b16 %v288, %v287
      %v292 = vunpack.c.l.b16 %v267
      %v293 = vunpack.c.l.b16 %v268
      %v294 = vpack.c.b16 %v293, %v292
      %vm295 = vcmask 523264
      %v297 = vsel %vm295, %v289, 0
      %v300 = vsel %vm295, %v294, 0
      %302 = vmatprep.subr.bf16.mxu0 0
      %303 = vmatpush1.bf16.xpose.msra.mxu0 %v300
      %304 = vmatprep.subr.bf16.mxu0 0
      %305 = vmatpush1.bf16.xpose.msra.mxu0 0
      %306 = vmatprep.subr.bf16.mxu0 0
      %307 = vmatpush1.bf16.xpose.msra.mxu0 0
      %308 = vmatprep.subr.bf16.mxu0 0
      %309 = vmatpush1.bf16.xpose.msra.mxu0 0
      %310 = vmatprep.subr.bf16.mxu0 0
      %311 = vmatpush1.bf16.xpose.msra.mxu0 0
      %312 = vmatprep.subr.bf16.mxu0 0
      %313 = vmatpush1.bf16.xpose.msra.mxu0 0
      %314 = vmatprep.subr.bf16.mxu0 0
      %315 = vmatpush1.bf16.xpose.msra.mxu0 0
      %316 = vmatprep.subr.bf16.mxu0 0
      %317 = vmatpush1.bf16.xpose.msra.mxu0 0
      %318 = vmatprep.subr.bf16.mxu0 0
      %319 = vmatpush1.bf16.xpose.msra.mxu0 0
      %320 = vmatprep.subr.bf16.mxu0 0
      %321 = vmatpush1.bf16.xpose.msra.mxu0 0
      %322 = vmatprep.subr.bf16.mxu0 0
      %323 = vmatpush1.bf16.xpose.msra.mxu0 0
      %324 = vmatprep.subr.bf16.mxu0 0
      %325 = vmatpush1.bf16.xpose.msra.mxu0 0
      %326 = vmatprep.subr.bf16.mxu0 0
      %327 = vmatpush1.bf16.xpose.msra.mxu0 0
      %328 = vmatprep.subr.bf16.mxu0 0
      %329 = vmatpush1.bf16.xpose.msra.mxu0 0
      %330 = vmatprep.subr.bf16.mxu0 0
      %331 = vmatpush1.bf16.xpose.msra.mxu0 0
      %332 = vmatprep.subr.bf16.mxu0 0
      %333 = vmatpush1.bf16.xpose.msra.mxu0 0
      %334 = vmatprep.mubr.bf16.mxu0 0
      %335 = vmatmul.mubr.bf16.gmra.mrb[0].mxu0 %v297
      %v336 = vpop.f32.mrb[0].mxu0
      %v337 = vadd.f32 0.0, %v336
      %v338 = vpop.f32.mrb[0].mxu0
      %v339 = vpop.f32.mrb[0].mxu0
      %v340 = vadd.f32 0.0, %v339
      %v341 = vpop.f32.mrb[0].mxu0
      %342 = vdwg.mxu0
      %v345 = vunpack.c.l.b16 %v261
      %v346 = vunpack.c.l.b16 %v262
      %v347 = vpack.c.b16 %v346, %v345
      %v350 = vunpack.c.l.b16 %v269
      %v351 = vunpack.c.l.b16 %v270
      %v352 = vpack.c.b16 %v351, %v350
      %v354 = vsel %vm295, %v347, 0
      %v357 = vsel %vm295, %v352, 0
      %359 = vmatprep.subr.bf16.mxu0 0
      %360 = vmatpush1.bf16.xpose.msra.mxu0 %v357
      %361 = vmatprep.subr.bf16.mxu0 0
      %362 = vmatpush1.bf16.xpose.msra.mxu0 0
      %363 = vmatprep.subr.bf16.mxu0 0
      %364 = vmatpush1.bf16.xpose.msra.mxu0 0
      %365 = vmatprep.subr.bf16.mxu0 0
      %366 = vmatpush1.bf16.xpose.msra.mxu0 0
      %367 = vmatprep.subr.bf16.mxu0 0
      %368 = vmatpush1.bf16.xpose.msra.mxu0 0
      %369 = vmatprep.subr.bf16.mxu0 0
      %370 = vmatpush1.bf16.xpose.msra.mxu0 0
      %371 = vmatprep.subr.bf16.mxu0 0
      %372 = vmatpush1.bf16.xpose.msra.mxu0 0
      %373 = vmatprep.subr.bf16.mxu0 0
      %374 = vmatpush1.bf16.xpose.msra.mxu0 0
      %375 = vmatprep.subr.bf16.mxu0 0
      %376 = vmatpush1.bf16.xpose.msra.mxu0 0
      %377 = vmatprep.subr.bf16.mxu0 0
      %378 = vmatpush1.bf16.xpose.msra.mxu0 0
      %379 = vmatprep.subr.bf16.mxu0 0
      %380 = vmatpush1.bf16.xpose.msra.mxu0 0
      %381 = vmatprep.subr.bf16.mxu0 0
      %382 = vmatpush1.bf16.xpose.msra.mxu0 0
      %383 = vmatprep.subr.bf16.mxu0 0
      %384 = vmatpush1.bf16.xpose.msra.mxu0 0
      %385 = vmatprep.subr.bf16.mxu0 0
      %386 = vmatpush1.bf16.xpose.msra.mxu0 0
      %387 = vmatprep.subr.bf16.mxu0 0
      %388 = vmatpush1.bf16.xpose.msra.mxu0 0
      %389 = vmatprep.subr.bf16.mxu0 0
      %390 = vmatpush1.bf16.xpose.msra.mxu0 0
      %391 = vmatprep.mubr.bf16.mxu0 0
      %392 = vmatmul.mubr.bf16.gmra.mrb[0].mxu0 %v354
      %v393 = vpop.f32.mrb[0].mxu0
      %v394 = vadd.f32 0.0, %v393
      %v395 = vpop.f32.mrb[0].mxu0
      %v396 = vpop.f32.mrb[0].mxu0
      %v397 = vadd.f32 0.0, %v396
      %v398 = vpop.f32.mrb[0].mxu0
      %399 = vdwg.mxu0
      %v402 = vunpack.c.l.b16 %v263
      %v403 = vunpack.c.l.b16 %v264
      %v404 = vpack.c.b16 %v403, %v402
      %v407 = vunpack.c.l.b16 %v271
      %v408 = vunpack.c.l.b16 %v272
      %v409 = vpack.c.b16 %v408, %v407
      %v411 = vsel %vm295, %v404, 0
      %v414 = vsel %vm295, %v409, 0
      %416 = vmatprep.subr.bf16.mxu0 0
      %417 = vmatpush1.bf16.xpose.msra.mxu0 %v414
      %418 = vmatprep.subr.bf16.mxu0 0
      %419 = vmatpush1.bf16.xpose.msra.mxu0 0
      %420 = vmatprep.subr.bf16.mxu0 0
      %421 = vmatpush1.bf16.xpose.msra.mxu0 0
      %422 = vmatprep.subr.bf16.mxu0 0
      %423 = vmatpush1.bf16.xpose.msra.mxu0 0
      %424 = vmatprep.subr.bf16.mxu0 0
      %425 = vmatpush1.bf16.xpose.msra.mxu0 0
      %426 = vmatprep.subr.bf16.mxu0 0
      %427 = vmatpush1.bf16.xpose.msra.mxu0 0
      %428 = vmatprep.subr.bf16.mxu0 0
      %429 = vmatpush1.bf16.xpose.msra.mxu0 0
      %430 = vmatprep.subr.bf16.mxu0 0
      %431 = vmatpush1.bf16.xpose.msra.mxu0 0
      %432 = vmatprep.subr.bf16.mxu0 0
      %433 = vmatpush1.bf16.xpose.msra.mxu0 0
      %434 = vmatprep.subr.bf16.mxu0 0
      %435 = vmatpush1.bf16.xpose.msra.mxu0 0
      %436 = vmatprep.subr.bf16.mxu0 0
      %437 = vmatpush1.bf16.xpose.msra.mxu0 0
      %438 = vmatprep.subr.bf16.mxu0 0
      %439 = vmatpush1.bf16.xpose.msra.mxu0 0
      %440 = vmatprep.subr.bf16.mxu0 0
      %441 = vmatpush1.bf16.xpose.msra.mxu0 0
      %442 = vmatprep.subr.bf16.mxu0 0
      %443 = vmatpush1.bf16.xpose.msra.mxu0 0
      %444 = vmatprep.subr.bf16.mxu0 0
      %445 = vmatpush1.bf16.xpose.msra.mxu0 0
      %446 = vmatprep.subr.bf16.mxu0 0
      %447 = vmatpush1.bf16.xpose.msra.mxu0 0
      %448 = vmatprep.mubr.bf16.mxu0 0
      %449 = vmatmul.mubr.bf16.gmra.mrb[0].mxu0 %v411
      %v450 = vpop.f32.mrb[0].mxu0
      %v451 = vadd.f32 0.0, %v450
      %v452 = vpop.f32.mrb[0].mxu0
      %v453 = vpop.f32.mrb[0].mxu0
      %v454 = vadd.f32 0.0, %v453
      %v455 = vpop.f32.mrb[0].mxu0
      %456 = vdwg.mxu0
      %v459 = vunpack.c.l.b16 %v265
      %v460 = vunpack.c.l.b16 %v266
      %v461 = vpack.c.b16 %v460, %v459
      %v464 = vunpack.c.l.b16 %v273
      %v465 = vunpack.c.l.b16 %v274
      %v466 = vpack.c.b16 %v465, %v464
      %v468 = vsel %vm295, %v461, 0
      %v471 = vsel %vm295, %v466, 0
      %473 = vmatprep.subr.bf16.mxu0 0
      %474 = vmatpush1.bf16.xpose.msra.mxu0 %v471
      %475 = vmatprep.subr.bf16.mxu0 0
      %476 = vmatpush1.bf16.xpose.msra.mxu0 0
      %477 = vmatprep.subr.bf16.mxu0 0
      %478 = vmatpush1.bf16.xpose.msra.mxu0 0
      %479 = vmatprep.subr.bf16.mxu0 0
      %480 = vmatpush1.bf16.xpose.msra.mxu0 0
      %481 = vmatprep.subr.bf16.mxu0 0
      %482 = vmatpush1.bf16.xpose.msra.mxu0 0
      %483 = vmatprep.subr.bf16.mxu0 0
      %484 = vmatpush1.bf16.xpose.msra.mxu0 0
      %485 = vmatprep.subr.bf16.mxu0 0
      %486 = vmatpush1.bf16.xpose.msra.mxu0 0
      %487 = vmatprep.subr.bf16.mxu0 0
      %488 = vmatpush1.bf16.xpose.msra.mxu0 0
      %489 = vmatprep.subr.bf16.mxu0 0
      %490 = vmatpush1.bf16.xpose.msra.mxu0 0
      %491 = vmatprep.subr.bf16.mxu0 0
      %492 = vmatpush1.bf16.xpose.msra.mxu0 0
      %493 = vmatprep.subr.bf16.mxu0 0
      %494 = vmatpush1.bf16.xpose.msra.mxu0 0
      %495 = vmatprep.subr.bf16.mxu0 0
      %496 = vmatpush1.bf16.xpose.msra.mxu0 0
      %497 = vmatprep.subr.bf16.mxu0 0
      %498 = vmatpush1.bf16.xpose.msra.mxu0 0
      %499 = vmatprep.subr.bf16.mxu0 0
      %500 = vmatpush1.bf16.xpose.msra.mxu0 0
      %501 = vmatprep.subr.bf16.mxu0 0
      %502 = vmatpush1.bf16.xpose.msra.mxu0 0
      %503 = vmatprep.subr.bf16.mxu0 0
      %504 = vmatpush1.bf16.xpose.msra.mxu0 0
      %505 = vmatprep.mubr.bf16.mxu0 0
      %506 = vmatmul.mubr.bf16.gmra.mrb[0].mxu0 %v468
      %v507 = vpop.f32.mrb[0].mxu0
      %v508 = vadd.f32 0.0, %v507
      %v509 = vpop.f32.mrb[0].mxu0
      %v510 = vpop.f32.mrb[0].mxu0
      %v511 = vadd.f32 0.0, %v510
      %v512 = vpop.f32.mrb[0].mxu0
      %513 = vdwg.mxu0
      %v514 = vmul.f32 %v337, 0.125
      %v515 = vmul.f32 %v340, 0.125
      %v516 = vmul.f32 %v394, 0.125
      %v517 = vmul.f32 %v397, 0.125
      %v518 = vmul.f32 %v451, 0.125
      %v519 = vmul.f32 %v454, 0.125
      %v520 = vmul.f32 %v508, 0.125
      %v521 = vmul.f32 %v511, 0.125
      %v522 = vadd.f32 %v514, %v283
      %v523 = vadd.f32 %v515, %v284
      %v524 = vadd.f32 %v516, %v283
      %v525 = vadd.f32 %v517, %v284
      %v526 = vadd.f32 %v518, %v283
      %v527 = vadd.f32 %v519, %v284
      %v528 = vadd.f32 %v520, %v283
      %v529 = vadd.f32 %v521, %v284
      %vm530 = vcmask 130048
      %v531 = vsel %vm530, %v522, -inf
      %532 = vmax.xlane.f32.xlu0 %v531
      %v533 = vpop.xlane.xlu0 %532
      %v534 = vsel %vm530, %v523, -inf
      %535 = vmax.xlane.f32.xlu0 %v534
      %v536 = vpop.xlane.xlu0 %535
      %v537 = vsel %vm530, %v524, -inf
      %538 = vmax.xlane.f32.xlu0 %v537
      %v539 = vpop.xlane.xlu0 %538
      %v540 = vsel %vm530, %v525, -inf
      %541 = vmax.xlane.f32.xlu0 %v540
      %v542 = vpop.xlane.xlu0 %541
      %v543 = vsel %vm530, %v526, -inf
      %544 = vmax.xlane.f32.xlu0 %v543
      %v545 = vpop.xlane.xlu0 %544
      %v546 = vsel %vm530, %v527, -inf
      %547 = vmax.xlane.f32.xlu0 %v546
      %v548 = vpop.xlane.xlu0 %547
      %v549 = vsel %vm530, %v528, -inf
      %550 = vmax.xlane.f32.xlu0 %v549
      %v551 = vpop.xlane.xlu0 %550
      %v552 = vsel %vm530, %v529, -inf
      %553 = vmax.xlane.f32.xlu0 %v552
      %v554 = vpop.xlane.xlu0 %553
      %v555 = vsub.f32 %v522, %v533
      %v556 = vsub.f32 %v523, %v536
      %v557 = vsub.f32 %v524, %v539
      %v558 = vsub.f32 %v525, %v542
      %v559 = vsub.f32 %v526, %v545
      %v560 = vsub.f32 %v527, %v548
      %v561 = vsub.f32 %v528, %v551
      %v562 = vsub.f32 %v529, %v554
      %v563 = vmul.f32 %v555, 1.442695
      %v564 = vpow.pop %v563
      %v565 = vmul.f32 %v556, 1.442695
      %v566 = vpow.pop %v565
      %v567 = vmul.f32 %v557, 1.442695
      %v568 = vpow.pop %v567
      %v569 = vmul.f32 %v558, 1.442695
      %v570 = vpow.pop %v569
      %v571 = vmul.f32 %v559, 1.442695
      %v572 = vpow.pop %v571
      %v573 = vmul.f32 %v560, 1.442695
      %v574 = vpow.pop %v573
      %v575 = vmul.f32 %v561, 1.442695
      %v576 = vpow.pop %v575
      %v577 = vmul.f32 %v562, 1.442695
      %v578 = vpow.pop %v577
      %v579 = vsel %vm530, %v564, 0.0
      %580 = vadd.xlane.f32.xlu0 %v579
      %v581 = vpop.xlane.xlu0 %580
      %v582 = vsel %vm530, %v566, 0.0
      %583 = vadd.xlane.f32.xlu0 %v582
      %v584 = vpop.xlane.xlu0 %583
      %v585 = vsel %vm530, %v568, 0.0
      %586 = vadd.xlane.f32.xlu0 %v585
      %v587 = vpop.xlane.xlu0 %586
      %v588 = vsel %vm530, %v570, 0.0
      %589 = vadd.xlane.f32.xlu0 %v588
      %v590 = vpop.xlane.xlu0 %589
      %v591 = vsel %vm530, %v572, 0.0
      %592 = vadd.xlane.f32.xlu0 %v591
      %v593 = vpop.xlane.xlu0 %592
      %v594 = vsel %vm530, %v574, 0.0
      %595 = vadd.xlane.f32.xlu0 %v594
      %v596 = vpop.xlane.xlu0 %595
      %v597 = vsel %vm530, %v576, 0.0
      %598 = vadd.xlane.f32.xlu0 %v597
      %v599 = vpop.xlane.xlu0 %598
      %v600 = vsel %vm530, %v578, 0.0
      %601 = vadd.xlane.f32.xlu0 %v600
      %v602 = vpop.xlane.xlu0 %601
      %v603 = vrcp.pop %v581
      %v604 = vrcp.pop %v584
      %v605 = vrcp.pop %v587
      %v606 = vrcp.pop %v590
      %v607 = vrcp.pop %v593
      %v608 = vrcp.pop %v596
      %v609 = vrcp.pop %v599
      %v610 = vrcp.pop %v602
      %v611 = vmul.f32 %v564, %v603
      %v612 = vmul.f32 %v566, %v604
      %v613 = vmul.f32 %v568, %v605
      %v614 = vmul.f32 %v570, %v606
      %v615 = vmul.f32 %v572, %v607
      %v616 = vmul.f32 %v574, %v608
      %v617 = vmul.f32 %v576, %v609
      %v618 = vmul.f32 %v578, %v610
      %v619 = vpack.c.bf16 %v612, %v611
      %v620 = vpack.c.bf16 %v614, %v613
      %v621 = vpack.c.bf16 %v616, %v615
      %v622 = vpack.c.bf16 %v618, %v617
      %v625 = vunpack.c.l.b16 %v275
      %v626 = vunpack.c.l.b16 %v276
      %v627 = vpack.c.b16 %v626, %v625
      %v630 = vsel %vm530, %v619, 0
      %632 = vmatprep.subr.bf16.mxu0 0
      %633 = vmatpush1.bf16.msra.mxu0 %v627
      %634 = vmatprep.subr.bf16.mxu0 0
      %635 = vmatpush1.bf16.msra.mxu0 0
      %636 = vmatprep.subr.bf16.mxu0 0
      %637 = vmatpush1.bf16.msra.mxu0 0
      %638 = vmatprep.subr.bf16.mxu0 0
      %639 = vmatpush1.bf16.msra.mxu0 0
      %640 = vmatprep.subr.bf16.mxu0 0
      %641 = vmatpush1.bf16.msra.mxu0 0
      %642 = vmatprep.subr.bf16.mxu0 0
      %643 = vmatpush1.bf16.msra.mxu0 0
      %644 = vmatprep.subr.bf16.mxu0 0
      %645 = vmatpush1.bf16.msra.mxu0 0
      %646 = vmatprep.subr.bf16.mxu0 0
      %647 = vmatpush1.bf16.msra.mxu0 0
      %648 = vmatprep.subr.bf16.mxu0 0
      %649 = vmatpush1.bf16.msra.mxu0 0
      %650 = vmatprep.subr.bf16.mxu0 0
      %651 = vmatpush1.bf16.msra.mxu0 0
      %652 = vmatprep.subr.bf16.mxu0 0
      %653 = vmatpush1.bf16.msra.mxu0 0
      %654 = vmatprep.subr.bf16.mxu0 0
      %655 = vmatpush1.bf16.msra.mxu0 0
      %656 = vmatprep.subr.bf16.mxu0 0
      %657 = vmatpush1.bf16.msra.mxu0 0
      %658 = vmatprep.subr.bf16.mxu0 0
      %659 = vmatpush1.bf16.msra.mxu0 0
      %660 = vmatprep.subr.bf16.mxu0 0
      %661 = vmatpush1.bf16.msra.mxu0 0
      %662 = vmatprep.subr.bf16.mxu0 0
      %663 = vmatpush1.bf16.msra.mxu0 0
      %664 = vmatprep.mubr.bf16.mxu0 0
      %665 = vmatmul.mubr.bf16.gmra.mrb[0].mxu0 %v630
      %v666 = vpop.f32.mrb[0].mxu0
      %v667 = vadd.f32 0.0, %v666
      %v668 = vpop.f32.mrb[0].mxu0
      %v669 = vpop.f32.mrb[0].mxu0
      %v670 = vadd.f32 0.0, %v669
      %v671 = vpop.f32.mrb[0].mxu0
      %672 = vdwg.mxu0
      %v675 = vunpack.c.l.b16 %v277
      %v676 = vunpack.c.l.b16 %v278
      %v677 = vpack.c.b16 %v676, %v675
      %v680 = vsel %vm530, %v620, 0
      %682 = vmatprep.subr.bf16.mxu0 0
      %683 = vmatpush1.bf16.msra.mxu0 %v677
      %684 = vmatprep.subr.bf16.mxu0 0
      %685 = vmatpush1.bf16.msra.mxu0 0
      %686 = vmatprep.subr.bf16.mxu0 0
      %687 = vmatpush1.bf16.msra.mxu0 0
      %688 = vmatprep.subr.bf16.mxu0 0
      %689 = vmatpush1.bf16.msra.mxu0 0
      %690 = vmatprep.subr.bf16.mxu0 0
      %691 = vmatpush1.bf16.msra.mxu0 0
      %692 = vmatprep.subr.bf16.mxu0 0
      %693 = vmatpush1.bf16.msra.mxu0 0
      %694 = vmatprep.subr.bf16.mxu0 0
      %695 = vmatpush1.bf16.msra.mxu0 0
      %696 = vmatprep.subr.bf16.mxu0 0
      %697 = vmatpush1.bf16.msra.mxu0 0
      %698 = vmatprep.subr.bf16.mxu0 0
      %699 = vmatpush1.bf16.msra.mxu0 0
      %700 = vmatprep.subr.bf16.mxu0 0
      %701 = vmatpush1.bf16.msra.mxu0 0
      %702 = vmatprep.subr.bf16.mxu0 0
      %703 = vmatpush1.bf16.msra.mxu0 0
      %704 = vmatprep.subr.bf16.mxu0 0
      %705 = vmatpush1.bf16.msra.mxu0 0
      %706 = vmatprep.subr.bf16.mxu0 0
      %707 = vmatpush1.bf16.msra.mxu0 0
      %708 = vmatprep.subr.bf16.mxu0 0
      %709 = vmatpush1.bf16.msra.mxu0 0
      %710 = vmatprep.subr.bf16.mxu0 0
      %711 = vmatpush1.bf16.msra.mxu0 0
      %712 = vmatprep.subr.bf16.mxu0 0
      %713 = vmatpush1.bf16.msra.mxu0 0
      %714 = vmatprep.mubr.bf16.mxu0 0
      %715 = vmatmul.mubr.bf16.gmra.mrb[0].mxu0 %v680
      %v716 = vpop.f32.mrb[0].mxu0
      %v717 = vadd.f32 0.0, %v716
      %v718 = vpop.f32.mrb[0].mxu0
      %v719 = vpop.f32.mrb[0].mxu0
      %v720 = vadd.f32 0.0, %v719
      %v721 = vpop.f32.mrb[0].mxu0
      %722 = vdwg.mxu0
      %v725 = vunpack.c.l.b16 %v279
      %v726 = vunpack.c.l.b16 %v280
      %v727 = vpack.c.b16 %v726, %v725
      %v730 = vsel %vm530, %v621, 0
      %732 = vmatprep.subr.bf16.mxu0 0
      %733 = vmatpush1.bf16.msra.mxu0 %v727
      %734 = vmatprep.subr.bf16.mxu0 0
      %735 = vmatpush1.bf16.msra.mxu0 0
      %736 = vmatprep.subr.bf16.mxu0 0
      %737 = vmatpush1.bf16.msra.mxu0 0
      %738 = vmatprep.subr.bf16.mxu0 0
      %739 = vmatpush1.bf16.msra.mxu0 0
      %740 = vmatprep.subr.bf16.mxu0 0
      %741 = vmatpush1.bf16.msra.mxu0 0
      %742 = vmatprep.subr.bf16.mxu0 0
      %743 = vmatpush1.bf16.msra.mxu0 0
      %744 = vmatprep.subr.bf16.mxu0 0
      %745 = vmatpush1.bf16.msra.mxu0 0
      %746 = vmatprep.subr.bf16.mxu0 0
      %747 = vmatpush1.bf16.msra.mxu0 0
      %748 = vmatprep.subr.bf16.mxu0 0
      %749 = vmatpush1.bf16.msra.mxu0 0
      %750 = vmatprep.subr.bf16.mxu0 0
      %751 = vmatpush1.bf16.msra.mxu0 0
      %752 = vmatprep.subr.bf16.mxu0 0
      %753 = vmatpush1.bf16.msra.mxu0 0
      %754 = vmatprep.subr.bf16.mxu0 0
      %755 = vmatpush1.bf16.msra.mxu0 0
      %756 = vmatprep.subr.bf16.mxu0 0
      %757 = vmatpush1.bf16.msra.mxu0 0
      %758 = vmatprep.subr.bf16.mxu0 0
      %759 = vmatpush1.bf16.msra.mxu0 0
      %760 = vmatprep.subr.bf16.mxu0 0
      %761 = vmatpush1.bf16.msra.mxu0 0
      %762 = vmatprep.subr.bf16.mxu0 0
      %763 = vmatpush1.bf16.msra.mxu0 0
      %764 = vmatprep.mubr.bf16.mxu0 0
      %765 = vmatmul.mubr.bf16.gmra.mrb[0].mxu0 %v730
      %v766 = vpop.f32.mrb[0].mxu0
      %v767 = vadd.f32 0.0, %v766
      %v768 = vpop.f32.mrb[0].mxu0
      %v769 = vpop.f32.mrb[0].mxu0
      %v770 = vadd.f32 0.0, %v769
      %v771 = vpop.f32.mrb[0].mxu0
      %772 = vdwg.mxu0
      %v775 = vunpack.c.l.b16 %v281
      %v776 = vunpack.c.l.b16 %v282
      %v777 = vpack.c.b16 %v776, %v775
      %v780 = vsel %vm530, %v622, 0
      %782 = vmatprep.subr.bf16.mxu0 0
      %783 = vmatpush1.bf16.msra.mxu0 %v777
      %784 = vmatprep.subr.bf16.mxu0 0
      %785 = vmatpush1.bf16.msra.mxu0 0
      %786 = vmatprep.subr.bf16.mxu0 0
      %787 = vmatpush1.bf16.msra.mxu0 0
      %788 = vmatprep.subr.bf16.mxu0 0
      %789 = vmatpush1.bf16.msra.mxu0 0
      %790 = vmatprep.subr.bf16.mxu0 0
      %791 = vmatpush1.bf16.msra.mxu0 0
      %792 = vmatprep.subr.bf16.mxu0 0
      %793 = vmatpush1.bf16.msra.mxu0 0
      %794 = vmatprep.subr.bf16.mxu0 0
      %795 = vmatpush1.bf16.msra.mxu0 0
      %796 = vmatprep.subr.bf16.mxu0 0
      %797 = vmatpush1.bf16.msra.mxu0 0
      %798 = vmatprep.subr.bf16.mxu0 0
      %799 = vmatpush1.bf16.msra.mxu0 0
      %800 = vmatprep.subr.bf16.mxu0 0
      %801 = vmatpush1.bf16.msra.mxu0 0
      %802 = vmatprep.subr.bf16.mxu0 0
      %803 = vmatpush1.bf16.msra.mxu0 0
      %804 = vmatprep.subr.bf16.mxu0 0
      %805 = vmatpush1.bf16.msra.mxu0 0
      %806 = vmatprep.subr.bf16.mxu0 0
      %807 = vmatpush1.bf16.msra.mxu0 0
      %808 = vmatprep.subr.bf16.mxu0 0
      %809 = vmatpush1.bf16.msra.mxu0 0
      %810 = vmatprep.subr.bf16.mxu0 0
      %811 = vmatpush1.bf16.msra.mxu0 0
      %812 = vmatprep.subr.bf16.mxu0 0
      %813 = vmatpush1.bf16.msra.mxu0 0
      %814 = vmatprep.mubr.bf16.mxu0 0
      %815 = vmatmul.mubr.bf16.gmra.mrb[0].mxu0 %v780
      %v816 = vpop.f32.mrb[0].mxu0
      %v817 = vadd.f32 0.0, %v816
      %v818 = vpop.f32.mrb[0].mxu0
      %v819 = vpop.f32.mrb[0].mxu0
      %v820 = vadd.f32 0.0, %v819
      %v821 = vpop.f32.mrb[0].mxu0
      %822 = vdwg.mxu0
      %v823 = vpack.c.bf16 %v670, %v667
      %v824 = vpack.c.bf16 %v720, %v717
      %v825 = vpack.c.bf16 %v770, %v767
      %v826 = vpack.c.bf16 %v820, %v817
      %v831 = vunpack.c.l.b16 %v823
      %v832 = vunpack.c.h.b16 %v823
      %v833 = vunpack.c.l.b16 %v824
      %v834 = vunpack.c.h.b16 %v824
      %v835 = vunpack.c.l.b16 %v825
      %v836 = vunpack.c.h.b16 %v825
      %v837 = vunpack.c.l.b16 %v826
      %v838 = vunpack.c.h.b16 %v826
      %v839 = vpack.c.b16 %v831, %v831
      %v840 = vpack.c.b16 %v832, %v832
      %v841 = vpack.c.b16 %v833, %v833
      %v842 = vpack.c.b16 %v834, %v834
      %v843 = vpack.c.b16 %v835, %v835
      %v844 = vpack.c.b16 %v836, %v836
      %v845 = vpack.c.b16 %v837, %v837
      %v846 = vpack.c.b16 %v838, %v838
      %vm855 = vcmask 519168
      %856 = vst.msk [vmem:[%s257] sm:$0xf] %vm855, %v839
      %857 = vst.msk [vmem:[%s257 + $0x4] sm:$0xf] %vm855, %v840
      %858 = vst.msk [vmem:[%s257 + $0x8] sm:$0xf] %vm855, %v841
      %859 = vst.msk [vmem:[%s257 + $0xc] sm:$0xf] %vm855, %v842
      %860 = vst.msk [vmem:[%s257 + $0x10] sm:$0xf] %vm855, %v843
      %861 = vst.msk [vmem:[%s257 + $0x14] sm:$0xf] %vm855, %v844
      %862 = vst.msk [vmem:[%s257 + $0x18] sm:$0xf] %vm855, %v845
      %863 = vst.msk [vmem:[%s257 + $0x1c] sm:$0xf] %vm855, %v846
      %p864 = scmp.lt.s32.totalorder %s15, 1
      %s865 = scalar_select %p864, %s15, 1
      %s866 = smul.addr %s865, 8
      %s867 = smul.addr %s866, 4
      %s868 = scalar_lea.vmem %s4, %s867
      // Predicated region
      $region37: #{e5smollm_forward.36} parent=35 // pred_check
        %p869 = pneg %p137
      $region38: #{e5smollm_forward.36} parent=35 // pred_check_branch
        %871 = sbr.rel (%p869) target = $region40
      $region39: #{e5smollm_forward.36} parent=35 // pred_region
        _
      $region40: #{e5smollm_forward.36} parent=35 // pred_fallthru
        _
    $region36: #{e5smollm_forward.36} parent=5 // pred_fallthru
      _
    %p872 = scmp.le.s32.totalorder 2, %s10
    // Predicated region
    $region41: #{e5smollm_forward.36} parent=5 // pred_check
      %p873 = pneg %p872
    $region42: #{e5smollm_forward.36} parent=5 // pred_check_branch
      %875 = sbr.rel (%p873) target = $region44
    $region43: #{e5smollm_forward.36} parent=5 // pred_region
      %s876 = ssub.s32 %s10, 2
      // Predicated region
      $region45: #{e5smollm_forward.36} parent=43 // pred_check
        %p877 = pneg %p143
      $region46: #{e5smollm_forward.36} parent=43 // pred_check_branch
        %879 = sbr.rel (%p877) target = $region48
      $region47: #{e5smollm_forward.36} parent=43 // pred_region
        %p880 = scmp.lt.s32.totalorder %s16, 1
        %s881 = scalar_select %p880, %s16, 1
        %s882 = smul.addr %s881, 8
        %s883 = smul.addr %s882, 4
        %s884 = scalar_lea.vmem %s4, %s883
      $region48: #{e5smollm_forward.36} parent=43 // pred_fallthru
        _
    $region44: #{e5smollm_forward.36} parent=5 // pred_fallthru
      _
  $region6: #{e5smollm_forward.36} parent=0 // loop_footer
    %s14 = sadd.s32 1, %s10
  $region7: #{e5smollm_forward.36} parent=0 // loop_footer_branch
    %9 = sbr.rel target = $region3
  $region8: #{e5smollm_forward.36} parent=0 // loop_exit
    _

// kernel: e5smollm_forward.39
$region0: #{e5smollm_forward.39}
  #allocation0 [shape = 'u32[]', space=smem, size = 0x4, offset = 0x4, fixed_abs, tag = 'smem constant byte address 0x4 - core index']
  #allocation1 [shape = 'u32[144,128]{1,0:T(1,128)}', space=vmem, size = 0x12000, scoped, tag = 'internal scratch']
  %s0 = inlined_call_operand.vmem [shape: bf16[32,512], index: 0, kind: input, shape index: {}]
  %s1 = inlined_call_operand.vmem [shape: bf16[512,256], index: 1, kind: input, shape index: {}]
  %s2 = inlined_call_operand.vmem [shape: bf16[32,256], index: 2, kind: input, shape index: {}]
  %s3 = inlined_call_operand.vmem [shape: bf16[32,256], index: 3, kind: output, shape index: {}]
  %s4 = sld [smem:[#allocation0]]
  $region45: #{e5smollm_forward.39} parent=0
    _
  %s6 = ssub.s32 1, %s4
  %s7 = scalar_select 0, %s6, %s4
  loop: start=0, step=1, limit=4
  $region2: #{e5smollm_forward.39} parent=0 // loop_pre_header
    _
  $region3: #{e5smollm_forward.39} parent=0 // loop_header
    %s9 = sphi 0, %s13
    %p10 = scmp.ge.s32.totalorder %s9, 4
    %s19 = sphi 0, %s21
    %s22 = sphi 0, %s19
    %s23 = sphi 0, %s22
    %s39 = sphi 0, %s23
    %s43 = sphi 0, %s43
    %s45 = sphi 0, %s43
    %s46 = sphi 0, %s45
    %s60 = sphi 0, %s46
    %s66 = sphi 0, %s68
    %s69 = sphi 0, %s66
    %s70 = sphi 0, %s69
    %s86 = sphi 0, %s70
    %s92 = sphi 0, %s94
    %s95 = sphi 0, %s92
    %s96 = sphi 0, %s95
    %s112 = sphi 0, %s96
  $region4: #{e5smollm_forward.39} parent=0 // loop_header_branch
    %12 = sbr.rel (%p10) target = $region8
  $region5: #{e5smollm_forward.39} parent=0 // loop_body
    %s14 = ssub.s32 %s9, 1
    %s15 = ssub.s32 %s9, 2
    %s16 = sadd.s32 %s9, 1
    %s17 = ssub.s32 %s9, %s16
    %p18 = scmp.eq.s32.totalorder %s17, 0
    %s20 = sadd.s32 %s19, 1
    %s21 = scalar_select %p18, %s19, %s20
    %p24 = pneg %p18
    %p25 = scmp.eq.s32.totalorder %s9, 1
    %p26 = por %p24, %p25
    %p27 = scmp.ne.s32.totalorder %s19, %s22
    %p28 = scmp.eq.s32.totalorder %s9, 0
    %p29 = por %p27, %p28
    %p30 = scmp.ne.s32.totalorder %s19, %s22
    %p31 = scmp.eq.s32.totalorder %s14, 1
    %p32 = por %p30, %p31
    %p33 = scmp.ne.s32.totalorder %s22, %s23
    %p34 = scmp.eq.s32.totalorder %s14, 0
    %p35 = por %p33, %p34
    %p36 = scmp.ne.s32.totalorder %s22, %s23
    %p37 = scmp.eq.s32.totalorder %s15, 1
    %p38 = por %p36, %p37
    %p40 = scmp.ne.s32.totalorder %s23, %s39
    %p41 = scmp.eq.s32.totalorder %s15, 0
    %p42 = por %p40, %p41
    %s44 = sadd.s32 %s43, 1
    %p47 = scmp.eq.s32.totalorder %s9, 1
    %p48 = scmp.ne.s32.totalorder %s43, %s45
    %p49 = scmp.eq.s32.totalorder %s9, 0
    %p50 = por %p48, %p49
    %p51 = scmp.ne.s32.totalorder %s43, %s45
    %p52 = scmp.eq.s32.totalorder %s14, 1
    %p53 = por %p51, %p52
    %p54 = scmp.ne.s32.totalorder %s45, %s46
    %p55 = scmp.eq.s32.totalorder %s14, 0
    %p56 = por %p54, %p55
    %p57 = scmp.ne.s32.totalorder %s45, %s46
    %p58 = scmp.eq.s32.totalorder %s15, 1
    %p59 = por %p57, %p58
    %p61 = scmp.ne.s32.totalorder %s46, %s60
    %p62 = scmp.eq.s32.totalorder %s15, 0
    %p63 = por %p61, %p62
    %s64 = ssub.s32 %s9, %s16
    %p65 = scmp.eq.s32.totalorder %s64, 0
    %s67 = sadd.s32 %s66, 1
    %s68 = scalar_select %p65, %s66, %s67
    %p71 = pneg %p65
    %p72 = scmp.eq.s32.totalorder %s9, 1
    %p73 = por %p71, %p72
    %p74 = scmp.ne.s32.totalorder %s66, %s69
    %p75 = scmp.eq.s32.totalorder %s9, 0
    %p76 = por %p74, %p75
    %p77 = scmp.ne.s32.totalorder %s66, %s69
    %p78 = scmp.eq.s32.totalorder %s14, 1
    %p79 = por %p77, %p78
    %p80 = scmp.ne.s32.totalorder %s69, %s70
    %p81 = scmp.eq.s32.totalorder %s14, 0
    %p82 = por %p80, %p81
    %p83 = scmp.ne.s32.totalorder %s69, %s70
    %p84 = scmp.eq.s32.totalorder %s15, 1
    %p85 = por %p83, %p84
    %p87 = scmp.ne.s32.totalorder %s70, %s86
    %p88 = scmp.eq.s32.totalorder %s15, 0
    %p89 = por %p87, %p88
    %s90 = ssub.s32 %s9, %s16
    %p91 = scmp.eq.s32.totalorder %s90, 0
    %s93 = sadd.s32 %s92, 1
    %s94 = scalar_select %p91, %s92, %s93
    %p97 = pneg %p91
    %p98 = scmp.eq.s32.totalorder %s9, 1
    %p99 = por %p97, %p98
    %p100 = scmp.ne.s32.totalorder %s92, %s95
    %p101 = scmp.eq.s32.totalorder %s9, 0
    %p102 = por %p100, %p101
    %p103 = scmp.ne.s32.totalorder %s92, %s95
    %p104 = scmp.eq.s32.totalorder %s14, 1
    %p105 = por %p103, %p104
    %p106 = scmp.ne.s32.totalorder %s95, %s96
    %p107 = scmp.eq.s32.totalorder %s14, 0
    %p108 = por %p106, %p107
    %p109 = scmp.ne.s32.totalorder %s95, %s96
    %p110 = scmp.eq.s32.totalorder %s15, 1
    %p111 = por %p109, %p110
    %p113 = scmp.ne.s32.totalorder %s96, %s112
    %p114 = scmp.eq.s32.totalorder %s15, 0
    %p115 = por %p113, %p114
    %p116 = scmp.le.s32.totalorder 1, %s9
    %p117 = scmp.lt.s32.totalorder %s9, 3
    %p118 = pnand %p116, %p117
    %p119 = pneg %p118
    // Predicated region
    $region9: #{e5smollm_forward.39} parent=5 // pred_check
      _
    $region10: #{e5smollm_forward.39} parent=5 // pred_check_branch
      %121 = sbr.rel (%p118) target = $region12
    $region11: #{e5smollm_forward.39} parent=5 // pred_region
      %s122 = ssub.s32 %s9, 1
      // Predicated region
      $region13: #{e5smollm_forward.39} parent=11 // pred_check
        %p123 = pneg %p56
      $region14: #{e5smollm_forward.39} parent=11 // pred_check_branch
        %125 = sbr.rel (%p123) target = $region16
      $region15: #{e5smollm_forward.39} parent=11 // pred_region
        _
      $region16: #{e5smollm_forward.39} parent=11 // pred_fallthru
        _
    $region12: #{e5smollm_forward.39} parent=5 // pred_fallthru
      _
    %p126 = scmp.lt.s32.totalorder %s9, 2
    // Predicated region
    $region17: #{e5smollm_forward.39} parent=5 // pred_check
      %p127 = pneg %p126
    $region18: #{e5smollm_forward.39} parent=5 // pred_check_branch
      %129 = sbr.rel (%p127) target = $region20
    $region19: #{e5smollm_forward.39} parent=5 // pred_region
      // Predicated region
      $region21: #{e5smollm_forward.39} parent=19 // pred_check
        %p130 = pneg %p29
      $region22: #{e5smollm_forward.39} parent=19 // pred_check_branch
        %132 = sbr.rel (%p130) target = $region24
      $region23: #{e5smollm_forward.39} parent=19 // pred_region
        %s133 = smul.u32 2, %s9
        %p134 = scmp.lt.s32.totalorder %s133, 3
        %s135 = scalar_select %p134, %s133, 3
        %s136 = smul.addr %s135, 4
        %s137 = smul.addr %s136, 4
        %s138 = scalar_lea.vmem %s0, %s137
        %s139 = smul.u32 2, %s9
      $region24: #{e5smollm_forward.39} parent=19 // pred_fallthru
        _
      // Predicated region
      $region25: #{e5smollm_forward.39} parent=19 // pred_check
        %p140 = pneg %p76
      $region26: #{e5smollm_forward.39} parent=19 // pred_check_branch
        %142 = sbr.rel (%p140) target = $region28
      $region27: #{e5smollm_forward.39} parent=19 // pred_region
        %s143 = smul.u32 2, %s9
        %p144 = scmp.lt.s32.totalorder %s143, 3
        %s145 = scalar_select %p144, %s143, 3
        %s146 = smul.addr %s145, 2
        %s147 = smul.addr %s146, 4
        %s148 = scalar_lea.vmem %s2, %s147
        %s149 = smul.u32 2, %s9
      $region28: #{e5smollm_forward.39} parent=19 // pred_fallthru
        _
    $region20: #{e5smollm_forward.39} parent=5 // pred_fallthru
      _
    %p150 = scmp.le.s32.totalorder 1, %s9
    %p151 = scmp.lt.s32.totalorder %s9, 3
    %p152 = pnand %p150, %p151
    %p153 = pneg %p152
    // Predicated region
    $region29: #{e5smollm_forward.39} parent=5 // pred_check
      _
    $region30: #{e5smollm_forward.39} parent=5 // pred_check_branch
      %155 = sbr.rel (%p152) target = $region32
    $region31: #{e5smollm_forward.39} parent=5 // pred_region
      %s156 = ssub.s32 %s9, 1
      %s157 = smul.u32 2, %s14
      %p158 = scmp.lt.s32.totalorder %s157, 3
      %s159 = scalar_select %p158, %s157, 3
      %s160 = smul.addr %s159, 4
      %s161 = smul.addr %s160, 4
      %s162 = scalar_lea.vmem %s0, %s161
      %p163 = pneg %p35
      %p164 = pneg %p32
      %p165 = pneg %p56
      %p166 = pneg %p53
      %s167 = smul.u32 2, %s14
      %p168 = scmp.lt.s32.totalorder %s167, 3
      %s169 = scalar_select %p168, %s167, 3
      %s170 = smul.addr %s169, 2
      %s171 = smul.addr %s170, 4
      %s172 = scalar_lea.vmem %s2, %s171
      %p173 = pneg %p82
      %p174 = pneg %p79
      %p175 = pneg %p108
      %p176 = pneg %p105
      %s177 = smul.u32 2, %s14
      %p178 = scmp.lt.s32.totalorder %s177, 3
      %s179 = scalar_select %p178, %s177, 3
      %s180 = smul.addr %s179, 2
      %s181 = smul.addr %s180, 4
      %s182 = scalar_lea.vmem %s3, %s181
      %s183 = smul.u32 2, %s14
      %p184 = scmp.lt.s32.totalorder %s183, 3
      %s185 = scalar_select %p184, %s183, 3
      %s186 = smul.addr %s185, 4
      %s187 = smul.addr %s186, 4
      %s188 = scalar_lea.vmem %s0, %s187
      %s189 = smul.u32 2, %s14
      %s190 = smul.u32 2, %s14
      %p191 = scmp.lt.s32.totalorder %s190, 3
      %s192 = scalar_select %p191, %s190, 3
      %s193 = smul.addr %s192, 2
      %s194 = smul.addr %s193, 4
      %s195 = scalar_lea.vmem %s2, %s194
      %s196 = smul.u32 2, %s14
      %s197 = smul.u32 2, %s14
      %p198 = scmp.lt.s32.totalorder %s197, 3
      %s199 = scalar_select %p198, %s197, 3
      %s200 = smul.addr %s199, 2
      %s201 = smul.addr %s200, 4
      %s202 = scalar_lea.vmem %s3, %s201
      %s203 = smul.u32 2, %s14
      %v204 = vld [vmem:[%s188] sm:$0xff]
      %v205 = vld [vmem:[%s188 + $0x8] sm:$0xff]
      %v206 = vld [vmem:[%s188 + $0x10] sm:$0xff]
      %v207 = vld [vmem:[%s188 + $0x18] sm:$0xff]
      %v208 = vld [vmem:[%s1] sm:$0xff]
      %v209 = vld [vmem:[%s1 + $0x8] sm:$0xff]
      %v210 = vld [vmem:[%s1 + $0x10] sm:$0xff]
      %v211 = vld [vmem:[%s1 + $0x18] sm:$0xff]
      %v212 = vld [vmem:[%s1 + $0x20] sm:$0xff]
      %v213 = vld [vmem:[%s1 + $0x28] sm:$0xff]
      %v214 = vld [vmem:[%s1 + $0x30] sm:$0xff]
      %v215 = vld [vmem:[%s1 + $0x38] sm:$0xff]
      %v216 = vld [vmem:[%s1 + $0x40] sm:$0xff]
      %v217 = vld [vmem:[%s1 + $0x48] sm:$0xff]
      %v218 = vld [vmem:[%s1 + $0x50] sm:$0xff]
      %v219 = vld [vmem:[%s1 + $0x58] sm:$0xff]
      %v220 = vld [vmem:[%s1 + $0x60] sm:$0xff]
      %v221 = vld [vmem:[%s1 + $0x68] sm:$0xff]
      %v222 = vld [vmem:[%s1 + $0x70] sm:$0xff]
      %v223 = vld [vmem:[%s1 + $0x78] sm:$0xff]
      %v224 = vld [vmem:[%s1 + $0x80] sm:$0xff]
      %v225 = vld [vmem:[%s1 + $0x88] sm:$0xff]
      %v226 = vld [vmem:[%s1 + $0x90] sm:$0xff]
      %v227 = vld [vmem:[%s1 + $0x98] sm:$0xff]
      %v228 = vld [vmem:[%s1 + $0xa0] sm:$0xff]
      %v229 = vld [vmem:[%s1 + $0xa8] sm:$0xff]
      %v230 = vld [vmem:[%s1 + $0xb0] sm:$0xff]
      %v231 = vld [vmem:[%s1 + $0xb8] sm:$0xff]
      %v232 = vld [vmem:[%s1 + $0xc0] sm:$0xff]
      %v233 = vld [vmem:[%s1 + $0xc8] sm:$0xff]
      %v234 = vld [vmem:[%s1 + $0xd0] sm:$0xff]
      %v235 = vld [vmem:[%s1 + $0xd8] sm:$0xff]
      %v236 = vld [vmem:[%s1 + $0xe0] sm:$0xff]
      %v237 = vld [vmem:[%s1 + $0xe8] sm:$0xff]
      %v238 = vld [vmem:[%s1 + $0xf0] sm:$0xff]
      %v239 = vld [vmem:[%s1 + $0xf8] sm:$0xff]
      %v240 = vld [vmem:[%s1 + $0x100] sm:$0xff]
      %v241 = vld [vmem:[%s1 + $0x108] sm:$0xff]
      %v242 = vld [vmem:[%s1 + $0x110] sm:$0xff]
      %v243 = vld [vmem:[%s1 + $0x118] sm:$0xff]
      %v244 = vld [vmem:[%s1 + $0x120] sm:$0xff]
      %v245 = vld [vmem:[%s1 + $0x128] sm:$0xff]
      %v246 = vld [vmem:[%s1 + $0x130] sm:$0xff]
      %v247 = vld [vmem:[%s1 + $0x138] sm:$0xff]
      %v248 = vld [vmem:[%s1 + $0x140] sm:$0xff]
      %v249 = vld [vmem:[%s1 + $0x148] sm:$0xff]
      %v250 = vld [vmem:[%s1 + $0x150] sm:$0xff]
      %v251 = vld [vmem:[%s1 + $0x158] sm:$0xff]
      %v252 = vld [vmem:[%s1 + $0x160] sm:$0xff]
      %v253 = vld [vmem:[%s1 + $0x168] sm:$0xff]
      %v254 = vld [vmem:[%s1 + $0x170] sm:$0xff]
      %v255 = vld [vmem:[%s1 + $0x178] sm:$0xff]
      %v256 = vld [vmem:[%s1 + $0x180] sm:$0xff]
      %v257 = vld [vmem:[%s1 + $0x188] sm:$0xff]
      %v258 = vld [vmem:[%s1 + $0x190] sm:$0xff]
      %v259 = vld [vmem:[%s1 + $0x198] sm:$0xff]
      %v260 = vld [vmem:[%s1 + $0x1a0] sm:$0xff]
      %v261 = vld [vmem:[%s1 + $0x1a8] sm:$0xff]
      %v262 = vld [vmem:[%s1 + $0x1b0] sm:$0xff]
      %v263 = vld [vmem:[%s1 + $0x1b8] sm:$0xff]
      %v264 = vld [vmem:[%s1 + $0x1c0] sm:$0xff]
      %v265 = vld [vmem:[%s1 + $0x1c8] sm:$0xff]
      %v266 = vld [vmem:[%s1 + $0x1d0] sm:$0xff]
      %v267 = vld [vmem:[%s1 + $0x1d8] sm:$0xff]
      %v268 = vld [vmem:[%s1 + $0x1e0] sm:$0xff]
      %v269 = vld [vmem:[%s1 + $0x1e8] sm:$0xff]
      %v270 = vld [vmem:[%s1 + $0x1f0] sm:$0xff]
      %v271 = vld [vmem:[%s1 + $0x1f8] sm:$0xff]
      %v272 = vld [vmem:[%s195] sm:$0xff]
      %v273 = vld [vmem:[%s195 + $0x8] sm:$0xff]
      %v274 = vunpack.c.l.bf16 %v272
      %v275 = vunpack.c.h.bf16 %v272
      %v276 = vunpack.c.l.bf16 %v273
      %v277 = vunpack.c.h.bf16 %v273
      %v282 = vunpack.c.l.b16 %v204
      %v283 = vunpack.c.h.b16 %v204
      %v284 = vunpack.c.l.b16 %v205
      %v285 = vunpack.c.h.b16 %v205
      %v286 = vunpack.c.l.b16 %v206
      %v287 = vunpack.c.h.b16 %v206
      %v288 = vunpack.c.l.b16 %v207
      %v289 = vunpack.c.h.b16 %v207
      %v290 = vpack.c.b16 %v286, %v282
      %v291 = vpack.c.b16 %v287, %v283
      %v292 = vpack.c.b16 %v288, %v284
      %v293 = vpack.c.b16 %v289, %v285
      %v362 = vunpack.c.l.b16 %v208
      %v363 = vunpack.c.h.b16 %v208
      %v364 = vunpack.c.l.b16 %v209
      %v365 = vunpack.c.h.b16 %v209
      %v366 = vunpack.c.l.b16 %v210
      %v367 = vunpack.c.h.b16 %v210
      %v368 = vunpack.c.l.b16 %v211
      %v369 = vunpack.c.h.b16 %v211
      %v370 = vunpack.c.l.b16 %v212
      %v371 = vunpack.c.h.b16 %v212
      %v372 = vunpack.c.l.b16 %v213
      %v373 = vunpack.c.h.b16 %v213
      %v374 = vunpack.c.l.b16 %v214
      %v375 = vunpack.c.h.b16 %v214
      %v376 = vunpack.c.l.b16 %v215
      %v377 = vunpack.c.h.b16 %v215
      %v378 = vunpack.c.l.b16 %v216
      %v379 = vunpack.c.h.b16 %v216
      %v380 = vunpack.c.l.b16 %v217
      %v381 = vunpack.c.h.b16 %v217
      %v382 = vunpack.c.l.b16 %v218
      %v383 = vunpack.c.h.b16 %v218
      %v384 = vunpack.c.l.b16 %v219
      %v385 = vunpack.c.h.b16 %v219
      %v386 = vunpack.c.l.b16 %v220
      %v387 = vunpack.c.h.b16 %v220
      %v388 = vunpack.c.l.b16 %v221
      %v389 = vunpack.c.h.b16 %v221
      %v390 = vunpack.c.l.b16 %v222
      %v391 = vunpack.c.h.b16 %v222
      %v392 = vunpack.c.l.b16 %v223
      %v393 = vunpack.c.h.b16 %v223
      %v394 = vunpack.c.l.b16 %v224
      %v395 = vunpack.c.h.b16 %v224
      %v396 = vunpack.c.l.b16 %v225
      %v397 = vunpack.c.h.b16 %v225
      %v398 = vunpack.c.l.b16 %v226
      %v399 = vunpack.c.h.b16 %v226
      %v400 = vunpack.c.l.b16 %v227
      %v401 = vunpack.c.h.b16 %v227
      %v402 = vunpack.c.l.b16 %v228
      %v403 = vunpack.c.h.b16 %v228
      %v404 = vunpack.c.l.b16 %v229
      %v405 = vunpack.c.h.b16 %v229
      %v406 = vunpack.c.l.b16 %v230
      %v407 = vunpack.c.h.b16 %v230
      %v408 = vunpack.c.l.b16 %v231
      %v409 = vunpack.c.h.b16 %v231
      %v410 = vunpack.c.l.b16 %v232
      %v411 = vunpack.c.h.b16 %v232
      %v412 = vunpack.c.l.b16 %v233
      %v413 = vunpack.c.h.b16 %v233
      %v414 = vunpack.c.l.b16 %v234
      %v415 = vunpack.c.h.b16 %v234
      %v416 = vunpack.c.l.b16 %v235
      %v417 = vunpack.c.h.b16 %v235
      %v418 = vunpack.c.l.b16 %v236
      %v419 = vunpack.c.h.b16 %v236
      %v420 = vunpack.c.l.b16 %v237
      %v421 = vunpack.c.h.b16 %v237
      %v422 = vunpack.c.l.b16 %v238
      %v423 = vunpack.c.h.b16 %v238
      %v424 = vunpack.c.l.b16 %v239
      %v425 = vunpack.c.h.b16 %v239
      %v426 = vunpack.c.l.b16 %v240
      %v427 = vunpack.c.h.b16 %v240
      %v428 = vunpack.c.l.b16 %v241
      %v429 = vunpack.c.h.b16 %v241
      %v430 = vunpack.c.l.b16 %v242
      %v431 = vunpack.c.h.b16 %v242
      %v432 = vunpack.c.l.b16 %v243
      %v433 = vunpack.c.h.b16 %v243
      %v434 = vunpack.c.l.b16 %v244
      %v435 = vunpack.c.h.b16 %v244
      %v436 = vunpack.c.l.b16 %v245
      %v437 = vunpack.c.h.b16 %v245
      %v438 = vunpack.c.l.b16 %v246
      %v439 = vunpack.c.h.b16 %v246
      %v440 = vunpack.c.l.b16 %v247
      %v441 = vunpack.c.h.b16 %v247
      %v442 = vunpack.c.l.b16 %v248
      %v443 = vunpack.c.h.b16 %v248
      %v444 = vunpack.c.l.b16 %v249
      %v445 = vunpack.c.h.b16 %v249
      %v446 = vunpack.c.l.b16 %v250
      %v447 = vunpack.c.h.b16 %v250
      %v448 = vunpack.c.l.b16 %v251
      %v449 = vunpack.c.h.b16 %v251
      %v450 = vunpack.c.l.b16 %v252
      %v451 = vunpack.c.h.b16 %v252
      %v452 = vunpack.c.l.b16 %v253
      %v453 = vunpack.c.h.b16 %v253
      %v454 = vunpack.c.l.b16 %v254
      %v455 = vunpack.c.h.b16 %v254
      %v456 = vunpack.c.l.b16 %v255
      %v457 = vunpack.c.h.b16 %v255
      %v458 = vunpack.c.l.b16 %v256
      %v459 = vunpack.c.h.b16 %v256
      %v460 = vunpack.c.l.b16 %v257
      %v461 = vunpack.c.h.b16 %v257
      %v462 = vunpack.c.l.b16 %v258
      %v463 = vunpack.c.h.b16 %v258
      %v464 = vunpack.c.l.b16 %v259
      %v465 = vunpack.c.h.b16 %v259
      %v466 = vunpack.c.l.b16 %v260
      %v467 = vunpack.c.h.b16 %v260
      %v468 = vunpack.c.l.b16 %v261
      %v469 = vunpack.c.h.b16 %v261
      %v470 = vunpack.c.l.b16 %v262
      %v471 = vunpack.c.h.b16 %v262
      %v472 = vunpack.c.l.b16 %v263
      %v473 = vunpack.c.h.b16 %v263
      %v474 = vunpack.c.l.b16 %v264
      %v475 = vunpack.c.h.b16 %v264
      %v476 = vunpack.c.l.b16 %v265
      %v477 = vunpack.c.h.b16 %v265
      %v478 = vunpack.c.l.b16 %v266
      %v479 = vunpack.c.h.b16 %v266
      %v480 = vunpack.c.l.b16 %v267
      %v481 = vunpack.c.h.b16 %v267
      %v482 = vunpack.c.l.b16 %v268
      %v483 = vunpack.c.h.b16 %v268
      %v484 = vunpack.c.l.b16 %v269
      %v485 = vunpack.c.h.b16 %v269
      %v486 = vunpack.c.l.b16 %v270
      %v487 = vunpack.c.h.b16 %v270
      %v488 = vunpack.c.l.b16 %v271
      %v489 = vunpack.c.h.b16 %v271
      %v490 = vpack.c.b16 %v364, %v362
      %v491 = vpack.c.b16 %v365, %v363
      %v492 = vpack.c.b16 %v368, %v366
      %v493 = vpack.c.b16 %v369, %v367
      %v494 = vpack.c.b16 %v372, %v370
      %v495 = vpack.c.b16 %v373, %v371
      %v496 = vpack.c.b16 %v376, %v374
      %v497 = vpack.c.b16 %v377, %v375
      %v498 = vpack.c.b16 %v380, %v378
      %v499 = vpack.c.b16 %v381, %v379
      %v500 = vpack.c.b16 %v384, %v382
      %v501 = vpack.c.b16 %v385, %v383
      %v502 = vpack.c.b16 %v388, %v386
      %v503 = vpack.c.b16 %v389, %v387
      %v504 = vpack.c.b16 %v392, %v390
      %v505 = vpack.c.b16 %v393, %v391
      %v506 = vpack.c.b16 %v396, %v394
      %v507 = vpack.c.b16 %v397, %v395
      %v508 = vpack.c.b16 %v400, %v398
      %v509 = vpack.c.b16 %v401, %v399
      %v510 = vpack.c.b16 %v404, %v402
      %v511 = vpack.c.b16 %v405, %v403
      %v512 = vpack.c.b16 %v408, %v406
      %v513 = vpack.c.b16 %v409, %v407
      %v514 = vpack.c.b16 %v412, %v410
      %v515 = vpack.c.b16 %v413, %v411
      %v516 = vpack.c.b16 %v416, %v414
      %v517 = vpack.c.b16 %v417, %v415
      %v518 = vpack.c.b16 %v420, %v418
      %v519 = vpack.c.b16 %v421, %v419
      %v520 = vpack.c.b16 %v424, %v422
      %v521 = vpack.c.b16 %v425, %v423
      %v522 = vpack.c.b16 %v428, %v426
      %v523 = vpack.c.b16 %v429, %v427
      %v524 = vpack.c.b16 %v432, %v430
      %v525 = vpack.c.b16 %v433, %v431
      %v526 = vpack.c.b16 %v436, %v434
      %v527 = vpack.c.b16 %v437, %v435
      %v528 = vpack.c.b16 %v440, %v438
      %v529 = vpack.c.b16 %v441, %v439
      %v530 = vpack.c.b16 %v444, %v442
      %v531 = vpack.c.b16 %v445, %v443
      %v532 = vpack.c.b16 %v448, %v446
      %v533 = vpack.c.b16 %v449, %v447
      %v534 = vpack.c.b16 %v452, %v450
      %v535 = vpack.c.b16 %v453, %v451
      %v536 = vpack.c.b16 %v456, %v454
      %v537 = vpack.c.b16 %v457, %v455
      %v538 = vpack.c.b16 %v460, %v458
      %v539 = vpack.c.b16 %v461, %v459
      %v540 = vpack.c.b16 %v464, %v462
      %v541 = vpack.c.b16 %v465, %v463
      %v542 = vpack.c.b16 %v468, %v466
      %v543 = vpack.c.b16 %v469, %v467
      %v544 = vpack.c.b16 %v472, %v470
      %v545 = vpack.c.b16 %v473, %v471
      %v546 = vpack.c.b16 %v476, %v474
      %v547 = vpack.c.b16 %v477, %v475
      %v548 = vpack.c.b16 %v480, %v478
      %v549 = vpack.c.b16 %v481, %v479
      %v550 = vpack.c.b16 %v484, %v482
      %v551 = vpack.c.b16 %v485, %v483
      %v552 = vpack.c.b16 %v488, %v486
      %v553 = vpack.c.b16 %v489, %v487
      %618 = vmatprep.subr.bf16.mxu0 %v491
      %619 = vmatpush1.bf16.msra.mxu0 %v490
      %620 = vmatprep.subr.bf16.mxu0 %v493
      %621 = vmatpush1.bf16.msra.mxu0 %v492
      %622 = vmatprep.subr.bf16.mxu0 %v495
      %623 = vmatpush1.bf16.msra.mxu0 %v494
      %624 = vmatprep.subr.bf16.mxu0 %v497
      %625 = vmatpush1.bf16.msra.mxu0 %v496
      %626 = vmatprep.subr.bf16.mxu0 %v499
      %627 = vmatpush1.bf16.msra.mxu0 %v498
      %628 = vmatprep.subr.bf16.mxu0 %v501
      %629 = vmatpush1.bf16.msra.mxu0 %v500
      %630 = vmatprep.subr.bf16.mxu0 %v503
      %631 = vmatpush1.bf16.msra.mxu0 %v502
      %632 = vmatprep.subr.bf16.mxu0 %v505
      %633 = vmatpush1.bf16.msra.mxu0 %v504
      %634 = vmatprep.subr.bf16.mxu0 %v507
      %635 = vmatpush1.bf16.msra.mxu0 %v506
      %636 = vmatprep.subr.bf16.mxu0 %v509
      %637 = vmatpush1.bf16.msra.mxu0 %v508
      %638 = vmatprep.subr.bf16.mxu0 %v511
      %639 = vmatpush1.bf16.msra.mxu0 %v510
      %640 = vmatprep.subr.bf16.mxu0 %v513
      %641 = vmatpush1.bf16.msra.mxu0 %v512
      %642 = vmatprep.subr.bf16.mxu0 %v515
      %643 = vmatpush1.bf16.msra.mxu0 %v514
      %644 = vmatprep.subr.bf16.mxu0 %v517
      %645 = vmatpush1.bf16.msra.mxu0 %v516
      %646 = vmatprep.subr.bf16.mxu0 %v519
      %647 = vmatpush1.bf16.msra.mxu0 %v518
      %648 = vmatprep.subr.bf16.mxu0 %v521
      %649 = vmatpush1.bf16.msra.mxu0 %v520
      %650 = vmatprep.mubr.bf16.mxu0 %v291
      %651 = vmatmul.mubr.bf16.gmra.mrb[0].mxu0 %v290
      %v652 = vpop.f32.mrb[0].mxu0
      %v653 = vadd.f32 %v274, %v652
      %v654 = vpop.f32.mrb[0].mxu0
      %v655 = vadd.f32 %v275, %v654
      %v656 = vpop.f32.mrb[0].mxu0
      %v657 = vadd.f32 %v276, %v656
      %v658 = vpop.f32.mrb[0].mxu0
      %v659 = vadd.f32 %v277, %v658
      %660 = vdwg.mxu0
      %661 = vmatprep.subr.bf16.mxu0 %v523
      %662 = vmatpush1.bf16.msra.mxu0 %v522
      %663 = vmatprep.subr.bf16.mxu0 %v525
      %664 = vmatpush1.bf16.msra.mxu0 %v524
      %665 = vmatprep.subr.bf16.mxu0 %v527
      %666 = vmatpush1.bf16.msra.mxu0 %v526
      %667 = vmatprep.subr.bf16.mxu0 %v529
      %668 = vmatpush1.bf16.msra.mxu0 %v528
      %669 = vmatprep.subr.bf16.mxu0 %v531
      %670 = vmatpush1.bf16.msra.mxu0 %v530
      %671 = vmatprep.subr.bf16.mxu0 %v533
      %672 = vmatpush1.bf16.msra.mxu0 %v532
      %673 = vmatprep.subr.bf16.mxu0 %v535
      %674 = vmatpush1.bf16.msra.mxu0 %v534
      %675 = vmatprep.subr.bf16.mxu0 %v537
      %676 = vmatpush1.bf16.msra.mxu0 %v536
      %677 = vmatprep.subr.bf16.mxu0 %v539
      %678 = vmatpush1.bf16.msra.mxu0 %v538
      %679 = vmatprep.subr.bf16.mxu0 %v541
      %680 = vmatpush1.bf16.msra.mxu0 %v540
      %681 = vmatprep.subr.bf16.mxu0 %v543
      %682 = vmatpush1.bf16.msra.mxu0 %v542
      %683 = vmatprep.subr.bf16.mxu0 %v545
      %684 = vmatpush1.bf16.msra.mxu0 %v544
      %685 = vmatprep.subr.bf16.mxu0 %v547
      %686 = vmatpush1.bf16.msra.mxu0 %v546
      %687 = vmatprep.subr.bf16.mxu0 %v549
      %688 = vmatpush1.bf16.msra.mxu0 %v548
      %689 = vmatprep.subr.bf16.mxu0 %v551
      %690 = vmatpush1.bf16.msra.mxu0 %v550
      %691 = vmatprep.subr.bf16.mxu0 %v553
      %692 = vmatpush1.bf16.msra.mxu0 %v552
      %693 = vmatprep.mubr.bf16.mxu0 %v293
      %694 = vmatmul.mubr.bf16.gmra.mrb[0].mxu0 %v292
      %v695 = vpop.f32.mrb[0].mxu0
      %v696 = vadd.f32 %v653, %v695
      %v697 = vpop.f32.mrb[0].mxu0
      %v698 = vadd.f32 %v655, %v697
      %v699 = vpop.f32.mrb[0].mxu0
      %v700 = vadd.f32 %v657, %v699
      %v701 = vpop.f32.mrb[0].mxu0
      %v702 = vadd.f32 %v659, %v701
      %703 = vdwg.mxu0
      %v704 = vpack.c.bf16 %v700, %v696
      %v705 = vpack.c.bf16 %v702, %v698
      %v708 = vunpack.c.l.b16 %v704
      %v709 = vunpack.c.l.b16 %v705
      %v710 = vunpack.c.h.b16 %v704
      %v711 = vunpack.c.h.b16 %v705
      %v712 = vpack.c.b16 %v709, %v708
      %v713 = vpack.c.b16 %v711, %v710
      %716 = vst [vmem:[%s202] sm:$0xff] %v712
      %717 = vst [vmem:[%s202 + $0x8] sm:$0xff] %v713
      %s718 = smul.u32 2, %s14
      %p719 = scmp.lt.s32.totalorder %s718, 3
      %s720 = scalar_select %p719, %s718, 3
      %s721 = smul.addr %s720, 2
      %s722 = smul.addr %s721, 4
      %s723 = scalar_lea.vmem %s3, %s722
      // Predicated region
      $region33: #{e5smollm_forward.39} parent=31 // pred_check
        %p724 = pneg %p105
      $region34: #{e5smollm_forward.39} parent=31 // pred_check_branch
        %726 = sbr.rel (%p724) target = $region36
      $region35: #{e5smollm_forward.39} parent=31 // pred_region
        %s727 = smul.u32 2, %s14
      $region36: #{e5smollm_forward.39} parent=31 // pred_fallthru
        _
    $region32: #{e5smollm_forward.39} parent=5 // pred_fallthru
      _
    %p728 = scmp.le.s32.totalorder 2, %s9
    // Predicated region
    $region37: #{e5smollm_forward.39} parent=5 // pred_check
      %p729 = pneg %p728
    $region38: #{e5smollm_forward.39} parent=5 // pred_check_branch
      %731 = sbr.rel (%p729) target = $region40
    $region39: #{e5smollm_forward.39} parent=5 // pred_region
      %s732 = ssub.s32 %s9, 2
      // Predicated region
      $region41: #{e5smollm_forward.39} parent=39 // pred_check
        %p733 = pneg %p111
      $region42: #{e5smollm_forward.39} parent=39 // pred_check_branch
        %735 = sbr.rel (%p733) target = $region44
      $region43: #{e5smollm_forward.39} parent=39 // pred_region
        %s736 = smul.u32 2, %s15
        %p737 = scmp.lt.s32.totalorder %s736, 3
        %s738 = scalar_select %p737, %s736, 3
        %s739 = smul.addr %s738, 2
        %s740 = smul.addr %s739, 4
        %s741 = scalar_lea.vmem %s3, %s740
      $region44: #{e5smollm_forward.39} parent=39 // pred_fallthru
        _
    $region40: #{e5smollm_forward.39} parent=5 // pred_fallthru
      _
  $region6: #{e5smollm_forward.39} parent=0 // loop_footer
    %s13 = sadd.s32 1, %s9
  $region7: #{e5smollm_forward.39} parent=0 // loop_footer_branch
    %8 = sbr.rel target = $region3
  $region8: #{e5smollm_forward.39} parent=0 // loop_exit
    _

// kernel: e5smollm_forward.38
$region0: #{e5smollm_forward.38}
  #allocation0 [shape = 'u32[]', space=smem, size = 0x4, offset = 0x4, fixed_abs, tag = 'smem constant byte address 0x4 - core index']
  #allocation1 [shape = 'u32[144,128]{1,0:T(1,128)}', space=vmem, size = 0x12000, scoped, tag = 'internal scratch']
  %s0 = inlined_call_operand.vmem [shape: bf16[32,256], index: 0, kind: input, shape index: {}]
  %s1 = inlined_call_operand.vmem [shape: f32[1,256], index: 1, kind: input, shape index: {}]
  %s2 = inlined_call_operand.vmem [shape: bf16[256,1024], index: 2, kind: input, shape index: {}]
  %s3 = inlined_call_operand.vmem [shape: bf16[32,512], index: 3, kind: output, shape index: {}]
  %s4 = sld [smem:[#allocation0]]
  $region45: #{e5smollm_forward.38} parent=0
    _
  %s6 = ssub.s32 1, %s4
  %s7 = scalar_select 0, %s6, %s4
  loop: start=0, step=1, limit=4
  $region2: #{e5smollm_forward.38} parent=0 // loop_pre_header
    _
  $region3: #{e5smollm_forward.38} parent=0 // loop_header
    %s9 = sphi 0, %s13
    %p10 = scmp.ge.s32.totalorder %s9, 4
    %s19 = sphi 0, %s21
    %s22 = sphi 0, %s19
    %s23 = sphi 0, %s22
    %s39 = sphi 0, %s23
    %s43 = sphi 0, %s43
    %s45 = sphi 0, %s43
    %s46 = sphi 0, %s45
    %s60 = sphi 0, %s46
    %s64 = sphi 0, %s64
    %s66 = sphi 0, %s64
    %s67 = sphi 0, %s66
    %s81 = sphi 0, %s67
    %s87 = sphi 0, %s89
    %s90 = sphi 0, %s87
    %s91 = sphi 0, %s90
    %s107 = sphi 0, %s91
  $region4: #{e5smollm_forward.38} parent=0 // loop_header_branch
    %12 = sbr.rel (%p10) target = $region8
  $region5: #{e5smollm_forward.38} parent=0 // loop_body
    %s14 = ssub.s32 %s9, 1
    %s15 = ssub.s32 %s9, 2
    %s16 = sadd.s32 %s9, 1
    %s17 = ssub.s32 %s9, %s16
    %p18 = scmp.eq.s32.totalorder %s17, 0
    %s20 = sadd.s32 %s19, 1
    %s21 = scalar_select %p18, %s19, %s20
    %p24 = pneg %p18
    %p25 = scmp.eq.s32.totalorder %s9, 1
    %p26 = por %p24, %p25
    %p27 = scmp.ne.s32.totalorder %s19, %s22
    %p28 = scmp.eq.s32.totalorder %s9, 0
    %p29 = por %p27, %p28
    %p30 = scmp.ne.s32.totalorder %s19, %s22
    %p31 = scmp.eq.s32.totalorder %s14, 1
    %p32 = por %p30, %p31
    %p33 = scmp.ne.s32.totalorder %s22, %s23
    %p34 = scmp.eq.s32.totalorder %s14, 0
    %p35 = por %p33, %p34
    %p36 = scmp.ne.s32.totalorder %s22, %s23
    %p37 = scmp.eq.s32.totalorder %s15, 1
    %p38 = por %p36, %p37
    %p40 = scmp.ne.s32.totalorder %s23, %s39
    %p41 = scmp.eq.s32.totalorder %s15, 0
    %p42 = por %p40, %p41
    %s44 = sadd.s32 %s43, 1
    %p47 = scmp.eq.s32.totalorder %s9, 1
    %p48 = scmp.ne.s32.totalorder %s43, %s45
    %p49 = scmp.eq.s32.totalorder %s9, 0
    %p50 = por %p48, %p49
    %p51 = scmp.ne.s32.totalorder %s43, %s45
    %p52 = scmp.eq.s32.totalorder %s14, 1
    %p53 = por %p51, %p52
    %p54 = scmp.ne.s32.totalorder %s45, %s46
    %p55 = scmp.eq.s32.totalorder %s14, 0
    %p56 = por %p54, %p55
    %p57 = scmp.ne.s32.totalorder %s45, %s46
    %p58 = scmp.eq.s32.totalorder %s15, 1
    %p59 = por %p57, %p58
    %p61 = scmp.ne.s32.totalorder %s46, %s60
    %p62 = scmp.eq.s32.totalorder %s15, 0
    %p63 = por %p61, %p62
    %s65 = sadd.s32 %s64, 1
    %p68 = scmp.eq.s32.totalorder %s9, 1
    %p69 = scmp.ne.s32.totalorder %s64, %s66
    %p70 = scmp.eq.s32.totalorder %s9, 0
    %p71 = por %p69, %p70
    %p72 = scmp.ne.s32.totalorder %s64, %s66
    %p73 = scmp.eq.s32.totalorder %s14, 1
    %p74 = por %p72, %p73
    %p75 = scmp.ne.s32.totalorder %s66, %s67
    %p76 = scmp.eq.s32.totalorder %s14, 0
    %p77 = por %p75, %p76
    %p78 = scmp.ne.s32.totalorder %s66, %s67
    %p79 = scmp.eq.s32.totalorder %s15, 1
    %p80 = por %p78, %p79
    %p82 = scmp.ne.s32.totalorder %s67, %s81
    %p83 = scmp.eq.s32.totalorder %s15, 0
    %p84 = por %p82, %p83
    %s85 = ssub.s32 %s9, %s16
    %p86 = scmp.eq.s32.totalorder %s85, 0
    %s88 = sadd.s32 %s87, 1
    %s89 = scalar_select %p86, %s87, %s88
    %p92 = pneg %p86
    %p93 = scmp.eq.s32.totalorder %s9, 1
    %p94 = por %p92, %p93
    %p95 = scmp.ne.s32.totalorder %s87, %s90
    %p96 = scmp.eq.s32.totalorder %s9, 0
    %p97 = por %p95, %p96
    %p98 = scmp.ne.s32.totalorder %s87, %s90
    %p99 = scmp.eq.s32.totalorder %s14, 1
    %p100 = por %p98, %p99
    %p101 = scmp.ne.s32.totalorder %s90, %s91
    %p102 = scmp.eq.s32.totalorder %s14, 0
    %p103 = por %p101, %p102
    %p104 = scmp.ne.s32.totalorder %s90, %s91
    %p105 = scmp.eq.s32.totalorder %s15, 1
    %p106 = por %p104, %p105
    %p108 = scmp.ne.s32.totalorder %s91, %s107
    %p109 = scmp.eq.s32.totalorder %s15, 0
    %p110 = por %p108, %p109
    %p111 = scmp.le.s32.totalorder 1, %s9
    %p112 = scmp.lt.s32.totalorder %s9, 3
    %p113 = pnand %p111, %p112
    %p114 = pneg %p113
    // Predicated region
    $region9: #{e5smollm_forward.38} parent=5 // pred_check
      _
    $region10: #{e5smollm_forward.38} parent=5 // pred_check_branch
      %116 = sbr.rel (%p113) target = $region12
    $region11: #{e5smollm_forward.38} parent=5 // pred_region
      %s117 = ssub.s32 %s9, 1
      // Predicated region
      $region13: #{e5smollm_forward.38} parent=11 // pred_check
        %p118 = pneg %p56
      $region14: #{e5smollm_forward.38} parent=11 // pred_check_branch
        %120 = sbr.rel (%p118) target = $region16
      $region15: #{e5smollm_forward.38} parent=11 // pred_region
        _
      $region16: #{e5smollm_forward.38} parent=11 // pred_fallthru
        _
      // Predicated region
      $region17: #{e5smollm_forward.38} parent=11 // pred_check
        %p121 = pneg %p77
      $region18: #{e5smollm_forward.38} parent=11 // pred_check_branch
        %123 = sbr.rel (%p121) target = $region20
      $region19: #{e5smollm_forward.38} parent=11 // pred_region
        _
      $region20: #{e5smollm_forward.38} parent=11 // pred_fallthru
        _
    $region12: #{e5smollm_forward.38} parent=5 // pred_fallthru
      _
    %p124 = scmp.lt.s32.totalorder %s9, 2
    // Predicated region
    $region21: #{e5smollm_forward.38} parent=5 // pred_check
      %p125 = pneg %p124
    $region22: #{e5smollm_forward.38} parent=5 // pred_check_branch
      %127 = sbr.rel (%p125) target = $region24
    $region23: #{e5smollm_forward.38} parent=5 // pred_region
      // Predicated region
      $region25: #{e5smollm_forward.38} parent=23 // pred_check
        %p128 = pneg %p29
      $region26: #{e5smollm_forward.38} parent=23 // pred_check_branch
        %130 = sbr.rel (%p128) target = $region28
      $region27: #{e5smollm_forward.38} parent=23 // pred_region
        %s131 = smul.u32 2, %s9
        %p132 = scmp.lt.s32.totalorder %s131, 3
        %s133 = scalar_select %p132, %s131, 3
        %s134 = smul.addr %s133, 2
        %s135 = smul.addr %s134, 4
        %s136 = scalar_lea.vmem %s0, %s135
        %s137 = smul.u32 2, %s9
      $region28: #{e5smollm_forward.38} parent=23 // pred_fallthru
        _
    $region24: #{e5smollm_forward.38} parent=5 // pred_fallthru
      _
    %p138 = scmp.le.s32.totalorder 1, %s9
    %p139 = scmp.lt.s32.totalorder %s9, 3
    %p140 = pnand %p138, %p139
    %p141 = pneg %p140
    // Predicated region
    $region29: #{e5smollm_forward.38} parent=5 // pred_check
      _
    $region30: #{e5smollm_forward.38} parent=5 // pred_check_branch
      %143 = sbr.rel (%p140) target = $region32
    $region31: #{e5smollm_forward.38} parent=5 // pred_region
      %s144 = ssub.s32 %s9, 1
      %s145 = smul.u32 2, %s14
      %p146 = scmp.lt.s32.totalorder %s145, 3
      %s147 = scalar_select %p146, %s145, 3
      %s148 = smul.addr %s147, 2
      %s149 = smul.addr %s148, 4
      %s150 = scalar_lea.vmem %s0, %s149
      %p151 = pneg %p35
      %p152 = pneg %p32
      %p153 = pneg %p56
      %p154 = pneg %p53
      %p155 = pneg %p77
      %p156 = pneg %p74
      %p157 = pneg %p103
      %p158 = pneg %p100
      %s159 = smul.u32 2, %s14
      %p160 = scmp.lt.s32.totalorder %s159, 3
      %s161 = scalar_select %p160, %s159, 3
      %s162 = smul.addr %s161, 4
      %s163 = smul.addr %s162, 4
      %s164 = scalar_lea.vmem %s3, %s163
      %s165 = smul.u32 2, %s14
      %p166 = scmp.lt.s32.totalorder %s165, 3
      %s167 = scalar_select %p166, %s165, 3
      %s168 = smul.addr %s167, 2
      %s169 = smul.addr %s168, 4
      %s170 = scalar_lea.vmem %s0, %s169
      %s171 = smul.u32 2, %s14
      %s172 = smul.u32 2, %s14
      %p173 = scmp.lt.s32.totalorder %s172, 3
      %s174 = scalar_select %p173, %s172, 3
      %s175 = smul.addr %s174, 4
      %s176 = smul.addr %s175, 4
      %s177 = scalar_lea.vmem %s3, %s176
      %s178 = smul.u32 2, %s14
      %v179 = vld [vmem:[%s170] sm:$0xff]
      %v180 = vld [vmem:[%s170 + $0x8] sm:$0xff]
      %v181 = vunpack.c.l.bf16 %v179
      %v182 = vunpack.c.h.bf16 %v179
      %v183 = vunpack.c.l.bf16 %v180
      %v184 = vunpack.c.h.bf16 %v180
      %v185 = vmul.f32 %v181, %v181
      %v186 = vmul.f32 %v182, %v182
      %v187 = vmul.f32 %v183, %v183
      %v188 = vmul.f32 %v184, %v184
      %v189 = vadd.f32 %v185, %v186
      %190 = vadd.xlane.f32.xlu0 %v189
      %v191 = vpop.xlane.xlu0 %190
      %v192 = vadd.f32 %v187, %v188
      %193 = vadd.xlane.f32.xlu0 %v192
      %v194 = vpop.xlane.xlu0 %193
      %v195 = vrcp.pop 256.0
      %v196 = vmul.f32 %v191, %v195
      %v197 = vmul.f32 %v194, %v195
      %v198 = vadd.f32 %v196, 1e-05
      %v199 = vadd.f32 %v197, 1e-05
      %v200 = vrsqrt.pop %v198
      %v201 = vrsqrt.pop %v199
      %v202 = vmul.f32 %v181, %v200
      %v203 = vmul.f32 %v182, %v200
      %v204 = vmul.f32 %v183, %v201
      %v205 = vmul.f32 %v184, %v201
      %v206 = vld [vmem:[%s1] sm:$0x3]
      %v208 = vlaneseq
      %v209 = vshrl.u32 %v208, 7
      %v210 = vsub.s32 0, %v209
      %v211 = vrot.slane %v206, %v210
      %v212 = vlaneseq
      %v213 = vshrl.u32 %v212, 7
      %v214 = vsub.s32 1, %v213
      %v215 = vrot.slane %v206, %v214
      %v218 = vmul.f32 %v202, %v211
      %v219 = vmul.f32 %v203, %v215
      %v220 = vmul.f32 %v204, %v211
      %v221 = vmul.f32 %v205, %v215
      %v222 = vpack.c.bf16 %v220, %v218
      %v223 = vpack.c.bf16 %v221, %v219
      %v224 = vld [vmem:[%s2] sm:$0xff]
      %v225 = vld [vmem:[%s2 + $0x8] sm:$0xff]
      %v226 = vld [vmem:[%s2 + $0x10] sm:$0xff]
      %v227 = vld [vmem:[%s2 + $0x18] sm:$0xff]
      %v228 = vld [vmem:[%s2 + $0x20] sm:$0xff]
      %v229 = vld [vmem:[%s2 + $0x28] sm:$0xff]
      %v230 = vld [vmem:[%s2 + $0x30] sm:$0xff]
      %v231 = vld [vmem:[%s2 + $0x38] sm:$0xff]
      %v232 = vld [vmem:[%s2 + $0x40] sm:$0xff]
      %v233 = vld [vmem:[%s2 + $0x48] sm:$0xff]
      %v234 = vld [vmem:[%s2 + $0x50] sm:$0xff]
      %v235 = vld [vmem:[%s2 + $0x58] sm:$0xff]
      %v236 = vld [vmem:[%s2 + $0x60] sm:$0xff]
      %v237 = vld [vmem:[%s2 + $0x68] sm:$0xff]
      %v238 = vld [vmem:[%s2 + $0x70] sm:$0xff]
      %v239 = vld [vmem:[%s2 + $0x78] sm:$0xff]
      %v240 = vld [vmem:[%s2 + $0x80] sm:$0xff]
      %v241 = vld [vmem:[%s2 + $0x88] sm:$0xff]
      %v242 = vld [vmem:[%s2 + $0x90] sm:$0xff]
      %v243 = vld [vmem:[%s2 + $0x98] sm:$0xff]
      %v244 = vld [vmem:[%s2 + $0xa0] sm:$0xff]
      %v245 = vld [vmem:[%s2 + $0xa8] sm:$0xff]
      %v246 = vld [vmem:[%s2 + $0xb0] sm:$0xff]
      %v247 = vld [vmem:[%s2 + $0xb8] sm:$0xff]
      %v248 = vld [vmem:[%s2 + $0xc0] sm:$0xff]
      %v249 = vld [vmem:[%s2 + $0xc8] sm:$0xff]
      %v250 = vld [vmem:[%s2 + $0xd0] sm:$0xff]
      %v251 = vld [vmem:[%s2 + $0xd8] sm:$0xff]
      %v252 = vld [vmem:[%s2 + $0xe0] sm:$0xff]
      %v253 = vld [vmem:[%s2 + $0xe8] sm:$0xff]
      %v254 = vld [vmem:[%s2 + $0xf0] sm:$0xff]
      %v255 = vld [vmem:[%s2 + $0xf8] sm:$0xff]
      %v256 = vld [vmem:[%s2 + $0x100] sm:$0xff]
      %v257 = vld [vmem:[%s2 + $0x108] sm:$0xff]
      %v258 = vld [vmem:[%s2 + $0x110] sm:$0xff]
      %v259 = vld [vmem:[%s2 + $0x118] sm:$0xff]
      %v260 = vld [vmem:[%s2 + $0x120] sm:$0xff]
      %v261 = vld [vmem:[%s2 + $0x128] sm:$0xff]
      %v262 = vld [vmem:[%s2 + $0x130] sm:$0xff]
      %v263 = vld [vmem:[%s2 + $0x138] sm:$0xff]
      %v264 = vld [vmem:[%s2 + $0x140] sm:$0xff]
      %v265 = vld [vmem:[%s2 + $0x148] sm:$0xff]
      %v266 = vld [vmem:[%s2 + $0x150] sm:$0xff]
      %v267 = vld [vmem:[%s2 + $0x158] sm:$0xff]
      %v268 = vld [vmem:[%s2 + $0x160] sm:$0xff]
      %v269 = vld [vmem:[%s2 + $0x168] sm:$0xff]
      %v270 = vld [vmem:[%s2 + $0x170] sm:$0xff]
      %v271 = vld [vmem:[%s2 + $0x178] sm:$0xff]
      %v272 = vld [vmem:[%s2 + $0x180] sm:$0xff]
      %v273 = vld [vmem:[%s2 + $0x188] sm:$0xff]
      %v274 = vld [vmem:[%s2 + $0x190] sm:$0xff]
      %v275 = vld [vmem:[%s2 + $0x198] sm:$0xff]
      %v276 = vld [vmem:[%s2 + $0x1a0] sm:$0xff]
      %v277 = vld [vmem:[%s2 + $0x1a8] sm:$0xff]
      %v278 = vld [vmem:[%s2 + $0x1b0] sm:$0xff]
      %v279 = vld [vmem:[%s2 + $0x1b8] sm:$0xff]
      %v280 = vld [vmem:[%s2 + $0x1c0] sm:$0xff]
      %v281 = vld [vmem:[%s2 + $0x1c8] sm:$0xff]
      %v282 = vld [vmem:[%s2 + $0x1d0] sm:$0xff]
      %v283 = vld [vmem:[%s2 + $0x1d8] sm:$0xff]
      %v284 = vld [vmem:[%s2 + $0x1e0] sm:$0xff]
      %v285 = vld [vmem:[%s2 + $0x1e8] sm:$0xff]
      %v286 = vld [vmem:[%s2 + $0x1f0] sm:$0xff]
      %v287 = vld [vmem:[%s2 + $0x1f8] sm:$0xff]
      %v288 = vld [vmem:[%s2 + $0x200] sm:$0xff]
      %v289 = vld [vmem:[%s2 + $0x208] sm:$0xff]
      %v290 = vld [vmem:[%s2 + $0x210] sm:$0xff]
      %v291 = vld [vmem:[%s2 + $0x218] sm:$0xff]
      %v292 = vld [vmem:[%s2 + $0x220] sm:$0xff]
      %v293 = vld [vmem:[%s2 + $0x228] sm:$0xff]
      %v294 = vld [vmem:[%s2 + $0x230] sm:$0xff]
      %v295 = vld [vmem:[%s2 + $0x238] sm:$0xff]
      %v296 = vld [vmem:[%s2 + $0x240] sm:$0xff]
      %v297 = vld [vmem:[%s2 + $0x248] sm:$0xff]
      %v298 = vld [vmem:[%s2 + $0x250] sm:$0xff]
      %v299 = vld [vmem:[%s2 + $0x258] sm:$0xff]
      %v300 = vld [vmem:[%s2 + $0x260] sm:$0xff]
      %v301 = vld [vmem:[%s2 + $0x268] sm:$0xff]
      %v302 = vld [vmem:[%s2 + $0x270] sm:$0xff]
      %v303 = vld [vmem:[%s2 + $0x278] sm:$0xff]
      %v304 = vld [vmem:[%s2 + $0x280] sm:$0xff]
      %v305 = vld [vmem:[%s2 + $0x288] sm:$0xff]
      %v306 = vld [vmem:[%s2 + $0x290] sm:$0xff]
      %v307 = vld [vmem:[%s2 + $0x298] sm:$0xff]
      %v308 = vld [vmem:[%s2 + $0x2a0] sm:$0xff]
      %v309 = vld [vmem:[%s2 + $0x2a8] sm:$0xff]
      %v310 = vld [vmem:[%s2 + $0x2b0] sm:$0xff]
      %v311 = vld [vmem:[%s2 + $0x2b8] sm:$0xff]
      %v312 = vld [vmem:[%s2 + $0x2c0] sm:$0xff]
      %v313 = vld [vmem:[%s2 + $0x2c8] sm:$0xff]
      %v314 = vld [vmem:[%s2 + $0x2d0] sm:$0xff]
      %v315 = vld [vmem:[%s2 + $0x2d8] sm:$0xff]
      %v316 = vld [vmem:[%s2 + $0x2e0] sm:$0xff]
      %v317 = vld [vmem:[%s2 + $0x2e8] sm:$0xff]
      %v318 = vld [vmem:[%s2 + $0x2f0] sm:$0xff]
      %v319 = vld [vmem:[%s2 + $0x2f8] sm:$0xff]
      %v320 = vld [vmem:[%s2 + $0x300] sm:$0xff]
      %v321 = vld [vmem:[%s2 + $0x308] sm:$0xff]
      %v322 = vld [vmem:[%s2 + $0x310] sm:$0xff]
      %v323 = vld [vmem:[%s2 + $0x318] sm:$0xff]
      %v324 = vld [vmem:[%s2 + $0x320] sm:$0xff]
      %v325 = vld [vmem:[%s2 + $0x328] sm:$0xff]
      %v326 = vld [vmem:[%s2 + $0x330] sm:$0xff]
      %v327 = vld [vmem:[%s2 + $0x338] sm:$0xff]
      %v328 = vld [vmem:[%s2 + $0x340] sm:$0xff]
      %v329 = vld [vmem:[%s2 + $0x348] sm:$0xff]
      %v330 = vld [vmem:[%s2 + $0x350] sm:$0xff]
      %v331 = vld [vmem:[%s2 + $0x358] sm:$0xff]
      %v332 = vld [vmem:[%s2 + $0x360] sm:$0xff]
      %v333 = vld [vmem:[%s2 + $0x368] sm:$0xff]
      %v334 = vld [vmem:[%s2 + $0x370] sm:$0xff]
      %v335 = vld [vmem:[%s2 + $0x378] sm:$0xff]
      %v336 = vld [vmem:[%s2 + $0x380] sm:$0xff]
      %v337 = vld [vmem:[%s2 + $0x388] sm:$0xff]
      %v338 = vld [vmem:[%s2 + $0x390] sm:$0xff]
      %v339 = vld [vmem:[%s2 + $0x398] sm:$0xff]
      %v340 = vld [vmem:[%s2 + $0x3a0] sm:$0xff]
      %v341 = vld [vmem:[%s2 + $0x3a8] sm:$0xff]
      %v342 = vld [vmem:[%s2 + $0x3b0] sm:$0xff]
      %v343 = vld [vmem:[%s2 + $0x3b8] sm:$0xff]
      %v344 = vld [vmem:[%s2 + $0x3c0] sm:$0xff]
      %v345 = vld [vmem:[%s2 + $0x3c8] sm:$0xff]
      %v346 = vld [vmem:[%s2 + $0x3d0] sm:$0xff]
      %v347 = vld [vmem:[%s2 + $0x3d8] sm:$0xff]
      %v348 = vld [vmem:[%s2 + $0x3e0] sm:$0xff]
      %v349 = vld [vmem:[%s2 + $0x3e8] sm:$0xff]
      %v350 = vld [vmem:[%s2 + $0x3f0] sm:$0xff]
      %v351 = vld [vmem:[%s2 + $0x3f8] sm:$0xff]
      %v480 = vunpack.c.l.b16 %v224
      %v481 = vunpack.c.h.b16 %v224
      %v482 = vunpack.c.l.b16 %v225
      %v483 = vunpack.c.h.b16 %v225
      %v484 = vunpack.c.l.b16 %v226
      %v485 = vunpack.c.h.b16 %v226
      %v486 = vunpack.c.l.b16 %v227
      %v487 = vunpack.c.h.b16 %v227
      %v488 = vunpack.c.l.b16 %v228
      %v489 = vunpack.c.h.b16 %v228
      %v490 = vunpack.c.l.b16 %v229
      %v491 = vunpack.c.h.b16 %v229
      %v492 = vunpack.c.l.b16 %v230
      %v493 = vunpack.c.h.b16 %v230
      %v494 = vunpack.c.l.b16 %v231
      %v495 = vunpack.c.h.b16 %v231
      %v496 = vunpack.c.l.b16 %v232
      %v497 = vunpack.c.h.b16 %v232
      %v498 = vunpack.c.l.b16 %v233
      %v499 = vunpack.c.h.b16 %v233
      %v500 = vunpack.c.l.b16 %v234
      %v501 = vunpack.c.h.b16 %v234
      %v502 = vunpack.c.l.b16 %v235
      %v503 = vunpack.c.h.b16 %v235
      %v504 = vunpack.c.l.b16 %v236
      %v505 = vunpack.c.h.b16 %v236
      %v506 = vunpack.c.l.b16 %v237
      %v507 = vunpack.c.h.b16 %v237
      %v508 = vunpack.c.l.b16 %v238
      %v509 = vunpack.c.h.b16 %v238
      %v510 = vunpack.c.l.b16 %v239
      %v511 = vunpack.c.h.b16 %v239
      %v512 = vunpack.c.l.b16 %v240
      %v513 = vunpack.c.h.b16 %v240
      %v514 = vunpack.c.l.b16 %v241
      %v515 = vunpack.c.h.b16 %v241
      %v516 = vunpack.c.l.b16 %v242
      %v517 = vunpack.c.h.b16 %v242
      %v518 = vunpack.c.l.b16 %v243
      %v519 = vunpack.c.h.b16 %v243
      %v520 = vunpack.c.l.b16 %v244
      %v521 = vunpack.c.h.b16 %v244
      %v522 = vunpack.c.l.b16 %v245
      %v523 = vunpack.c.h.b16 %v245
      %v524 = vunpack.c.l.b16 %v246
      %v525 = vunpack.c.h.b16 %v246
      %v526 = vunpack.c.l.b16 %v247
      %v527 = vunpack.c.h.b16 %v247
      %v528 = vunpack.c.l.b16 %v248
      %v529 = vunpack.c.h.b16 %v248
      %v530 = vunpack.c.l.b16 %v249
      %v531 = vunpack.c.h.b16 %v249
      %v532 = vunpack.c.l.b16 %v250
      %v533 = vunpack.c.h.b16 %v250
      %v534 = vunpack.c.l.b16 %v251
      %v535 = vunpack.c.h.b16 %v251
      %v536 = vunpack.c.l.b16 %v252
      %v537 = vunpack.c.h.b16 %v252
      %v538 = vunpack.c.l.b16 %v253
      %v539 = vunpack.c.h.b16 %v253
      %v540 = vunpack.c.l.b16 %v254
      %v541 = vunpack.c.h.b16 %v254
      %v542 = vunpack.c.l.b16 %v255
      %v543 = vunpack.c.h.b16 %v255
      %v544 = vunpack.c.l.b16 %v256
      %v545 = vunpack.c.h.b16 %v256
      %v546 = vunpack.c.l.b16 %v257
      %v547 = vunpack.c.h.b16 %v257
      %v548 = vunpack.c.l.b16 %v258
      %v549 = vunpack.c.h.b16 %v258
      %v550 = vunpack.c.l.b16 %v259
      %v551 = vunpack.c.h.b16 %v259
      %v552 = vunpack.c.l.b16 %v260
      %v553 = vunpack.c.h.b16 %v260
      %v554 = vunpack.c.l.b16 %v261
      %v555 = vunpack.c.h.b16 %v261
      %v556 = vunpack.c.l.b16 %v262
      %v557 = vunpack.c.h.b16 %v262
      %v558 = vunpack.c.l.b16 %v263
      %v559 = vunpack.c.h.b16 %v263
      %v560 = vunpack.c.l.b16 %v264
      %v561 = vunpack.c.h.b16 %v264
      %v562 = vunpack.c.l.b16 %v265
      %v563 = vunpack.c.h.b16 %v265
      %v564 = vunpack.c.l.b16 %v266
      %v565 = vunpack.c.h.b16 %v266
      %v566 = vunpack.c.l.b16 %v267
      %v567 = vunpack.c.h.b16 %v267
      %v568 = vunpack.c.l.b16 %v268
      %v569 = vunpack.c.h.b16 %v268
      %v570 = vunpack.c.l.b16 %v269
      %v571 = vunpack.c.h.b16 %v269
      %v572 = vunpack.c.l.b16 %v270
      %v573 = vunpack.c.h.b16 %v270
      %v574 = vunpack.c.l.b16 %v271
      %v575 = vunpack.c.h.b16 %v271
      %v576 = vunpack.c.l.b16 %v272
      %v577 = vunpack.c.h.b16 %v272
      %v578 = vunpack.c.l.b16 %v273
      %v579 = vunpack.c.h.b16 %v273
      %v580 = vunpack.c.l.b16 %v274
      %v581 = vunpack.c.h.b16 %v274
      %v582 = vunpack.c.l.b16 %v275
      %v583 = vunpack.c.h.b16 %v275
      %v584 = vunpack.c.l.b16 %v276
      %v585 = vunpack.c.h.b16 %v276
      %v586 = vunpack.c.l.b16 %v277
      %v587 = vunpack.c.h.b16 %v277
      %v588 = vunpack.c.l.b16 %v278
      %v589 = vunpack.c.h.b16 %v278
      %v590 = vunpack.c.l.b16 %v279
      %v591 = vunpack.c.h.b16 %v279
      %v592 = vunpack.c.l.b16 %v280
      %v593 = vunpack.c.h.b16 %v280
      %v594 = vunpack.c.l.b16 %v281
      %v595 = vunpack.c.h.b16 %v281
      %v596 = vunpack.c.l.b16 %v282
      %v597 = vunpack.c.h.b16 %v282
      %v598 = vunpack.c.l.b16 %v283
      %v599 = vunpack.c.h.b16 %v283
      %v600 = vunpack.c.l.b16 %v284
      %v601 = vunpack.c.h.b16 %v284
      %v602 = vunpack.c.l.b16 %v285
      %v603 = vunpack.c.h.b16 %v285
      %v604 = vunpack.c.l.b16 %v286
      %v605 = vunpack.c.h.b16 %v286
      %v606 = vunpack.c.l.b16 %v287
      %v607 = vunpack.c.h.b16 %v287
      %v608 = vunpack.c.l.b16 %v288
      %v609 = vunpack.c.h.b16 %v288
      %v610 = vunpack.c.l.b16 %v289
      %v611 = vunpack.c.h.b16 %v289
      %v612 = vunpack.c.l.b16 %v290
      %v613 = vunpack.c.h.b16 %v290
      %v614 = vunpack.c.l.b16 %v291
      %v615 = vunpack.c.h.b16 %v291
      %v616 = vunpack.c.l.b16 %v292
      %v617 = vunpack.c.h.b16 %v292
      %v618 = vunpack.c.l.b16 %v293
      %v619 = vunpack.c.h.b16 %v293
      %v620 = vunpack.c.l.b16 %v294
      %v621 = vunpack.c.h.b16 %v294
      %v622 = vunpack.c.l.b16 %v295
      %v623 = vunpack.c.h.b16 %v295
      %v624 = vunpack.c.l.b16 %v296
      %v625 = vunpack.c.h.b16 %v296
      %v626 = vunpack.c.l.b16 %v297
      %v627 = vunpack.c.h.b16 %v297
      %v628 = vunpack.c.l.b16 %v298
      %v629 = vunpack.c.h.b16 %v298
      %v630 = vunpack.c.l.b16 %v299
      %v631 = vunpack.c.h.b16 %v299
      %v632 = vunpack.c.l.b16 %v300
      %v633 = vunpack.c.h.b16 %v300
      %v634 = vunpack.c.l.b16 %v301
      %v635 = vunpack.c.h.b16 %v301
      %v636 = vunpack.c.l.b16 %v302
      %v637 = vunpack.c.h.b16 %v302
      %v638 = vunpack.c.l.b16 %v303
      %v639 = vunpack.c.h.b16 %v303
      %v640 = vunpack.c.l.b16 %v304
      %v641 = vunpack.c.h.b16 %v304
      %v642 = vunpack.c.l.b16 %v305
      %v643 = vunpack.c.h.b16 %v305
      %v644 = vunpack.c.l.b16 %v306
      %v645 = vunpack.c.h.b16 %v306
      %v646 = vunpack.c.l.b16 %v307
      %v647 = vunpack.c.h.b16 %v307
      %v648 = vunpack.c.l.b16 %v308
      %v649 = vunpack.c.h.b16 %v308
      %v650 = vunpack.c.l.b16 %v309
      %v651 = vunpack.c.h.b16 %v309
      %v652 = vunpack.c.l.b16 %v310
      %v653 = vunpack.c.h.b16 %v310
      %v654 = vunpack.c.l.b16 %v311
      %v655 = vunpack.c.h.b16 %v311
      %v656 = vunpack.c.l.b16 %v312
      %v657 = vunpack.c.h.b16 %v312
      %v658 = vunpack.c.l.b16 %v313
      %v659 = vunpack.c.h.b16 %v313
      %v660 = vunpack.c.l.b16 %v314
      %v661 = vunpack.c.h.b16 %v314
      %v662 = vunpack.c.l.b16 %v315
      %v663 = vunpack.c.h.b16 %v315
      %v664 = vunpack.c.l.b16 %v316
      %v665 = vunpack.c.h.b16 %v316
      %v666 = vunpack.c.l.b16 %v317
      %v667 = vunpack.c.h.b16 %v317
      %v668 = vunpack.c.l.b16 %v318
      %v669 = vunpack.c.h.b16 %v318
      %v670 = vunpack.c.l.b16 %v319
      %v671 = vunpack.c.h.b16 %v319
      %v672 = vunpack.c.l.b16 %v320
      %v673 = vunpack.c.h.b16 %v320
      %v674 = vunpack.c.l.b16 %v321
      %v675 = vunpack.c.h.b16 %v321
      %v676 = vunpack.c.l.b16 %v322
      %v677 = vunpack.c.h.b16 %v322
      %v678 = vunpack.c.l.b16 %v323
      %v679 = vunpack.c.h.b16 %v323
      %v680 = vunpack.c.l.b16 %v324
      %v681 = vunpack.c.h.b16 %v324
      %v682 = vunpack.c.l.b16 %v325
      %v683 = vunpack.c.h.b16 %v325
      %v684 = vunpack.c.l.b16 %v326
      %v685 = vunpack.c.h.b16 %v326
      %v686 = vunpack.c.l.b16 %v327
      %v687 = vunpack.c.h.b16 %v327
      %v688 = vunpack.c.l.b16 %v328
      %v689 = vunpack.c.h.b16 %v328
      %v690 = vunpack.c.l.b16 %v329
      %v691 = vunpack.c.h.b16 %v329
      %v692 = vunpack.c.l.b16 %v330
      %v693 = vunpack.c.h.b16 %v330
      %v694 = vunpack.c.l.b16 %v331
      %v695 = vunpack.c.h.b16 %v331
      %v696 = vunpack.c.l.b16 %v332
      %v697 = vunpack.c.h.b16 %v332
      %v698 = vunpack.c.l.b16 %v333
      %v699 = vunpack.c.h.b16 %v333
      %v700 = vunpack.c.l.b16 %v334
      %v701 = vunpack.c.h.b16 %v334
      %v702 = vunpack.c.l.b16 %v335
      %v703 = vunpack.c.h.b16 %v335
      %v704 = vunpack.c.l.b16 %v336
      %v705 = vunpack.c.h.b16 %v336
      %v706 = vunpack.c.l.b16 %v337
      %v707 = vunpack.c.h.b16 %v337
      %v708 = vunpack.c.l.b16 %v338
      %v709 = vunpack.c.h.b16 %v338
      %v710 = vunpack.c.l.b16 %v339
      %v711 = vunpack.c.h.b16 %v339
      %v712 = vunpack.c.l.b16 %v340
      %v713 = vunpack.c.h.b16 %v340
      %v714 = vunpack.c.l.b16 %v341
      %v715 = vunpack.c.h.b16 %v341
      %v716 = vunpack.c.l.b16 %v342
      %v717 = vunpack.c.h.b16 %v342
      %v718 = vunpack.c.l.b16 %v343
      %v719 = vunpack.c.h.b16 %v343
      %v720 = vunpack.c.l.b16 %v344
      %v721 = vunpack.c.h.b16 %v344
      %v722 = vunpack.c.l.b16 %v345
      %v723 = vunpack.c.h.b16 %v345
      %v724 = vunpack.c.l.b16 %v346
      %v725 = vunpack.c.h.b16 %v346
      %v726 = vunpack.c.l.b16 %v347
      %v727 = vunpack.c.h.b16 %v347
      %v728 = vunpack.c.l.b16 %v348
      %v729 = vunpack.c.h.b16 %v348
      %v730 = vunpack.c.l.b16 %v349
      %v731 = vunpack.c.h.b16 %v349
      %v732 = vunpack.c.l.b16 %v350
      %v733 = vunpack.c.h.b16 %v350
      %v734 = vunpack.c.l.b16 %v351
      %v735 = vunpack.c.h.b16 %v351
      %v736 = vpack.c.b16 %v488, %v480
      %v737 = vpack.c.b16 %v489, %v481
      %v738 = vpack.c.b16 %v490, %v482
      %v739 = vpack.c.b16 %v491, %v483
      %v740 = vpack.c.b16 %v492, %v484
      %v741 = vpack.c.b16 %v493, %v485
      %v742 = vpack.c.b16 %v494, %v486
      %v743 = vpack.c.b16 %v495, %v487
      %v744 = vpack.c.b16 %v504, %v496
      %v745 = vpack.c.b16 %v505, %v497
      %v746 = vpack.c.b16 %v506, %v498
      %v747 = vpack.c.b16 %v507, %v499
      %v748 = vpack.c.b16 %v508, %v500
      %v749 = vpack.c.b16 %v509, %v501
      %v750 = vpack.c.b16 %v510, %v502
      %v751 = vpack.c.b16 %v511, %v503
      %v752 = vpack.c.b16 %v520, %v512
      %v753 = vpack.c.b16 %v521, %v513
      %v754 = vpack.c.b16 %v522, %v514
      %v755 = vpack.c.b16 %v523, %v515
      %v756 = vpack.c.b16 %v524, %v516
      %v757 = vpack.c.b16 %v525, %v517
      %v758 = vpack.c.b16 %v526, %v518
      %v759 = vpack.c.b16 %v527, %v519
      %v760 = vpack.c.b16 %v536, %v528
      %v761 = vpack.c.b16 %v537, %v529
      %v762 = vpack.c.b16 %v538, %v530
      %v763 = vpack.c.b16 %v539, %v531
      %v764 = vpack.c.b16 %v540, %v532
      %v765 = vpack.c.b16 %v541, %v533
      %v766 = vpack.c.b16 %v542, %v534
      %v767 = vpack.c.b16 %v543, %v535
      %v768 = vpack.c.b16 %v552, %v544
      %v769 = vpack.c.b16 %v553, %v545
      %v770 = vpack.c.b16 %v554, %v546
      %v771 = vpack.c.b16 %v555, %v547
      %v772 = vpack.c.b16 %v556, %v548
      %v773 = vpack.c.b16 %v557, %v549
      %v774 = vpack.c.b16 %v558, %v550
      %v775 = vpack.c.b16 %v559, %v551
      %v776 = vpack.c.b16 %v568, %v560
      %v777 = vpack.c.b16 %v569, %v561
      %v778 = vpack.c.b16 %v570, %v562
      %v779 = vpack.c.b16 %v571, %v563
      %v780 = vpack.c.b16 %v572, %v564
      %v781 = vpack.c.b16 %v573, %v565
      %v782 = vpack.c.b16 %v574, %v566
      %v783 = vpack.c.b16 %v575, %v567
      %v784 = vpack.c.b16 %v584, %v576
      %v785 = vpack.c.b16 %v585, %v577
      %v786 = vpack.c.b16 %v586, %v578
      %v787 = vpack.c.b16 %v587, %v579
      %v788 = vpack.c.b16 %v588, %v580
      %v789 = vpack.c.b16 %v589, %v581
      %v790 = vpack.c.b16 %v590, %v582
      %v791 = vpack.c.b16 %v591, %v583
      %v792 = vpack.c.b16 %v600, %v592
      %v793 = vpack.c.b16 %v601, %v593
      %v794 = vpack.c.b16 %v602, %v594
      %v795 = vpack.c.b16 %v603, %v595
      %v796 = vpack.c.b16 %v604, %v596
      %v797 = vpack.c.b16 %v605, %v597
      %v798 = vpack.c.b16 %v606, %v598
      %v799 = vpack.c.b16 %v607, %v599
      %v800 = vpack.c.b16 %v616, %v608
      %v801 = vpack.c.b16 %v617, %v609
      %v802 = vpack.c.b16 %v618, %v610
      %v803 = vpack.c.b16 %v619, %v611
      %v804 = vpack.c.b16 %v620, %v612
      %v805 = vpack.c.b16 %v621, %v613
      %v806 = vpack.c.b16 %v622, %v614
      %v807 = vpack.c.b16 %v623, %v615
      %v808 = vpack.c.b16 %v632, %v624
      %v809 = vpack.c.b16 %v633, %v625
      %v810 = vpack.c.b16 %v634, %v626
      %v811 = vpack.c.b16 %v635, %v627
      %v812 = vpack.c.b16 %v636, %v628
      %v813 = vpack.c.b16 %v637, %v629
      %v814 = vpack.c.b16 %v638, %v630
      %v815 = vpack.c.b16 %v639, %v631
      %v816 = vpack.c.b16 %v648, %v640
      %v817 = vpack.c.b16 %v649, %v641
      %v818 = vpack.c.b16 %v650, %v642
      %v819 = vpack.c.b16 %v651, %v643
      %v820 = vpack.c.b16 %v652, %v644
      %v821 = vpack.c.b16 %v653, %v645
      %v822 = vpack.c.b16 %v654, %v646
      %v823 = vpack.c.b16 %v655, %v647
      %v824 = vpack.c.b16 %v664, %v656
      %v825 = vpack.c.b16 %v665, %v657
      %v826 = vpack.c.b16 %v666, %v658
      %v827 = vpack.c.b16 %v667, %v659
      %v828 = vpack.c.b16 %v668, %v660
      %v829 = vpack.c.b16 %v669, %v661
      %v830 = vpack.c.b16 %v670, %v662
      %v831 = vpack.c.b16 %v671, %v663
      %v832 = vpack.c.b16 %v680, %v672
      %v833 = vpack.c.b16 %v681, %v673
      %v834 = vpack.c.b16 %v682, %v674
      %v835 = vpack.c.b16 %v683, %v675
      %v836 = vpack.c.b16 %v684, %v676
      %v837 = vpack.c.b16 %v685, %v677
      %v838 = vpack.c.b16 %v686, %v678
      %v839 = vpack.c.b16 %v687, %v679
      %v840 = vpack.c.b16 %v696, %v688
      %v841 = vpack.c.b16 %v697, %v689
      %v842 = vpack.c.b16 %v698, %v690
      %v843 = vpack.c.b16 %v699, %v691
      %v844 = vpack.c.b16 %v700, %v692
      %v845 = vpack.c.b16 %v701, %v693
      %v846 = vpack.c.b16 %v702, %v694
      %v847 = vpack.c.b16 %v703, %v695
      %v848 = vpack.c.b16 %v712, %v704
      %v849 = vpack.c.b16 %v713, %v705
      %v850 = vpack.c.b16 %v714, %v706
      %v851 = vpack.c.b16 %v715, %v707
      %v852 = vpack.c.b16 %v716, %v708
      %v853 = vpack.c.b16 %v717, %v709
      %v854 = vpack.c.b16 %v718, %v710
      %v855 = vpack.c.b16 %v719, %v711
      %v856 = vpack.c.b16 %v728, %v720
      %v857 = vpack.c.b16 %v729, %v721
      %v858 = vpack.c.b16 %v730, %v722
      %v859 = vpack.c.b16 %v731, %v723
      %v860 = vpack.c.b16 %v732, %v724
      %v861 = vpack.c.b16 %v733, %v725
      %v862 = vpack.c.b16 %v734, %v726
      %v863 = vpack.c.b16 %v735, %v727
      %992 = vmatprep.subr.bf16.mxu0 %v737
      %993 = vmatpush1.bf16.msra.mxu0 %v736
      %994 = vmatprep.subr.bf16.mxu0 %v745
      %995 = vmatpush1.bf16.msra.mxu0 %v744
      %996 = vmatprep.subr.bf16.mxu0 %v753
      %997 = vmatpush1.bf16.msra.mxu0 %v752
      %998 = vmatprep.subr.bf16.mxu0 %v761
      %999 = vmatpush1.bf16.msra.mxu0 %v760
      %1000 = vmatprep.subr.bf16.mxu0 %v769
      %1001 = vmatpush1.bf16.msra.mxu0 %v768
      %1002 = vmatprep.subr.bf16.mxu0 %v777
      %1003 = vmatpush1.bf16.msra.mxu0 %v776
      %1004 = vmatprep.subr.bf16.mxu0 %v785
      %1005 = vmatpush1.bf16.msra.mxu0 %v784
      %1006 = vmatprep.subr.bf16.mxu0 %v793
      %1007 = vmatpush1.bf16.msra.mxu0 %v792
      %1008 = vmatprep.subr.bf16.mxu0 %v801
      %1009 = vmatpush1.bf16.msra.mxu0 %v800
      %1010 = vmatprep.subr.bf16.mxu0 %v809
      %1011 = vmatpush1.bf16.msra.mxu0 %v808
      %1012 = vmatprep.subr.bf16.mxu0 %v817
      %1013 = vmatpush1.bf16.msra.mxu0 %v816
      %1014 = vmatprep.subr.bf16.mxu0 %v825
      %1015 = vmatpush1.bf16.msra.mxu0 %v824
      %1016 = vmatprep.subr.bf16.mxu0 %v833
      %1017 = vmatpush1.bf16.msra.mxu0 %v832
      %1018 = vmatprep.subr.bf16.mxu0 %v841
      %1019 = vmatpush1.bf16.msra.mxu0 %v840
      %1020 = vmatprep.subr.bf16.mxu0 %v849
      %1021 = vmatpush1.bf16.msra.mxu0 %v848
      %1022 = vmatprep.subr.bf16.mxu0 %v857
      %1023 = vmatpush1.bf16.msra.mxu0 %v856
      %1024 = vmatprep.mubr.bf16.mxu0 %v223
      %1025 = vmatmul.mubr.bf16.gmra.mrb[0].mxu0 %v222
      %v1026 = vpop.f32.mrb[0].mxu0
      %v1027 = vadd.f32 0.0, %v1026
      %v1028 = vpop.f32.mrb[0].mxu0
      %v1029 = vadd.f32 0.0, %v1028
      %v1030 = vpop.f32.mrb[0].mxu0
      %v1031 = vadd.f32 0.0, %v1030
      %v1032 = vpop.f32.mrb[0].mxu0
      %v1033 = vadd.f32 0.0, %v1032
      %1034 = vdwg.mxu0
      %1035 = vmatprep.subr.bf16.mxu0 %v739
      %1036 = vmatpush1.bf16.msra.mxu0 %v738
      %1037 = vmatprep.subr.bf16.mxu0 %v747
      %1038 = vmatpush1.bf16.msra.mxu0 %v746
      %1039 = vmatprep.subr.bf16.mxu0 %v755
      %1040 = vmatpush1.bf16.msra.mxu0 %v754
      %1041 = vmatprep.subr.bf16.mxu0 %v763
      %1042 = vmatpush1.bf16.msra.mxu0 %v762
      %1043 = vmatprep.subr.bf16.mxu0 %v771
      %1044 = vmatpush1.bf16.msra.mxu0 %v770
      %1045 = vmatprep.subr.bf16.mxu0 %v779
      %1046 = vmatpush1.bf16.msra.mxu0 %v778
      %1047 = vmatprep.subr.bf16.mxu0 %v787
      %1048 = vmatpush1.bf16.msra.mxu0 %v786
      %1049 = vmatprep.subr.bf16.mxu0 %v795
      %1050 = vmatpush1.bf16.msra.mxu0 %v794
      %1051 = vmatprep.subr.bf16.mxu0 %v803
      %1052 = vmatpush1.bf16.msra.mxu0 %v802
      %1053 = vmatprep.subr.bf16.mxu0 %v811
      %1054 = vmatpush1.bf16.msra.mxu0 %v810
      %1055 = vmatprep.subr.bf16.mxu0 %v819
      %1056 = vmatpush1.bf16.msra.mxu0 %v818
      %1057 = vmatprep.subr.bf16.mxu0 %v827
      %1058 = vmatpush1.bf16.msra.mxu0 %v826
      %1059 = vmatprep.subr.bf16.mxu0 %v835
      %1060 = vmatpush1.bf16.msra.mxu0 %v834
      %1061 = vmatprep.subr.bf16.mxu0 %v843
      %1062 = vmatpush1.bf16.msra.mxu0 %v842
      %1063 = vmatprep.subr.bf16.mxu0 %v851
      %1064 = vmatpush1.bf16.msra.mxu0 %v850
      %1065 = vmatprep.subr.bf16.mxu0 %v859
      %1066 = vmatpush1.bf16.msra.mxu0 %v858
      %1067 = vmatprep.mubr.bf16.mxu0 %v223
      %1068 = vmatmul.mubr.bf16.gmra.mrb[0].mxu0 %v222
      %v1069 = vpop.f32.mrb[0].mxu0
      %v1070 = vadd.f32 0.0, %v1069
      %v1071 = vpop.f32.mrb[0].mxu0
      %v1072 = vadd.f32 0.0, %v1071
      %v1073 = vpop.f32.mrb[0].mxu0
      %v1074 = vadd.f32 0.0, %v1073
      %v1075 = vpop.f32.mrb[0].mxu0
      %v1076 = vadd.f32 0.0, %v1075
      %1077 = vdwg.mxu0
      %1078 = vmatprep.subr.bf16.mxu0 %v741
      %1079 = vmatpush1.bf16.msra.mxu0 %v740
      %1080 = vmatprep.subr.bf16.mxu0 %v749
      %1081 = vmatpush1.bf16.msra.mxu0 %v748
      %1082 = vmatprep.subr.bf16.mxu0 %v757
      %1083 = vmatpush1.bf16.msra.mxu0 %v756
      %1084 = vmatprep.subr.bf16.mxu0 %v765
      %1085 = vmatpush1.bf16.msra.mxu0 %v764
      %1086 = vmatprep.subr.bf16.mxu0 %v773
      %1087 = vmatpush1.bf16.msra.mxu0 %v772
      %1088 = vmatprep.subr.bf16.mxu0 %v781
      %1089 = vmatpush1.bf16.msra.mxu0 %v780
      %1090 = vmatprep.subr.bf16.mxu0 %v789
      %1091 = vmatpush1.bf16.msra.mxu0 %v788
      %1092 = vmatprep.subr.bf16.mxu0 %v797
      %1093 = vmatpush1.bf16.msra.mxu0 %v796
      %1094 = vmatprep.subr.bf16.mxu0 %v805
      %1095 = vmatpush1.bf16.msra.mxu0 %v804
      %1096 = vmatprep.subr.bf16.mxu0 %v813
      %1097 = vmatpush1.bf16.msra.mxu0 %v812
      %1098 = vmatprep.subr.bf16.mxu0 %v821
      %1099 = vmatpush1.bf16.msra.mxu0 %v820
      %1100 = vmatprep.subr.bf16.mxu0 %v829
      %1101 = vmatpush1.bf16.msra.mxu0 %v828
      %1102 = vmatprep.subr.bf16.mxu0 %v837
      %1103 = vmatpush1.bf16.msra.mxu0 %v836
      %1104 = vmatprep.subr.bf16.mxu0 %v845
      %1105 = vmatpush1.bf16.msra.mxu0 %v844
      %1106 = vmatprep.subr.bf16.mxu0 %v853
      %1107 = vmatpush1.bf16.msra.mxu0 %v852
      %1108 = vmatprep.subr.bf16.mxu0 %v861
      %1109 = vmatpush1.bf16.msra.mxu0 %v860
      %1110 = vmatprep.mubr.bf16.mxu0 %v223
      %1111 = vmatmul.mubr.bf16.gmra.mrb[0].mxu0 %v222
      %v1112 = vpop.f32.mrb[0].mxu0
      %v1113 = vadd.f32 0.0, %v1112
      %v1114 = vpop.f32.mrb[0].mxu0
      %v1115 = vadd.f32 0.0, %v1114
      %v1116 = vpop.f32.mrb[0].mxu0
      %v1117 = vadd.f32 0.0, %v1116
      %v1118 = vpop.f32.mrb[0].mxu0
      %v1119 = vadd.f32 0.0, %v1118
      %1120 = vdwg.mxu0
      %1121 = vmatprep.subr.bf16.mxu0 %v743
      %1122 = vmatpush1.bf16.msra.mxu0 %v742
      %1123 = vmatprep.subr.bf16.mxu0 %v751
      %1124 = vmatpush1.bf16.msra.mxu0 %v750
      %1125 = vmatprep.subr.bf16.mxu0 %v759
      %1126 = vmatpush1.bf16.msra.mxu0 %v758
      %1127 = vmatprep.subr.bf16.mxu0 %v767
      %1128 = vmatpush1.bf16.msra.mxu0 %v766
      %1129 = vmatprep.subr.bf16.mxu0 %v775
      %1130 = vmatpush1.bf16.msra.mxu0 %v774
      %1131 = vmatprep.subr.bf16.mxu0 %v783
      %1132 = vmatpush1.bf16.msra.mxu0 %v782
      %1133 = vmatprep.subr.bf16.mxu0 %v791
      %1134 = vmatpush1.bf16.msra.mxu0 %v790
      %1135 = vmatprep.subr.bf16.mxu0 %v799
      %1136 = vmatpush1.bf16.msra.mxu0 %v798
      %1137 = vmatprep.subr.bf16.mxu0 %v807
      %1138 = vmatpush1.bf16.msra.mxu0 %v806
      %1139 = vmatprep.subr.bf16.mxu0 %v815
      %1140 = vmatpush1.bf16.msra.mxu0 %v814
      %1141 = vmatprep.subr.bf16.mxu0 %v823
      %1142 = vmatpush1.bf16.msra.mxu0 %v822
      %1143 = vmatprep.subr.bf16.mxu0 %v831
      %1144 = vmatpush1.bf16.msra.mxu0 %v830
      %1145 = vmatprep.subr.bf16.mxu0 %v839
      %1146 = vmatpush1.bf16.msra.mxu0 %v838
      %1147 = vmatprep.subr.bf16.mxu0 %v847
      %1148 = vmatpush1.bf16.msra.mxu0 %v846
      %1149 = vmatprep.subr.bf16.mxu0 %v855
      %1150 = vmatpush1.bf16.msra.mxu0 %v854
      %1151 = vmatprep.subr.bf16.mxu0 %v863
      %1152 = vmatpush1.bf16.msra.mxu0 %v862
      %1153 = vmatprep.mubr.bf16.mxu0 %v223
      %1154 = vmatmul.mubr.bf16.gmra.mrb[0].mxu0 %v222
      %v1155 = vpop.f32.mrb[0].mxu0
      %v1156 = vadd.f32 0.0, %v1155
      %v1157 = vpop.f32.mrb[0].mxu0
      %v1158 = vadd.f32 0.0, %v1157
      %v1159 = vpop.f32.mrb[0].mxu0
      %v1160 = vadd.f32 0.0, %v1159
      %v1161 = vpop.f32.mrb[0].mxu0
      %v1162 = vadd.f32 0.0, %v1161
      %1163 = vdwg.mxu0
      %v1164 = vxor.u32 %v1027, 2147483648
      %v1165 = vxor.u32 %v1029, 2147483648
      %v1166 = vxor.u32 %v1070, 2147483648
      %v1167 = vxor.u32 %v1072, 2147483648
      %v1168 = vxor.u32 %v1031, 2147483648
      %v1169 = vxor.u32 %v1033, 2147483648
      %v1170 = vxor.u32 %v1074, 2147483648
      %v1171 = vxor.u32 %v1076, 2147483648
      %v1172 = vmul.f32 %v1164, 1.442695
      %v1173 = vpow.pop %v1172
      %v1174 = vmul.f32 %v1165, 1.442695
      %v1175 = vpow.pop %v1174
      %v1176 = vmul.f32 %v1166, 1.442695
      %v1177 = vpow.pop %v1176
      %v1178 = vmul.f32 %v1167, 1.442695
      %v1179 = vpow.pop %v1178
      %v1180 = vmul.f32 %v1168, 1.442695
      %v1181 = vpow.pop %v1180
      %v1182 = vmul.f32 %v1169, 1.442695
      %v1183 = vpow.pop %v1182
      %v1184 = vmul.f32 %v1170, 1.442695
      %v1185 = vpow.pop %v1184
      %v1186 = vmul.f32 %v1171, 1.442695
      %v1187 = vpow.pop %v1186
      %v1188 = vadd.f32 %v1173, 1.0
      %v1189 = vadd.f32 %v1175, 1.0
      %v1190 = vadd.f32 %v1177, 1.0
      %v1191 = vadd.f32 %v1179, 1.0
      %v1192 = vadd.f32 %v1181, 1.0
      %v1193 = vadd.f32 %v1183, 1.0
      %v1194 = vadd.f32 %v1185, 1.0
      %v1195 = vadd.f32 %v1187, 1.0
      %v1196 = vrcp.pop %v1188
      %v1197 = vmul.f32 1.0, %v1196
      %v1198 = vrcp.pop %v1189
      %v1199 = vmul.f32 1.0, %v1198
      %v1200 = vrcp.pop %v1190
      %v1201 = vmul.f32 1.0, %v1200
      %v1202 = vrcp.pop %v1191
      %v1203 = vmul.f32 1.0, %v1202
      %v1204 = vrcp.pop %v1192
      %v1205 = vmul.f32 1.0, %v1204
      %v1206 = vrcp.pop %v1193
      %v1207 = vmul.f32 1.0, %v1206
      %v1208 = vrcp.pop %v1194
      %v1209 = vmul.f32 1.0, %v1208
      %v1210 = vrcp.pop %v1195
      %v1211 = vmul.f32 1.0, %v1210
      %v1212 = vmul.f32 %v1027, %v1197
      %v1213 = vmul.f32 %v1029, %v1199
      %v1214 = vmul.f32 %v1070, %v1201
      %v1215 = vmul.f32 %v1072, %v1203
      %v1216 = vmul.f32 %v1031, %v1205
      %v1217 = vmul.f32 %v1033, %v1207
      %v1218 = vmul.f32 %v1074, %v1209
      %v1219 = vmul.f32 %v1076, %v1211
      %v1220 = vmul.f32 %v1212, %v1113
      %v1221 = vmul.f32 %v1213, %v1115
      %v1222 = vmul.f32 %v1214, %v1156
      %v1223 = vmul.f32 %v1215, %v1158
      %v1224 = vmul.f32 %v1216, %v1117
      %v1225 = vmul.f32 %v1217, %v1119
      %v1226 = vmul.f32 %v1218, %v1160
      %v1227 = vmul.f32 %v1219, %v1162
      %v1228 = vpack.c.bf16 %v1224, %v1220
      %v1229 = vpack.c.bf16 %v1225, %v1221
      %v1230 = vpack.c.bf16 %v1226, %v1222
      %v1231 = vpack.c.bf16 %v1227, %v1223
      %v1236 = vunpack.c.l.b16 %v1228
      %v1237 = vunpack.c.l.b16 %v1229
      %v1238 = vunpack.c.l.b16 %v1230
      %v1239 = vunpack.c.l.b16 %v1231
      %v1240 = vunpack.c.h.b16 %v1228
      %v1241 = vunpack.c.h.b16 %v1229
      %v1242 = vunpack.c.h.b16 %v1230
      %v1243 = vunpack.c.h.b16 %v1231
      %v1244 = vpack.c.b16 %v1237, %v1236
      %v1245 = vpack.c.b16 %v1239, %v1238
      %v1246 = vpack.c.b16 %v1241, %v1240
      %v1247 = vpack.c.b16 %v1243, %v1242
      %1252 = vst [vmem:[%s177] sm:$0xff] %v1244
      %1253 = vst [vmem:[%s177 + $0x8] sm:$0xff] %v1245
      %1254 = vst [vmem:[%s177 + $0x10] sm:$0xff] %v1246
      %1255 = vst [vmem:[%s177 + $0x18] sm:$0xff] %v1247
      %s1256 = smul.u32 2, %s14
      %p1257 = scmp.lt.s32.totalorder %s1256, 3
      %s1258 = scalar_select %p1257, %s1256, 3
      %s1259 = smul.addr %s1258, 4
      %s1260 = smul.addr %s1259, 4
      %s1261 = scalar_lea.vmem %s3, %s1260
      // Predicated region
      $region33: #{e5smollm_forward.38} parent=31 // pred_check
        %p1262 = pneg %p100
      $region34: #{e5smollm_forward.38} parent=31 // pred_check_branch
        %1264 = sbr.rel (%p1262) target = $region36
      $region35: #{e5smollm_forward.38} parent=31 // pred_region
        %s1265 = smul.u32 2, %s14
      $region36: #{e5smollm_forward.38} parent=31 // pred_fallthru
        _
    $region32: #{e5smollm_forward.38} parent=5 // pred_fallthru
      _
    %p1266 = scmp.le.s32.totalorder 2, %s9
    // Predicated region
    $region37: #{e5smollm_forward.38} parent=5 // pred_check
      %p1267 = pneg %p1266
    $region38: #{e5smollm_forward.38} parent=5 // pred_check_branch
      %1269 = sbr.rel (%p1267) target = $region40
    $region39: #{e5smollm_forward.38} parent=5 // pred_region
      %s1270 = ssub.s32 %s9, 2
      // Predicated region
      $region41: #{e5smollm_forward.38} parent=39 // pred_check
        %p1271 = pneg %p106
      $region42: #{e5smollm_forward.38} parent=39 // pred_check_branch
        %1273 = sbr.rel (%p1271) target = $region44
      $region43: #{e5smollm_forward.38} parent=39 // pred_region
        %s1274 = smul.u32 2, %s15
        %p1275 = scmp.lt.s32.totalorder %s1274, 3
        %s1276 = scalar_select %p1275, %s1274, 3
        %s1277 = smul.addr %s1276, 4
        %s1278 = smul.addr %s1277, 4
        %s1279 = scalar_lea.vmem %s3, %s1278
      $region44: #{e5smollm_forward.38} parent=39 // pred_fallthru
        _
    $region40: #{e5smollm_forward.38} parent=5 // pred_fallthru
      _
  $region6: #{e5smollm_forward.38} parent=0 // loop_footer
    %s13 = sadd.s32 1, %s9
  $region7: #{e5smollm_forward.38} parent=0 // loop_footer_branch
    %8 = sbr.rel target = $region3
  $region8: #{e5smollm_forward.38} parent=0 // loop_exit
    _

// kernel: e5smollm_forward.45
$region0: #{e5smollm_forward.45}
  #allocation0 [shape = 'u32[]', space=smem, size = 0x4, offset = 0x4, fixed_abs, tag = 'smem constant byte address 0x4 - core index']
  #allocation1 [shape = 'u32[144,128]{1,0:T(1,128)}', space=vmem, size = 0x12000, scoped, tag = 'internal scratch']
  %s0 = inlined_call_operand.vmem [shape: bf16[32,256], index: 0, kind: input, shape index: {}]
  %s1 = inlined_call_operand.vmem [shape: f32[1,256], index: 1, kind: input, shape index: {}]
  %s2 = inlined_call_operand.vmem [shape: bf16[256,512], index: 2, kind: input, shape index: {}]
  %s3 = inlined_call_operand.vmem [shape: s32[32,1], index: 3, kind: input, shape index: {}]
  %s4 = inlined_call_operand.hbm [shape: f32[32,512], index: 4, kind: output, shape index: {0}]
  %s5 = inlined_call_operand.vmem [shape: f32[32,128], index: 5, kind: output, shape index: {1}]
  %6 = xla_tuple %s4, %s5
  %s7 = sld [smem:[#allocation0]]
  $region57: #{e5smollm_forward.45} parent=0
    _
  %s9 = ssub.s32 1, %s7
  %s10 = scalar_select 0, %s9, %s7
  $region1: #{e5smollm_forward.45} parent=0
    #allocation2 [shape = 'u8[65536]{0}', space=vmem, size = 0x10000, scoped, tag = 'output window, operand 0']
    #allocation3 [shape = 's32[2]{0}', space=sflag, size = 0x8, scoped, tag = 'scoped memory for e5smollm_forward.45']
    %11 = vsyncpa [#allocation3], 0
    %s12 = scalar_lea.sflag [#allocation3], 1
    %13 = vsyncpa %s12, 0
    loop: start=0, step=1, limit=4
    $region2: #{e5smollm_forward.45} parent=1 // loop_pre_header
      _
    $region3: #{e5smollm_forward.45} parent=1 // loop_header
      %s15 = sphi 0, %s19
      %p16 = scmp.ge.s32.totalorder %s15, 4
      %s25 = sphi 0, %s27
      %s28 = sphi 0, %s25
      %s29 = sphi 0, %s28
      %s45 = sphi 0, %s29
      %s49 = sphi 0, %s49
      %s51 = sphi 0, %s49
      %s52 = sphi 0, %s51
      %s66 = sphi 0, %s52
      %s70 = sphi 0, %s70
      %s72 = sphi 0, %s70
      %s73 = sphi 0, %s72
      %s87 = sphi 0, %s73
      %s93 = sphi 0, %s95
      %s96 = sphi 0, %s93
      %s97 = sphi 0, %s96
      %s113 = sphi 0, %s97
      %s119 = sphi 0, %s121
      %s122 = sphi 0, %s119
      %s123 = sphi 0, %s122
      %s139 = sphi 0, %s123
      %s145 = sphi 0, %s147
      %s148 = sphi 0, %s145
      %s149 = sphi 0, %s148
      %s165 = sphi 0, %s149
    $region4: #{e5smollm_forward.45} parent=1 // loop_header_branch
      %18 = sbr.rel (%p16) target = $region8
    $region5: #{e5smollm_forward.45} parent=1 // loop_body
      %s20 = ssub.s32 %s15, 1
      %s21 = ssub.s32 %s15, 2
      %s22 = sadd.s32 %s15, 1
      %s23 = ssub.s32 %s15, %s22
      %p24 = scmp.eq.s32.totalorder %s23, 0
      %s26 = sadd.s32 %s25, 1
      %s27 = scalar_select %p24, %s25, %s26
      %p30 = pneg %p24
      %p31 = scmp.eq.s32.totalorder %s15, 1
      %p32 = por %p30, %p31
      %p33 = scmp.ne.s32.totalorder %s25, %s28
      %p34 = scmp.eq.s32.totalorder %s15, 0
      %p35 = por %p33, %p34
      %p36 = scmp.ne.s32.totalorder %s25, %s28
      %p37 = scmp.eq.s32.totalorder %s20, 1
      %p38 = por %p36, %p37
      %p39 = scmp.ne.s32.totalorder %s28, %s29
      %p40 = scmp.eq.s32.totalorder %s20, 0
      %p41 = por %p39, %p40
      %p42 = scmp.ne.s32.totalorder %s28, %s29
      %p43 = scmp.eq.s32.totalorder %s21, 1
      %p44 = por %p42, %p43
      %p46 = scmp.ne.s32.totalorder %s29, %s45
      %p47 = scmp.eq.s32.totalorder %s21, 0
      %p48 = por %p46, %p47
      %s50 = sadd.s32 %s49, 1
      %p53 = scmp.eq.s32.totalorder %s15, 1
      %p54 = scmp.ne.s32.totalorder %s49, %s51
      %p55 = scmp.eq.s32.totalorder %s15, 0
      %p56 = por %p54, %p55
      %p57 = scmp.ne.s32.totalorder %s49, %s51
      %p58 = scmp.eq.s32.totalorder %s20, 1
      %p59 = por %p57, %p58
      %p60 = scmp.ne.s32.totalorder %s51, %s52
      %p61 = scmp.eq.s32.totalorder %s20, 0
      %p62 = por %p60, %p61
      %p63 = scmp.ne.s32.totalorder %s51, %s52
      %p64 = scmp.eq.s32.totalorder %s21, 1
      %p65 = por %p63, %p64
      %p67 = scmp.ne.s32.totalorder %s52, %s66
      %p68 = scmp.eq.s32.totalorder %s21, 0
      %p69 = por %p67, %p68
      %s71 = sadd.s32 %s70, 1
      %p74 = scmp.eq.s32.totalorder %s15, 1
      %p75 = scmp.ne.s32.totalorder %s70, %s72
      %p76 = scmp.eq.s32.totalorder %s15, 0
      %p77 = por %p75, %p76
      %p78 = scmp.ne.s32.totalorder %s70, %s72
      %p79 = scmp.eq.s32.totalorder %s20, 1
      %p80 = por %p78, %p79
      %p81 = scmp.ne.s32.totalorder %s72, %s73
      %p82 = scmp.eq.s32.totalorder %s20, 0
      %p83 = por %p81, %p82
      %p84 = scmp.ne.s32.totalorder %s72, %s73
      %p85 = scmp.eq.s32.totalorder %s21, 1
      %p86 = por %p84, %p85
      %p88 = scmp.ne.s32.totalorder %s73, %s87
      %p89 = scmp.eq.s32.totalorder %s21, 0
      %p90 = por %p88, %p89
      %s91 = ssub.s32 %s15, %s22
      %p92 = scmp.eq.s32.totalorder %s91, 0
      %s94 = sadd.s32 %s93, 1
      %s95 = scalar_select %p92, %s93, %s94
      %p98 = pneg %p92
      %p99 = scmp.eq.s32.totalorder %s15, 1
      %p100 = por %p98, %p99
      %p101 = scmp.ne.s32.totalorder %s93, %s96
      %p102 = scmp.eq.s32.totalorder %s15, 0
      %p103 = por %p101, %p102
      %p104 = scmp.ne.s32.totalorder %s93, %s96
      %p105 = scmp.eq.s32.totalorder %s20, 1
      %p106 = por %p104, %p105
      %p107 = scmp.ne.s32.totalorder %s96, %s97
      %p108 = scmp.eq.s32.totalorder %s20, 0
      %p109 = por %p107, %p108
      %p110 = scmp.ne.s32.totalorder %s96, %s97
      %p111 = scmp.eq.s32.totalorder %s21, 1
      %p112 = por %p110, %p111
      %p114 = scmp.ne.s32.totalorder %s97, %s113
      %p115 = scmp.eq.s32.totalorder %s21, 0
      %p116 = por %p114, %p115
      %s117 = ssub.s32 %s15, %s22
      %p118 = scmp.eq.s32.totalorder %s117, 0
      %s120 = sadd.s32 %s119, 1
      %s121 = scalar_select %p118, %s119, %s120
      %p124 = pneg %p118
      %p125 = scmp.eq.s32.totalorder %s15, 1
      %p126 = por %p124, %p125
      %p127 = scmp.ne.s32.totalorder %s119, %s122
      %p128 = scmp.eq.s32.totalorder %s15, 0
      %p129 = por %p127, %p128
      %p130 = scmp.ne.s32.totalorder %s119, %s122
      %p131 = scmp.eq.s32.totalorder %s20, 1
      %p132 = por %p130, %p131
      %p133 = scmp.ne.s32.totalorder %s122, %s123
      %p134 = scmp.eq.s32.totalorder %s20, 0
      %p135 = por %p133, %p134
      %p136 = scmp.ne.s32.totalorder %s122, %s123
      %p137 = scmp.eq.s32.totalorder %s21, 1
      %p138 = por %p136, %p137
      %p140 = scmp.ne.s32.totalorder %s123, %s139
      %p141 = scmp.eq.s32.totalorder %s21, 0
      %p142 = por %p140, %p141
      %s143 = ssub.s32 %s15, %s22
      %p144 = scmp.eq.s32.totalorder %s143, 0
      %s146 = sadd.s32 %s145, 1
      %s147 = scalar_select %p144, %s145, %s146
      %p150 = pneg %p144
      %p151 = scmp.eq.s32.totalorder %s15, 1
      %p152 = por %p150, %p151
      %p153 = scmp.ne.s32.totalorder %s145, %s148
      %p154 = scmp.eq.s32.totalorder %s15, 0
      %p155 = por %p153, %p154
      %p156 = scmp.ne.s32.totalorder %s145, %s148
      %p157 = scmp.eq.s32.totalorder %s20, 1
      %p158 = por %p156, %p157
      %p159 = scmp.ne.s32.totalorder %s148, %s149
      %p160 = scmp.eq.s32.totalorder %s20, 0
      %p161 = por %p159, %p160
      %p162 = scmp.ne.s32.totalorder %s148, %s149
      %p163 = scmp.eq.s32.totalorder %s21, 1
      %p164 = por %p162, %p163
      %p166 = scmp.ne.s32.totalorder %s149, %s165
      %p167 = scmp.eq.s32.totalorder %s21, 0
      %p168 = por %p166, %p167
      %p169 = scmp.le.s32.totalorder 1, %s15
      %p170 = scmp.lt.s32.totalorder %s15, 3
      %p171 = pnand %p169, %p170
      %p172 = pneg %p171
      // Predicated region
      $region9: #{e5smollm_forward.45} parent=5 // pred_check
        _
      $region10: #{e5smollm_forward.45} parent=5 // pred_check_branch
        %174 = sbr.rel (%p171) target = $region12
      $region11: #{e5smollm_forward.45} parent=5 // pred_region
        %s175 = ssub.s32 %s15, 1
        // Predicated region
        $region13: #{e5smollm_forward.45} parent=11 // pred_check
          %p176 = pneg %p62
        $region14: #{e5smollm_forward.45} parent=11 // pred_check_branch
          %178 = sbr.rel (%p176) target = $region16
        $region15: #{e5smollm_forward.45} parent=11 // pred_region
          _
        $region16: #{e5smollm_forward.45} parent=11 // pred_fallthru
          _
        // Predicated region
        $region17: #{e5smollm_forward.45} parent=11 // pred_check
          %p179 = pneg %p83
        $region18: #{e5smollm_forward.45} parent=11 // pred_check_branch
          %181 = sbr.rel (%p179) target = $region20
        $region19: #{e5smollm_forward.45} parent=11 // pred_region
          _
        $region20: #{e5smollm_forward.45} parent=11 // pred_fallthru
          _
      $region12: #{e5smollm_forward.45} parent=5 // pred_fallthru
        _
      %p182 = scmp.lt.s32.totalorder %s15, 2
      // Predicated region
      $region21: #{e5smollm_forward.45} parent=5 // pred_check
        %p183 = pneg %p182
      $region22: #{e5smollm_forward.45} parent=5 // pred_check_branch
        %185 = sbr.rel (%p183) target = $region24
      $region23: #{e5smollm_forward.45} parent=5 // pred_region
        // Predicated region
        $region25: #{e5smollm_forward.45} parent=23 // pred_check
          %p186 = pneg %p35
        $region26: #{e5smollm_forward.45} parent=23 // pred_check_branch
          %188 = sbr.rel (%p186) target = $region28
        $region27: #{e5smollm_forward.45} parent=23 // pred_region
          %s189 = smul.u32 2, %s15
          %p190 = scmp.lt.s32.totalorder %s189, 3
          %s191 = scalar_select %p190, %s189, 3
          %s192 = smul.addr %s191, 2
          %s193 = smul.addr %s192, 4
          %s194 = scalar_lea.vmem %s0, %s193
          %s195 = smul.u32 2, %s15
        $region28: #{e5smollm_forward.45} parent=23 // pred_fallthru
          _
        // Predicated region
        $region29: #{e5smollm_forward.45} parent=23 // pred_check
          %p196 = pneg %p103
        $region30: #{e5smollm_forward.45} parent=23 // pred_check_branch
          %198 = sbr.rel (%p196) target = $region32
        $region31: #{e5smollm_forward.45} parent=23 // pred_region
          %s199 = smul.u32 2, %s15
          %p200 = scmp.lt.s32.totalorder %s199, 3
          %s201 = scalar_select %p200, %s199, 3
          %s202 = smul.addr %s201, 8
          %s203 = scalar_lea.vmem %s3, %s202
          %s204 = smul.u32 2, %s15
        $region32: #{e5smollm_forward.45} parent=23 // pred_fallthru
          _
      $region24: #{e5smollm_forward.45} parent=5 // pred_fallthru
        _
      %p205 = scmp.le.s32.totalorder 1, %s15
      %p206 = scmp.lt.s32.totalorder %s15, 3
      %p207 = pnand %p205, %p206
      %p208 = pneg %p207
      // Predicated region
      $region33: #{e5smollm_forward.45} parent=5 // pred_check
        _
      $region34: #{e5smollm_forward.45} parent=5 // pred_check_branch
        %210 = sbr.rel (%p207) target = $region36
      $region35: #{e5smollm_forward.45} parent=5 // pred_region
        %s211 = ssub.s32 %s15, 1
        %s212 = smul.u32 2, %s20
        %p213 = scmp.lt.s32.totalorder %s212, 3
        %s214 = scalar_select %p213, %s212, 3
        %s215 = smul.addr %s214, 2
        %s216 = smul.addr %s215, 4
        %s217 = scalar_lea.vmem %s0, %s216
        %p218 = pneg %p41
        %p219 = pneg %p38
        %p220 = pneg %p62
        %p221 = pneg %p59
        %p222 = pneg %p83
        %p223 = pneg %p80
        %s224 = smul.u32 2, %s20
        %p225 = scmp.lt.s32.totalorder %s224, 3
        %s226 = scalar_select %p225, %s224, 3
        %s227 = smul.addr %s226, 8
        %s228 = scalar_lea.vmem %s3, %s227
        %p229 = pneg %p109
        %p230 = pneg %p106
        %p231 = pneg %p135
        %p232 = pneg %p132
        %s233 = sand.u32 %s122, 1
        %s234 = scalar_lea.sflag [#allocation3], %s233
        %s235 = sand.u32 %s122, 1
        %s236 = smul.addr %s235, 64
        %s237 = scalar_lea.vmem [#allocation2], %s236
        %p238 = pneg %p161
        %p239 = pneg %p158
        %s240 = smul.u32 2, %s20
        %p241 = scmp.lt.s32.totalorder %s240, 3
        %s242 = scalar_select %p241, %s240, 3
        %s243 = smul.addr %s242, 8
        %s244 = scalar_lea.vmem %s5, %s243
        %s245 = smul.u32 2, %s20
        %p246 = scmp.lt.s32.totalorder %s245, 3
        %s247 = scalar_select %p246, %s245, 3
        %s248 = smul.addr %s247, 2
        %s249 = smul.addr %s248, 4
        %s250 = scalar_lea.vmem %s0, %s249
        %s251 = smul.u32 2, %s20
        %s252 = smul.u32 2, %s20
        %p253 = scmp.lt.s32.totalorder %s252, 3
        %s254 = scalar_select %p253, %s252, 3
        %s255 = smul.addr %s254, 8
        %s256 = scalar_lea.vmem %s3, %s255
        %s257 = smul.u32 2, %s20
        %s258 = smul.u32 2, %s20
        %s259 = smul.u32 2, %s20
        %p260 = scmp.lt.s32.totalorder %s259, 3
        %s261 = scalar_select %p260, %s259, 3
        %s262 = smul.addr %s261, 8
        %s263 = scalar_lea.vmem %s5, %s262
        %s264 = smul.u32 2, %s20
        %v265 = vld [vmem:[%s250] sm:$0xff]
        %v266 = vld [vmem:[%s250 + $0x8] sm:$0xff]
        %v267 = vunpack.c.l.bf16 %v265
        %v268 = vunpack.c.h.bf16 %v265
        %v269 = vunpack.c.l.bf16 %v266
        %v270 = vunpack.c.h.bf16 %v266
        %v271 = vmul.f32 %v267, %v267
        %v272 = vmul.f32 %v268, %v268
        %v273 = vmul.f32 %v269, %v269
        %v274 = vmul.f32 %v270, %v270
        %v275 = vadd.f32 %v271, %v272
        %276 = vadd.xlane.f32.xlu0 %v275
        %v277 = vpop.xlane.xlu0 %276
        %v278 = vadd.f32 %v273, %v274
        %279 = vadd.xlane.f32.xlu0 %v278
        %v280 = vpop.xlane.xlu0 %279
        %v281 = vrcp.pop 256.0
        %v282 = vmul.f32 %v277, %v281
        %v283 = vmul.f32 %v280, %v281
        %v284 = vadd.f32 %v282, 1e-05
        %v285 = vadd.f32 %v283, 1e-05
        %v286 = vrsqrt.pop %v284
        %v287 = vrsqrt.pop %v285
        %v288 = vmul.f32 %v267, %v286
        %v289 = vmul.f32 %v268, %v286
        %v290 = vmul.f32 %v269, %v287
        %v291 = vmul.f32 %v270, %v287
        %v292 = vld [vmem:[%s1] sm:$0x3]
        %v294 = vlaneseq
        %v295 = vshrl.u32 %v294, 7
        %v296 = vsub.s32 0, %v295
        %v297 = vrot.slane %v292, %v296
        %v298 = vlaneseq
        %v299 = vshrl.u32 %v298, 7
        %v300 = vsub.s32 1, %v299
        %v301 = vrot.slane %v292, %v300
        %v304 = vmul.f32 %v288, %v297
        %v305 = vmul.f32 %v289, %v301
        %v306 = vmul.f32 %v290, %v297
        %v307 = vmul.f32 %v291, %v301
        %v308 = vpack.c.bf16 %v306, %v304
        %v309 = vpack.c.bf16 %v307, %v305
        %v310 = vld [vmem:[%s2] sm:$0xff]
        %v311 = vld [vmem:[%s2 + $0x8] sm:$0xff]
        %v312 = vld [vmem:[%s2 + $0x10] sm:$0xff]
        %v313 = vld [vmem:[%s2 + $0x18] sm:$0xff]
        %v314 = vld [vmem:[%s2 + $0x20] sm:$0xff]
        %v315 = vld [vmem:[%s2 + $0x28] sm:$0xff]
        %v316 = vld [vmem:[%s2 + $0x30] sm:$0xff]
        %v317 = vld [vmem:[%s2 + $0x38] sm:$0xff]
        %v318 = vld [vmem:[%s2 + $0x40] sm:$0xff]
        %v319 = vld [vmem:[%s2 + $0x48] sm:$0xff]
        %v320 = vld [vmem:[%s2 + $0x50] sm:$0xff]
        %v321 = vld [vmem:[%s2 + $0x58] sm:$0xff]
        %v322 = vld [vmem:[%s2 + $0x60] sm:$0xff]
        %v323 = vld [vmem:[%s2 + $0x68] sm:$0xff]
        %v324 = vld [vmem:[%s2 + $0x70] sm:$0xff]
        %v325 = vld [vmem:[%s2 + $0x78] sm:$0xff]
        %v326 = vld [vmem:[%s2 + $0x80] sm:$0xff]
        %v327 = vld [vmem:[%s2 + $0x88] sm:$0xff]
        %v328 = vld [vmem:[%s2 + $0x90] sm:$0xff]
        %v329 = vld [vmem:[%s2 + $0x98] sm:$0xff]
        %v330 = vld [vmem:[%s2 + $0xa0] sm:$0xff]
        %v331 = vld [vmem:[%s2 + $0xa8] sm:$0xff]
        %v332 = vld [vmem:[%s2 + $0xb0] sm:$0xff]
        %v333 = vld [vmem:[%s2 + $0xb8] sm:$0xff]
        %v334 = vld [vmem:[%s2 + $0xc0] sm:$0xff]
        %v335 = vld [vmem:[%s2 + $0xc8] sm:$0xff]
        %v336 = vld [vmem:[%s2 + $0xd0] sm:$0xff]
        %v337 = vld [vmem:[%s2 + $0xd8] sm:$0xff]
        %v338 = vld [vmem:[%s2 + $0xe0] sm:$0xff]
        %v339 = vld [vmem:[%s2 + $0xe8] sm:$0xff]
        %v340 = vld [vmem:[%s2 + $0xf0] sm:$0xff]
        %v341 = vld [vmem:[%s2 + $0xf8] sm:$0xff]
        %v342 = vld [vmem:[%s2 + $0x100] sm:$0xff]
        %v343 = vld [vmem:[%s2 + $0x108] sm:$0xff]
        %v344 = vld [vmem:[%s2 + $0x110] sm:$0xff]
        %v345 = vld [vmem:[%s2 + $0x118] sm:$0xff]
        %v346 = vld [vmem:[%s2 + $0x120] sm:$0xff]
        %v347 = vld [vmem:[%s2 + $0x128] sm:$0xff]
        %v348 = vld [vmem:[%s2 + $0x130] sm:$0xff]
        %v349 = vld [vmem:[%s2 + $0x138] sm:$0xff]
        %v350 = vld [vmem:[%s2 + $0x140] sm:$0xff]
        %v351 = vld [vmem:[%s2 + $0x148] sm:$0xff]
        %v352 = vld [vmem:[%s2 + $0x150] sm:$0xff]
        %v353 = vld [vmem:[%s2 + $0x158] sm:$0xff]
        %v354 = vld [vmem:[%s2 + $0x160] sm:$0xff]
        %v355 = vld [vmem:[%s2 + $0x168] sm:$0xff]
        %v356 = vld [vmem:[%s2 + $0x170] sm:$0xff]
        %v357 = vld [vmem:[%s2 + $0x178] sm:$0xff]
        %v358 = vld [vmem:[%s2 + $0x180] sm:$0xff]
        %v359 = vld [vmem:[%s2 + $0x188] sm:$0xff]
        %v360 = vld [vmem:[%s2 + $0x190] sm:$0xff]
        %v361 = vld [vmem:[%s2 + $0x198] sm:$0xff]
        %v362 = vld [vmem:[%s2 + $0x1a0] sm:$0xff]
        %v363 = vld [vmem:[%s2 + $0x1a8] sm:$0xff]
        %v364 = vld [vmem:[%s2 + $0x1b0] sm:$0xff]
        %v365 = vld [vmem:[%s2 + $0x1b8] sm:$0xff]
        %v366 = vld [vmem:[%s2 + $0x1c0] sm:$0xff]
        %v367 = vld [vmem:[%s2 + $0x1c8] sm:$0xff]
        %v368 = vld [vmem:[%s2 + $0x1d0] sm:$0xff]
        %v369 = vld [vmem:[%s2 + $0x1d8] sm:$0xff]
        %v370 = vld [vmem:[%s2 + $0x1e0] sm:$0xff]
        %v371 = vld [vmem:[%s2 + $0x1e8] sm:$0xff]
        %v372 = vld [vmem:[%s2 + $0x1f0] sm:$0xff]
        %v373 = vld [vmem:[%s2 + $0x1f8] sm:$0xff]
        %v438 = vunpack.c.l.b16 %v310
        %v439 = vunpack.c.h.b16 %v310
        %v440 = vunpack.c.l.b16 %v311
        %v441 = vunpack.c.h.b16 %v311
        %v442 = vunpack.c.l.b16 %v312
        %v443 = vunpack.c.h.b16 %v312
        %v444 = vunpack.c.l.b16 %v313
        %v445 = vunpack.c.h.b16 %v313
        %v446 = vunpack.c.l.b16 %v314
        %v447 = vunpack.c.h.b16 %v314
        %v448 = vunpack.c.l.b16 %v315
        %v449 = vunpack.c.h.b16 %v315
        %v450 = vunpack.c.l.b16 %v316
        %v451 = vunpack.c.h.b16 %v316
        %v452 = vunpack.c.l.b16 %v317
        %v453 = vunpack.c.h.b16 %v317
        %v454 = vunpack.c.l.b16 %v318
        %v455 = vunpack.c.h.b16 %v318
        %v456 = vunpack.c.l.b16 %v319
        %v457 = vunpack.c.h.b16 %v319
        %v458 = vunpack.c.l.b16 %v320
        %v459 = vunpack.c.h.b16 %v320
        %v460 = vunpack.c.l.b16 %v321
        %v461 = vunpack.c.h.b16 %v321
        %v462 = vunpack.c.l.b16 %v322
        %v463 = vunpack.c.h.b16 %v322
        %v464 = vunpack.c.l.b16 %v323
        %v465 = vunpack.c.h.b16 %v323
        %v466 = vunpack.c.l.b16 %v324
        %v467 = vunpack.c.h.b16 %v324
        %v468 = vunpack.c.l.b16 %v325
        %v469 = vunpack.c.h.b16 %v325
        %v470 = vunpack.c.l.b16 %v326
        %v471 = vunpack.c.h.b16 %v326
        %v472 = vunpack.c.l.b16 %v327
        %v473 = vunpack.c.h.b16 %v327
        %v474 = vunpack.c.l.b16 %v328
        %v475 = vunpack.c.h.b16 %v328
        %v476 = vunpack.c.l.b16 %v329
        %v477 = vunpack.c.h.b16 %v329
        %v478 = vunpack.c.l.b16 %v330
        %v479 = vunpack.c.h.b16 %v330
        %v480 = vunpack.c.l.b16 %v331
        %v481 = vunpack.c.h.b16 %v331
        %v482 = vunpack.c.l.b16 %v332
        %v483 = vunpack.c.h.b16 %v332
        %v484 = vunpack.c.l.b16 %v333
        %v485 = vunpack.c.h.b16 %v333
        %v486 = vunpack.c.l.b16 %v334
        %v487 = vunpack.c.h.b16 %v334
        %v488 = vunpack.c.l.b16 %v335
        %v489 = vunpack.c.h.b16 %v335
        %v490 = vunpack.c.l.b16 %v336
        %v491 = vunpack.c.h.b16 %v336
        %v492 = vunpack.c.l.b16 %v337
        %v493 = vunpack.c.h.b16 %v337
        %v494 = vunpack.c.l.b16 %v338
        %v495 = vunpack.c.h.b16 %v338
        %v496 = vunpack.c.l.b16 %v339
        %v497 = vunpack.c.h.b16 %v339
        %v498 = vunpack.c.l.b16 %v340
        %v499 = vunpack.c.h.b16 %v340
        %v500 = vunpack.c.l.b16 %v341
        %v501 = vunpack.c.h.b16 %v341
        %v502 = vunpack.c.l.b16 %v342
        %v503 = vunpack.c.h.b16 %v342
        %v504 = vunpack.c.l.b16 %v343
        %v505 = vunpack.c.h.b16 %v343
        %v506 = vunpack.c.l.b16 %v344
        %v507 = vunpack.c.h.b16 %v344
        %v508 = vunpack.c.l.b16 %v345
        %v509 = vunpack.c.h.b16 %v345
        %v510 = vunpack.c.l.b16 %v346
        %v511 = vunpack.c.h.b16 %v346
        %v512 = vunpack.c.l.b16 %v347
        %v513 = vunpack.c.h.b16 %v347
        %v514 = vunpack.c.l.b16 %v348
        %v515 = vunpack.c.h.b16 %v348
        %v516 = vunpack.c.l.b16 %v349
        %v517 = vunpack.c.h.b16 %v349
        %v518 = vunpack.c.l.b16 %v350
        %v519 = vunpack.c.h.b16 %v350
        %v520 = vunpack.c.l.b16 %v351
        %v521 = vunpack.c.h.b16 %v351
        %v522 = vunpack.c.l.b16 %v352
        %v523 = vunpack.c.h.b16 %v352
        %v524 = vunpack.c.l.b16 %v353
        %v525 = vunpack.c.h.b16 %v353
        %v526 = vunpack.c.l.b16 %v354
        %v527 = vunpack.c.h.b16 %v354
        %v528 = vunpack.c.l.b16 %v355
        %v529 = vunpack.c.h.b16 %v355
        %v530 = vunpack.c.l.b16 %v356
        %v531 = vunpack.c.h.b16 %v356
        %v532 = vunpack.c.l.b16 %v357
        %v533 = vunpack.c.h.b16 %v357
        %v534 = vunpack.c.l.b16 %v358
        %v535 = vunpack.c.h.b16 %v358
        %v536 = vunpack.c.l.b16 %v359
        %v537 = vunpack.c.h.b16 %v359
        %v538 = vunpack.c.l.b16 %v360
        %v539 = vunpack.c.h.b16 %v360
        %v540 = vunpack.c.l.b16 %v361
        %v541 = vunpack.c.h.b16 %v361
        %v542 = vunpack.c.l.b16 %v362
        %v543 = vunpack.c.h.b16 %v362
        %v544 = vunpack.c.l.b16 %v363
        %v545 = vunpack.c.h.b16 %v363
        %v546 = vunpack.c.l.b16 %v364
        %v547 = vunpack.c.h.b16 %v364
        %v548 = vunpack.c.l.b16 %v365
        %v549 = vunpack.c.h.b16 %v365
        %v550 = vunpack.c.l.b16 %v366
        %v551 = vunpack.c.h.b16 %v366
        %v552 = vunpack.c.l.b16 %v367
        %v553 = vunpack.c.h.b16 %v367
        %v554 = vunpack.c.l.b16 %v368
        %v555 = vunpack.c.h.b16 %v368
        %v556 = vunpack.c.l.b16 %v369
        %v557 = vunpack.c.h.b16 %v369
        %v558 = vunpack.c.l.b16 %v370
        %v559 = vunpack.c.h.b16 %v370
        %v560 = vunpack.c.l.b16 %v371
        %v561 = vunpack.c.h.b16 %v371
        %v562 = vunpack.c.l.b16 %v372
        %v563 = vunpack.c.h.b16 %v372
        %v564 = vunpack.c.l.b16 %v373
        %v565 = vunpack.c.h.b16 %v373
        %v566 = vpack.c.b16 %v442, %v438
        %v567 = vpack.c.b16 %v443, %v439
        %v568 = vpack.c.b16 %v444, %v440
        %v569 = vpack.c.b16 %v445, %v441
        %v570 = vpack.c.b16 %v450, %v446
        %v571 = vpack.c.b16 %v451, %v447
        %v572 = vpack.c.b16 %v452, %v448
        %v573 = vpack.c.b16 %v453, %v449
        %v574 = vpack.c.b16 %v458, %v454
        %v575 = vpack.c.b16 %v459, %v455
        %v576 = vpack.c.b16 %v460, %v456
        %v577 = vpack.c.b16 %v461, %v457
        %v578 = vpack.c.b16 %v466, %v462
        %v579 = vpack.c.b16 %v467, %v463
        %v580 = vpack.c.b16 %v468, %v464
        %v581 = vpack.c.b16 %v469, %v465
        %v582 = vpack.c.b16 %v474, %v470
        %v583 = vpack.c.b16 %v475, %v471
        %v584 = vpack.c.b16 %v476, %v472
        %v585 = vpack.c.b16 %v477, %v473
        %v586 = vpack.c.b16 %v482, %v478
        %v587 = vpack.c.b16 %v483, %v479
        %v588 = vpack.c.b16 %v484, %v480
        %v589 = vpack.c.b16 %v485, %v481
        %v590 = vpack.c.b16 %v490, %v486
        %v591 = vpack.c.b16 %v491, %v487
        %v592 = vpack.c.b16 %v492, %v488
        %v593 = vpack.c.b16 %v493, %v489
        %v594 = vpack.c.b16 %v498, %v494
        %v595 = vpack.c.b16 %v499, %v495
        %v596 = vpack.c.b16 %v500, %v496
        %v597 = vpack.c.b16 %v501, %v497
        %v598 = vpack.c.b16 %v506, %v502
        %v599 = vpack.c.b16 %v507, %v503
        %v600 = vpack.c.b16 %v508, %v504
        %v601 = vpack.c.b16 %v509, %v505
        %v602 = vpack.c.b16 %v514, %v510
        %v603 = vpack.c.b16 %v515, %v511
        %v604 = vpack.c.b16 %v516, %v512
        %v605 = vpack.c.b16 %v517, %v513
        %v606 = vpack.c.b16 %v522, %v518
        %v607 = vpack.c.b16 %v523, %v519
        %v608 = vpack.c.b16 %v524, %v520
        %v609 = vpack.c.b16 %v525, %v521
        %v610 = vpack.c.b16 %v530, %v526
        %v611 = vpack.c.b16 %v531, %v527
        %v612 = vpack.c.b16 %v532, %v528
        %v613 = vpack.c.b16 %v533, %v529
        %v614 = vpack.c.b16 %v538, %v534
        %v615 = vpack.c.b16 %v539, %v535
        %v616 = vpack.c.b16 %v540, %v536
        %v617 = vpack.c.b16 %v541, %v537
        %v618 = vpack.c.b16 %v546, %v542
        %v619 = vpack.c.b16 %v547, %v543
        %v620 = vpack.c.b16 %v548, %v544
        %v621 = vpack.c.b16 %v549, %v545
        %v622 = vpack.c.b16 %v554, %v550
        %v623 = vpack.c.b16 %v555, %v551
        %v624 = vpack.c.b16 %v556, %v552
        %v625 = vpack.c.b16 %v557, %v553
        %v626 = vpack.c.b16 %v562, %v558
        %v627 = vpack.c.b16 %v563, %v559
        %v628 = vpack.c.b16 %v564, %v560
        %v629 = vpack.c.b16 %v565, %v561
        %694 = vmatprep.subr.bf16.mxu0 %v567
        %695 = vmatpush1.bf16.msra.mxu0 %v566
        %696 = vmatprep.subr.bf16.mxu0 %v571
        %697 = vmatpush1.bf16.msra.mxu0 %v570
        %698 = vmatprep.subr.bf16.mxu0 %v575
        %699 = vmatpush1.bf16.msra.mxu0 %v574
        %700 = vmatprep.subr.bf16.mxu0 %v579
        %701 = vmatpush1.bf16.msra.mxu0 %v578
        %702 = vmatprep.subr.bf16.mxu0 %v583
        %703 = vmatpush1.bf16.msra.mxu0 %v582
        %704 = vmatprep.subr.bf16.mxu0 %v587
        %705 = vmatpush1.bf16.msra.mxu0 %v586
        %706 = vmatprep.subr.bf16.mxu0 %v591
        %707 = vmatpush1.bf16.msra.mxu0 %v590
        %708 = vmatprep.subr.bf16.mxu0 %v595
        %709 = vmatpush1.bf16.msra.mxu0 %v594
        %710 = vmatprep.subr.bf16.mxu0 %v599
        %711 = vmatpush1.bf16.msra.mxu0 %v598
        %712 = vmatprep.subr.bf16.mxu0 %v603
        %713 = vmatpush1.bf16.msra.mxu0 %v602
        %714 = vmatprep.subr.bf16.mxu0 %v607
        %715 = vmatpush1.bf16.msra.mxu0 %v606
        %716 = vmatprep.subr.bf16.mxu0 %v611
        %717 = vmatpush1.bf16.msra.mxu0 %v610
        %718 = vmatprep.subr.bf16.mxu0 %v615
        %719 = vmatpush1.bf16.msra.mxu0 %v614
        %720 = vmatprep.subr.bf16.mxu0 %v619
        %721 = vmatpush1.bf16.msra.mxu0 %v618
        %722 = vmatprep.subr.bf16.mxu0 %v623
        %723 = vmatpush1.bf16.msra.mxu0 %v622
        %724 = vmatprep.subr.bf16.mxu0 %v627
        %725 = vmatpush1.bf16.msra.mxu0 %v626
        %726 = vmatprep.mubr.bf16.mxu0 %v309
        %727 = vmatmul.mubr.bf16.gmra.mrb[0].mxu0 %v308
        %v728 = vpop.f32.mrb[0].mxu0
        %v729 = vadd.f32 0.0, %v728
        %v730 = vpop.f32.mrb[0].mxu0
        %v731 = vadd.f32 0.0, %v730
        %v732 = vpop.f32.mrb[0].mxu0
        %v733 = vadd.f32 0.0, %v732
        %v734 = vpop.f32.mrb[0].mxu0
        %v735 = vadd.f32 0.0, %v734
        %736 = vdwg.mxu0
        %737 = vmatprep.subr.bf16.mxu0 %v569
        %738 = vmatpush1.bf16.msra.mxu0 %v568
        %739 = vmatprep.subr.bf16.mxu0 %v573
        %740 = vmatpush1.bf16.msra.mxu0 %v572
        %741 = vmatprep.subr.bf16.mxu0 %v577
        %742 = vmatpush1.bf16.msra.mxu0 %v576
        %743 = vmatprep.subr.bf16.mxu0 %v581
        %744 = vmatpush1.bf16.msra.mxu0 %v580
        %745 = vmatprep.subr.bf16.mxu0 %v585
        %746 = vmatpush1.bf16.msra.mxu0 %v584
        %747 = vmatprep.subr.bf16.mxu0 %v589
        %748 = vmatpush1.bf16.msra.mxu0 %v588
        %749 = vmatprep.subr.bf16.mxu0 %v593
        %750 = vmatpush1.bf16.msra.mxu0 %v592
        %751 = vmatprep.subr.bf16.mxu0 %v597
        %752 = vmatpush1.bf16.msra.mxu0 %v596
        %753 = vmatprep.subr.bf16.mxu0 %v601
        %754 = vmatpush1.bf16.msra.mxu0 %v600
        %755 = vmatprep.subr.bf16.mxu0 %v605
        %756 = vmatpush1.bf16.msra.mxu0 %v604
        %757 = vmatprep.subr.bf16.mxu0 %v609
        %758 = vmatpush1.bf16.msra.mxu0 %v608
        %759 = vmatprep.subr.bf16.mxu0 %v613
        %760 = vmatpush1.bf16.msra.mxu0 %v612
        %761 = vmatprep.subr.bf16.mxu0 %v617
        %762 = vmatpush1.bf16.msra.mxu0 %v616
        %763 = vmatprep.subr.bf16.mxu0 %v621
        %764 = vmatpush1.bf16.msra.mxu0 %v620
        %765 = vmatprep.subr.bf16.mxu0 %v625
        %766 = vmatpush1.bf16.msra.mxu0 %v624
        %767 = vmatprep.subr.bf16.mxu0 %v629
        %768 = vmatpush1.bf16.msra.mxu0 %v628
        %769 = vmatprep.mubr.bf16.mxu0 %v309
        %770 = vmatmul.mubr.bf16.gmra.mrb[0].mxu0 %v308
        %v771 = vpop.f32.mrb[0].mxu0
        %v772 = vadd.f32 0.0, %v771
        %v773 = vpop.f32.mrb[0].mxu0
        %v774 = vadd.f32 0.0, %v773
        %v775 = vpop.f32.mrb[0].mxu0
        %v776 = vadd.f32 0.0, %v775
        %v777 = vpop.f32.mrb[0].mxu0
        %v778 = vadd.f32 0.0, %v777
        %779 = vdwg.mxu0
        %780 = vst [vmem:[%s237] sm:$0xff] %v729
        %781 = vst [vmem:[%s237 + $0x8] sm:$0xff] %v731
        %782 = vst [vmem:[%s237 + $0x10] sm:$0xff] %v772
        %783 = vst [vmem:[%s237 + $0x18] sm:$0xff] %v774
        %784 = vst [vmem:[%s237 + $0x20] sm:$0xff] %v733
        %785 = vst [vmem:[%s237 + $0x28] sm:$0xff] %v735
        %786 = vst [vmem:[%s237 + $0x30] sm:$0xff] %v776
        %787 = vst [vmem:[%s237 + $0x38] sm:$0xff] %v778
        %v788 = vmax.f32 %v729, %v772
        %v789 = vmax.f32 %v731, %v774
        %v790 = vmax.f32 %v788, %v789
        %791 = vmax.xlane.f32.xlu0 %v790
        %v792 = vpop.xlane.xlu0 %791
        %v793 = vmax.f32 %v733, %v776
        %v794 = vmax.f32 %v735, %v778
        %v795 = vmax.f32 %v793, %v794
        %796 = vmax.xlane.f32.xlu0 %v795
        %v797 = vpop.xlane.xlu0 %796
        %v798 = vsub.f32 %v729, %v792
        %v799 = vsub.f32 %v731, %v792
        %v800 = vsub.f32 %v772, %v792
        %v801 = vsub.f32 %v774, %v792
        %v802 = vsub.f32 %v733, %v797
        %v803 = vsub.f32 %v735, %v797
        %v804 = vsub.f32 %v776, %v797
        %v805 = vsub.f32 %v778, %v797
        %v806 = vmul.f32 %v798, 1.442695
        %v807 = vpow.pop %v806
        %v808 = vmul.f32 %v799, 1.442695
        %v809 = vpow.pop %v808
        %v810 = vmul.f32 %v800, 1.442695
        %v811 = vpow.pop %v810
        %v812 = vmul.f32 %v801, 1.442695
        %v813 = vpow.pop %v812
        %v814 = vmul.f32 %v802, 1.442695
        %v815 = vpow.pop %v814
        %v816 = vmul.f32 %v803, 1.442695
        %v817 = vpow.pop %v816
        %v818 = vmul.f32 %v804, 1.442695
        %v819 = vpow.pop %v818
        %v820 = vmul.f32 %v805, 1.442695
        %v821 = vpow.pop %v820
        %v822 = vadd.f32 %v807, %v809
        %v823 = vadd.f32 %v822, %v811
        %v824 = vadd.f32 %v823, %v813
        %825 = vadd.xlane.f32.xlu0 %v824
        %v826 = vpop.xlane.xlu0 %825
        %v827 = vadd.f32 %v815, %v817
        %v828 = vadd.f32 %v827, %v819
        %v829 = vadd.f32 %v828, %v821
        %830 = vadd.xlane.f32.xlu0 %v829
        %v831 = vpop.xlane.xlu0 %830
        %v832 = vlog2.pop %v826
        %v833 = vmul.f32 %v832, 0.6931472
        %v834 = vlog2.pop %v831
        %v835 = vmul.f32 %v834, 0.6931472
        %v836 = vadd.f32 %v833, %v792
        %v837 = vadd.f32 %v835, %v797
        %v838 = vld [vmem:[%s256] sm:$0xff]
        %v839 = vld [vmem:[%s256 + $0x8] sm:$0xff]
        %v840 = vlaneseq
        %v841 = vand.u32 %v840, 127
        %v842 = vadd.s32 %v841, 128
        %v843 = vadd.s32 %v841, 256
        %v844 = vadd.s32 %v841, 384
        %845 = vset.pattern.permute.xlu0 0
        %846 = vperm.xlu0 %845, %v838
        %v847 = vpop.permute.xlu0 %846
        %848 = vset.pattern.permute.xlu0 0
        %849 = vperm.xlu0 %848, %v839
        %v850 = vpop.permute.xlu0 %849
        %vm851 = vcmp.eq.s32.totalorder %v841, %v847
        %vm852 = vcmp.eq.s32.totalorder %v842, %v847
        %vm853 = vcmp.eq.s32.totalorder %v843, %v847
        %vm854 = vcmp.eq.s32.totalorder %v844, %v847
        %vm855 = vcmp.eq.s32.totalorder %v841, %v850
        %vm856 = vcmp.eq.s32.totalorder %v842, %v850
        %vm857 = vcmp.eq.s32.totalorder %v843, %v850
        %vm858 = vcmp.eq.s32.totalorder %v844, %v850
        %v859 = vsel %vm851, %v729, 0.0
        %v860 = vsel %vm852, %v731, 0.0
        %v861 = vsel %vm853, %v772, 0.0
        %v862 = vsel %vm854, %v774, 0.0
        %v863 = vsel %vm855, %v733, 0.0
        %v864 = vsel %vm856, %v735, 0.0
        %v865 = vsel %vm857, %v776, 0.0
        %v866 = vsel %vm858, %v778, 0.0
        %v867 = vadd.f32 %v859, %v860
        %v868 = vadd.f32 %v867, %v861
        %v869 = vadd.f32 %v868, %v862
        %870 = vadd.xlane.f32.xlu0 %v869
        %v871 = vpop.xlane.xlu0 %870
        %v872 = vadd.f32 %v863, %v864
        %v873 = vadd.f32 %v872, %v865
        %v874 = vadd.f32 %v873, %v866
        %875 = vadd.xlane.f32.xlu0 %v874
        %v876 = vpop.xlane.xlu0 %875
        %v877 = vsub.f32 %v836, %v871
        %v878 = vsub.f32 %v837, %v876
        %879 = vst [vmem:[%s263] sm:$0xff] %v877
        %880 = vst [vmem:[%s263 + $0x8] sm:$0xff] %v878
        %s881 = sand.u32 %s122, 1
        %s882 = scalar_lea.sflag [#allocation3], %s881
        %s883 = sand.u32 %s122, 1
        %s884 = smul.addr %s883, 64
        %s885 = scalar_lea.vmem [#allocation2], %s884
        %s886 = smul.u32 2, %s20
        %p887 = scmp.lt.s32.totalorder %s886, 3
        %s888 = scalar_select %p887, %s886, 3
        %s889 = smul.addr %s888, 8
        %s890 = scalar_lea.vmem %s5, %s889
        // Predicated region
        $region37: #{e5smollm_forward.45} parent=35 // pred_check
          %p891 = pneg %p132
        $region38: #{e5smollm_forward.45} parent=35 // pred_check_branch
          %893 = sbr.rel (%p891) target = $region40
        $region39: #{e5smollm_forward.45} parent=35 // pred_region
          %s894 = smul.u32 2, %s20
          %s896 = ssub.s32 1024, 1024
          %897 = vsyncadd %s882, %s896
          %s898 = smul.addr %s894, 4
          %s899 = smul.addr %s898, 128
          %s900 = scalar_lea.hbm %s4, %s899
          %s901 = sshll.u32 %s885, 4
          %s902 = int_to_ptr.vmem [resolvable:$true] %s901
          %907 = dma.vmem_to_hbm [thread:$0]  %s902, 1024, %s900, %s882, 512, 512, 32
        $region40: #{e5smollm_forward.45} parent=35 // pred_fallthru
          _
        // Predicated region
        $region41: #{e5smollm_forward.45} parent=35 // pred_check
          %p908 = pneg %p158
        $region42: #{e5smollm_forward.45} parent=35 // pred_check_branch
          %910 = sbr.rel (%p908) target = $region44
        $region43: #{e5smollm_forward.45} parent=35 // pred_region
          %s911 = smul.u32 2, %s20
        $region44: #{e5smollm_forward.45} parent=35 // pred_fallthru
          _
      $region36: #{e5smollm_forward.45} parent=5 // pred_fallthru
        _
      %p912 = scmp.le.s32.totalorder 2, %s15
      // Predicated region
      $region45: #{e5smollm_forward.45} parent=5 // pred_check
        %p913 = pneg %p912
      $region46: #{e5smollm_forward.45} parent=5 // pred_check_branch
        %915 = sbr.rel (%p913) target = $region48
      $region47: #{e5smollm_forward.45} parent=5 // pred_region
        %s916 = ssub.s32 %s15, 2
        // Predicated region
        $region49: #{e5smollm_forward.45} parent=47 // pred_check
          %p917 = pneg %p138
        $region50: #{e5smollm_forward.45} parent=47 // pred_check_branch
          %919 = sbr.rel (%p917) target = $region52
        $region51: #{e5smollm_forward.45} parent=47 // pred_region
          %s920 = sand.u32 %s123, 1
          %s921 = scalar_lea.sflag [#allocation3], %s920
          %s922 = sand.u32 %s123, 1
          %s923 = smul.addr %s922, 64
          %s924 = scalar_lea.vmem [#allocation2], %s923
          %925 = dma.done %s921, 1024
        $region52: #{e5smollm_forward.45} parent=47 // pred_fallthru
          _
        // Predicated region
        $region53: #{e5smollm_forward.45} parent=47 // pred_check
          %p926 = pneg %p164
        $region54: #{e5smollm_forward.45} parent=47 // pred_check_branch
          %928 = sbr.rel (%p926) target = $region56
        $region55: #{e5smollm_forward.45} parent=47 // pred_region
          %s929 = smul.u32 2, %s21
          %p930 = scmp.lt.s32.totalorder %s929, 3
          %s931 = scalar_select %p930, %s929, 3
          %s932 = smul.addr %s931, 8
          %s933 = scalar_lea.vmem %s5, %s932
        $region56: #{e5smollm_forward.45} parent=47 // pred_fallthru
          _
      $region48: #{e5smollm_forward.45} parent=5 // pred_fallthru
        _
    $region6: #{e5smollm_forward.45} parent=1 // loop_footer
      %s19 = sadd.s32 1, %s15
    $region7: #{e5smollm_forward.45} parent=1 // loop_footer_branch
      %14 = sbr.rel target = $region3
    $region8: #{e5smollm_forward.45} parent=1 // loop_exit
      _
    %934 = vsyncpa [#allocation3], 1
    %s935 = scalar_lea.sflag [#allocation3], 1
    %936 = vsyncpa %s935, 1

</llo_original>
